<compile_context>
chip_gen: v6e
topology: v6e:2x2x1
jax: 0.10.0
libtpu: 0.0.40
codegen_flags: <defaults>
</compile_context>

<pallas_src>
import jax
import jax.numpy as jnp
from jax.experimental import pallas as pl
from jax.experimental.pallas import tpu as pltpu

# ----- model hyperparameters (match the PyTorch module defaults) -----
INPUT_DIM = 16
OUTPUT_DIM = 4
D_MODEL = 64
NHEAD = 4
HEAD_DIM = D_MODEL // NHEAD
NUM_LAYERS = 2
DIM_FF = 2048          # nn.TransformerEncoderLayer default dim_feedforward
EPS = 1e-5             # nn.LayerNorm default eps

FF_CHUNK = 512         # DIM_FF tiling chunk (>= 256 keeps MXU passes efficient)
NUM_FF_CHUNKS = DIM_FF // FF_CHUNK
MAX_BATCH_TILE = 256   # with FF chunking, peak activation VMEM stays well under the limit below
VMEM_LIMIT_BYTES = 64 * 1024 * 1024


def _cdiv(a, b):
    return -(-a // b)


def _round_up(a, m):
    return ((a + m - 1) // m) * m


def transformer_kernel(x_ref,
                       w_in_ref, b_in_ref,
                       wq_ref, bq_ref, wk_ref, bk_ref, wv_ref, bv_ref,
                       wo_ref, bo_ref,
                       n1w_ref, n1b_ref, n2w_ref, n2b_ref,
                       f1w_ref, f1b_ref, f2w_ref, f2b_ref,
                       w_out_ref, b_out_ref,
                       o_ref):
    BT, S, _ = x_ref.shape
    f32, bf16 = jnp.float32, jnp.bfloat16

    # input_linear on all BT*S tokens at once (weights already (in, out))
    x = x_ref[...].astype(f32).reshape(BT * S, INPUT_DIM)
    h = jnp.dot(x, w_in_ref[...], preferred_element_type=f32) + b_in_ref[...]

    def layernorm(z, w, b):
        mu = jnp.mean(z, axis=-1, keepdims=True)
        var = jnp.mean((z - mu) ** 2, axis=-1, keepdims=True)
        return (z - mu) * jax.lax.rsqrt(var + EPS) * w + b

    def mha(hq_b, hk_b, l):
        # hq_b: (rows_q, D) bf16 query tokens; hk_b: (BT*S, D) bf16 key/value tokens.
        rows_q = hq_b.shape[0]
        sq = rows_q // BT
        # Head-fused projections (q-scale folded into wq/bq); f32 accumulation.
        q = jnp.dot(hq_b, wq_ref[l], preferred_element_type=f32) + bq_ref[l]
        k = jnp.dot(hk_b, wk_ref[l], preferred_element_type=f32) + bk_ref[l]
        v = jnp.dot(hk_b, wv_ref[l], preferred_element_type=f32) + bv_ref[l]
        heads = []
        for hh in range(NHEAD):
            lo, hi = hh * HEAD_DIM, (hh + 1) * HEAD_DIM
            q3 = q[:, lo:hi].reshape(BT, sq, HEAD_DIM)
            k3 = k[:, lo:hi].reshape(BT, S, HEAD_DIM)
            v3 = v[:, lo:hi].reshape(BT, S, HEAD_DIM)
            # batched-over-BT attention for this head, softmax in f32
            s = jnp.einsum('bqd,bkd->bqk', q3, k3, preferred_element_type=f32)  # (BT, sq, S)
            s = s - jnp.max(s, axis=-1, keepdims=True)
            p = jnp.exp(s)
            p = p * pl.reciprocal(jnp.sum(p, axis=-1, keepdims=True), approx=True)
            o = jnp.einsum('bqk,bkd->bqd', p, v3, preferred_element_type=f32)   # (BT, sq, HEAD_DIM)
            heads.append(o.reshape(rows_q, HEAD_DIM))
        # lane-concat of head outputs (== PyTorch concat order) -> single K=64 out_proj matmul
        attn = jnp.concatenate(heads, axis=-1)                                  # (rows_q, D)
        return jnp.dot(attn.astype(bf16), wo_ref[l], preferred_element_type=f32) + bo_ref[l]

    def encoder_layer(h_q, hq_b, hk_b, l):
        # post-norm encoder layer (nn.TransformerEncoderLayer default), ReLU activation
        y = layernorm(h_q + mha(hq_b, hk_b, l), n1w_ref[l], n1b_ref[l])
        y_b = y.astype(bf16)
        # FFN tiled over DIM_FF: FF1 chunk -> ReLU -> FF2 chunk accumulate (peak-VMEM relief)
        ff = jnp.zeros_like(y)
        for c in range(NUM_FF_CHUNKS):
            t = jnp.dot(y_b, f1w_ref[l, c], preferred_element_type=f32) + f1b_ref[l, c]
            t = jnp.maximum(t, 0.0)
            ff = ff + jnp.dot(t.astype(bf16), f2w_ref[l, c], preferred_element_type=f32)
        ff = ff + f2b_ref[l]
        return layernorm(y + ff, n2w_ref[l], n2b_ref[l])

    # all layers but the last: full sequence (bf16 cast of h computed once per layer)
    for l in range(NUM_LAYERS - 1):
        h_b = h.astype(bf16)
        h = encoder_layer(h, h_b, h_b, l)

    # last layer: only the last token of each example feeds output_linear, so the query path,
    # out_proj, residual+norm1, FFN and norm2 are computed for those BT rows only.
    h_b = h.astype(bf16)
    h_last = h.reshape(BT, S, D_MODEL)[:, S - 1, :]                             # (BT, D)
    h_last = encoder_layer(h_last, h_last.astype(bf16), h_b, NUM_LAYERS - 1)    # (BT, D)

    out = jnp.dot(h_last, w_out_ref[...], preferred_element_type=f32) + b_out_ref[...]
    # Note: zero-padded batch rows hit LayerNorm with var=0 -> rsqrt(eps); finite and discarded.
    o_ref[...] = out.astype(o_ref.dtype)                                        # (BT, OUTPUT_DIM)


def simple_transformer_forward(x, packed_params):
    """x: (B, S, INPUT_DIM) float32 -> (B, OUTPUT_DIM) float32."""
    B, S, in_dim = x.shape
    assert in_dim == INPUT_DIM

    if B >= 16:
        # >= 2 grid steps so both v7x TensorCores get work; tile rounded to 8 rows so the
        # (BT, OUTPUT_DIM) output block satisfies the sublane constraint.
        n_steps = max(2, _cdiv(B, MAX_BATCH_TILE))
        BT = _round_up(_cdiv(B, n_steps), 8)
    else:
        BT = B   # tiny batch: single full-batch block (padding/extra-step overhead not worth it)
    B_pad = BT * _cdiv(B, BT)
    if B_pad != B:
        x = jnp.pad(x, ((0, B_pad - B), (0, 0), (0, 0)))

    x_spec = pl.BlockSpec((BT, S, INPUT_DIM), lambda b: (b, 0, 0))
    # weights: full block, constant index map (resident across the whole grid)
    w_specs = [pl.BlockSpec(p.shape, (lambda b, _nd=p.ndim: (0,) * _nd)) for p in packed_params]

    out = pl.pallas_call(
        transformer_kernel,
        out_shape=jax.ShapeDtypeStruct((B_pad, OUTPUT_DIM), jnp.float32),
        grid_spec=pltpu.PrefetchScalarGridSpec(
            num_scalar_prefetch=0,
            grid=(B_pad // BT,),
            in_specs=[x_spec] + w_specs,
            out_specs=pl.BlockSpec((BT, OUTPUT_DIM), lambda b: (b, 0)),
        ),
        compiler_params=pltpu.CompilerParams(
            dimension_semantics=("parallel",),
            vmem_limit_bytes=VMEM_LIMIT_BYTES),
    )(x, *packed_params)
    return out[:B]


def init_params(key):
    """Deterministic synthetic parameters in the PyTorch module's native layout."""
    ks = jax.random.split(key, 16)
    nrm = lambda k, shape, s=0.05: (s * jax.random.normal(k, shape)).astype(jnp.float32)
    L = NUM_LAYERS
    return (
        nrm(ks[0], (D_MODEL, INPUT_DIM)),            # input_linear.weight   (out, in)
        nrm(ks[1], (1, D_MODEL)),                    # input_linear.bias
        nrm(ks[2], (L, 3 * D_MODEL, D_MODEL)),       # self_attn.in_proj_weight
        nrm(ks[3], (L, 1, 3 * D_MODEL)),             # self_attn.in_proj_bias
        nrm(ks[4], (L, D_MODEL, D_MODEL)),           # self_attn.out_proj.weight
        nrm(ks[5], (L, 1, D_MODEL)),                 # self_attn.out_proj.bias
        jnp.ones((L, 1, D_MODEL), jnp.float32),      # norm1.weight
        jnp.zeros((L, 1, D_MODEL), jnp.float32),     # norm1.bias
        jnp.ones((L, 1, D_MODEL), jnp.float32),      # norm2.weight
        jnp.zeros((L, 1, D_MODEL), jnp.float32),     # norm2.bias
        nrm(ks[6], (L, DIM_FF, D_MODEL)),            # linear1.weight
        nrm(ks[7], (L, 1, DIM_FF)),                  # linear1.bias
        nrm(ks[8], (L, D_MODEL, DIM_FF)),            # linear2.weight
        nrm(ks[9], (L, 1, D_MODEL)),                 # linear2.bias
        nrm(ks[10], (OUTPUT_DIM, D_MODEL)),          # output_linear.weight
        nrm(ks[11], (1, OUTPUT_DIM)),                # output_linear.bias
    )


def pack_params(torch_params):
    """Host-side constant fold: transpose to (in, out), fuse Q/K/V across heads, fold q-scale,
    chunk the FFN weights over DIM_FF, cast big weights to bf16. Semantics-preserving
    re-layout of the PyTorch parameters."""
    (w_in, b_in, inproj_w, inproj_b, outproj_w, outproj_b,
     n1w, n1b, n2w, n2b, f1w, f1b, f2w, f2b, w_out, b_out) = torch_params
    L, D = NUM_LAYERS, D_MODEL
    NC, FC = NUM_FF_CHUNKS, FF_CHUNK
    scale = HEAD_DIM ** -0.5
    f32, bf16 = jnp.float32, jnp.bfloat16

    def to_in_out(w):   # (L, D_out, D_in) -> (L, D_in, D_out)
        return jnp.transpose(w, (0, 2, 1))

    # in_proj split into Q/K/V, kept head-major along the output dim (PyTorch layout);
    # softmax scale folded into the Q weights/bias.
    wq = (to_in_out(inproj_w[:, :D, :]) * scale).astype(bf16)            # (L, D, D)
    wk = to_in_out(inproj_w[:, D:2 * D, :]).astype(bf16)
    wv = to_in_out(inproj_w[:, 2 * D:, :]).astype(bf16)
    bq = (inproj_b[:, :, :D] * scale).astype(f32)                        # (L, 1, D)
    bk = inproj_b[:, :, D:2 * D].astype(f32)
    bv = inproj_b[:, :, 2 * D:].astype(f32)

    wo = to_in_out(outproj_w).astype(bf16)                               # (L, D, D)

    # FFN weights chunked over DIM_FF for in-kernel tiling.
    f1w_c = jnp.transpose(to_in_out(f1w).reshape(L, D, NC, FC), (0, 2, 1, 3)).astype(bf16)  # (L,NC,D,FC)
    f1b_c = f1b.reshape(L, NC, 1, FC).astype(f32)                                           # (L,NC,1,FC)
    f2w_c = to_in_out(f2w).reshape(L, NC, FC, D).astype(bf16)                               # (L,NC,FC,D)

    return (
        jnp.transpose(w_in).astype(f32), b_in.astype(f32),
        wq, bq, wk, bk, wv, bv,
        wo, outproj_b.astype(f32),
        n1w.astype(f32), n1b.astype(f32), n2w.astype(f32), n2b.astype(f32),
        f1w_c, f1b_c,
        f2w_c, f2b.astype(f32),
        jnp.transpose(w_out).astype(f32), b_out.astype(f32),
    )


if __name__ == "__main__":
    B, S = 2, 8
    key = jax.random.PRNGKey(0)
    k_x, k_p = jax.random.split(key)
    x = jax.random.normal(k_x, (B, S, INPUT_DIM), dtype=jnp.float32)
    params = pack_params(init_params(k_p))

    out = simple_transformer_forward(x, params)
    out = jax.block_until_ready(out)
    assert out.shape == (B, OUTPUT_DIM), out.shape
    assert bool(jnp.all(jnp.isfinite(out)))
    print("KERNEL_OK")
</pallas_src>

<mosaic_0001>
module attributes {stable_mosaic.version = 11 : i64} {
  func.func @transformer_kernel(%arg0: i32, %arg1: memref<2x8x16xf32, #tpu.memory_space<vmem>>, %arg2: memref<16x64xf32, #tpu.memory_space<vmem>>, %arg3: memref<1x64xf32, #tpu.memory_space<vmem>>, %arg4: memref<2x64x64xbf16, #tpu.memory_space<vmem>>, %arg5: memref<2x1x64xf32, #tpu.memory_space<vmem>>, %arg6: memref<2x64x64xbf16, #tpu.memory_space<vmem>>, %arg7: memref<2x1x64xf32, #tpu.memory_space<vmem>>, %arg8: memref<2x64x64xbf16, #tpu.memory_space<vmem>>, %arg9: memref<2x1x64xf32, #tpu.memory_space<vmem>>, %arg10: memref<2x64x64xbf16, #tpu.memory_space<vmem>>, %arg11: memref<2x1x64xf32, #tpu.memory_space<vmem>>, %arg12: memref<2x1x64xf32, #tpu.memory_space<vmem>>, %arg13: memref<2x1x64xf32, #tpu.memory_space<vmem>>, %arg14: memref<2x1x64xf32, #tpu.memory_space<vmem>>, %arg15: memref<2x1x64xf32, #tpu.memory_space<vmem>>, %arg16: memref<2x4x64x512xbf16, #tpu.memory_space<vmem>>, %arg17: memref<2x4x1x512xf32, #tpu.memory_space<vmem>>, %arg18: memref<2x4x512x64xbf16, #tpu.memory_space<vmem>>, %arg19: memref<2x1x64xf32, #tpu.memory_space<vmem>>, %arg20: memref<64x4xf32, #tpu.memory_space<vmem>>, %arg21: memref<1x4xf32, #tpu.memory_space<vmem>>, %arg22: memref<2x4xf32, #tpu.memory_space<vmem>>) attributes {dimension_semantics = [#tpu.dimension_semantics<parallel>], iteration_bounds = array<i64: 1>, scalar_prefetch = 0 : i64, scratch_operands = 0 : i64, tpu.core_type = #tpu.core_type<tc>, window_params = [{transform_indices = @transform_0, window_bounds = array<i64: 2, 8, 16>}, {pipeline_mode = #tpu.pipeline_mode<synchronous>, transform_indices = @transform_1, window_bounds = array<i64: 16, 64>}, {pipeline_mode = #tpu.pipeline_mode<synchronous>, transform_indices = @transform_2, window_bounds = array<i64: 1, 64>}, {pipeline_mode = #tpu.pipeline_mode<synchronous>, transform_indices = @transform_3, window_bounds = array<i64: 2, 64, 64>}, {pipeline_mode = #tpu.pipeline_mode<synchronous>, transform_indices = @transform_4, window_bounds = array<i64: 2, 1, 64>}, {pipeline_mode = #tpu.pipeline_mode<synchronous>, transform_indices = @transform_5, window_bounds = array<i64: 2, 64, 64>}, {pipeline_mode = #tpu.pipeline_mode<synchronous>, transform_indices = @transform_6, window_bounds = array<i64: 2, 1, 64>}, {pipeline_mode = #tpu.pipeline_mode<synchronous>, transform_indices = @transform_7, window_bounds = array<i64: 2, 64, 64>}, {pipeline_mode = #tpu.pipeline_mode<synchronous>, transform_indices = @transform_8, window_bounds = array<i64: 2, 1, 64>}, {pipeline_mode = #tpu.pipeline_mode<synchronous>, transform_indices = @transform_9, window_bounds = array<i64: 2, 64, 64>}, {pipeline_mode = #tpu.pipeline_mode<synchronous>, transform_indices = @transform_10, window_bounds = array<i64: 2, 1, 64>}, {pipeline_mode = #tpu.pipeline_mode<synchronous>, transform_indices = @transform_11, window_bounds = array<i64: 2, 1, 64>}, {pipeline_mode = #tpu.pipeline_mode<synchronous>, transform_indices = @transform_12, window_bounds = array<i64: 2, 1, 64>}, {pipeline_mode = #tpu.pipeline_mode<synchronous>, transform_indices = @transform_13, window_bounds = array<i64: 2, 1, 64>}, {pipeline_mode = #tpu.pipeline_mode<synchronous>, transform_indices = @transform_14, window_bounds = array<i64: 2, 1, 64>}, {pipeline_mode = #tpu.pipeline_mode<synchronous>, transform_indices = @transform_15, window_bounds = array<i64: 2, 4, 64, 512>}, {pipeline_mode = #tpu.pipeline_mode<synchronous>, transform_indices = @transform_16, window_bounds = array<i64: 2, 4, 1, 512>}, {pipeline_mode = #tpu.pipeline_mode<synchronous>, transform_indices = @transform_17, window_bounds = array<i64: 2, 4, 512, 64>}, {pipeline_mode = #tpu.pipeline_mode<synchronous>, transform_indices = @transform_18, window_bounds = array<i64: 2, 1, 64>}, {pipeline_mode = #tpu.pipeline_mode<synchronous>, transform_indices = @transform_19, window_bounds = array<i64: 64, 4>}, {pipeline_mode = #tpu.pipeline_mode<synchronous>, transform_indices = @transform_20, window_bounds = array<i64: 1, 4>}, {transform_indices = @transform_21, window_bounds = array<i64: 2, 4>}]} {
    %c0 = arith.constant 0 : index
    %c0_0 = arith.constant 0 : index
    %c0_1 = arith.constant 0 : index
    %0 = vector.load %arg1[%c0, %c0_0, %c0_1] : memref<2x8x16xf32, #tpu.memory_space<vmem>>, vector<2x8x16xf32>
    %1 = vector.shape_cast %0 : vector<2x8x16xf32> to vector<16x16xf32>
    %c0_2 = arith.constant 0 : index
    %c0_3 = arith.constant 0 : index
    %2 = vector.load %arg2[%c0_2, %c0_3] : memref<16x64xf32, #tpu.memory_space<vmem>>, vector<16x64xf32>
    %cst = arith.constant dense<0.000000e+00> : vector<16x64xf32>
    %3 = tpu.matmul %1, %2, %cst {dimension_numbers = #tpu.dot_dimension_numbers<[1], [0], [0], [1], [0, 0, 1, 1], [], []>} : vector<16x16xf32>, vector<16x64xf32>, vector<16x64xf32> -> vector<16x64xf32>
    %c0_4 = arith.constant 0 : index
    %c0_5 = arith.constant 0 : index
    %4 = vector.load %arg3[%c0_4, %c0_5] : memref<1x64xf32, #tpu.memory_space<vmem>>, vector<1x64xf32>
    %5 = vector.broadcast %4 : vector<1x64xf32> to vector<16x64xf32>
    %6 = arith.addf %3, %5 : vector<16x64xf32>
    %7 = arith.truncf %6 : vector<16x64xf32> to vector<16x64xbf16>
    %c0_6 = arith.constant 0 : index
    %c0_7 = arith.constant 0 : index
    %c0_8 = arith.constant 0 : index
    %8 = vector.load %arg4[%c0_6, %c0_7, %c0_8] : memref<2x64x64xbf16, #tpu.memory_space<vmem>>, vector<1x64x64xbf16>
    %9 = vector.shape_cast %8 : vector<1x64x64xbf16> to vector<64x64xbf16>
    %cst_9 = arith.constant dense<0.000000e+00> : vector<16x64xf32>
    %10 = tpu.matmul %7, %9, %cst_9 {dimension_numbers = #tpu.dot_dimension_numbers<[1], [0], [0], [1], [0, 0, 1, 1], [], []>} : vector<16x64xbf16>, vector<64x64xbf16>, vector<16x64xf32> -> vector<16x64xf32>
    %c0_10 = arith.constant 0 : index
    %c0_11 = arith.constant 0 : index
    %c0_12 = arith.constant 0 : index
    %11 = vector.load %arg5[%c0_10, %c0_11, %c0_12] : memref<2x1x64xf32, #tpu.memory_space<vmem>>, vector<1x1x64xf32>
    %12 = vector.shape_cast %11 : vector<1x1x64xf32> to vector<1x64xf32>
    %13 = vector.broadcast %12 : vector<1x64xf32> to vector<16x64xf32>
    %14 = arith.addf %10, %13 : vector<16x64xf32>
    %c0_13 = arith.constant 0 : index
    %c0_14 = arith.constant 0 : index
    %c0_15 = arith.constant 0 : index
    %15 = vector.load %arg6[%c0_13, %c0_14, %c0_15] : memref<2x64x64xbf16, #tpu.memory_space<vmem>>, vector<1x64x64xbf16>
    %16 = vector.shape_cast %15 : vector<1x64x64xbf16> to vector<64x64xbf16>
    %cst_16 = arith.constant dense<0.000000e+00> : vector<16x64xf32>
    %17 = tpu.matmul %7, %16, %cst_16 {dimension_numbers = #tpu.dot_dimension_numbers<[1], [0], [0], [1], [0, 0, 1, 1], [], []>} : vector<16x64xbf16>, vector<64x64xbf16>, vector<16x64xf32> -> vector<16x64xf32>
    %c0_17 = arith.constant 0 : index
    %c0_18 = arith.constant 0 : index
    %c0_19 = arith.constant 0 : index
    %18 = vector.load %arg7[%c0_17, %c0_18, %c0_19] : memref<2x1x64xf32, #tpu.memory_space<vmem>>, vector<1x1x64xf32>
    %19 = vector.shape_cast %18 : vector<1x1x64xf32> to vector<1x64xf32>
    %20 = vector.broadcast %19 : vector<1x64xf32> to vector<16x64xf32>
    %21 = arith.addf %17, %20 : vector<16x64xf32>
    %c0_20 = arith.constant 0 : index
    %c0_21 = arith.constant 0 : index
    %c0_22 = arith.constant 0 : index
    %22 = vector.load %arg8[%c0_20, %c0_21, %c0_22] : memref<2x64x64xbf16, #tpu.memory_space<vmem>>, vector<1x64x64xbf16>
    %23 = vector.shape_cast %22 : vector<1x64x64xbf16> to vector<64x64xbf16>
    %cst_23 = arith.constant dense<0.000000e+00> : vector<16x64xf32>
    %24 = tpu.matmul %7, %23, %cst_23 {dimension_numbers = #tpu.dot_dimension_numbers<[1], [0], [0], [1], [0, 0, 1, 1], [], []>} : vector<16x64xbf16>, vector<64x64xbf16>, vector<16x64xf32> -> vector<16x64xf32>
    %c0_24 = arith.constant 0 : index
    %c0_25 = arith.constant 0 : index
    %c0_26 = arith.constant 0 : index
    %25 = vector.load %arg9[%c0_24, %c0_25, %c0_26] : memref<2x1x64xf32, #tpu.memory_space<vmem>>, vector<1x1x64xf32>
    %26 = vector.shape_cast %25 : vector<1x1x64xf32> to vector<1x64xf32>
    %27 = vector.broadcast %26 : vector<1x64xf32> to vector<16x64xf32>
    %28 = arith.addf %24, %27 : vector<16x64xf32>
    %29 = vector.extract_strided_slice %14 {offsets = [0, 0], sizes = [16, 16], strides = [1, 1]} : vector<16x64xf32> to vector<16x16xf32>
    %30 = vector.shape_cast %29 : vector<16x16xf32> to vector<2x8x16xf32>
    %31 = vector.extract_strided_slice %21 {offsets = [0, 0], sizes = [16, 16], strides = [1, 1]} : vector<16x64xf32> to vector<16x16xf32>
    %32 = vector.shape_cast %31 : vector<16x16xf32> to vector<2x8x16xf32>
    %33 = vector.extract_strided_slice %28 {offsets = [0, 0], sizes = [16, 16], strides = [1, 1]} : vector<16x64xf32> to vector<16x16xf32>
    %34 = vector.shape_cast %33 : vector<16x16xf32> to vector<2x8x16xf32>
    "tpu.trace_start"() <{level = 10 : i32, message = "bqd,bkd->bqk"}> : () -> ()
    %cst_27 = arith.constant dense<0.000000e+00> : vector<2x8x8xf32>
    %35 = tpu.matmul %30, %32, %cst_27 {dimension_numbers = #tpu.dot_dimension_numbers<[2], [2], [1], [1], [0, 0, 0, 1, 1, 1], [0], [0]>} : vector<2x8x16xf32>, vector<2x8x16xf32>, vector<2x8x8xf32> -> vector<2x8x8xf32>
    "tpu.trace_stop"() : () -> ()
    %cst_28 = arith.constant dense<0xFF800000> : vector<2x8xf32>
    %36 = vector.multi_reduction <maximumf>, %35, %cst_28 [2] : vector<2x8x8xf32> to vector<2x8xf32>
    %37 = vector.shape_cast %36 : vector<2x8xf32> to vector<2x8x1xf32>
    %38 = vector.broadcast %37 : vector<2x8x1xf32> to vector<2x8x8xf32>
    %39 = arith.subf %35, %38 : vector<2x8x8xf32>
    %40 = math.exp %39 : vector<2x8x8xf32>
    %cst_29 = arith.constant dense<0.000000e+00> : vector<2x8xf32>
    %41 = vector.multi_reduction <add>, %40, %cst_29 [2] : vector<2x8x8xf32> to vector<2x8xf32>
    %42 = vector.shape_cast %41 : vector<2x8xf32> to vector<2x8x1xf32>
    %43 = tpu.reciprocal %42 {approx = true} : vector<2x8x1xf32> -> vector<2x8x1xf32>
    %44 = vector.broadcast %43 : vector<2x8x1xf32> to vector<2x8x8xf32>
    %45 = arith.mulf %40, %44 : vector<2x8x8xf32>
    "tpu.trace_start"() <{level = 10 : i32, message = "bqk,bkd->bqd"}> : () -> ()
    %cst_30 = arith.constant dense<0.000000e+00> : vector<2x8x16xf32>
    %46 = tpu.matmul %45, %34, %cst_30 {dimension_numbers = #tpu.dot_dimension_numbers<[2], [1], [1], [2], [0, 0, 0, 1, 1, 2], [0], [0]>} : vector<2x8x8xf32>, vector<2x8x16xf32>, vector<2x8x16xf32> -> vector<2x8x16xf32>
    "tpu.trace_stop"() : () -> ()
    %47 = vector.shape_cast %46 : vector<2x8x16xf32> to vector<16x16xf32>
    %48 = vector.extract_strided_slice %14 {offsets = [0, 16], sizes = [16, 16], strides = [1, 1]} : vector<16x64xf32> to vector<16x16xf32>
    %49 = vector.shape_cast %48 : vector<16x16xf32> to vector<2x8x16xf32>
    %50 = vector.extract_strided_slice %21 {offsets = [0, 16], sizes = [16, 16], strides = [1, 1]} : vector<16x64xf32> to vector<16x16xf32>
    %51 = vector.shape_cast %50 : vector<16x16xf32> to vector<2x8x16xf32>
    %52 = vector.extract_strided_slice %28 {offsets = [0, 16], sizes = [16, 16], strides = [1, 1]} : vector<16x64xf32> to vector<16x16xf32>
    %53 = vector.shape_cast %52 : vector<16x16xf32> to vector<2x8x16xf32>
    "tpu.trace_start"() <{level = 10 : i32, message = "bqd,bkd->bqk"}> : () -> ()
    %cst_31 = arith.constant dense<0.000000e+00> : vector<2x8x8xf32>
    %54 = tpu.matmul %49, %51, %cst_31 {dimension_numbers = #tpu.dot_dimension_numbers<[2], [2], [1], [1], [0, 0, 0, 1, 1, 1], [0], [0]>} : vector<2x8x16xf32>, vector<2x8x16xf32>, vector<2x8x8xf32> -> vector<2x8x8xf32>
    "tpu.trace_stop"() : () -> ()
    %cst_32 = arith.constant dense<0xFF800000> : vector<2x8xf32>
    %55 = vector.multi_reduction <maximumf>, %54, %cst_32 [2] : vector<2x8x8xf32> to vector<2x8xf32>
    %56 = vector.shape_cast %55 : vector<2x8xf32> to vector<2x8x1xf32>
    %57 = vector.broadcast %56 : vector<2x8x1xf32> to vector<2x8x8xf32>
    %58 = arith.subf %54, %57 : vector<2x8x8xf32>
    %59 = math.exp %58 : vector<2x8x8xf32>
    %cst_33 = arith.constant dense<0.000000e+00> : vector<2x8xf32>
    %60 = vector.multi_reduction <add>, %59, %cst_33 [2] : vector<2x8x8xf32> to vector<2x8xf32>
    %61 = vector.shape_cast %60 : vector<2x8xf32> to vector<2x8x1xf32>
    %62 = tpu.reciprocal %61 {approx = true} : vector<2x8x1xf32> -> vector<2x8x1xf32>
    %63 = vector.broadcast %62 : vector<2x8x1xf32> to vector<2x8x8xf32>
    %64 = arith.mulf %59, %63 : vector<2x8x8xf32>
    "tpu.trace_start"() <{level = 10 : i32, message = "bqk,bkd->bqd"}> : () -> ()
    %cst_34 = arith.constant dense<0.000000e+00> : vector<2x8x16xf32>
    %65 = tpu.matmul %64, %53, %cst_34 {dimension_numbers = #tpu.dot_dimension_numbers<[2], [1], [1], [2], [0, 0, 0, 1, 1, 2], [0], [0]>} : vector<2x8x8xf32>, vector<2x8x16xf32>, vector<2x8x16xf32> -> vector<2x8x16xf32>
    "tpu.trace_stop"() : () -> ()
    %66 = vector.shape_cast %65 : vector<2x8x16xf32> to vector<16x16xf32>
    %67 = vector.extract_strided_slice %14 {offsets = [0, 32], sizes = [16, 16], strides = [1, 1]} : vector<16x64xf32> to vector<16x16xf32>
    %68 = vector.shape_cast %67 : vector<16x16xf32> to vector<2x8x16xf32>
    %69 = vector.extract_strided_slice %21 {offsets = [0, 32], sizes = [16, 16], strides = [1, 1]} : vector<16x64xf32> to vector<16x16xf32>
    %70 = vector.shape_cast %69 : vector<16x16xf32> to vector<2x8x16xf32>
    %71 = vector.extract_strided_slice %28 {offsets = [0, 32], sizes = [16, 16], strides = [1, 1]} : vector<16x64xf32> to vector<16x16xf32>
    %72 = vector.shape_cast %71 : vector<16x16xf32> to vector<2x8x16xf32>
    "tpu.trace_start"() <{level = 10 : i32, message = "bqd,bkd->bqk"}> : () -> ()
    %cst_35 = arith.constant dense<0.000000e+00> : vector<2x8x8xf32>
    %73 = tpu.matmul %68, %70, %cst_35 {dimension_numbers = #tpu.dot_dimension_numbers<[2], [2], [1], [1], [0, 0, 0, 1, 1, 1], [0], [0]>} : vector<2x8x16xf32>, vector<2x8x16xf32>, vector<2x8x8xf32> -> vector<2x8x8xf32>
    "tpu.trace_stop"() : () -> ()
    %cst_36 = arith.constant dense<0xFF800000> : vector<2x8xf32>
    %74 = vector.multi_reduction <maximumf>, %73, %cst_36 [2] : vector<2x8x8xf32> to vector<2x8xf32>
    %75 = vector.shape_cast %74 : vector<2x8xf32> to vector<2x8x1xf32>
    %76 = vector.broadcast %75 : vector<2x8x1xf32> to vector<2x8x8xf32>
    %77 = arith.subf %73, %76 : vector<2x8x8xf32>
    %78 = math.exp %77 : vector<2x8x8xf32>
    %cst_37 = arith.constant dense<0.000000e+00> : vector<2x8xf32>
    %79 = vector.multi_reduction <add>, %78, %cst_37 [2] : vector<2x8x8xf32> to vector<2x8xf32>
    %80 = vector.shape_cast %79 : vector<2x8xf32> to vector<2x8x1xf32>
    %81 = tpu.reciprocal %80 {approx = true} : vector<2x8x1xf32> -> vector<2x8x1xf32>
    %82 = vector.broadcast %81 : vector<2x8x1xf32> to vector<2x8x8xf32>
    %83 = arith.mulf %78, %82 : vector<2x8x8xf32>
    "tpu.trace_start"() <{level = 10 : i32, message = "bqk,bkd->bqd"}> : () -> ()
    %cst_38 = arith.constant dense<0.000000e+00> : vector<2x8x16xf32>
    %84 = tpu.matmul %83, %72, %cst_38 {dimension_numbers = #tpu.dot_dimension_numbers<[2], [1], [1], [2], [0, 0, 0, 1, 1, 2], [0], [0]>} : vector<2x8x8xf32>, vector<2x8x16xf32>, vector<2x8x16xf32> -> vector<2x8x16xf32>
    "tpu.trace_stop"() : () -> ()
    %85 = vector.shape_cast %84 : vector<2x8x16xf32> to vector<16x16xf32>
    %86 = vector.extract_strided_slice %14 {offsets = [0, 48], sizes = [16, 16], strides = [1, 1]} : vector<16x64xf32> to vector<16x16xf32>
    %87 = vector.shape_cast %86 : vector<16x16xf32> to vector<2x8x16xf32>
    %88 = vector.extract_strided_slice %21 {offsets = [0, 48], sizes = [16, 16], strides = [1, 1]} : vector<16x64xf32> to vector<16x16xf32>
    %89 = vector.shape_cast %88 : vector<16x16xf32> to vector<2x8x16xf32>
    %90 = vector.extract_strided_slice %28 {offsets = [0, 48], sizes = [16, 16], strides = [1, 1]} : vector<16x64xf32> to vector<16x16xf32>
    %91 = vector.shape_cast %90 : vector<16x16xf32> to vector<2x8x16xf32>
    "tpu.trace_start"() <{level = 10 : i32, message = "bqd,bkd->bqk"}> : () -> ()
    %cst_39 = arith.constant dense<0.000000e+00> : vector<2x8x8xf32>
    %92 = tpu.matmul %87, %89, %cst_39 {dimension_numbers = #tpu.dot_dimension_numbers<[2], [2], [1], [1], [0, 0, 0, 1, 1, 1], [0], [0]>} : vector<2x8x16xf32>, vector<2x8x16xf32>, vector<2x8x8xf32> -> vector<2x8x8xf32>
    "tpu.trace_stop"() : () -> ()
    %cst_40 = arith.constant dense<0xFF800000> : vector<2x8xf32>
    %93 = vector.multi_reduction <maximumf>, %92, %cst_40 [2] : vector<2x8x8xf32> to vector<2x8xf32>
    %94 = vector.shape_cast %93 : vector<2x8xf32> to vector<2x8x1xf32>
    %95 = vector.broadcast %94 : vector<2x8x1xf32> to vector<2x8x8xf32>
    %96 = arith.subf %92, %95 : vector<2x8x8xf32>
    %97 = math.exp %96 : vector<2x8x8xf32>
    %cst_41 = arith.constant dense<0.000000e+00> : vector<2x8xf32>
    %98 = vector.multi_reduction <add>, %97, %cst_41 [2] : vector<2x8x8xf32> to vector<2x8xf32>
    %99 = vector.shape_cast %98 : vector<2x8xf32> to vector<2x8x1xf32>
    %100 = tpu.reciprocal %99 {approx = true} : vector<2x8x1xf32> -> vector<2x8x1xf32>
    %101 = vector.broadcast %100 : vector<2x8x1xf32> to vector<2x8x8xf32>
    %102 = arith.mulf %97, %101 : vector<2x8x8xf32>
    "tpu.trace_start"() <{level = 10 : i32, message = "bqk,bkd->bqd"}> : () -> ()
    %cst_42 = arith.constant dense<0.000000e+00> : vector<2x8x16xf32>
    %103 = tpu.matmul %102, %91, %cst_42 {dimension_numbers = #tpu.dot_dimension_numbers<[2], [1], [1], [2], [0, 0, 0, 1, 1, 2], [0], [0]>} : vector<2x8x8xf32>, vector<2x8x16xf32>, vector<2x8x16xf32> -> vector<2x8x16xf32>
    "tpu.trace_stop"() : () -> ()
    %104 = vector.shape_cast %103 : vector<2x8x16xf32> to vector<16x16xf32>
    %105 = tpu.concatenate %47, %66, %85, %104 in 1 : vector<16x16xf32>, vector<16x16xf32>, vector<16x16xf32>, vector<16x16xf32> -> vector<16x64xf32>
    %106 = arith.truncf %105 : vector<16x64xf32> to vector<16x64xbf16>
    %c0_43 = arith.constant 0 : index
    %c0_44 = arith.constant 0 : index
    %c0_45 = arith.constant 0 : index
    %107 = vector.load %arg10[%c0_43, %c0_44, %c0_45] : memref<2x64x64xbf16, #tpu.memory_space<vmem>>, vector<1x64x64xbf16>
    %108 = vector.shape_cast %107 : vector<1x64x64xbf16> to vector<64x64xbf16>
    %cst_46 = arith.constant dense<0.000000e+00> : vector<16x64xf32>
    %109 = tpu.matmul %106, %108, %cst_46 {dimension_numbers = #tpu.dot_dimension_numbers<[1], [0], [0], [1], [0, 0, 1, 1], [], []>} : vector<16x64xbf16>, vector<64x64xbf16>, vector<16x64xf32> -> vector<16x64xf32>
    %c0_47 = arith.constant 0 : index
    %c0_48 = arith.constant 0 : index
    %c0_49 = arith.constant 0 : index
    %110 = vector.load %arg11[%c0_47, %c0_48, %c0_49] : memref<2x1x64xf32, #tpu.memory_space<vmem>>, vector<1x1x64xf32>
    %111 = vector.shape_cast %110 : vector<1x1x64xf32> to vector<1x64xf32>
    %112 = vector.broadcast %111 : vector<1x64xf32> to vector<16x64xf32>
    %113 = arith.addf %109, %112 : vector<16x64xf32>
    %114 = arith.addf %6, %113 : vector<16x64xf32>
    %c0_50 = arith.constant 0 : index
    %c0_51 = arith.constant 0 : index
    %c0_52 = arith.constant 0 : index
    %115 = vector.load %arg12[%c0_50, %c0_51, %c0_52] : memref<2x1x64xf32, #tpu.memory_space<vmem>>, vector<1x1x64xf32>
    %116 = vector.shape_cast %115 : vector<1x1x64xf32> to vector<1x64xf32>
    %c0_53 = arith.constant 0 : index
    %c0_54 = arith.constant 0 : index
    %c0_55 = arith.constant 0 : index
    %117 = vector.load %arg13[%c0_53, %c0_54, %c0_55] : memref<2x1x64xf32, #tpu.memory_space<vmem>>, vector<1x1x64xf32>
    %118 = vector.shape_cast %117 : vector<1x1x64xf32> to vector<1x64xf32>
    %cst_56 = arith.constant dense<0.000000e+00> : vector<16xf32>
    %119 = vector.multi_reduction <add>, %114, %cst_56 [1] : vector<16x64xf32> to vector<16xf32>
    %120 = vector.shape_cast %119 : vector<16xf32> to vector<16x1xf32>
    %cst_57 = arith.constant 6.400000e+01 : f32
    %121 = vector.broadcast %cst_57 : f32 to vector<16x1xf32>
    %122 = arith.divf %120, %121 : vector<16x1xf32>
    %123 = vector.broadcast %122 : vector<16x1xf32> to vector<16x64xf32>
    %124 = arith.subf %114, %123 : vector<16x64xf32>
    %125 = arith.mulf %124, %124 : vector<16x64xf32>
    %cst_58 = arith.constant dense<0.000000e+00> : vector<16xf32>
    %126 = vector.multi_reduction <add>, %125, %cst_58 [1] : vector<16x64xf32> to vector<16xf32>
    %127 = vector.shape_cast %126 : vector<16xf32> to vector<16x1xf32>
    %cst_59 = arith.constant 6.400000e+01 : f32
    %128 = vector.broadcast %cst_59 : f32 to vector<16x1xf32>
    %129 = arith.divf %127, %128 : vector<16x1xf32>
    %130 = vector.broadcast %122 : vector<16x1xf32> to vector<16x64xf32>
    %131 = arith.subf %114, %130 : vector<16x64xf32>
    %cst_60 = arith.constant 9.99999974E-6 : f32
    %132 = vector.broadcast %cst_60 : f32 to vector<16x1xf32>
    %133 = arith.addf %129, %132 : vector<16x1xf32>
    %134 = math.rsqrt %133 : vector<16x1xf32>
    %135 = vector.broadcast %134 : vector<16x1xf32> to vector<16x64xf32>
    %136 = arith.mulf %131, %135 : vector<16x64xf32>
    %137 = vector.broadcast %116 : vector<1x64xf32> to vector<16x64xf32>
    %138 = arith.mulf %136, %137 : vector<16x64xf32>
    %139 = vector.broadcast %118 : vector<1x64xf32> to vector<16x64xf32>
    %140 = arith.addf %138, %139 : vector<16x64xf32>
    %141 = arith.truncf %140 : vector<16x64xf32> to vector<16x64xbf16>
    %cst_61 = arith.constant 0.000000e+00 : f32
    %142 = vector.broadcast %cst_61 : f32 to vector<16x64xf32>
    %c0_62 = arith.constant 0 : index
    %c0_63 = arith.constant 0 : index
    %c0_64 = arith.constant 0 : index
    %c0_65 = arith.constant 0 : index
    %143 = vector.load %arg16[%c0_62, %c0_63, %c0_64, %c0_65] : memref<2x4x64x512xbf16, #tpu.memory_space<vmem>>, vector<1x1x64x512xbf16>
    %144 = vector.shape_cast %143 : vector<1x1x64x512xbf16> to vector<64x512xbf16>
    %cst_66 = arith.constant dense<0.000000e+00> : vector<16x512xf32>
    %145 = tpu.matmul %141, %144, %cst_66 {dimension_numbers = #tpu.dot_dimension_numbers<[1], [0], [0], [1], [0, 0, 1, 1], [], []>} : vector<16x64xbf16>, vector<64x512xbf16>, vector<16x512xf32> -> vector<16x512xf32>
    %c0_67 = arith.constant 0 : index
    %c0_68 = arith.constant 0 : index
    %c0_69 = arith.constant 0 : index
    %c0_70 = arith.constant 0 : index
    %146 = vector.load %arg17[%c0_67, %c0_68, %c0_69, %c0_70] : memref<2x4x1x512xf32, #tpu.memory_space<vmem>>, vector<1x1x1x512xf32>
    %147 = vector.shape_cast %146 : vector<1x1x1x512xf32> to vector<1x512xf32>
    %148 = vector.broadcast %147 : vector<1x512xf32> to vector<16x512xf32>
    %149 = arith.addf %145, %148 : vector<16x512xf32>
    %cst_71 = arith.constant 0.000000e+00 : f32
    %150 = vector.broadcast %cst_71 : f32 to vector<16x512xf32>
    %151 = arith.maximumf %149, %150 : vector<16x512xf32>
    %152 = arith.truncf %151 : vector<16x512xf32> to vector<16x512xbf16>
    %c0_72 = arith.constant 0 : index
    %c0_73 = arith.constant 0 : index
    %c0_74 = arith.constant 0 : index
    %c0_75 = arith.constant 0 : index
    %153 = vector.load %arg18[%c0_72, %c0_73, %c0_74, %c0_75] : memref<2x4x512x64xbf16, #tpu.memory_space<vmem>>, vector<1x1x512x64xbf16>
    %154 = vector.shape_cast %153 : vector<1x1x512x64xbf16> to vector<512x64xbf16>
    %cst_76 = arith.constant dense<0.000000e+00> : vector<16x64xf32>
    %155 = tpu.matmul %152, %154, %cst_76 {dimension_numbers = #tpu.dot_dimension_numbers<[1], [0], [0], [1], [0, 0, 1, 1], [], []>} : vector<16x512xbf16>, vector<512x64xbf16>, vector<16x64xf32> -> vector<16x64xf32>
    %156 = arith.addf %142, %155 : vector<16x64xf32>
    %c0_77 = arith.constant 0 : index
    %c1 = arith.constant 1 : index
    %c0_78 = arith.constant 0 : index
    %c0_79 = arith.constant 0 : index
    %157 = vector.load %arg16[%c0_77, %c1, %c0_78, %c0_79] : memref<2x4x64x512xbf16, #tpu.memory_space<vmem>>, vector<1x1x64x512xbf16>
    %158 = vector.shape_cast %157 : vector<1x1x64x512xbf16> to vector<64x512xbf16>
    %cst_80 = arith.constant dense<0.000000e+00> : vector<16x512xf32>
    %159 = tpu.matmul %141, %158, %cst_80 {dimension_numbers = #tpu.dot_dimension_numbers<[1], [0], [0], [1], [0, 0, 1, 1], [], []>} : vector<16x64xbf16>, vector<64x512xbf16>, vector<16x512xf32> -> vector<16x512xf32>
    %c0_81 = arith.constant 0 : index
    %c1_82 = arith.constant 1 : index
    %c0_83 = arith.constant 0 : index
    %c0_84 = arith.constant 0 : index
    %160 = vector.load %arg17[%c0_81, %c1_82, %c0_83, %c0_84] : memref<2x4x1x512xf32, #tpu.memory_space<vmem>>, vector<1x1x1x512xf32>
    %161 = vector.shape_cast %160 : vector<1x1x1x512xf32> to vector<1x512xf32>
    %162 = vector.broadcast %161 : vector<1x512xf32> to vector<16x512xf32>
    %163 = arith.addf %159, %162 : vector<16x512xf32>
    %cst_85 = arith.constant 0.000000e+00 : f32
    %164 = vector.broadcast %cst_85 : f32 to vector<16x512xf32>
    %165 = arith.maximumf %163, %164 : vector<16x512xf32>
    %166 = arith.truncf %165 : vector<16x512xf32> to vector<16x512xbf16>
    %c0_86 = arith.constant 0 : index
    %c1_87 = arith.constant 1 : index
    %c0_88 = arith.constant 0 : index
    %c0_89 = arith.constant 0 : index
    %167 = vector.load %arg18[%c0_86, %c1_87, %c0_88, %c0_89] : memref<2x4x512x64xbf16, #tpu.memory_space<vmem>>, vector<1x1x512x64xbf16>
    %168 = vector.shape_cast %167 : vector<1x1x512x64xbf16> to vector<512x64xbf16>
    %cst_90 = arith.constant dense<0.000000e+00> : vector<16x64xf32>
    %169 = tpu.matmul %166, %168, %cst_90 {dimension_numbers = #tpu.dot_dimension_numbers<[1], [0], [0], [1], [0, 0, 1, 1], [], []>} : vector<16x512xbf16>, vector<512x64xbf16>, vector<16x64xf32> -> vector<16x64xf32>
    %170 = arith.addf %156, %169 : vector<16x64xf32>
    %c0_91 = arith.constant 0 : index
    %c2 = arith.constant 2 : index
    %c0_92 = arith.constant 0 : index
    %c0_93 = arith.constant 0 : index
    %171 = vector.load %arg16[%c0_91, %c2, %c0_92, %c0_93] : memref<2x4x64x512xbf16, #tpu.memory_space<vmem>>, vector<1x1x64x512xbf16>
    %172 = vector.shape_cast %171 : vector<1x1x64x512xbf16> to vector<64x512xbf16>
    %cst_94 = arith.constant dense<0.000000e+00> : vector<16x512xf32>
    %173 = tpu.matmul %141, %172, %cst_94 {dimension_numbers = #tpu.dot_dimension_numbers<[1], [0], [0], [1], [0, 0, 1, 1], [], []>} : vector<16x64xbf16>, vector<64x512xbf16>, vector<16x512xf32> -> vector<16x512xf32>
    %c0_95 = arith.constant 0 : index
    %c2_96 = arith.constant 2 : index
    %c0_97 = arith.constant 0 : index
    %c0_98 = arith.constant 0 : index
    %174 = vector.load %arg17[%c0_95, %c2_96, %c0_97, %c0_98] : memref<2x4x1x512xf32, #tpu.memory_space<vmem>>, vector<1x1x1x512xf32>
    %175 = vector.shape_cast %174 : vector<1x1x1x512xf32> to vector<1x512xf32>
    %176 = vector.broadcast %175 : vector<1x512xf32> to vector<16x512xf32>
    %177 = arith.addf %173, %176 : vector<16x512xf32>
    %cst_99 = arith.constant 0.000000e+00 : f32
    %178 = vector.broadcast %cst_99 : f32 to vector<16x512xf32>
    %179 = arith.maximumf %177, %178 : vector<16x512xf32>
    %180 = arith.truncf %179 : vector<16x512xf32> to vector<16x512xbf16>
    %c0_100 = arith.constant 0 : index
    %c2_101 = arith.constant 2 : index
    %c0_102 = arith.constant 0 : index
    %c0_103 = arith.constant 0 : index
    %181 = vector.load %arg18[%c0_100, %c2_101, %c0_102, %c0_103] : memref<2x4x512x64xbf16, #tpu.memory_space<vmem>>, vector<1x1x512x64xbf16>
    %182 = vector.shape_cast %181 : vector<1x1x512x64xbf16> to vector<512x64xbf16>
    %cst_104 = arith.constant dense<0.000000e+00> : vector<16x64xf32>
    %183 = tpu.matmul %180, %182, %cst_104 {dimension_numbers = #tpu.dot_dimension_numbers<[1], [0], [0], [1], [0, 0, 1, 1], [], []>} : vector<16x512xbf16>, vector<512x64xbf16>, vector<16x64xf32> -> vector<16x64xf32>
    %184 = arith.addf %170, %183 : vector<16x64xf32>
    %c0_105 = arith.constant 0 : index
    %c3 = arith.constant 3 : index
    %c0_106 = arith.constant 0 : index
    %c0_107 = arith.constant 0 : index
    %185 = vector.load %arg16[%c0_105, %c3, %c0_106, %c0_107] : memref<2x4x64x512xbf16, #tpu.memory_space<vmem>>, vector<1x1x64x512xbf16>
    %186 = vector.shape_cast %185 : vector<1x1x64x512xbf16> to vector<64x512xbf16>
    %cst_108 = arith.constant dense<0.000000e+00> : vector<16x512xf32>
    %187 = tpu.matmul %141, %186, %cst_108 {dimension_numbers = #tpu.dot_dimension_numbers<[1], [0], [0], [1], [0, 0, 1, 1], [], []>} : vector<16x64xbf16>, vector<64x512xbf16>, vector<16x512xf32> -> vector<16x512xf32>
    %c0_109 = arith.constant 0 : index
    %c3_110 = arith.constant 3 : index
    %c0_111 = arith.constant 0 : index
    %c0_112 = arith.constant 0 : index
    %188 = vector.load %arg17[%c0_109, %c3_110, %c0_111, %c0_112] : memref<2x4x1x512xf32, #tpu.memory_space<vmem>>, vector<1x1x1x512xf32>
    %189 = vector.shape_cast %188 : vector<1x1x1x512xf32> to vector<1x512xf32>
    %190 = vector.broadcast %189 : vector<1x512xf32> to vector<16x512xf32>
    %191 = arith.addf %187, %190 : vector<16x512xf32>
    %cst_113 = arith.constant 0.000000e+00 : f32
    %192 = vector.broadcast %cst_113 : f32 to vector<16x512xf32>
    %193 = arith.maximumf %191, %192 : vector<16x512xf32>
    %194 = arith.truncf %193 : vector<16x512xf32> to vector<16x512xbf16>
    %c0_114 = arith.constant 0 : index
    %c3_115 = arith.constant 3 : index
    %c0_116 = arith.constant 0 : index
    %c0_117 = arith.constant 0 : index
    %195 = vector.load %arg18[%c0_114, %c3_115, %c0_116, %c0_117] : memref<2x4x512x64xbf16, #tpu.memory_space<vmem>>, vector<1x1x512x64xbf16>
    %196 = vector.shape_cast %195 : vector<1x1x512x64xbf16> to vector<512x64xbf16>
    %cst_118 = arith.constant dense<0.000000e+00> : vector<16x64xf32>
    %197 = tpu.matmul %194, %196, %cst_118 {dimension_numbers = #tpu.dot_dimension_numbers<[1], [0], [0], [1], [0, 0, 1, 1], [], []>} : vector<16x512xbf16>, vector<512x64xbf16>, vector<16x64xf32> -> vector<16x64xf32>
    %198 = arith.addf %184, %197 : vector<16x64xf32>
    %c0_119 = arith.constant 0 : index
    %c0_120 = arith.constant 0 : index
    %c0_121 = arith.constant 0 : index
    %199 = vector.load %arg19[%c0_119, %c0_120, %c0_121] : memref<2x1x64xf32, #tpu.memory_space<vmem>>, vector<1x1x64xf32>
    %200 = vector.shape_cast %199 : vector<1x1x64xf32> to vector<1x64xf32>
    %201 = vector.broadcast %200 : vector<1x64xf32> to vector<16x64xf32>
    %202 = arith.addf %198, %201 : vector<16x64xf32>
    %203 = arith.addf %140, %202 : vector<16x64xf32>
    %c0_122 = arith.constant 0 : index
    %c0_123 = arith.constant 0 : index
    %c0_124 = arith.constant 0 : index
    %204 = vector.load %arg14[%c0_122, %c0_123, %c0_124] : memref<2x1x64xf32, #tpu.memory_space<vmem>>, vector<1x1x64xf32>
    %205 = vector.shape_cast %204 : vector<1x1x64xf32> to vector<1x64xf32>
    %c0_125 = arith.constant 0 : index
    %c0_126 = arith.constant 0 : index
    %c0_127 = arith.constant 0 : index
    %206 = vector.load %arg15[%c0_125, %c0_126, %c0_127] : memref<2x1x64xf32, #tpu.memory_space<vmem>>, vector<1x1x64xf32>
    %207 = vector.shape_cast %206 : vector<1x1x64xf32> to vector<1x64xf32>
    %cst_128 = arith.constant dense<0.000000e+00> : vector<16xf32>
    %208 = vector.multi_reduction <add>, %203, %cst_128 [1] : vector<16x64xf32> to vector<16xf32>
    %209 = vector.shape_cast %208 : vector<16xf32> to vector<16x1xf32>
    %cst_129 = arith.constant 6.400000e+01 : f32
    %210 = vector.broadcast %cst_129 : f32 to vector<16x1xf32>
    %211 = arith.divf %209, %210 : vector<16x1xf32>
    %212 = vector.broadcast %211 : vector<16x1xf32> to vector<16x64xf32>
    %213 = arith.subf %203, %212 : vector<16x64xf32>
    %214 = arith.mulf %213, %213 : vector<16x64xf32>
    %cst_130 = arith.constant dense<0.000000e+00> : vector<16xf32>
    %215 = vector.multi_reduction <add>, %214, %cst_130 [1] : vector<16x64xf32> to vector<16xf32>
    %216 = vector.shape_cast %215 : vector<16xf32> to vector<16x1xf32>
    %cst_131 = arith.constant 6.400000e+01 : f32
    %217 = vector.broadcast %cst_131 : f32 to vector<16x1xf32>
    %218 = arith.divf %216, %217 : vector<16x1xf32>
    %219 = vector.broadcast %211 : vector<16x1xf32> to vector<16x64xf32>
    %220 = arith.subf %203, %219 : vector<16x64xf32>
    %cst_132 = arith.constant 9.99999974E-6 : f32
    %221 = vector.broadcast %cst_132 : f32 to vector<16x1xf32>
    %222 = arith.addf %218, %221 : vector<16x1xf32>
    %223 = math.rsqrt %222 : vector<16x1xf32>
    %224 = vector.broadcast %223 : vector<16x1xf32> to vector<16x64xf32>
    %225 = arith.mulf %220, %224 : vector<16x64xf32>
    %226 = vector.broadcast %205 : vector<1x64xf32> to vector<16x64xf32>
    %227 = arith.mulf %225, %226 : vector<16x64xf32>
    %228 = vector.broadcast %207 : vector<1x64xf32> to vector<16x64xf32>
    %229 = arith.addf %227, %228 : vector<16x64xf32>
    %230 = arith.truncf %229 : vector<16x64xf32> to vector<16x64xbf16>
    %231 = vector.shape_cast %229 : vector<16x64xf32> to vector<2x8x64xf32>
    %232 = vector.extract_strided_slice %231 {offsets = [0, 7, 0], sizes = [2, 1, 64], strides = [1, 1, 1]} : vector<2x8x64xf32> to vector<2x1x64xf32>
    %233 = vector.shape_cast %232 : vector<2x1x64xf32> to vector<2x64xf32>
    %234 = arith.truncf %233 : vector<2x64xf32> to vector<2x64xbf16>
    %c1_133 = arith.constant 1 : index
    %c0_134 = arith.constant 0 : index
    %c0_135 = arith.constant 0 : index
    %235 = vector.load %arg4[%c1_133, %c0_134, %c0_135] : memref<2x64x64xbf16, #tpu.memory_space<vmem>>, vector<1x64x64xbf16>
    %236 = vector.shape_cast %235 : vector<1x64x64xbf16> to vector<64x64xbf16>
    %cst_136 = arith.constant dense<0.000000e+00> : vector<2x64xf32>
    %237 = tpu.matmul %234, %236, %cst_136 {dimension_numbers = #tpu.dot_dimension_numbers<[1], [0], [0], [1], [0, 0, 1, 1], [], []>} : vector<2x64xbf16>, vector<64x64xbf16>, vector<2x64xf32> -> vector<2x64xf32>
    %c1_137 = arith.constant 1 : index
    %c0_138 = arith.constant 0 : index
    %c0_139 = arith.constant 0 : index
    %238 = vector.load %arg5[%c1_137, %c0_138, %c0_139] : memref<2x1x64xf32, #tpu.memory_space<vmem>>, vector<1x1x64xf32>
    %239 = vector.shape_cast %238 : vector<1x1x64xf32> to vector<1x64xf32>
    %240 = vector.broadcast %239 : vector<1x64xf32> to vector<2x64xf32>
    %241 = arith.addf %237, %240 : vector<2x64xf32>
    %c1_140 = arith.constant 1 : index
    %c0_141 = arith.constant 0 : index
    %c0_142 = arith.constant 0 : index
    %242 = vector.load %arg6[%c1_140, %c0_141, %c0_142] : memref<2x64x64xbf16, #tpu.memory_space<vmem>>, vector<1x64x64xbf16>
    %243 = vector.shape_cast %242 : vector<1x64x64xbf16> to vector<64x64xbf16>
    %cst_143 = arith.constant dense<0.000000e+00> : vector<16x64xf32>
    %244 = tpu.matmul %230, %243, %cst_143 {dimension_numbers = #tpu.dot_dimension_numbers<[1], [0], [0], [1], [0, 0, 1, 1], [], []>} : vector<16x64xbf16>, vector<64x64xbf16>, vector<16x64xf32> -> vector<16x64xf32>
    %c1_144 = arith.constant 1 : index
    %c0_145 = arith.constant 0 : index
    %c0_146 = arith.constant 0 : index
    %245 = vector.load %arg7[%c1_144, %c0_145, %c0_146] : memref<2x1x64xf32, #tpu.memory_space<vmem>>, vector<1x1x64xf32>
    %246 = vector.shape_cast %245 : vector<1x1x64xf32> to vector<1x64xf32>
    %247 = vector.broadcast %246 : vector<1x64xf32> to vector<16x64xf32>
    %248 = arith.addf %244, %247 : vector<16x64xf32>
    %c1_147 = arith.constant 1 : index
    %c0_148 = arith.constant 0 : index
    %c0_149 = arith.constant 0 : index
    %249 = vector.load %arg8[%c1_147, %c0_148, %c0_149] : memref<2x64x64xbf16, #tpu.memory_space<vmem>>, vector<1x64x64xbf16>
    %250 = vector.shape_cast %249 : vector<1x64x64xbf16> to vector<64x64xbf16>
    %cst_150 = arith.constant dense<0.000000e+00> : vector<16x64xf32>
    %251 = tpu.matmul %230, %250, %cst_150 {dimension_numbers = #tpu.dot_dimension_numbers<[1], [0], [0], [1], [0, 0, 1, 1], [], []>} : vector<16x64xbf16>, vector<64x64xbf16>, vector<16x64xf32> -> vector<16x64xf32>
    %c1_151 = arith.constant 1 : index
    %c0_152 = arith.constant 0 : index
    %c0_153 = arith.constant 0 : index
    %252 = vector.load %arg9[%c1_151, %c0_152, %c0_153] : memref<2x1x64xf32, #tpu.memory_space<vmem>>, vector<1x1x64xf32>
    %253 = vector.shape_cast %252 : vector<1x1x64xf32> to vector<1x64xf32>
    %254 = vector.broadcast %253 : vector<1x64xf32> to vector<16x64xf32>
    %255 = arith.addf %251, %254 : vector<16x64xf32>
    %256 = vector.extract_strided_slice %241 {offsets = [0, 0], sizes = [2, 16], strides = [1, 1]} : vector<2x64xf32> to vector<2x16xf32>
    %257 = vector.shape_cast %256 : vector<2x16xf32> to vector<2x1x16xf32>
    %258 = vector.extract_strided_slice %248 {offsets = [0, 0], sizes = [16, 16], strides = [1, 1]} : vector<16x64xf32> to vector<16x16xf32>
    %259 = vector.shape_cast %258 : vector<16x16xf32> to vector<2x8x16xf32>
    %260 = vector.extract_strided_slice %255 {offsets = [0, 0], sizes = [16, 16], strides = [1, 1]} : vector<16x64xf32> to vector<16x16xf32>
    %261 = vector.shape_cast %260 : vector<16x16xf32> to vector<2x8x16xf32>
    "tpu.trace_start"() <{level = 10 : i32, message = "bqd,bkd->bqk"}> : () -> ()
    %cst_154 = arith.constant dense<0.000000e+00> : vector<2x1x8xf32>
    %262 = tpu.matmul %257, %259, %cst_154 {dimension_numbers = #tpu.dot_dimension_numbers<[2], [2], [1], [1], [0, 0, 0, 1, 1, 1], [0], [0]>} : vector<2x1x16xf32>, vector<2x8x16xf32>, vector<2x1x8xf32> -> vector<2x1x8xf32>
    "tpu.trace_stop"() : () -> ()
    %cst_155 = arith.constant dense<0xFF800000> : vector<2x1xf32>
    %263 = vector.multi_reduction <maximumf>, %262, %cst_155 [2] : vector<2x1x8xf32> to vector<2x1xf32>
    %264 = vector.shape_cast %263 : vector<2x1xf32> to vector<2x1x1xf32>
    %265 = vector.broadcast %264 : vector<2x1x1xf32> to vector<2x1x8xf32>
    %266 = arith.subf %262, %265 : vector<2x1x8xf32>
    %267 = math.exp %266 : vector<2x1x8xf32>
    %cst_156 = arith.constant dense<0.000000e+00> : vector<2x1xf32>
    %268 = vector.multi_reduction <add>, %267, %cst_156 [2] : vector<2x1x8xf32> to vector<2x1xf32>
    %269 = vector.shape_cast %268 : vector<2x1xf32> to vector<2x1x1xf32>
    %270 = tpu.reciprocal %269 {approx = true} : vector<2x1x1xf32> -> vector<2x1x1xf32>
    %271 = vector.broadcast %270 : vector<2x1x1xf32> to vector<2x1x8xf32>
    %272 = arith.mulf %267, %271 : vector<2x1x8xf32>
    "tpu.trace_start"() <{level = 10 : i32, message = "bqk,bkd->bqd"}> : () -> ()
    %cst_157 = arith.constant dense<0.000000e+00> : vector<2x1x16xf32>
    %273 = tpu.matmul %272, %261, %cst_157 {dimension_numbers = #tpu.dot_dimension_numbers<[2], [1], [1], [2], [0, 0, 0, 1, 1, 2], [0], [0]>} : vector<2x1x8xf32>, vector<2x8x16xf32>, vector<2x1x16xf32> -> vector<2x1x16xf32>
    "tpu.trace_stop"() : () -> ()
    %274 = vector.shape_cast %273 : vector<2x1x16xf32> to vector<2x16xf32>
    %275 = vector.extract_strided_slice %241 {offsets = [0, 16], sizes = [2, 16], strides = [1, 1]} : vector<2x64xf32> to vector<2x16xf32>
    %276 = vector.shape_cast %275 : vector<2x16xf32> to vector<2x1x16xf32>
    %277 = vector.extract_strided_slice %248 {offsets = [0, 16], sizes = [16, 16], strides = [1, 1]} : vector<16x64xf32> to vector<16x16xf32>
    %278 = vector.shape_cast %277 : vector<16x16xf32> to vector<2x8x16xf32>
    %279 = vector.extract_strided_slice %255 {offsets = [0, 16], sizes = [16, 16], strides = [1, 1]} : vector<16x64xf32> to vector<16x16xf32>
    %280 = vector.shape_cast %279 : vector<16x16xf32> to vector<2x8x16xf32>
    "tpu.trace_start"() <{level = 10 : i32, message = "bqd,bkd->bqk"}> : () -> ()
    %cst_158 = arith.constant dense<0.000000e+00> : vector<2x1x8xf32>
    %281 = tpu.matmul %276, %278, %cst_158 {dimension_numbers = #tpu.dot_dimension_numbers<[2], [2], [1], [1], [0, 0, 0, 1, 1, 1], [0], [0]>} : vector<2x1x16xf32>, vector<2x8x16xf32>, vector<2x1x8xf32> -> vector<2x1x8xf32>
    "tpu.trace_stop"() : () -> ()
    %cst_159 = arith.constant dense<0xFF800000> : vector<2x1xf32>
    %282 = vector.multi_reduction <maximumf>, %281, %cst_159 [2] : vector<2x1x8xf32> to vector<2x1xf32>
    %283 = vector.shape_cast %282 : vector<2x1xf32> to vector<2x1x1xf32>
    %284 = vector.broadcast %283 : vector<2x1x1xf32> to vector<2x1x8xf32>
    %285 = arith.subf %281, %284 : vector<2x1x8xf32>
    %286 = math.exp %285 : vector<2x1x8xf32>
    %cst_160 = arith.constant dense<0.000000e+00> : vector<2x1xf32>
    %287 = vector.multi_reduction <add>, %286, %cst_160 [2] : vector<2x1x8xf32> to vector<2x1xf32>
    %288 = vector.shape_cast %287 : vector<2x1xf32> to vector<2x1x1xf32>
    %289 = tpu.reciprocal %288 {approx = true} : vector<2x1x1xf32> -> vector<2x1x1xf32>
    %290 = vector.broadcast %289 : vector<2x1x1xf32> to vector<2x1x8xf32>
    %291 = arith.mulf %286, %290 : vector<2x1x8xf32>
    "tpu.trace_start"() <{level = 10 : i32, message = "bqk,bkd->bqd"}> : () -> ()
    %cst_161 = arith.constant dense<0.000000e+00> : vector<2x1x16xf32>
    %292 = tpu.matmul %291, %280, %cst_161 {dimension_numbers = #tpu.dot_dimension_numbers<[2], [1], [1], [2], [0, 0, 0, 1, 1, 2], [0], [0]>} : vector<2x1x8xf32>, vector<2x8x16xf32>, vector<2x1x16xf32> -> vector<2x1x16xf32>
    "tpu.trace_stop"() : () -> ()
    %293 = vector.shape_cast %292 : vector<2x1x16xf32> to vector<2x16xf32>
    %294 = vector.extract_strided_slice %241 {offsets = [0, 32], sizes = [2, 16], strides = [1, 1]} : vector<2x64xf32> to vector<2x16xf32>
    %295 = vector.shape_cast %294 : vector<2x16xf32> to vector<2x1x16xf32>
    %296 = vector.extract_strided_slice %248 {offsets = [0, 32], sizes = [16, 16], strides = [1, 1]} : vector<16x64xf32> to vector<16x16xf32>
    %297 = vector.shape_cast %296 : vector<16x16xf32> to vector<2x8x16xf32>
    %298 = vector.extract_strided_slice %255 {offsets = [0, 32], sizes = [16, 16], strides = [1, 1]} : vector<16x64xf32> to vector<16x16xf32>
    %299 = vector.shape_cast %298 : vector<16x16xf32> to vector<2x8x16xf32>
    "tpu.trace_start"() <{level = 10 : i32, message = "bqd,bkd->bqk"}> : () -> ()
    %cst_162 = arith.constant dense<0.000000e+00> : vector<2x1x8xf32>
    %300 = tpu.matmul %295, %297, %cst_162 {dimension_numbers = #tpu.dot_dimension_numbers<[2], [2], [1], [1], [0, 0, 0, 1, 1, 1], [0], [0]>} : vector<2x1x16xf32>, vector<2x8x16xf32>, vector<2x1x8xf32> -> vector<2x1x8xf32>
    "tpu.trace_stop"() : () -> ()
    %cst_163 = arith.constant dense<0xFF800000> : vector<2x1xf32>
    %301 = vector.multi_reduction <maximumf>, %300, %cst_163 [2] : vector<2x1x8xf32> to vector<2x1xf32>
    %302 = vector.shape_cast %301 : vector<2x1xf32> to vector<2x1x1xf32>
    %303 = vector.broadcast %302 : vector<2x1x1xf32> to vector<2x1x8xf32>
    %304 = arith.subf %300, %303 : vector<2x1x8xf32>
    %305 = math.exp %304 : vector<2x1x8xf32>
    %cst_164 = arith.constant dense<0.000000e+00> : vector<2x1xf32>
    %306 = vector.multi_reduction <add>, %305, %cst_164 [2] : vector<2x1x8xf32> to vector<2x1xf32>
    %307 = vector.shape_cast %306 : vector<2x1xf32> to vector<2x1x1xf32>
    %308 = tpu.reciprocal %307 {approx = true} : vector<2x1x1xf32> -> vector<2x1x1xf32>
    %309 = vector.broadcast %308 : vector<2x1x1xf32> to vector<2x1x8xf32>
    %310 = arith.mulf %305, %309 : vector<2x1x8xf32>
    "tpu.trace_start"() <{level = 10 : i32, message = "bqk,bkd->bqd"}> : () -> ()
    %cst_165 = arith.constant dense<0.000000e+00> : vector<2x1x16xf32>
    %311 = tpu.matmul %310, %299, %cst_165 {dimension_numbers = #tpu.dot_dimension_numbers<[2], [1], [1], [2], [0, 0, 0, 1, 1, 2], [0], [0]>} : vector<2x1x8xf32>, vector<2x8x16xf32>, vector<2x1x16xf32> -> vector<2x1x16xf32>
    "tpu.trace_stop"() : () -> ()
    %312 = vector.shape_cast %311 : vector<2x1x16xf32> to vector<2x16xf32>
    %313 = vector.extract_strided_slice %241 {offsets = [0, 48], sizes = [2, 16], strides = [1, 1]} : vector<2x64xf32> to vector<2x16xf32>
    %314 = vector.shape_cast %313 : vector<2x16xf32> to vector<2x1x16xf32>
    %315 = vector.extract_strided_slice %248 {offsets = [0, 48], sizes = [16, 16], strides = [1, 1]} : vector<16x64xf32> to vector<16x16xf32>
    %316 = vector.shape_cast %315 : vector<16x16xf32> to vector<2x8x16xf32>
    %317 = vector.extract_strided_slice %255 {offsets = [0, 48], sizes = [16, 16], strides = [1, 1]} : vector<16x64xf32> to vector<16x16xf32>
    %318 = vector.shape_cast %317 : vector<16x16xf32> to vector<2x8x16xf32>
    "tpu.trace_start"() <{level = 10 : i32, message = "bqd,bkd->bqk"}> : () -> ()
    %cst_166 = arith.constant dense<0.000000e+00> : vector<2x1x8xf32>
    %319 = tpu.matmul %314, %316, %cst_166 {dimension_numbers = #tpu.dot_dimension_numbers<[2], [2], [1], [1], [0, 0, 0, 1, 1, 1], [0], [0]>} : vector<2x1x16xf32>, vector<2x8x16xf32>, vector<2x1x8xf32> -> vector<2x1x8xf32>
    "tpu.trace_stop"() : () -> ()
    %cst_167 = arith.constant dense<0xFF800000> : vector<2x1xf32>
    %320 = vector.multi_reduction <maximumf>, %319, %cst_167 [2] : vector<2x1x8xf32> to vector<2x1xf32>
    %321 = vector.shape_cast %320 : vector<2x1xf32> to vector<2x1x1xf32>
    %322 = vector.broadcast %321 : vector<2x1x1xf32> to vector<2x1x8xf32>
    %323 = arith.subf %319, %322 : vector<2x1x8xf32>
    %324 = math.exp %323 : vector<2x1x8xf32>
    %cst_168 = arith.constant dense<0.000000e+00> : vector<2x1xf32>
    %325 = vector.multi_reduction <add>, %324, %cst_168 [2] : vector<2x1x8xf32> to vector<2x1xf32>
    %326 = vector.shape_cast %325 : vector<2x1xf32> to vector<2x1x1xf32>
    %327 = tpu.reciprocal %326 {approx = true} : vector<2x1x1xf32> -> vector<2x1x1xf32>
    %328 = vector.broadcast %327 : vector<2x1x1xf32> to vector<2x1x8xf32>
    %329 = arith.mulf %324, %328 : vector<2x1x8xf32>
    "tpu.trace_start"() <{level = 10 : i32, message = "bqk,bkd->bqd"}> : () -> ()
    %cst_169 = arith.constant dense<0.000000e+00> : vector<2x1x16xf32>
    %330 = tpu.matmul %329, %318, %cst_169 {dimension_numbers = #tpu.dot_dimension_numbers<[2], [1], [1], [2], [0, 0, 0, 1, 1, 2], [0], [0]>} : vector<2x1x8xf32>, vector<2x8x16xf32>, vector<2x1x16xf32> -> vector<2x1x16xf32>
    "tpu.trace_stop"() : () -> ()
    %331 = vector.shape_cast %330 : vector<2x1x16xf32> to vector<2x16xf32>
    %332 = tpu.concatenate %274, %293, %312, %331 in 1 : vector<2x16xf32>, vector<2x16xf32>, vector<2x16xf32>, vector<2x16xf32> -> vector<2x64xf32>
    %333 = arith.truncf %332 : vector<2x64xf32> to vector<2x64xbf16>
    %c1_170 = arith.constant 1 : index
    %c0_171 = arith.constant 0 : index
    %c0_172 = arith.constant 0 : index
    %334 = vector.load %arg10[%c1_170, %c0_171, %c0_172] : memref<2x64x64xbf16, #tpu.memory_space<vmem>>, vector<1x64x64xbf16>
    %335 = vector.shape_cast %334 : vector<1x64x64xbf16> to vector<64x64xbf16>
    %cst_173 = arith.constant dense<0.000000e+00> : vector<2x64xf32>
    %336 = tpu.matmul %333, %335, %cst_173 {dimension_numbers = #tpu.dot_dimension_numbers<[1], [0], [0], [1], [0, 0, 1, 1], [], []>} : vector<2x64xbf16>, vector<64x64xbf16>, vector<2x64xf32> -> vector<2x64xf32>
    %c1_174 = arith.constant 1 : index
    %c0_175 = arith.constant 0 : index
    %c0_176 = arith.constant 0 : index
    %337 = vector.load %arg11[%c1_174, %c0_175, %c0_176] : memref<2x1x64xf32, #tpu.memory_space<vmem>>, vector<1x1x64xf32>
    %338 = vector.shape_cast %337 : vector<1x1x64xf32> to vector<1x64xf32>
    %339 = vector.broadcast %338 : vector<1x64xf32> to vector<2x64xf32>
    %340 = arith.addf %336, %339 : vector<2x64xf32>
    %341 = arith.addf %233, %340 : vector<2x64xf32>
    %c1_177 = arith.constant 1 : index
    %c0_178 = arith.constant 0 : index
    %c0_179 = arith.constant 0 : index
    %342 = vector.load %arg12[%c1_177, %c0_178, %c0_179] : memref<2x1x64xf32, #tpu.memory_space<vmem>>, vector<1x1x64xf32>
    %343 = vector.shape_cast %342 : vector<1x1x64xf32> to vector<1x64xf32>
    %c1_180 = arith.constant 1 : index
    %c0_181 = arith.constant 0 : index
    %c0_182 = arith.constant 0 : index
    %344 = vector.load %arg13[%c1_180, %c0_181, %c0_182] : memref<2x1x64xf32, #tpu.memory_space<vmem>>, vector<1x1x64xf32>
    %345 = vector.shape_cast %344 : vector<1x1x64xf32> to vector<1x64xf32>
    %cst_183 = arith.constant dense<0.000000e+00> : vector<2xf32>
    %346 = vector.multi_reduction <add>, %341, %cst_183 [1] : vector<2x64xf32> to vector<2xf32>
    %347 = vector.shape_cast %346 : vector<2xf32> to vector<2x1xf32>
    %cst_184 = arith.constant 6.400000e+01 : f32
    %348 = vector.broadcast %cst_184 : f32 to vector<2x1xf32>
    %349 = arith.divf %347, %348 : vector<2x1xf32>
    %350 = vector.broadcast %349 : vector<2x1xf32> to vector<2x64xf32>
    %351 = arith.subf %341, %350 : vector<2x64xf32>
    %352 = arith.mulf %351, %351 : vector<2x64xf32>
    %cst_185 = arith.constant dense<0.000000e+00> : vector<2xf32>
    %353 = vector.multi_reduction <add>, %352, %cst_185 [1] : vector<2x64xf32> to vector<2xf32>
    %354 = vector.shape_cast %353 : vector<2xf32> to vector<2x1xf32>
    %cst_186 = arith.constant 6.400000e+01 : f32
    %355 = vector.broadcast %cst_186 : f32 to vector<2x1xf32>
    %356 = arith.divf %354, %355 : vector<2x1xf32>
    %357 = vector.broadcast %349 : vector<2x1xf32> to vector<2x64xf32>
    %358 = arith.subf %341, %357 : vector<2x64xf32>
    %cst_187 = arith.constant 9.99999974E-6 : f32
    %359 = vector.broadcast %cst_187 : f32 to vector<2x1xf32>
    %360 = arith.addf %356, %359 : vector<2x1xf32>
    %361 = math.rsqrt %360 : vector<2x1xf32>
    %362 = vector.broadcast %361 : vector<2x1xf32> to vector<2x64xf32>
    %363 = arith.mulf %358, %362 : vector<2x64xf32>
    %364 = vector.broadcast %343 : vector<1x64xf32> to vector<2x64xf32>
    %365 = arith.mulf %363, %364 : vector<2x64xf32>
    %366 = vector.broadcast %345 : vector<1x64xf32> to vector<2x64xf32>
    %367 = arith.addf %365, %366 : vector<2x64xf32>
    %368 = arith.truncf %367 : vector<2x64xf32> to vector<2x64xbf16>
    %cst_188 = arith.constant 0.000000e+00 : f32
    %369 = vector.broadcast %cst_188 : f32 to vector<2x64xf32>
    %c1_189 = arith.constant 1 : index
    %c0_190 = arith.constant 0 : index
    %c0_191 = arith.constant 0 : index
    %c0_192 = arith.constant 0 : index
    %370 = vector.load %arg16[%c1_189, %c0_190, %c0_191, %c0_192] : memref<2x4x64x512xbf16, #tpu.memory_space<vmem>>, vector<1x1x64x512xbf16>
    %371 = vector.shape_cast %370 : vector<1x1x64x512xbf16> to vector<64x512xbf16>
    %cst_193 = arith.constant dense<0.000000e+00> : vector<2x512xf32>
    %372 = tpu.matmul %368, %371, %cst_193 {dimension_numbers = #tpu.dot_dimension_numbers<[1], [0], [0], [1], [0, 0, 1, 1], [], []>} : vector<2x64xbf16>, vector<64x512xbf16>, vector<2x512xf32> -> vector<2x512xf32>
    %c1_194 = arith.constant 1 : index
    %c0_195 = arith.constant 0 : index
    %c0_196 = arith.constant 0 : index
    %c0_197 = arith.constant 0 : index
    %373 = vector.load %arg17[%c1_194, %c0_195, %c0_196, %c0_197] : memref<2x4x1x512xf32, #tpu.memory_space<vmem>>, vector<1x1x1x512xf32>
    %374 = vector.shape_cast %373 : vector<1x1x1x512xf32> to vector<1x512xf32>
    %375 = vector.broadcast %374 : vector<1x512xf32> to vector<2x512xf32>
    %376 = arith.addf %372, %375 : vector<2x512xf32>
    %cst_198 = arith.constant 0.000000e+00 : f32
    %377 = vector.broadcast %cst_198 : f32 to vector<2x512xf32>
    %378 = arith.maximumf %376, %377 : vector<2x512xf32>
    %379 = arith.truncf %378 : vector<2x512xf32> to vector<2x512xbf16>
    %c1_199 = arith.constant 1 : index
    %c0_200 = arith.constant 0 : index
    %c0_201 = arith.constant 0 : index
    %c0_202 = arith.constant 0 : index
    %380 = vector.load %arg18[%c1_199, %c0_200, %c0_201, %c0_202] : memref<2x4x512x64xbf16, #tpu.memory_space<vmem>>, vector<1x1x512x64xbf16>
    %381 = vector.shape_cast %380 : vector<1x1x512x64xbf16> to vector<512x64xbf16>
    %cst_203 = arith.constant dense<0.000000e+00> : vector<2x64xf32>
    %382 = tpu.matmul %379, %381, %cst_203 {dimension_numbers = #tpu.dot_dimension_numbers<[1], [0], [0], [1], [0, 0, 1, 1], [], []>} : vector<2x512xbf16>, vector<512x64xbf16>, vector<2x64xf32> -> vector<2x64xf32>
    %383 = arith.addf %369, %382 : vector<2x64xf32>
    %c1_204 = arith.constant 1 : index
    %c1_205 = arith.constant 1 : index
    %c0_206 = arith.constant 0 : index
    %c0_207 = arith.constant 0 : index
    %384 = vector.load %arg16[%c1_204, %c1_205, %c0_206, %c0_207] : memref<2x4x64x512xbf16, #tpu.memory_space<vmem>>, vector<1x1x64x512xbf16>
    %385 = vector.shape_cast %384 : vector<1x1x64x512xbf16> to vector<64x512xbf16>
    %cst_208 = arith.constant dense<0.000000e+00> : vector<2x512xf32>
    %386 = tpu.matmul %368, %385, %cst_208 {dimension_numbers = #tpu.dot_dimension_numbers<[1], [0], [0], [1], [0, 0, 1, 1], [], []>} : vector<2x64xbf16>, vector<64x512xbf16>, vector<2x512xf32> -> vector<2x512xf32>
    %c1_209 = arith.constant 1 : index
    %c1_210 = arith.constant 1 : index
    %c0_211 = arith.constant 0 : index
    %c0_212 = arith.constant 0 : index
    %387 = vector.load %arg17[%c1_209, %c1_210, %c0_211, %c0_212] : memref<2x4x1x512xf32, #tpu.memory_space<vmem>>, vector<1x1x1x512xf32>
    %388 = vector.shape_cast %387 : vector<1x1x1x512xf32> to vector<1x512xf32>
    %389 = vector.broadcast %388 : vector<1x512xf32> to vector<2x512xf32>
    %390 = arith.addf %386, %389 : vector<2x512xf32>
    %cst_213 = arith.constant 0.000000e+00 : f32
    %391 = vector.broadcast %cst_213 : f32 to vector<2x512xf32>
    %392 = arith.maximumf %390, %391 : vector<2x512xf32>
    %393 = arith.truncf %392 : vector<2x512xf32> to vector<2x512xbf16>
    %c1_214 = arith.constant 1 : index
    %c1_215 = arith.constant 1 : index
    %c0_216 = arith.constant 0 : index
    %c0_217 = arith.constant 0 : index
    %394 = vector.load %arg18[%c1_214, %c1_215, %c0_216, %c0_217] : memref<2x4x512x64xbf16, #tpu.memory_space<vmem>>, vector<1x1x512x64xbf16>
    %395 = vector.shape_cast %394 : vector<1x1x512x64xbf16> to vector<512x64xbf16>
    %cst_218 = arith.constant dense<0.000000e+00> : vector<2x64xf32>
    %396 = tpu.matmul %393, %395, %cst_218 {dimension_numbers = #tpu.dot_dimension_numbers<[1], [0], [0], [1], [0, 0, 1, 1], [], []>} : vector<2x512xbf16>, vector<512x64xbf16>, vector<2x64xf32> -> vector<2x64xf32>
    %397 = arith.addf %383, %396 : vector<2x64xf32>
    %c1_219 = arith.constant 1 : index
    %c2_220 = arith.constant 2 : index
    %c0_221 = arith.constant 0 : index
    %c0_222 = arith.constant 0 : index
    %398 = vector.load %arg16[%c1_219, %c2_220, %c0_221, %c0_222] : memref<2x4x64x512xbf16, #tpu.memory_space<vmem>>, vector<1x1x64x512xbf16>
    %399 = vector.shape_cast %398 : vector<1x1x64x512xbf16> to vector<64x512xbf16>
    %cst_223 = arith.constant dense<0.000000e+00> : vector<2x512xf32>
    %400 = tpu.matmul %368, %399, %cst_223 {dimension_numbers = #tpu.dot_dimension_numbers<[1], [0], [0], [1], [0, 0, 1, 1], [], []>} : vector<2x64xbf16>, vector<64x512xbf16>, vector<2x512xf32> -> vector<2x512xf32>
    %c1_224 = arith.constant 1 : index
    %c2_225 = arith.constant 2 : index
    %c0_226 = arith.constant 0 : index
    %c0_227 = arith.constant 0 : index
    %401 = vector.load %arg17[%c1_224, %c2_225, %c0_226, %c0_227] : memref<2x4x1x512xf32, #tpu.memory_space<vmem>>, vector<1x1x1x512xf32>
    %402 = vector.shape_cast %401 : vector<1x1x1x512xf32> to vector<1x512xf32>
    %403 = vector.broadcast %402 : vector<1x512xf32> to vector<2x512xf32>
    %404 = arith.addf %400, %403 : vector<2x512xf32>
    %cst_228 = arith.constant 0.000000e+00 : f32
    %405 = vector.broadcast %cst_228 : f32 to vector<2x512xf32>
    %406 = arith.maximumf %404, %405 : vector<2x512xf32>
    %407 = arith.truncf %406 : vector<2x512xf32> to vector<2x512xbf16>
    %c1_229 = arith.constant 1 : index
    %c2_230 = arith.constant 2 : index
    %c0_231 = arith.constant 0 : index
    %c0_232 = arith.constant 0 : index
    %408 = vector.load %arg18[%c1_229, %c2_230, %c0_231, %c0_232] : memref<2x4x512x64xbf16, #tpu.memory_space<vmem>>, vector<1x1x512x64xbf16>
    %409 = vector.shape_cast %408 : vector<1x1x512x64xbf16> to vector<512x64xbf16>
    %cst_233 = arith.constant dense<0.000000e+00> : vector<2x64xf32>
    %410 = tpu.matmul %407, %409, %cst_233 {dimension_numbers = #tpu.dot_dimension_numbers<[1], [0], [0], [1], [0, 0, 1, 1], [], []>} : vector<2x512xbf16>, vector<512x64xbf16>, vector<2x64xf32> -> vector<2x64xf32>
    %411 = arith.addf %397, %410 : vector<2x64xf32>
    %c1_234 = arith.constant 1 : index
    %c3_235 = arith.constant 3 : index
    %c0_236 = arith.constant 0 : index
    %c0_237 = arith.constant 0 : index
    %412 = vector.load %arg16[%c1_234, %c3_235, %c0_236, %c0_237] : memref<2x4x64x512xbf16, #tpu.memory_space<vmem>>, vector<1x1x64x512xbf16>
    %413 = vector.shape_cast %412 : vector<1x1x64x512xbf16> to vector<64x512xbf16>
    %cst_238 = arith.constant dense<0.000000e+00> : vector<2x512xf32>
    %414 = tpu.matmul %368, %413, %cst_238 {dimension_numbers = #tpu.dot_dimension_numbers<[1], [0], [0], [1], [0, 0, 1, 1], [], []>} : vector<2x64xbf16>, vector<64x512xbf16>, vector<2x512xf32> -> vector<2x512xf32>
    %c1_239 = arith.constant 1 : index
    %c3_240 = arith.constant 3 : index
    %c0_241 = arith.constant 0 : index
    %c0_242 = arith.constant 0 : index
    %415 = vector.load %arg17[%c1_239, %c3_240, %c0_241, %c0_242] : memref<2x4x1x512xf32, #tpu.memory_space<vmem>>, vector<1x1x1x512xf32>
    %416 = vector.shape_cast %415 : vector<1x1x1x512xf32> to vector<1x512xf32>
    %417 = vector.broadcast %416 : vector<1x512xf32> to vector<2x512xf32>
    %418 = arith.addf %414, %417 : vector<2x512xf32>
    %cst_243 = arith.constant 0.000000e+00 : f32
    %419 = vector.broadcast %cst_243 : f32 to vector<2x512xf32>
    %420 = arith.maximumf %418, %419 : vector<2x512xf32>
    %421 = arith.truncf %420 : vector<2x512xf32> to vector<2x512xbf16>
    %c1_244 = arith.constant 1 : index
    %c3_245 = arith.constant 3 : index
    %c0_246 = arith.constant 0 : index
    %c0_247 = arith.constant 0 : index
    %422 = vector.load %arg18[%c1_244, %c3_245, %c0_246, %c0_247] : memref<2x4x512x64xbf16, #tpu.memory_space<vmem>>, vector<1x1x512x64xbf16>
    %423 = vector.shape_cast %422 : vector<1x1x512x64xbf16> to vector<512x64xbf16>
    %cst_248 = arith.constant dense<0.000000e+00> : vector<2x64xf32>
    %424 = tpu.matmul %421, %423, %cst_248 {dimension_numbers = #tpu.dot_dimension_numbers<[1], [0], [0], [1], [0, 0, 1, 1], [], []>} : vector<2x512xbf16>, vector<512x64xbf16>, vector<2x64xf32> -> vector<2x64xf32>
    %425 = arith.addf %411, %424 : vector<2x64xf32>
    %c1_249 = arith.constant 1 : index
    %c0_250 = arith.constant 0 : index
    %c0_251 = arith.constant 0 : index
    %426 = vector.load %arg19[%c1_249, %c0_250, %c0_251] : memref<2x1x64xf32, #tpu.memory_space<vmem>>, vector<1x1x64xf32>
    %427 = vector.shape_cast %426 : vector<1x1x64xf32> to vector<1x64xf32>
    %428 = vector.broadcast %427 : vector<1x64xf32> to vector<2x64xf32>
    %429 = arith.addf %425, %428 : vector<2x64xf32>
    %430 = arith.addf %367, %429 : vector<2x64xf32>
    %c1_252 = arith.constant 1 : index
    %c0_253 = arith.constant 0 : index
    %c0_254 = arith.constant 0 : index
    %431 = vector.load %arg14[%c1_252, %c0_253, %c0_254] : memref<2x1x64xf32, #tpu.memory_space<vmem>>, vector<1x1x64xf32>
    %432 = vector.shape_cast %431 : vector<1x1x64xf32> to vector<1x64xf32>
    %c1_255 = arith.constant 1 : index
    %c0_256 = arith.constant 0 : index
    %c0_257 = arith.constant 0 : index
    %433 = vector.load %arg15[%c1_255, %c0_256, %c0_257] : memref<2x1x64xf32, #tpu.memory_space<vmem>>, vector<1x1x64xf32>
    %434 = vector.shape_cast %433 : vector<1x1x64xf32> to vector<1x64xf32>
    %cst_258 = arith.constant dense<0.000000e+00> : vector<2xf32>
    %435 = vector.multi_reduction <add>, %430, %cst_258 [1] : vector<2x64xf32> to vector<2xf32>
    %436 = vector.shape_cast %435 : vector<2xf32> to vector<2x1xf32>
    %cst_259 = arith.constant 6.400000e+01 : f32
    %437 = vector.broadcast %cst_259 : f32 to vector<2x1xf32>
    %438 = arith.divf %436, %437 : vector<2x1xf32>
    %439 = vector.broadcast %438 : vector<2x1xf32> to vector<2x64xf32>
    %440 = arith.subf %430, %439 : vector<2x64xf32>
    %441 = arith.mulf %440, %440 : vector<2x64xf32>
    %cst_260 = arith.constant dense<0.000000e+00> : vector<2xf32>
    %442 = vector.multi_reduction <add>, %441, %cst_260 [1] : vector<2x64xf32> to vector<2xf32>
    %443 = vector.shape_cast %442 : vector<2xf32> to vector<2x1xf32>
    %cst_261 = arith.constant 6.400000e+01 : f32
    %444 = vector.broadcast %cst_261 : f32 to vector<2x1xf32>
    %445 = arith.divf %443, %444 : vector<2x1xf32>
    %446 = vector.broadcast %438 : vector<2x1xf32> to vector<2x64xf32>
    %447 = arith.subf %430, %446 : vector<2x64xf32>
    %cst_262 = arith.constant 9.99999974E-6 : f32
    %448 = vector.broadcast %cst_262 : f32 to vector<2x1xf32>
    %449 = arith.addf %445, %448 : vector<2x1xf32>
    %450 = math.rsqrt %449 : vector<2x1xf32>
    %451 = vector.broadcast %450 : vector<2x1xf32> to vector<2x64xf32>
    %452 = arith.mulf %447, %451 : vector<2x64xf32>
    %453 = vector.broadcast %432 : vector<1x64xf32> to vector<2x64xf32>
    %454 = arith.mulf %452, %453 : vector<2x64xf32>
    %455 = vector.broadcast %434 : vector<1x64xf32> to vector<2x64xf32>
    %456 = arith.addf %454, %455 : vector<2x64xf32>
    %c0_263 = arith.constant 0 : index
    %c0_264 = arith.constant 0 : index
    %457 = vector.load %arg20[%c0_263, %c0_264] : memref<64x4xf32, #tpu.memory_space<vmem>>, vector<64x4xf32>
    %cst_265 = arith.constant dense<0.000000e+00> : vector<2x4xf32>
    %458 = tpu.matmul %456, %457, %cst_265 {dimension_numbers = #tpu.dot_dimension_numbers<[1], [0], [0], [1], [0, 0, 1, 1], [], []>} : vector<2x64xf32>, vector<64x4xf32>, vector<2x4xf32> -> vector<2x4xf32>
    %c0_266 = arith.constant 0 : index
    %c0_267 = arith.constant 0 : index
    %459 = vector.load %arg21[%c0_266, %c0_267] : memref<1x4xf32, #tpu.memory_space<vmem>>, vector<1x4xf32>
    %460 = vector.broadcast %459 : vector<1x4xf32> to vector<2x4xf32>
    %461 = arith.addf %458, %460 : vector<2x4xf32>
    %c0_268 = arith.constant 0 : index
    %c0_269 = arith.constant 0 : index
    %462 = vector.load %arg22[%c0_268, %c0_269] : memref<2x4xf32, #tpu.memory_space<vmem>>, vector<2x4xf32>
    tpu.vector_store %arg22[%c0_268, %c0_269], %461 {strides = array<i32>} : memref<2x4xf32, #tpu.memory_space<vmem>>, vector<2x4xf32>,
    return
  }
  func.func @transform_0(%arg0: i32) -> (i32, i32, i32) {
    %c0_i32 = arith.constant 0 : i32
    %c0_i32_0 = arith.constant 0 : i32
    %c0_i32_1 = arith.constant 0 : i32
    return %arg0, %c0_i32, %c0_i32_0 : i32, i32, i32
  }
  func.func @transform_1(%arg0: i32) -> (i32, i32) {
    %c0_i32 = arith.constant 0 : i32
    %c0_i32_0 = arith.constant 0 : i32
    %c0_i32_1 = arith.constant 0 : i32
    return %c0_i32, %c0_i32_0 : i32, i32
  }
  func.func @transform_2(%arg0: i32) -> (i32, i32) {
    %c0_i32 = arith.constant 0 : i32
    %c0_i32_0 = arith.constant 0 : i32
    %c0_i32_1 = arith.constant 0 : i32
    return %c0_i32, %c0_i32_0 : i32, i32
  }
  func.func @transform_3(%arg0: i32) -> (i32, i32, i32) {
    %c0_i32 = arith.constant 0 : i32
    %c0_i32_0 = arith.constant 0 : i32
    %c0_i32_1 = arith.constant 0 : i32
    %c0_i32_2 = arith.constant 0 : i32
    return %c0_i32, %c0_i32_0, %c0_i32_1 : i32, i32, i32
  }
  func.func @transform_4(%arg0: i32) -> (i32, i32, i32) {
    %c0_i32 = arith.constant 0 : i32
    %c0_i32_0 = arith.constant 0 : i32
    %c0_i32_1 = arith.constant 0 : i32
    %c0_i32_2 = arith.constant 0 : i32
    return %c0_i32, %c0_i32_0, %c0_i32_1 : i32, i32, i32
  }
  func.func @transform_5(%arg0: i32) -> (i32, i32, i32) {
    %c0_i32 = arith.constant 0 : i32
    %c0_i32_0 = arith.constant 0 : i32
    %c0_i32_1 = arith.constant 0 : i32
    %c0_i32_2 = arith.constant 0 : i32
    return %c0_i32, %c0_i32_0, %c0_i32_1 : i32, i32, i32
  }
  func.func @transform_6(%arg0: i32) -> (i32, i32, i32) {
    %c0_i32 = arith.constant 0 : i32
    %c0_i32_0 = arith.constant 0 : i32
    %c0_i32_1 = arith.constant 0 : i32
    %c0_i32_2 = arith.constant 0 : i32
    return %c0_i32, %c0_i32_0, %c0_i32_1 : i32, i32, i32
  }
  func.func @transform_7(%arg0: i32) -> (i32, i32, i32) {
    %c0_i32 = arith.constant 0 : i32
    %c0_i32_0 = arith.constant 0 : i32
    %c0_i32_1 = arith.constant 0 : i32
    %c0_i32_2 = arith.constant 0 : i32
    return %c0_i32, %c0_i32_0, %c0_i32_1 : i32, i32, i32
  }
  func.func @transform_8(%arg0: i32) -> (i32, i32, i32) {
    %c0_i32 = arith.constant 0 : i32
    %c0_i32_0 = arith.constant 0 : i32
    %c0_i32_1 = arith.constant 0 : i32
    %c0_i32_2 = arith.constant 0 : i32
    return %c0_i32, %c0_i32_0, %c0_i32_1 : i32, i32, i32
  }
  func.func @transform_9(%arg0: i32) -> (i32, i32, i32) {
    %c0_i32 = arith.constant 0 : i32
    %c0_i32_0 = arith.constant 0 : i32
    %c0_i32_1 = arith.constant 0 : i32
    %c0_i32_2 = arith.constant 0 : i32
    return %c0_i32, %c0_i32_0, %c0_i32_1 : i32, i32, i32
  }
  func.func @transform_10(%arg0: i32) -> (i32, i32, i32) {
    %c0_i32 = arith.constant 0 : i32
    %c0_i32_0 = arith.constant 0 : i32
    %c0_i32_1 = arith.constant 0 : i32
    %c0_i32_2 = arith.constant 0 : i32
    return %c0_i32, %c0_i32_0, %c0_i32_1 : i32, i32, i32
  }
  func.func @transform_11(%arg0: i32) -> (i32, i32, i32) {
    %c0_i32 = arith.constant 0 : i32
    %c0_i32_0 = arith.constant 0 : i32
    %c0_i32_1 = arith.constant 0 : i32
    %c0_i32_2 = arith.constant 0 : i32
    return %c0_i32, %c0_i32_0, %c0_i32_1 : i32, i32, i32
  }
  func.func @transform_12(%arg0: i32) -> (i32, i32, i32) {
    %c0_i32 = arith.constant 0 : i32
    %c0_i32_0 = arith.constant 0 : i32
    %c0_i32_1 = arith.constant 0 : i32
    %c0_i32_2 = arith.constant 0 : i32
    return %c0_i32, %c0_i32_0, %c0_i32_1 : i32, i32, i32
  }
  func.func @transform_13(%arg0: i32) -> (i32, i32, i32) {
    %c0_i32 = arith.constant 0 : i32
    %c0_i32_0 = arith.constant 0 : i32
    %c0_i32_1 = arith.constant 0 : i32
    %c0_i32_2 = arith.constant 0 : i32
    return %c0_i32, %c0_i32_0, %c0_i32_1 : i32, i32, i32
  }
  func.func @transform_14(%arg0: i32) -> (i32, i32, i32) {
    %c0_i32 = arith.constant 0 : i32
    %c0_i32_0 = arith.constant 0 : i32
    %c0_i32_1 = arith.constant 0 : i32
    %c0_i32_2 = arith.constant 0 : i32
    return %c0_i32, %c0_i32_0, %c0_i32_1 : i32, i32, i32
  }
  func.func @transform_15(%arg0: i32) -> (i32, i32, i32, i32) {
    %c0_i32 = arith.constant 0 : i32
    %c0_i32_0 = arith.constant 0 : i32
    %c0_i32_1 = arith.constant 0 : i32
    %c0_i32_2 = arith.constant 0 : i32
    %c0_i32_3 = arith.constant 0 : i32
    return %c0_i32, %c0_i32_0, %c0_i32_1, %c0_i32_2 : i32, i32, i32, i32
  }
  func.func @transform_16(%arg0: i32) -> (i32, i32, i32, i32) {
    %c0_i32 = arith.constant 0 : i32
    %c0_i32_0 = arith.constant 0 : i32
    %c0_i32_1 = arith.constant 0 : i32
    %c0_i32_2 = arith.constant 0 : i32
    %c0_i32_3 = arith.constant 0 : i32
    return %c0_i32, %c0_i32_0, %c0_i32_1, %c0_i32_2 : i32, i32, i32, i32
  }
  func.func @transform_17(%arg0: i32) -> (i32, i32, i32, i32) {
    %c0_i32 = arith.constant 0 : i32
    %c0_i32_0 = arith.constant 0 : i32
    %c0_i32_1 = arith.constant 0 : i32
    %c0_i32_2 = arith.constant 0 : i32
    %c0_i32_3 = arith.constant 0 : i32
    return %c0_i32, %c0_i32_0, %c0_i32_1, %c0_i32_2 : i32, i32, i32, i32
  }
  func.func @transform_18(%arg0: i32) -> (i32, i32, i32) {
    %c0_i32 = arith.constant 0 : i32
    %c0_i32_0 = arith.constant 0 : i32
    %c0_i32_1 = arith.constant 0 : i32
    %c0_i32_2 = arith.constant 0 : i32
    return %c0_i32, %c0_i32_0, %c0_i32_1 : i32, i32, i32
  }
  func.func @transform_19(%arg0: i32) -> (i32, i32) {
    %c0_i32 = arith.constant 0 : i32
    %c0_i32_0 = arith.constant 0 : i32
    %c0_i32_1 = arith.constant 0 : i32
    return %c0_i32, %c0_i32_0 : i32, i32
  }
  func.func @transform_20(%arg0: i32) -> (i32, i32) {
    %c0_i32 = arith.constant 0 : i32
    %c0_i32_0 = arith.constant 0 : i32
    %c0_i32_1 = arith.constant 0 : i32
    return %c0_i32, %c0_i32_0 : i32, i32
  }
  func.func @transform_21(%arg0: i32) -> (i32, i32) {
    %c0_i32 = arith.constant 0 : i32
    %c0_i32_0 = arith.constant 0 : i32
    return %arg0, %c0_i32 : i32, i32
  }
}

</mosaic_0001>

<llo_original>
// kernel: tpu_custom_call.1
$region0: #{tpu_custom_call.1}
  #allocation0 [shape = 'u32[]', space=smem, size = 0x4, offset = 0x4, fixed_abs, tag = 'smem constant byte address 0x4 - core index']
  #allocation1 [shape = 'u32[144,128]{1,0:T(1,128)}', space=vmem, size = 0x12000, scoped, tag = 'internal scratch']
  %s0 = inlined_call_operand.vmem [shape: f32[2,8,16], index: 0, kind: input, shape index: {}]
  %s1 = inlined_call_operand.vmem [shape: f32[16,64], index: 1, kind: input, shape index: {}]
  %s2 = inlined_call_operand.vmem [shape: f32[1,64], index: 2, kind: input, shape index: {}]
  %s3 = inlined_call_operand.vmem [shape: bf16[2,64,64], index: 3, kind: input, shape index: {}]
  %s4 = inlined_call_operand.vmem [shape: f32[2,1,64], index: 4, kind: input, shape index: {}]
  %s5 = inlined_call_operand.vmem [shape: bf16[2,64,64], index: 5, kind: input, shape index: {}]
  %s6 = inlined_call_operand.vmem [shape: f32[2,1,64], index: 6, kind: input, shape index: {}]
  %s7 = inlined_call_operand.vmem [shape: bf16[2,64,64], index: 7, kind: input, shape index: {}]
  %s8 = inlined_call_operand.vmem [shape: f32[2,1,64], index: 8, kind: input, shape index: {}]
  %s9 = inlined_call_operand.vmem [shape: bf16[2,64,64], index: 9, kind: input, shape index: {}]
  %s10 = inlined_call_operand.vmem [shape: f32[2,1,64], index: 10, kind: input, shape index: {}]
  %s11 = inlined_call_operand.vmem [shape: f32[2,1,64], index: 11, kind: input, shape index: {}]
  %s12 = inlined_call_operand.vmem [shape: f32[2,1,64], index: 12, kind: input, shape index: {}]
  %s13 = inlined_call_operand.vmem [shape: f32[2,1,64], index: 13, kind: input, shape index: {}]
  %s14 = inlined_call_operand.vmem [shape: f32[2,1,64], index: 14, kind: input, shape index: {}]
  %s15 = inlined_call_operand.vmem [shape: bf16[2,4,64,512], index: 15, kind: input, shape index: {}]
  %s16 = inlined_call_operand.vmem [shape: f32[2,4,1,512], index: 16, kind: input, shape index: {}]
  %s17 = inlined_call_operand.vmem [shape: bf16[2,4,512,64], index: 17, kind: input, shape index: {}]
  %s18 = inlined_call_operand.vmem [shape: f32[2,1,64], index: 18, kind: input, shape index: {}]
  %s19 = inlined_call_operand.vmem [shape: f32[64,4], index: 19, kind: input, shape index: {}]
  %s20 = inlined_call_operand.vmem [shape: f32[1,4], index: 20, kind: input, shape index: {}]
  %s21 = inlined_call_operand.hbm [shape: f32[2,4], index: 21, kind: output, shape index: {}]
  %s22 = sld [smem:[#allocation0]]
  $region94: #{tpu_custom_call.1} parent=0
    _
  %s24 = ssub.s32 1, %s22
  %s25 = scalar_select 0, %s24, %s22
  $region1: #{tpu_custom_call.1} parent=0
    #allocation2 [shape = 'u8[1024]{0}', space=vmem, size = 0x400, scoped, tag = 'output window, operand 0, single buffered']
    #allocation3 [shape = 's32[1]{0}', space=sflag, size = 0x4, scoped, tag = 'scoped memory for tpu_custom_call.1']
    %26 = vsyncpa [#allocation3], 0
    // Predicated region
    $region2: #{tpu_custom_call.1} parent=1 // pred_check
      _
    $region3: #{tpu_custom_call.1} parent=1 // pred_check_branch
      %28 = sbr.rel (0) target = $region5
    $region4: #{tpu_custom_call.1} parent=1 // pred_region
      _
    $region5: #{tpu_custom_call.1} parent=1 // pred_fallthru
      _
    // Predicated region
    $region6: #{tpu_custom_call.1} parent=1 // pred_check
      _
    $region7: #{tpu_custom_call.1} parent=1 // pred_check_branch
      %30 = sbr.rel (0) target = $region9
    $region8: #{tpu_custom_call.1} parent=1 // pred_region
      _
    $region9: #{tpu_custom_call.1} parent=1 // pred_fallthru
      _
    // Predicated region
    $region10: #{tpu_custom_call.1} parent=1 // pred_check
      _
    $region11: #{tpu_custom_call.1} parent=1 // pred_check_branch
      %32 = sbr.rel (0) target = $region13
    $region12: #{tpu_custom_call.1} parent=1 // pred_region
      _
    $region13: #{tpu_custom_call.1} parent=1 // pred_fallthru
      _
    // Predicated region
    $region14: #{tpu_custom_call.1} parent=1 // pred_check
      _
    $region15: #{tpu_custom_call.1} parent=1 // pred_check_branch
      %34 = sbr.rel (0) target = $region17
    $region16: #{tpu_custom_call.1} parent=1 // pred_region
      _
    $region17: #{tpu_custom_call.1} parent=1 // pred_fallthru
      _
    // Predicated region
    $region18: #{tpu_custom_call.1} parent=1 // pred_check
      _
    $region19: #{tpu_custom_call.1} parent=1 // pred_check_branch
      %36 = sbr.rel (0) target = $region21
    $region20: #{tpu_custom_call.1} parent=1 // pred_region
      _
    $region21: #{tpu_custom_call.1} parent=1 // pred_fallthru
      _
    // Predicated region
    $region22: #{tpu_custom_call.1} parent=1 // pred_check
      _
    $region23: #{tpu_custom_call.1} parent=1 // pred_check_branch
      %38 = sbr.rel (0) target = $region25
    $region24: #{tpu_custom_call.1} parent=1 // pred_region
      _
    $region25: #{tpu_custom_call.1} parent=1 // pred_fallthru
      _
    // Predicated region
    $region26: #{tpu_custom_call.1} parent=1 // pred_check
      _
    $region27: #{tpu_custom_call.1} parent=1 // pred_check_branch
      %40 = sbr.rel (0) target = $region29
    $region28: #{tpu_custom_call.1} parent=1 // pred_region
      _
    $region29: #{tpu_custom_call.1} parent=1 // pred_fallthru
      _
    // Predicated region
    $region30: #{tpu_custom_call.1} parent=1 // pred_check
      _
    $region31: #{tpu_custom_call.1} parent=1 // pred_check_branch
      %42 = sbr.rel (0) target = $region33
    $region32: #{tpu_custom_call.1} parent=1 // pred_region
      _
    $region33: #{tpu_custom_call.1} parent=1 // pred_fallthru
      _
    // Predicated region
    $region34: #{tpu_custom_call.1} parent=1 // pred_check
      _
    $region35: #{tpu_custom_call.1} parent=1 // pred_check_branch
      %44 = sbr.rel (0) target = $region37
    $region36: #{tpu_custom_call.1} parent=1 // pred_region
      _
    $region37: #{tpu_custom_call.1} parent=1 // pred_fallthru
      _
    // Predicated region
    $region38: #{tpu_custom_call.1} parent=1 // pred_check
      _
    $region39: #{tpu_custom_call.1} parent=1 // pred_check_branch
      %46 = sbr.rel (0) target = $region41
    $region40: #{tpu_custom_call.1} parent=1 // pred_region
      _
    $region41: #{tpu_custom_call.1} parent=1 // pred_fallthru
      _
    // Predicated region
    $region42: #{tpu_custom_call.1} parent=1 // pred_check
      _
    $region43: #{tpu_custom_call.1} parent=1 // pred_check_branch
      %48 = sbr.rel (0) target = $region45
    $region44: #{tpu_custom_call.1} parent=1 // pred_region
      _
    $region45: #{tpu_custom_call.1} parent=1 // pred_fallthru
      _
    // Predicated region
    $region46: #{tpu_custom_call.1} parent=1 // pred_check
      _
    $region47: #{tpu_custom_call.1} parent=1 // pred_check_branch
      %50 = sbr.rel (0) target = $region49
    $region48: #{tpu_custom_call.1} parent=1 // pred_region
      _
    $region49: #{tpu_custom_call.1} parent=1 // pred_fallthru
      _
    // Predicated region
    $region50: #{tpu_custom_call.1} parent=1 // pred_check
      _
    $region51: #{tpu_custom_call.1} parent=1 // pred_check_branch
      %52 = sbr.rel (0) target = $region53
    $region52: #{tpu_custom_call.1} parent=1 // pred_region
      _
    $region53: #{tpu_custom_call.1} parent=1 // pred_fallthru
      _
    // Predicated region
    $region54: #{tpu_custom_call.1} parent=1 // pred_check
      _
    $region55: #{tpu_custom_call.1} parent=1 // pred_check_branch
      %54 = sbr.rel (0) target = $region57
    $region56: #{tpu_custom_call.1} parent=1 // pred_region
      _
    $region57: #{tpu_custom_call.1} parent=1 // pred_fallthru
      _
    // Predicated region
    $region58: #{tpu_custom_call.1} parent=1 // pred_check
      _
    $region59: #{tpu_custom_call.1} parent=1 // pred_check_branch
      %56 = sbr.rel (0) target = $region61
    $region60: #{tpu_custom_call.1} parent=1 // pred_region
      _
    $region61: #{tpu_custom_call.1} parent=1 // pred_fallthru
      _
    // Predicated region
    $region62: #{tpu_custom_call.1} parent=1 // pred_check
      _
    $region63: #{tpu_custom_call.1} parent=1 // pred_check_branch
      %58 = sbr.rel (0) target = $region65
    $region64: #{tpu_custom_call.1} parent=1 // pred_region
      _
    $region65: #{tpu_custom_call.1} parent=1 // pred_fallthru
      _
    // Predicated region
    $region66: #{tpu_custom_call.1} parent=1 // pred_check
      _
    $region67: #{tpu_custom_call.1} parent=1 // pred_check_branch
      %60 = sbr.rel (0) target = $region69
    $region68: #{tpu_custom_call.1} parent=1 // pred_region
      _
    $region69: #{tpu_custom_call.1} parent=1 // pred_fallthru
      _
    // Predicated region
    $region70: #{tpu_custom_call.1} parent=1 // pred_check
      _
    $region71: #{tpu_custom_call.1} parent=1 // pred_check_branch
      %62 = sbr.rel (0) target = $region73
    $region72: #{tpu_custom_call.1} parent=1 // pred_region
      _
    $region73: #{tpu_custom_call.1} parent=1 // pred_fallthru
      _
    // Predicated region
    $region74: #{tpu_custom_call.1} parent=1 // pred_check
      _
    $region75: #{tpu_custom_call.1} parent=1 // pred_check_branch
      %64 = sbr.rel (0) target = $region77
    $region76: #{tpu_custom_call.1} parent=1 // pred_region
      _
    $region77: #{tpu_custom_call.1} parent=1 // pred_fallthru
      _
    // Predicated region
    $region78: #{tpu_custom_call.1} parent=1 // pred_check
      _
    $region79: #{tpu_custom_call.1} parent=1 // pred_check_branch
      %66 = sbr.rel (0) target = $region81
    $region80: #{tpu_custom_call.1} parent=1 // pred_region
      _
    $region81: #{tpu_custom_call.1} parent=1 // pred_fallthru
      _
    // Predicated region
    $region82: #{tpu_custom_call.1} parent=1 // pred_check
      _
    $region83: #{tpu_custom_call.1} parent=1 // pred_check_branch
      %68 = sbr.rel (0) target = $region85
    $region84: #{tpu_custom_call.1} parent=1 // pred_region
      _
    $region85: #{tpu_custom_call.1} parent=1 // pred_fallthru
      _
    %v70 = vld [vmem:[%s0] sm:$0xff]
    %v71 = vld [vmem:[%s0 + $0x8] sm:$0xff]
    %v72 = vld [vmem:[%s1] sm:$0xff]
    %v73 = vld [vmem:[%s1 + $0x8] sm:$0xff]
    %v74 = vld [vmem:[%s2] sm:$0x1]
    %v76 = vlaneseq
    %v77 = vshrl.u32 %v76, 7
    %v78 = vsub.s32 0, %v77
    %v79 = vrot.slane %v74, %v78
    %vm81 = vcmask 130048
    %v83 = vsel %vm81, %v70, 0
    %v86 = vsel %vm81, %v71, 0
    %88 = vmatprep.subr.mxu0 0.0
    %89 = vmatpush1.msra.mxu0 0.0
    %90 = vmatprep.subr.mxu0 0.0
    %91 = vmatpush1.msra.mxu0 0.0
    %92 = vmatprep.subr.mxu0 0.0
    %93 = vmatpush1.msra.mxu0 0.0
    %94 = vmatprep.subr.mxu0 0.0
    %95 = vmatpush1.msra.mxu0 0.0
    %96 = vmatprep.subr.mxu0 0.0
    %97 = vmatpush1.msra.mxu0 0.0
    %98 = vmatprep.subr.mxu0 0.0
    %99 = vmatpush1.msra.mxu0 0.0
    %100 = vmatprep.subr.mxu0 0.0
    %101 = vmatpush1.msra.mxu0 0.0
    %102 = vmatprep.subr.mxu0 0.0
    %103 = vmatpush1.msra.mxu0 0.0
    %104 = vmatprep.subr.mxu0 0.0
    %105 = vmatpush1.msra.mxu0 0.0
    %106 = vmatprep.subr.mxu0 0.0
    %107 = vmatpush1.msra.mxu0 0.0
    %108 = vmatprep.subr.mxu0 0.0
    %109 = vmatpush1.msra.mxu0 0.0
    %110 = vmatprep.subr.mxu0 0.0
    %111 = vmatpush1.msra.mxu0 0.0
    %112 = vmatprep.subr.mxu0 0.0
    %113 = vmatpush1.msra.mxu0 0.0
    %114 = vmatprep.subr.mxu0 0.0
    %115 = vmatpush1.msra.mxu0 0.0
    %116 = vmatprep.subr.mxu0 0.0
    %117 = vmatpush1.msra.mxu0 %v73
    %118 = vmatprep.subr.mxu0 0.0
    %119 = vmatpush1.msra.mxu0 %v72
    %120 = vmatprep.subr.mxu0 0.0
    %121 = vmatpush2.msra.mxu0 0.0
    %122 = vmatprep.subr.mxu0 0.0
    %123 = vmatpush2.msra.mxu0 0.0
    %124 = vmatprep.subr.mxu0 0.0
    %125 = vmatpush2.msra.mxu0 0.0
    %126 = vmatprep.subr.mxu0 0.0
    %127 = vmatpush2.msra.mxu0 0.0
    %128 = vmatprep.subr.mxu0 0.0
    %129 = vmatpush2.msra.mxu0 0.0
    %130 = vmatprep.subr.mxu0 0.0
    %131 = vmatpush2.msra.mxu0 0.0
    %132 = vmatprep.subr.mxu0 0.0
    %133 = vmatpush2.msra.mxu0 0.0
    %134 = vmatprep.subr.mxu0 0.0
    %135 = vmatpush2.msra.mxu0 0.0
    %136 = vmatprep.subr.mxu0 0.0
    %137 = vmatpush2.msra.mxu0 0.0
    %138 = vmatprep.subr.mxu0 0.0
    %139 = vmatpush2.msra.mxu0 0.0
    %140 = vmatprep.subr.mxu0 0.0
    %141 = vmatpush2.msra.mxu0 0.0
    %142 = vmatprep.subr.mxu0 0.0
    %143 = vmatpush2.msra.mxu0 0.0
    %144 = vmatprep.subr.mxu0 0.0
    %145 = vmatpush2.msra.mxu0 0.0
    %146 = vmatprep.subr.mxu0 0.0
    %147 = vmatpush2.msra.mxu0 0.0
    %148 = vmatprep.subr.mxu0 0.0
    %149 = vmatpush2.msra.mxu0 0.0
    %150 = vmatprep.subr.mxu0 0.0
    %151 = vmatpush2.msra.mxu0 0.0
    %152 = vmatprep.mubr.f32.mxu0 0.0
    %153 = vmatmul.mubr.f32.gmra.mxu0 %v83
    %v154 = vpop.f32.mrf.mxu0
    %v155 = vadd.f32 %v79, %v154
    %v156 = vpop.f32.mrf.mxu0
    %157 = vmatprep.mubr.f32.mxu0 0.0
    %158 = vmatmul.mubr.f32.gmra.mxu0 %v86
    %v159 = vpop.f32.mrf.mxu0
    %v160 = vadd.f32 %v79, %v159
    %v161 = vpop.f32.mrf.mxu0
    %162 = vdwg.mxu0
    %v163 = vpack.c.bf16 %v160, %v155
    %v164 = vld [vmem:[%s3] sm:$0xf]
    %v165 = vld [vmem:[%s3 + $0x4] sm:$0xf]
    %v166 = vld [vmem:[%s3 + $0x8] sm:$0xf]
    %v167 = vld [vmem:[%s3 + $0xc] sm:$0xf]
    %v168 = vld [vmem:[%s3 + $0x10] sm:$0xf]
    %v169 = vld [vmem:[%s3 + $0x14] sm:$0xf]
    %v170 = vld [vmem:[%s3 + $0x18] sm:$0xf]
    %v171 = vld [vmem:[%s3 + $0x1c] sm:$0xf]
    %v172 = vld [vmem:[%s4] sm:$0x1]
    %v174 = vlaneseq
    %v175 = vshrl.u32 %v174, 7
    %v176 = vsub.s32 0, %v175
    %v177 = vrot.slane %v172, %v176
    %v187 = vunpack.c.l.b16 %v164
    %v188 = vunpack.c.l.b16 %v165
    %v189 = vunpack.c.l.b16 %v166
    %v190 = vunpack.c.l.b16 %v167
    %v191 = vunpack.c.l.b16 %v168
    %v192 = vunpack.c.l.b16 %v169
    %v193 = vunpack.c.l.b16 %v170
    %v194 = vunpack.c.l.b16 %v171
    %v195 = vpack.c.b16 %v188, %v187
    %v196 = vpack.c.b16 %v190, %v189
    %v197 = vpack.c.b16 %v192, %v191
    %v198 = vpack.c.b16 %v194, %v193
    %vm203 = vcmask 523264
    %v205 = vsel %vm203, %v163, 0
    %207 = vmatprep.subr.bf16.mxu0 0
    %208 = vmatpush1.bf16.msra.mxu0 0
    %209 = vmatprep.subr.bf16.mxu0 0
    %210 = vmatpush1.bf16.msra.mxu0 0
    %211 = vmatprep.subr.bf16.mxu0 0
    %212 = vmatpush1.bf16.msra.mxu0 0
    %213 = vmatprep.subr.bf16.mxu0 0
    %214 = vmatpush1.bf16.msra.mxu0 0
    %215 = vmatprep.subr.bf16.mxu0 0
    %216 = vmatpush1.bf16.msra.mxu0 %v198
    %217 = vmatprep.subr.bf16.mxu0 0
    %218 = vmatpush1.bf16.msra.mxu0 %v197
    %219 = vmatprep.subr.bf16.mxu0 0
    %220 = vmatpush1.bf16.msra.mxu0 %v196
    %221 = vmatprep.subr.bf16.mxu0 0
    %222 = vmatpush1.bf16.msra.mxu0 %v195
    %223 = vmatprep.subr.bf16.mxu0 0
    %224 = vmatpush2.bf16.msra.mxu0 0
    %225 = vmatprep.subr.bf16.mxu0 0
    %226 = vmatpush2.bf16.msra.mxu0 0
    %227 = vmatprep.subr.bf16.mxu0 0
    %228 = vmatpush2.bf16.msra.mxu0 0
    %229 = vmatprep.subr.bf16.mxu0 0
    %230 = vmatpush2.bf16.msra.mxu0 0
    %231 = vmatprep.subr.bf16.mxu0 0
    %232 = vmatpush2.bf16.msra.mxu0 0
    %233 = vmatprep.subr.bf16.mxu0 0
    %234 = vmatpush2.bf16.msra.mxu0 0
    %235 = vmatprep.subr.bf16.mxu0 0
    %236 = vmatpush2.bf16.msra.mxu0 0
    %237 = vmatprep.subr.bf16.mxu0 0
    %238 = vmatpush2.bf16.msra.mxu0 0
    %239 = vmatprep.mubr.bf16.mxu0 0
    %240 = vmatmul.mubr.bf16.gmra.mxu0 %v205
    %v241 = vpop.f32.mrf.mxu0
    %v242 = vadd.f32 %v177, %v241
    %v243 = vpop.f32.mrf.mxu0
    %v244 = vpop.f32.mrf.mxu0
    %v245 = vadd.f32 %v177, %v244
    %v246 = vpop.f32.mrf.mxu0
    %247 = vdwg.mxu0
    %v248 = vld [vmem:[%s5] sm:$0xf]
    %v249 = vld [vmem:[%s5 + $0x4] sm:$0xf]
    %v250 = vld [vmem:[%s5 + $0x8] sm:$0xf]
    %v251 = vld [vmem:[%s5 + $0xc] sm:$0xf]
    %v252 = vld [vmem:[%s5 + $0x10] sm:$0xf]
    %v253 = vld [vmem:[%s5 + $0x14] sm:$0xf]
    %v254 = vld [vmem:[%s5 + $0x18] sm:$0xf]
    %v255 = vld [vmem:[%s5 + $0x1c] sm:$0xf]
    %v256 = vld [vmem:[%s6] sm:$0x1]
    %v258 = vlaneseq
    %v259 = vshrl.u32 %v258, 7
    %v260 = vsub.s32 0, %v259
    %v261 = vrot.slane %v256, %v260
    %v271 = vunpack.c.l.b16 %v248
    %v272 = vunpack.c.l.b16 %v249
    %v273 = vunpack.c.l.b16 %v250
    %v274 = vunpack.c.l.b16 %v251
    %v275 = vunpack.c.l.b16 %v252
    %v276 = vunpack.c.l.b16 %v253
    %v277 = vunpack.c.l.b16 %v254
    %v278 = vunpack.c.l.b16 %v255
    %v279 = vpack.c.b16 %v272, %v271
    %v280 = vpack.c.b16 %v274, %v273
    %v281 = vpack.c.b16 %v276, %v275
    %v282 = vpack.c.b16 %v278, %v277
    %287 = vmatprep.subr.bf16.mxu0 0
    %288 = vmatpush1.bf16.msra.mxu0 0
    %289 = vmatprep.subr.bf16.mxu0 0
    %290 = vmatpush1.bf16.msra.mxu0 0
    %291 = vmatprep.subr.bf16.mxu0 0
    %292 = vmatpush1.bf16.msra.mxu0 0
    %293 = vmatprep.subr.bf16.mxu0 0
    %294 = vmatpush1.bf16.msra.mxu0 0
    %295 = vmatprep.subr.bf16.mxu0 0
    %296 = vmatpush1.bf16.msra.mxu0 %v282
    %297 = vmatprep.subr.bf16.mxu0 0
    %298 = vmatpush1.bf16.msra.mxu0 %v281
    %299 = vmatprep.subr.bf16.mxu0 0
    %300 = vmatpush1.bf16.msra.mxu0 %v280
    %301 = vmatprep.subr.bf16.mxu0 0
    %302 = vmatpush1.bf16.msra.mxu0 %v279
    %303 = vmatprep.subr.bf16.mxu0 0
    %304 = vmatpush2.bf16.msra.mxu0 0
    %305 = vmatprep.subr.bf16.mxu0 0
    %306 = vmatpush2.bf16.msra.mxu0 0
    %307 = vmatprep.subr.bf16.mxu0 0
    %308 = vmatpush2.bf16.msra.mxu0 0
    %309 = vmatprep.subr.bf16.mxu0 0
    %310 = vmatpush2.bf16.msra.mxu0 0
    %311 = vmatprep.subr.bf16.mxu0 0
    %312 = vmatpush2.bf16.msra.mxu0 0
    %313 = vmatprep.subr.bf16.mxu0 0
    %314 = vmatpush2.bf16.msra.mxu0 0
    %315 = vmatprep.subr.bf16.mxu0 0
    %316 = vmatpush2.bf16.msra.mxu0 0
    %317 = vmatprep.subr.bf16.mxu0 0
    %318 = vmatpush2.bf16.msra.mxu0 0
    %319 = vmatprep.mubr.bf16.mxu0 0
    %320 = vmatmul.mubr.bf16.gmra.mxu0 %v205
    %v321 = vpop.f32.mrf.mxu0
    %v322 = vadd.f32 %v261, %v321
    %v323 = vpop.f32.mrf.mxu0
    %v324 = vpop.f32.mrf.mxu0
    %v325 = vadd.f32 %v261, %v324
    %v326 = vpop.f32.mrf.mxu0
    %327 = vdwg.mxu0
    %v328 = vld [vmem:[%s7] sm:$0xf]
    %v329 = vld [vmem:[%s7 + $0x4] sm:$0xf]
    %v330 = vld [vmem:[%s7 + $0x8] sm:$0xf]
    %v331 = vld [vmem:[%s7 + $0xc] sm:$0xf]
    %v332 = vld [vmem:[%s7 + $0x10] sm:$0xf]
    %v333 = vld [vmem:[%s7 + $0x14] sm:$0xf]
    %v334 = vld [vmem:[%s7 + $0x18] sm:$0xf]
    %v335 = vld [vmem:[%s7 + $0x1c] sm:$0xf]
    %v336 = vld [vmem:[%s8] sm:$0x1]
    %v338 = vlaneseq
    %v339 = vshrl.u32 %v338, 7
    %v340 = vsub.s32 0, %v339
    %v341 = vrot.slane %v336, %v340
    %v351 = vunpack.c.l.b16 %v328
    %v352 = vunpack.c.l.b16 %v329
    %v353 = vunpack.c.l.b16 %v330
    %v354 = vunpack.c.l.b16 %v331
    %v355 = vunpack.c.l.b16 %v332
    %v356 = vunpack.c.l.b16 %v333
    %v357 = vunpack.c.l.b16 %v334
    %v358 = vunpack.c.l.b16 %v335
    %v359 = vpack.c.b16 %v352, %v351
    %v360 = vpack.c.b16 %v354, %v353
    %v361 = vpack.c.b16 %v356, %v355
    %v362 = vpack.c.b16 %v358, %v357
    %367 = vmatprep.subr.bf16.mxu0 0
    %368 = vmatpush1.bf16.msra.mxu0 0
    %369 = vmatprep.subr.bf16.mxu0 0
    %370 = vmatpush1.bf16.msra.mxu0 0
    %371 = vmatprep.subr.bf16.mxu0 0
    %372 = vmatpush1.bf16.msra.mxu0 0
    %373 = vmatprep.subr.bf16.mxu0 0
    %374 = vmatpush1.bf16.msra.mxu0 0
    %375 = vmatprep.subr.bf16.mxu0 0
    %376 = vmatpush1.bf16.msra.mxu0 %v362
    %377 = vmatprep.subr.bf16.mxu0 0
    %378 = vmatpush1.bf16.msra.mxu0 %v361
    %379 = vmatprep.subr.bf16.mxu0 0
    %380 = vmatpush1.bf16.msra.mxu0 %v360
    %381 = vmatprep.subr.bf16.mxu0 0
    %382 = vmatpush1.bf16.msra.mxu0 %v359
    %383 = vmatprep.subr.bf16.mxu0 0
    %384 = vmatpush2.bf16.msra.mxu0 0
    %385 = vmatprep.subr.bf16.mxu0 0
    %386 = vmatpush2.bf16.msra.mxu0 0
    %387 = vmatprep.subr.bf16.mxu0 0
    %388 = vmatpush2.bf16.msra.mxu0 0
    %389 = vmatprep.subr.bf16.mxu0 0
    %390 = vmatpush2.bf16.msra.mxu0 0
    %391 = vmatprep.subr.bf16.mxu0 0
    %392 = vmatpush2.bf16.msra.mxu0 0
    %393 = vmatprep.subr.bf16.mxu0 0
    %394 = vmatpush2.bf16.msra.mxu0 0
    %395 = vmatprep.subr.bf16.mxu0 0
    %396 = vmatpush2.bf16.msra.mxu0 0
    %397 = vmatprep.subr.bf16.mxu0 0
    %398 = vmatpush2.bf16.msra.mxu0 0
    %399 = vmatprep.mubr.bf16.mxu0 0
    %400 = vmatmul.mubr.bf16.gmra.mxu0 %v205
    %v401 = vpop.f32.mrf.mxu0
    %v402 = vadd.f32 %v341, %v401
    %v403 = vpop.f32.mrf.mxu0
    %v404 = vpop.f32.mrf.mxu0
    %v405 = vadd.f32 %v341, %v404
    %v406 = vpop.f32.mrf.mxu0
    %407 = vdwg.mxu0
    %v409 = vsel %vm81, %v242, 0
    %v412 = vsel %vm81, %v322, 0
    %414 = vmatprep.subr.mxu0 0.0
    %415 = vmatpush1.xpose.msra.mxu0 0.0
    %416 = vmatprep.subr.mxu0 0.0
    %417 = vmatpush1.xpose.msra.mxu0 0.0
    %418 = vmatprep.subr.mxu0 0.0
    %419 = vmatpush1.xpose.msra.mxu0 0.0
    %420 = vmatprep.subr.mxu0 0.0
    %421 = vmatpush1.xpose.msra.mxu0 0.0
    %422 = vmatprep.subr.mxu0 0.0
    %423 = vmatpush1.xpose.msra.mxu0 0.0
    %424 = vmatprep.subr.mxu0 0.0
    %425 = vmatpush1.xpose.msra.mxu0 0.0
    %426 = vmatprep.subr.mxu0 0.0
    %427 = vmatpush1.xpose.msra.mxu0 0.0
    %428 = vmatprep.subr.mxu0 0.0
    %429 = vmatpush1.xpose.msra.mxu0 0.0
    %430 = vmatprep.subr.mxu0 0.0
    %431 = vmatpush1.xpose.msra.mxu0 0.0
    %432 = vmatprep.subr.mxu0 0.0
    %433 = vmatpush1.xpose.msra.mxu0 0.0
    %434 = vmatprep.subr.mxu0 0.0
    %435 = vmatpush1.xpose.msra.mxu0 0.0
    %436 = vmatprep.subr.mxu0 0.0
    %437 = vmatpush1.xpose.msra.mxu0 0.0
    %438 = vmatprep.subr.mxu0 0.0
    %439 = vmatpush1.xpose.msra.mxu0 0.0
    %440 = vmatprep.subr.mxu0 0.0
    %441 = vmatpush1.xpose.msra.mxu0 0.0
    %442 = vmatprep.subr.mxu0 0.0
    %443 = vmatpush1.xpose.msra.mxu0 0.0
    %444 = vmatprep.subr.mxu0 0.0
    %445 = vmatpush1.xpose.msra.mxu0 %v412
    %446 = vmatprep.subr.mxu0 0.0
    %447 = vmatpush2.xpose.msra.mxu0 0.0
    %448 = vmatprep.subr.mxu0 0.0
    %449 = vmatpush2.xpose.msra.mxu0 0.0
    %450 = vmatprep.subr.mxu0 0.0
    %451 = vmatpush2.xpose.msra.mxu0 0.0
    %452 = vmatprep.subr.mxu0 0.0
    %453 = vmatpush2.xpose.msra.mxu0 0.0
    %454 = vmatprep.subr.mxu0 0.0
    %455 = vmatpush2.xpose.msra.mxu0 0.0
    %456 = vmatprep.subr.mxu0 0.0
    %457 = vmatpush2.xpose.msra.mxu0 0.0
    %458 = vmatprep.subr.mxu0 0.0
    %459 = vmatpush2.xpose.msra.mxu0 0.0
    %460 = vmatprep.subr.mxu0 0.0
    %461 = vmatpush2.xpose.msra.mxu0 0.0
    %462 = vmatprep.subr.mxu0 0.0
    %463 = vmatpush2.xpose.msra.mxu0 0.0
    %464 = vmatprep.subr.mxu0 0.0
    %465 = vmatpush2.xpose.msra.mxu0 0.0
    %466 = vmatprep.subr.mxu0 0.0
    %467 = vmatpush2.xpose.msra.mxu0 0.0
    %468 = vmatprep.subr.mxu0 0.0
    %469 = vmatpush2.xpose.msra.mxu0 0.0
    %470 = vmatprep.subr.mxu0 0.0
    %471 = vmatpush2.xpose.msra.mxu0 0.0
    %472 = vmatprep.subr.mxu0 0.0
    %473 = vmatpush2.xpose.msra.mxu0 0.0
    %474 = vmatprep.subr.mxu0 0.0
    %475 = vmatpush2.xpose.msra.mxu0 0.0
    %476 = vmatprep.subr.mxu0 0.0
    %477 = vmatpush2.xpose.msra.mxu0 0.0
    %478 = vmatprep.mubr.f32.mxu0 0.0
    %479 = vmatmul.mubr.f32.gmra.mxu0 %v409
    %v480 = vpop.f32.mrf.mxu0
    %v481 = vadd.f32 0.0, %v480
    %v482 = vpop.f32.mrf.mxu0
    %483 = vdwg.mxu0
    %v485 = vsel %vm81, %v245, 0
    %v488 = vsel %vm81, %v325, 0
    %490 = vmatprep.subr.mxu0 0.0
    %491 = vmatpush1.xpose.msra.mxu0 0.0
    %492 = vmatprep.subr.mxu0 0.0
    %493 = vmatpush1.xpose.msra.mxu0 0.0
    %494 = vmatprep.subr.mxu0 0.0
    %495 = vmatpush1.xpose.msra.mxu0 0.0
    %496 = vmatprep.subr.mxu0 0.0
    %497 = vmatpush1.xpose.msra.mxu0 0.0
    %498 = vmatprep.subr.mxu0 0.0
    %499 = vmatpush1.xpose.msra.mxu0 0.0
    %500 = vmatprep.subr.mxu0 0.0
    %501 = vmatpush1.xpose.msra.mxu0 0.0
    %502 = vmatprep.subr.mxu0 0.0
    %503 = vmatpush1.xpose.msra.mxu0 0.0
    %504 = vmatprep.subr.mxu0 0.0
    %505 = vmatpush1.xpose.msra.mxu0 0.0
    %506 = vmatprep.subr.mxu0 0.0
    %507 = vmatpush1.xpose.msra.mxu0 0.0
    %508 = vmatprep.subr.mxu0 0.0
    %509 = vmatpush1.xpose.msra.mxu0 0.0
    %510 = vmatprep.subr.mxu0 0.0
    %511 = vmatpush1.xpose.msra.mxu0 0.0
    %512 = vmatprep.subr.mxu0 0.0
    %513 = vmatpush1.xpose.msra.mxu0 0.0
    %514 = vmatprep.subr.mxu0 0.0
    %515 = vmatpush1.xpose.msra.mxu0 0.0
    %516 = vmatprep.subr.mxu0 0.0
    %517 = vmatpush1.xpose.msra.mxu0 0.0
    %518 = vmatprep.subr.mxu0 0.0
    %519 = vmatpush1.xpose.msra.mxu0 0.0
    %520 = vmatprep.subr.mxu0 0.0
    %521 = vmatpush1.xpose.msra.mxu0 %v488
    %522 = vmatprep.subr.mxu0 0.0
    %523 = vmatpush2.xpose.msra.mxu0 0.0
    %524 = vmatprep.subr.mxu0 0.0
    %525 = vmatpush2.xpose.msra.mxu0 0.0
    %526 = vmatprep.subr.mxu0 0.0
    %527 = vmatpush2.xpose.msra.mxu0 0.0
    %528 = vmatprep.subr.mxu0 0.0
    %529 = vmatpush2.xpose.msra.mxu0 0.0
    %530 = vmatprep.subr.mxu0 0.0
    %531 = vmatpush2.xpose.msra.mxu0 0.0
    %532 = vmatprep.subr.mxu0 0.0
    %533 = vmatpush2.xpose.msra.mxu0 0.0
    %534 = vmatprep.subr.mxu0 0.0
    %535 = vmatpush2.xpose.msra.mxu0 0.0
    %536 = vmatprep.subr.mxu0 0.0
    %537 = vmatpush2.xpose.msra.mxu0 0.0
    %538 = vmatprep.subr.mxu0 0.0
    %539 = vmatpush2.xpose.msra.mxu0 0.0
    %540 = vmatprep.subr.mxu0 0.0
    %541 = vmatpush2.xpose.msra.mxu0 0.0
    %542 = vmatprep.subr.mxu0 0.0
    %543 = vmatpush2.xpose.msra.mxu0 0.0
    %544 = vmatprep.subr.mxu0 0.0
    %545 = vmatpush2.xpose.msra.mxu0 0.0
    %546 = vmatprep.subr.mxu0 0.0
    %547 = vmatpush2.xpose.msra.mxu0 0.0
    %548 = vmatprep.subr.mxu0 0.0
    %549 = vmatpush2.xpose.msra.mxu0 0.0
    %550 = vmatprep.subr.mxu0 0.0
    %551 = vmatpush2.xpose.msra.mxu0 0.0
    %552 = vmatprep.subr.mxu0 0.0
    %553 = vmatpush2.xpose.msra.mxu0 0.0
    %554 = vmatprep.mubr.f32.mxu0 0.0
    %555 = vmatmul.mubr.f32.gmra.mxu0 %v485
    %v556 = vpop.f32.mrf.mxu0
    %v557 = vadd.f32 0.0, %v556
    %v558 = vpop.f32.mrf.mxu0
    %559 = vdwg.mxu0
    %vm560 = vcmask 64512
    %v561 = vsel %vm560, %v481, -inf
    %562 = vmax.xlane.f32.xlu0 %v561
    %v563 = vpop.xlane.xlu0 %562
    %v564 = vsel %vm560, %v557, -inf
    %565 = vmax.xlane.f32.xlu0 %v564
    %v566 = vpop.xlane.xlu0 %565
    %v567 = vsub.f32 %v481, %v563
    %v568 = vsub.f32 %v557, %v566
    %v569 = vmul.f32 %v567, 1.442695
    %v570 = vpow.pop %v569
    %v571 = vmul.f32 %v568, 1.442695
    %v572 = vpow.pop %v571
    %v573 = vsel %vm560, %v570, 0.0
    %574 = vadd.xlane.f32.xlu0 %v573
    %v575 = vpop.xlane.xlu0 %574
    %v576 = vsel %vm560, %v572, 0.0
    %577 = vadd.xlane.f32.xlu0 %v576
    %v578 = vpop.xlane.xlu0 %577
    %v579 = vrcp.pop %v575
    %v580 = vrcp.pop %v578
    %v581 = vmul.f32 %v570, %v579
    %v582 = vmul.f32 %v572, %v580
    %v584 = vsel %vm560, %v581, 0
    %586 = vmatprep.subr.mxu0 0.0
    %587 = vmatpush1.msra.mxu0 0.0
    %588 = vmatprep.subr.mxu0 0.0
    %589 = vmatpush1.msra.mxu0 0.0
    %590 = vmatprep.subr.mxu0 0.0
    %591 = vmatpush1.msra.mxu0 0.0
    %592 = vmatprep.subr.mxu0 0.0
    %593 = vmatpush1.msra.mxu0 0.0
    %594 = vmatprep.subr.mxu0 0.0
    %595 = vmatpush1.msra.mxu0 0.0
    %596 = vmatprep.subr.mxu0 0.0
    %597 = vmatpush1.msra.mxu0 0.0
    %598 = vmatprep.subr.mxu0 0.0
    %599 = vmatpush1.msra.mxu0 0.0
    %600 = vmatprep.subr.mxu0 0.0
    %601 = vmatpush1.msra.mxu0 0.0
    %602 = vmatprep.subr.mxu0 0.0
    %603 = vmatpush1.msra.mxu0 0.0
    %604 = vmatprep.subr.mxu0 0.0
    %605 = vmatpush1.msra.mxu0 0.0
    %606 = vmatprep.subr.mxu0 0.0
    %607 = vmatpush1.msra.mxu0 0.0
    %608 = vmatprep.subr.mxu0 0.0
    %609 = vmatpush1.msra.mxu0 0.0
    %610 = vmatprep.subr.mxu0 0.0
    %611 = vmatpush1.msra.mxu0 0.0
    %612 = vmatprep.subr.mxu0 0.0
    %613 = vmatpush1.msra.mxu0 0.0
    %614 = vmatprep.subr.mxu0 0.0
    %615 = vmatpush1.msra.mxu0 0.0
    %616 = vmatprep.subr.mxu0 0.0
    %617 = vmatpush1.msra.mxu0 %v402
    %618 = vmatprep.subr.mxu0 0.0
    %619 = vmatpush2.msra.mxu0 0.0
    %620 = vmatprep.subr.mxu0 0.0
    %621 = vmatpush2.msra.mxu0 0.0
    %622 = vmatprep.subr.mxu0 0.0
    %623 = vmatpush2.msra.mxu0 0.0
    %624 = vmatprep.subr.mxu0 0.0
    %625 = vmatpush2.msra.mxu0 0.0
    %626 = vmatprep.subr.mxu0 0.0
    %627 = vmatpush2.msra.mxu0 0.0
    %628 = vmatprep.subr.mxu0 0.0
    %629 = vmatpush2.msra.mxu0 0.0
    %630 = vmatprep.subr.mxu0 0.0
    %631 = vmatpush2.msra.mxu0 0.0
    %632 = vmatprep.subr.mxu0 0.0
    %633 = vmatpush2.msra.mxu0 0.0
    %634 = vmatprep.subr.mxu0 0.0
    %635 = vmatpush2.msra.mxu0 0.0
    %636 = vmatprep.subr.mxu0 0.0
    %637 = vmatpush2.msra.mxu0 0.0
    %638 = vmatprep.subr.mxu0 0.0
    %639 = vmatpush2.msra.mxu0 0.0
    %640 = vmatprep.subr.mxu0 0.0
    %641 = vmatpush2.msra.mxu0 0.0
    %642 = vmatprep.subr.mxu0 0.0
    %643 = vmatpush2.msra.mxu0 0.0
    %644 = vmatprep.subr.mxu0 0.0
    %645 = vmatpush2.msra.mxu0 0.0
    %646 = vmatprep.subr.mxu0 0.0
    %647 = vmatpush2.msra.mxu0 0.0
    %648 = vmatprep.subr.mxu0 0.0
    %649 = vmatpush2.msra.mxu0 0.0
    %650 = vmatprep.mubr.f32.mxu0 0.0
    %651 = vmatmul.mubr.f32.gmra.mxu0 %v584
    %v652 = vpop.f32.mrf.mxu0
    %v653 = vadd.f32 0.0, %v652
    %v654 = vpop.f32.mrf.mxu0
    %655 = vdwg.mxu0
    %v657 = vsel %vm560, %v582, 0
    %659 = vmatprep.subr.mxu0 0.0
    %660 = vmatpush1.msra.mxu0 0.0
    %661 = vmatprep.subr.mxu0 0.0
    %662 = vmatpush1.msra.mxu0 0.0
    %663 = vmatprep.subr.mxu0 0.0
    %664 = vmatpush1.msra.mxu0 0.0
    %665 = vmatprep.subr.mxu0 0.0
    %666 = vmatpush1.msra.mxu0 0.0
    %667 = vmatprep.subr.mxu0 0.0
    %668 = vmatpush1.msra.mxu0 0.0
    %669 = vmatprep.subr.mxu0 0.0
    %670 = vmatpush1.msra.mxu0 0.0
    %671 = vmatprep.subr.mxu0 0.0
    %672 = vmatpush1.msra.mxu0 0.0
    %673 = vmatprep.subr.mxu0 0.0
    %674 = vmatpush1.msra.mxu0 0.0
    %675 = vmatprep.subr.mxu0 0.0
    %676 = vmatpush1.msra.mxu0 0.0
    %677 = vmatprep.subr.mxu0 0.0
    %678 = vmatpush1.msra.mxu0 0.0
    %679 = vmatprep.subr.mxu0 0.0
    %680 = vmatpush1.msra.mxu0 0.0
    %681 = vmatprep.subr.mxu0 0.0
    %682 = vmatpush1.msra.mxu0 0.0
    %683 = vmatprep.subr.mxu0 0.0
    %684 = vmatpush1.msra.mxu0 0.0
    %685 = vmatprep.subr.mxu0 0.0
    %686 = vmatpush1.msra.mxu0 0.0
    %687 = vmatprep.subr.mxu0 0.0
    %688 = vmatpush1.msra.mxu0 0.0
    %689 = vmatprep.subr.mxu0 0.0
    %690 = vmatpush1.msra.mxu0 %v405
    %691 = vmatprep.subr.mxu0 0.0
    %692 = vmatpush2.msra.mxu0 0.0
    %693 = vmatprep.subr.mxu0 0.0
    %694 = vmatpush2.msra.mxu0 0.0
    %695 = vmatprep.subr.mxu0 0.0
    %696 = vmatpush2.msra.mxu0 0.0
    %697 = vmatprep.subr.mxu0 0.0
    %698 = vmatpush2.msra.mxu0 0.0
    %699 = vmatprep.subr.mxu0 0.0
    %700 = vmatpush2.msra.mxu0 0.0
    %701 = vmatprep.subr.mxu0 0.0
    %702 = vmatpush2.msra.mxu0 0.0
    %703 = vmatprep.subr.mxu0 0.0
    %704 = vmatpush2.msra.mxu0 0.0
    %705 = vmatprep.subr.mxu0 0.0
    %706 = vmatpush2.msra.mxu0 0.0
    %707 = vmatprep.subr.mxu0 0.0
    %708 = vmatpush2.msra.mxu0 0.0
    %709 = vmatprep.subr.mxu0 0.0
    %710 = vmatpush2.msra.mxu0 0.0
    %711 = vmatprep.subr.mxu0 0.0
    %712 = vmatpush2.msra.mxu0 0.0
    %713 = vmatprep.subr.mxu0 0.0
    %714 = vmatpush2.msra.mxu0 0.0
    %715 = vmatprep.subr.mxu0 0.0
    %716 = vmatpush2.msra.mxu0 0.0
    %717 = vmatprep.subr.mxu0 0.0
    %718 = vmatpush2.msra.mxu0 0.0
    %719 = vmatprep.subr.mxu0 0.0
    %720 = vmatpush2.msra.mxu0 0.0
    %721 = vmatprep.subr.mxu0 0.0
    %722 = vmatpush2.msra.mxu0 0.0
    %723 = vmatprep.mubr.f32.mxu0 0.0
    %724 = vmatmul.mubr.f32.gmra.mxu0 %v657
    %v725 = vpop.f32.mrf.mxu0
    %v726 = vadd.f32 0.0, %v725
    %v727 = vpop.f32.mrf.mxu0
    %728 = vdwg.mxu0
    %729 = vrot.lane.b32.xlu0 %v242, 112
    %v730 = vpop.permute.xlu0 %729
    %731 = vrot.lane.b32.xlu0 %v322, 112
    %v732 = vpop.permute.xlu0 %731
    %v733 = vsel %vm81, %v730, 0
    %v735 = vsel %vm81, %v732, 0
    %737 = vmatprep.subr.mxu0 0.0
    %738 = vmatpush1.xpose.msra.mxu0 0.0
    %739 = vmatprep.subr.mxu0 0.0
    %740 = vmatpush1.xpose.msra.mxu0 0.0
    %741 = vmatprep.subr.mxu0 0.0
    %742 = vmatpush1.xpose.msra.mxu0 0.0
    %743 = vmatprep.subr.mxu0 0.0
    %744 = vmatpush1.xpose.msra.mxu0 0.0
    %745 = vmatprep.subr.mxu0 0.0
    %746 = vmatpush1.xpose.msra.mxu0 0.0
    %747 = vmatprep.subr.mxu0 0.0
    %748 = vmatpush1.xpose.msra.mxu0 0.0
    %749 = vmatprep.subr.mxu0 0.0
    %750 = vmatpush1.xpose.msra.mxu0 0.0
    %751 = vmatprep.subr.mxu0 0.0
    %752 = vmatpush1.xpose.msra.mxu0 0.0
    %753 = vmatprep.subr.mxu0 0.0
    %754 = vmatpush1.xpose.msra.mxu0 0.0
    %755 = vmatprep.subr.mxu0 0.0
    %756 = vmatpush1.xpose.msra.mxu0 0.0
    %757 = vmatprep.subr.mxu0 0.0
    %758 = vmatpush1.xpose.msra.mxu0 0.0
    %759 = vmatprep.subr.mxu0 0.0
    %760 = vmatpush1.xpose.msra.mxu0 0.0
    %761 = vmatprep.subr.mxu0 0.0
    %762 = vmatpush1.xpose.msra.mxu0 0.0
    %763 = vmatprep.subr.mxu0 0.0
    %764 = vmatpush1.xpose.msra.mxu0 0.0
    %765 = vmatprep.subr.mxu0 0.0
    %766 = vmatpush1.xpose.msra.mxu0 0.0
    %767 = vmatprep.subr.mxu0 0.0
    %768 = vmatpush1.xpose.msra.mxu0 %v735
    %769 = vmatprep.subr.mxu0 0.0
    %770 = vmatpush2.xpose.msra.mxu0 0.0
    %771 = vmatprep.subr.mxu0 0.0
    %772 = vmatpush2.xpose.msra.mxu0 0.0
    %773 = vmatprep.subr.mxu0 0.0
    %774 = vmatpush2.xpose.msra.mxu0 0.0
    %775 = vmatprep.subr.mxu0 0.0
    %776 = vmatpush2.xpose.msra.mxu0 0.0
    %777 = vmatprep.subr.mxu0 0.0
    %778 = vmatpush2.xpose.msra.mxu0 0.0
    %779 = vmatprep.subr.mxu0 0.0
    %780 = vmatpush2.xpose.msra.mxu0 0.0
    %781 = vmatprep.subr.mxu0 0.0
    %782 = vmatpush2.xpose.msra.mxu0 0.0
    %783 = vmatprep.subr.mxu0 0.0
    %784 = vmatpush2.xpose.msra.mxu0 0.0
    %785 = vmatprep.subr.mxu0 0.0
    %786 = vmatpush2.xpose.msra.mxu0 0.0
    %787 = vmatprep.subr.mxu0 0.0
    %788 = vmatpush2.xpose.msra.mxu0 0.0
    %789 = vmatprep.subr.mxu0 0.0
    %790 = vmatpush2.xpose.msra.mxu0 0.0
    %791 = vmatprep.subr.mxu0 0.0
    %792 = vmatpush2.xpose.msra.mxu0 0.0
    %793 = vmatprep.subr.mxu0 0.0
    %794 = vmatpush2.xpose.msra.mxu0 0.0
    %795 = vmatprep.subr.mxu0 0.0
    %796 = vmatpush2.xpose.msra.mxu0 0.0
    %797 = vmatprep.subr.mxu0 0.0
    %798 = vmatpush2.xpose.msra.mxu0 0.0
    %799 = vmatprep.subr.mxu0 0.0
    %800 = vmatpush2.xpose.msra.mxu0 0.0
    %801 = vmatprep.mubr.f32.mxu0 0.0
    %802 = vmatmul.mubr.f32.gmra.mxu0 %v733
    %v803 = vpop.f32.mrf.mxu0
    %v804 = vadd.f32 0.0, %v803
    %v805 = vpop.f32.mrf.mxu0
    %806 = vdwg.mxu0
    %807 = vrot.lane.b32.xlu0 %v245, 112
    %v808 = vpop.permute.xlu0 %807
    %809 = vrot.lane.b32.xlu0 %v325, 112
    %v810 = vpop.permute.xlu0 %809
    %v811 = vsel %vm81, %v808, 0
    %v813 = vsel %vm81, %v810, 0
    %815 = vmatprep.subr.mxu0 0.0
    %816 = vmatpush1.xpose.msra.mxu0 0.0
    %817 = vmatprep.subr.mxu0 0.0
    %818 = vmatpush1.xpose.msra.mxu0 0.0
    %819 = vmatprep.subr.mxu0 0.0
    %820 = vmatpush1.xpose.msra.mxu0 0.0
    %821 = vmatprep.subr.mxu0 0.0
    %822 = vmatpush1.xpose.msra.mxu0 0.0
    %823 = vmatprep.subr.mxu0 0.0
    %824 = vmatpush1.xpose.msra.mxu0 0.0
    %825 = vmatprep.subr.mxu0 0.0
    %826 = vmatpush1.xpose.msra.mxu0 0.0
    %827 = vmatprep.subr.mxu0 0.0
    %828 = vmatpush1.xpose.msra.mxu0 0.0
    %829 = vmatprep.subr.mxu0 0.0
    %830 = vmatpush1.xpose.msra.mxu0 0.0
    %831 = vmatprep.subr.mxu0 0.0
    %832 = vmatpush1.xpose.msra.mxu0 0.0
    %833 = vmatprep.subr.mxu0 0.0
    %834 = vmatpush1.xpose.msra.mxu0 0.0
    %835 = vmatprep.subr.mxu0 0.0
    %836 = vmatpush1.xpose.msra.mxu0 0.0
    %837 = vmatprep.subr.mxu0 0.0
    %838 = vmatpush1.xpose.msra.mxu0 0.0
    %839 = vmatprep.subr.mxu0 0.0
    %840 = vmatpush1.xpose.msra.mxu0 0.0
    %841 = vmatprep.subr.mxu0 0.0
    %842 = vmatpush1.xpose.msra.mxu0 0.0
    %843 = vmatprep.subr.mxu0 0.0
    %844 = vmatpush1.xpose.msra.mxu0 0.0
    %845 = vmatprep.subr.mxu0 0.0
    %846 = vmatpush1.xpose.msra.mxu0 %v813
    %847 = vmatprep.subr.mxu0 0.0
    %848 = vmatpush2.xpose.msra.mxu0 0.0
    %849 = vmatprep.subr.mxu0 0.0
    %850 = vmatpush2.xpose.msra.mxu0 0.0
    %851 = vmatprep.subr.mxu0 0.0
    %852 = vmatpush2.xpose.msra.mxu0 0.0
    %853 = vmatprep.subr.mxu0 0.0
    %854 = vmatpush2.xpose.msra.mxu0 0.0
    %855 = vmatprep.subr.mxu0 0.0
    %856 = vmatpush2.xpose.msra.mxu0 0.0
    %857 = vmatprep.subr.mxu0 0.0
    %858 = vmatpush2.xpose.msra.mxu0 0.0
    %859 = vmatprep.subr.mxu0 0.0
    %860 = vmatpush2.xpose.msra.mxu0 0.0
    %861 = vmatprep.subr.mxu0 0.0
    %862 = vmatpush2.xpose.msra.mxu0 0.0
    %863 = vmatprep.subr.mxu0 0.0
    %864 = vmatpush2.xpose.msra.mxu0 0.0
    %865 = vmatprep.subr.mxu0 0.0
    %866 = vmatpush2.xpose.msra.mxu0 0.0
    %867 = vmatprep.subr.mxu0 0.0
    %868 = vmatpush2.xpose.msra.mxu0 0.0
    %869 = vmatprep.subr.mxu0 0.0
    %870 = vmatpush2.xpose.msra.mxu0 0.0
    %871 = vmatprep.subr.mxu0 0.0
    %872 = vmatpush2.xpose.msra.mxu0 0.0
    %873 = vmatprep.subr.mxu0 0.0
    %874 = vmatpush2.xpose.msra.mxu0 0.0
    %875 = vmatprep.subr.mxu0 0.0
    %876 = vmatpush2.xpose.msra.mxu0 0.0
    %877 = vmatprep.subr.mxu0 0.0
    %878 = vmatpush2.xpose.msra.mxu0 0.0
    %879 = vmatprep.mubr.f32.mxu0 0.0
    %880 = vmatmul.mubr.f32.gmra.mxu0 %v811
    %v881 = vpop.f32.mrf.mxu0
    %v882 = vadd.f32 0.0, %v881
    %v883 = vpop.f32.mrf.mxu0
    %884 = vdwg.mxu0
    %v885 = vsel %vm560, %v804, -inf
    %886 = vmax.xlane.f32.xlu0 %v885
    %v887 = vpop.xlane.xlu0 %886
    %v888 = vsel %vm560, %v882, -inf
    %889 = vmax.xlane.f32.xlu0 %v888
    %v890 = vpop.xlane.xlu0 %889
    %v891 = vsub.f32 %v804, %v887
    %v892 = vsub.f32 %v882, %v890
    %v893 = vmul.f32 %v891, 1.442695
    %v894 = vpow.pop %v893
    %v895 = vmul.f32 %v892, 1.442695
    %v896 = vpow.pop %v895
    %v897 = vsel %vm560, %v894, 0.0
    %898 = vadd.xlane.f32.xlu0 %v897
    %v899 = vpop.xlane.xlu0 %898
    %v900 = vsel %vm560, %v896, 0.0
    %901 = vadd.xlane.f32.xlu0 %v900
    %v902 = vpop.xlane.xlu0 %901
    %v903 = vrcp.pop %v899
    %v904 = vrcp.pop %v902
    %v905 = vmul.f32 %v894, %v903
    %v906 = vmul.f32 %v896, %v904
    %908 = vrot.lane.b32.xlu0 %v402, 112
    %v909 = vpop.permute.xlu0 %908
    %v912 = vsel %vm560, %v905, 0
    %914 = vmatprep.subr.mxu0 0.0
    %915 = vmatpush1.msra.mxu0 0.0
    %916 = vmatprep.subr.mxu0 0.0
    %917 = vmatpush1.msra.mxu0 0.0
    %918 = vmatprep.subr.mxu0 0.0
    %919 = vmatpush1.msra.mxu0 0.0
    %920 = vmatprep.subr.mxu0 0.0
    %921 = vmatpush1.msra.mxu0 0.0
    %922 = vmatprep.subr.mxu0 0.0
    %923 = vmatpush1.msra.mxu0 0.0
    %924 = vmatprep.subr.mxu0 0.0
    %925 = vmatpush1.msra.mxu0 0.0
    %926 = vmatprep.subr.mxu0 0.0
    %927 = vmatpush1.msra.mxu0 0.0
    %928 = vmatprep.subr.mxu0 0.0
    %929 = vmatpush1.msra.mxu0 0.0
    %930 = vmatprep.subr.mxu0 0.0
    %931 = vmatpush1.msra.mxu0 0.0
    %932 = vmatprep.subr.mxu0 0.0
    %933 = vmatpush1.msra.mxu0 0.0
    %934 = vmatprep.subr.mxu0 0.0
    %935 = vmatpush1.msra.mxu0 0.0
    %936 = vmatprep.subr.mxu0 0.0
    %937 = vmatpush1.msra.mxu0 0.0
    %938 = vmatprep.subr.mxu0 0.0
    %939 = vmatpush1.msra.mxu0 0.0
    %940 = vmatprep.subr.mxu0 0.0
    %941 = vmatpush1.msra.mxu0 0.0
    %942 = vmatprep.subr.mxu0 0.0
    %943 = vmatpush1.msra.mxu0 0.0
    %944 = vmatprep.subr.mxu0 0.0
    %945 = vmatpush1.msra.mxu0 %v909
    %946 = vmatprep.subr.mxu0 0.0
    %947 = vmatpush2.msra.mxu0 0.0
    %948 = vmatprep.subr.mxu0 0.0
    %949 = vmatpush2.msra.mxu0 0.0
    %950 = vmatprep.subr.mxu0 0.0
    %951 = vmatpush2.msra.mxu0 0.0
    %952 = vmatprep.subr.mxu0 0.0
    %953 = vmatpush2.msra.mxu0 0.0
    %954 = vmatprep.subr.mxu0 0.0
    %955 = vmatpush2.msra.mxu0 0.0
    %956 = vmatprep.subr.mxu0 0.0
    %957 = vmatpush2.msra.mxu0 0.0
    %958 = vmatprep.subr.mxu0 0.0
    %959 = vmatpush2.msra.mxu0 0.0
    %960 = vmatprep.subr.mxu0 0.0
    %961 = vmatpush2.msra.mxu0 0.0
    %962 = vmatprep.subr.mxu0 0.0
    %963 = vmatpush2.msra.mxu0 0.0
    %964 = vmatprep.subr.mxu0 0.0
    %965 = vmatpush2.msra.mxu0 0.0
    %966 = vmatprep.subr.mxu0 0.0
    %967 = vmatpush2.msra.mxu0 0.0
    %968 = vmatprep.subr.mxu0 0.0
    %969 = vmatpush2.msra.mxu0 0.0
    %970 = vmatprep.subr.mxu0 0.0
    %971 = vmatpush2.msra.mxu0 0.0
    %972 = vmatprep.subr.mxu0 0.0
    %973 = vmatpush2.msra.mxu0 0.0
    %974 = vmatprep.subr.mxu0 0.0
    %975 = vmatpush2.msra.mxu0 0.0
    %976 = vmatprep.subr.mxu0 0.0
    %977 = vmatpush2.msra.mxu0 0.0
    %978 = vmatprep.mubr.f32.mxu0 0.0
    %979 = vmatmul.mubr.f32.gmra.mxu0 %v912
    %v980 = vpop.f32.mrf.mxu0
    %v981 = vadd.f32 0.0, %v980
    %v982 = vpop.f32.mrf.mxu0
    %983 = vdwg.mxu0
    %985 = vrot.lane.b32.xlu0 %v405, 112
    %v986 = vpop.permute.xlu0 %985
    %v989 = vsel %vm560, %v906, 0
    %991 = vmatprep.subr.mxu0 0.0
    %992 = vmatpush1.msra.mxu0 0.0
    %993 = vmatprep.subr.mxu0 0.0
    %994 = vmatpush1.msra.mxu0 0.0
    %995 = vmatprep.subr.mxu0 0.0
    %996 = vmatpush1.msra.mxu0 0.0
    %997 = vmatprep.subr.mxu0 0.0
    %998 = vmatpush1.msra.mxu0 0.0
    %999 = vmatprep.subr.mxu0 0.0
    %1000 = vmatpush1.msra.mxu0 0.0
    %1001 = vmatprep.subr.mxu0 0.0
    %1002 = vmatpush1.msra.mxu0 0.0
    %1003 = vmatprep.subr.mxu0 0.0
    %1004 = vmatpush1.msra.mxu0 0.0
    %1005 = vmatprep.subr.mxu0 0.0
    %1006 = vmatpush1.msra.mxu0 0.0
    %1007 = vmatprep.subr.mxu0 0.0
    %1008 = vmatpush1.msra.mxu0 0.0
    %1009 = vmatprep.subr.mxu0 0.0
    %1010 = vmatpush1.msra.mxu0 0.0
    %1011 = vmatprep.subr.mxu0 0.0
    %1012 = vmatpush1.msra.mxu0 0.0
    %1013 = vmatprep.subr.mxu0 0.0
    %1014 = vmatpush1.msra.mxu0 0.0
    %1015 = vmatprep.subr.mxu0 0.0
    %1016 = vmatpush1.msra.mxu0 0.0
    %1017 = vmatprep.subr.mxu0 0.0
    %1018 = vmatpush1.msra.mxu0 0.0
    %1019 = vmatprep.subr.mxu0 0.0
    %1020 = vmatpush1.msra.mxu0 0.0
    %1021 = vmatprep.subr.mxu0 0.0
    %1022 = vmatpush1.msra.mxu0 %v986
    %1023 = vmatprep.subr.mxu0 0.0
    %1024 = vmatpush2.msra.mxu0 0.0
    %1025 = vmatprep.subr.mxu0 0.0
    %1026 = vmatpush2.msra.mxu0 0.0
    %1027 = vmatprep.subr.mxu0 0.0
    %1028 = vmatpush2.msra.mxu0 0.0
    %1029 = vmatprep.subr.mxu0 0.0
    %1030 = vmatpush2.msra.mxu0 0.0
    %1031 = vmatprep.subr.mxu0 0.0
    %1032 = vmatpush2.msra.mxu0 0.0
    %1033 = vmatprep.subr.mxu0 0.0
    %1034 = vmatpush2.msra.mxu0 0.0
    %1035 = vmatprep.subr.mxu0 0.0
    %1036 = vmatpush2.msra.mxu0 0.0
    %1037 = vmatprep.subr.mxu0 0.0
    %1038 = vmatpush2.msra.mxu0 0.0
    %1039 = vmatprep.subr.mxu0 0.0
    %1040 = vmatpush2.msra.mxu0 0.0
    %1041 = vmatprep.subr.mxu0 0.0
    %1042 = vmatpush2.msra.mxu0 0.0
    %1043 = vmatprep.subr.mxu0 0.0
    %1044 = vmatpush2.msra.mxu0 0.0
    %1045 = vmatprep.subr.mxu0 0.0
    %1046 = vmatpush2.msra.mxu0 0.0
    %1047 = vmatprep.subr.mxu0 0.0
    %1048 = vmatpush2.msra.mxu0 0.0
    %1049 = vmatprep.subr.mxu0 0.0
    %1050 = vmatpush2.msra.mxu0 0.0
    %1051 = vmatprep.subr.mxu0 0.0
    %1052 = vmatpush2.msra.mxu0 0.0
    %1053 = vmatprep.subr.mxu0 0.0
    %1054 = vmatpush2.msra.mxu0 0.0
    %1055 = vmatprep.mubr.f32.mxu0 0.0
    %1056 = vmatmul.mubr.f32.gmra.mxu0 %v989
    %v1057 = vpop.f32.mrf.mxu0
    %v1058 = vadd.f32 0.0, %v1057
    %v1059 = vpop.f32.mrf.mxu0
    %1060 = vdwg.mxu0
    %1061 = vrot.lane.b32.xlu0 %v242, 96
    %v1062 = vpop.permute.xlu0 %1061
    %1063 = vrot.lane.b32.xlu0 %v322, 96
    %v1064 = vpop.permute.xlu0 %1063
    %v1065 = vsel %vm81, %v1062, 0
    %v1067 = vsel %vm81, %v1064, 0
    %1069 = vmatprep.subr.mxu0 0.0
    %1070 = vmatpush1.xpose.msra.mxu0 0.0
    %1071 = vmatprep.subr.mxu0 0.0
    %1072 = vmatpush1.xpose.msra.mxu0 0.0
    %1073 = vmatprep.subr.mxu0 0.0
    %1074 = vmatpush1.xpose.msra.mxu0 0.0
    %1075 = vmatprep.subr.mxu0 0.0
    %1076 = vmatpush1.xpose.msra.mxu0 0.0
    %1077 = vmatprep.subr.mxu0 0.0
    %1078 = vmatpush1.xpose.msra.mxu0 0.0
    %1079 = vmatprep.subr.mxu0 0.0
    %1080 = vmatpush1.xpose.msra.mxu0 0.0
    %1081 = vmatprep.subr.mxu0 0.0
    %1082 = vmatpush1.xpose.msra.mxu0 0.0
    %1083 = vmatprep.subr.mxu0 0.0
    %1084 = vmatpush1.xpose.msra.mxu0 0.0
    %1085 = vmatprep.subr.mxu0 0.0
    %1086 = vmatpush1.xpose.msra.mxu0 0.0
    %1087 = vmatprep.subr.mxu0 0.0
    %1088 = vmatpush1.xpose.msra.mxu0 0.0
    %1089 = vmatprep.subr.mxu0 0.0
    %1090 = vmatpush1.xpose.msra.mxu0 0.0
    %1091 = vmatprep.subr.mxu0 0.0
    %1092 = vmatpush1.xpose.msra.mxu0 0.0
    %1093 = vmatprep.subr.mxu0 0.0
    %1094 = vmatpush1.xpose.msra.mxu0 0.0
    %1095 = vmatprep.subr.mxu0 0.0
    %1096 = vmatpush1.xpose.msra.mxu0 0.0
    %1097 = vmatprep.subr.mxu0 0.0
    %1098 = vmatpush1.xpose.msra.mxu0 0.0
    %1099 = vmatprep.subr.mxu0 0.0
    %1100 = vmatpush1.xpose.msra.mxu0 %v1067
    %1101 = vmatprep.subr.mxu0 0.0
    %1102 = vmatpush2.xpose.msra.mxu0 0.0
    %1103 = vmatprep.subr.mxu0 0.0
    %1104 = vmatpush2.xpose.msra.mxu0 0.0
    %1105 = vmatprep.subr.mxu0 0.0
    %1106 = vmatpush2.xpose.msra.mxu0 0.0
    %1107 = vmatprep.subr.mxu0 0.0
    %1108 = vmatpush2.xpose.msra.mxu0 0.0
    %1109 = vmatprep.subr.mxu0 0.0
    %1110 = vmatpush2.xpose.msra.mxu0 0.0
    %1111 = vmatprep.subr.mxu0 0.0
    %1112 = vmatpush2.xpose.msra.mxu0 0.0
    %1113 = vmatprep.subr.mxu0 0.0
    %1114 = vmatpush2.xpose.msra.mxu0 0.0
    %1115 = vmatprep.subr.mxu0 0.0
    %1116 = vmatpush2.xpose.msra.mxu0 0.0
    %1117 = vmatprep.subr.mxu0 0.0
    %1118 = vmatpush2.xpose.msra.mxu0 0.0
    %1119 = vmatprep.subr.mxu0 0.0
    %1120 = vmatpush2.xpose.msra.mxu0 0.0
    %1121 = vmatprep.subr.mxu0 0.0
    %1122 = vmatpush2.xpose.msra.mxu0 0.0
    %1123 = vmatprep.subr.mxu0 0.0
    %1124 = vmatpush2.xpose.msra.mxu0 0.0
    %1125 = vmatprep.subr.mxu0 0.0
    %1126 = vmatpush2.xpose.msra.mxu0 0.0
    %1127 = vmatprep.subr.mxu0 0.0
    %1128 = vmatpush2.xpose.msra.mxu0 0.0
    %1129 = vmatprep.subr.mxu0 0.0
    %1130 = vmatpush2.xpose.msra.mxu0 0.0
    %1131 = vmatprep.subr.mxu0 0.0
    %1132 = vmatpush2.xpose.msra.mxu0 0.0
    %1133 = vmatprep.mubr.f32.mxu0 0.0
    %1134 = vmatmul.mubr.f32.gmra.mxu0 %v1065
    %v1135 = vpop.f32.mrf.mxu0
    %v1136 = vadd.f32 0.0, %v1135
    %v1137 = vpop.f32.mrf.mxu0
    %1138 = vdwg.mxu0
    %1139 = vrot.lane.b32.xlu0 %v245, 96
    %v1140 = vpop.permute.xlu0 %1139
    %1141 = vrot.lane.b32.xlu0 %v325, 96
    %v1142 = vpop.permute.xlu0 %1141
    %v1143 = vsel %vm81, %v1140, 0
    %v1145 = vsel %vm81, %v1142, 0
    %1147 = vmatprep.subr.mxu0 0.0
    %1148 = vmatpush1.xpose.msra.mxu0 0.0
    %1149 = vmatprep.subr.mxu0 0.0
    %1150 = vmatpush1.xpose.msra.mxu0 0.0
    %1151 = vmatprep.subr.mxu0 0.0
    %1152 = vmatpush1.xpose.msra.mxu0 0.0
    %1153 = vmatprep.subr.mxu0 0.0
    %1154 = vmatpush1.xpose.msra.mxu0 0.0
    %1155 = vmatprep.subr.mxu0 0.0
    %1156 = vmatpush1.xpose.msra.mxu0 0.0
    %1157 = vmatprep.subr.mxu0 0.0
    %1158 = vmatpush1.xpose.msra.mxu0 0.0
    %1159 = vmatprep.subr.mxu0 0.0
    %1160 = vmatpush1.xpose.msra.mxu0 0.0
    %1161 = vmatprep.subr.mxu0 0.0
    %1162 = vmatpush1.xpose.msra.mxu0 0.0
    %1163 = vmatprep.subr.mxu0 0.0
    %1164 = vmatpush1.xpose.msra.mxu0 0.0
    %1165 = vmatprep.subr.mxu0 0.0
    %1166 = vmatpush1.xpose.msra.mxu0 0.0
    %1167 = vmatprep.subr.mxu0 0.0
    %1168 = vmatpush1.xpose.msra.mxu0 0.0
    %1169 = vmatprep.subr.mxu0 0.0
    %1170 = vmatpush1.xpose.msra.mxu0 0.0
    %1171 = vmatprep.subr.mxu0 0.0
    %1172 = vmatpush1.xpose.msra.mxu0 0.0
    %1173 = vmatprep.subr.mxu0 0.0
    %1174 = vmatpush1.xpose.msra.mxu0 0.0
    %1175 = vmatprep.subr.mxu0 0.0
    %1176 = vmatpush1.xpose.msra.mxu0 0.0
    %1177 = vmatprep.subr.mxu0 0.0
    %1178 = vmatpush1.xpose.msra.mxu0 %v1145
    %1179 = vmatprep.subr.mxu0 0.0
    %1180 = vmatpush2.xpose.msra.mxu0 0.0
    %1181 = vmatprep.subr.mxu0 0.0
    %1182 = vmatpush2.xpose.msra.mxu0 0.0
    %1183 = vmatprep.subr.mxu0 0.0
    %1184 = vmatpush2.xpose.msra.mxu0 0.0
    %1185 = vmatprep.subr.mxu0 0.0
    %1186 = vmatpush2.xpose.msra.mxu0 0.0
    %1187 = vmatprep.subr.mxu0 0.0
    %1188 = vmatpush2.xpose.msra.mxu0 0.0
    %1189 = vmatprep.subr.mxu0 0.0
    %1190 = vmatpush2.xpose.msra.mxu0 0.0
    %1191 = vmatprep.subr.mxu0 0.0
    %1192 = vmatpush2.xpose.msra.mxu0 0.0
    %1193 = vmatprep.subr.mxu0 0.0
    %1194 = vmatpush2.xpose.msra.mxu0 0.0
    %1195 = vmatprep.subr.mxu0 0.0
    %1196 = vmatpush2.xpose.msra.mxu0 0.0
    %1197 = vmatprep.subr.mxu0 0.0
    %1198 = vmatpush2.xpose.msra.mxu0 0.0
    %1199 = vmatprep.subr.mxu0 0.0
    %1200 = vmatpush2.xpose.msra.mxu0 0.0
    %1201 = vmatprep.subr.mxu0 0.0
    %1202 = vmatpush2.xpose.msra.mxu0 0.0
    %1203 = vmatprep.subr.mxu0 0.0
    %1204 = vmatpush2.xpose.msra.mxu0 0.0
    %1205 = vmatprep.subr.mxu0 0.0
    %1206 = vmatpush2.xpose.msra.mxu0 0.0
    %1207 = vmatprep.subr.mxu0 0.0
    %1208 = vmatpush2.xpose.msra.mxu0 0.0
    %1209 = vmatprep.subr.mxu0 0.0
    %1210 = vmatpush2.xpose.msra.mxu0 0.0
    %1211 = vmatprep.mubr.f32.mxu0 0.0
    %1212 = vmatmul.mubr.f32.gmra.mxu0 %v1143
    %v1213 = vpop.f32.mrf.mxu0
    %v1214 = vadd.f32 0.0, %v1213
    %v1215 = vpop.f32.mrf.mxu0
    %1216 = vdwg.mxu0
    %v1217 = vsel %vm560, %v1136, -inf
    %1218 = vmax.xlane.f32.xlu0 %v1217
    %v1219 = vpop.xlane.xlu0 %1218
    %v1220 = vsel %vm560, %v1214, -inf
    %1221 = vmax.xlane.f32.xlu0 %v1220
    %v1222 = vpop.xlane.xlu0 %1221
    %v1223 = vsub.f32 %v1136, %v1219
    %v1224 = vsub.f32 %v1214, %v1222
    %v1225 = vmul.f32 %v1223, 1.442695
    %v1226 = vpow.pop %v1225
    %v1227 = vmul.f32 %v1224, 1.442695
    %v1228 = vpow.pop %v1227
    %v1229 = vsel %vm560, %v1226, 0.0
    %1230 = vadd.xlane.f32.xlu0 %v1229
    %v1231 = vpop.xlane.xlu0 %1230
    %v1232 = vsel %vm560, %v1228, 0.0
    %1233 = vadd.xlane.f32.xlu0 %v1232
    %v1234 = vpop.xlane.xlu0 %1233
    %v1235 = vrcp.pop %v1231
    %v1236 = vrcp.pop %v1234
    %v1237 = vmul.f32 %v1226, %v1235
    %v1238 = vmul.f32 %v1228, %v1236
    %1239 = vrot.lane.b32.xlu0 %v402, 96
    %v1240 = vpop.permute.xlu0 %1239
    %v1243 = vsel %vm560, %v1237, 0
    %1245 = vmatprep.subr.mxu0 0.0
    %1246 = vmatpush1.msra.mxu0 0.0
    %1247 = vmatprep.subr.mxu0 0.0
    %1248 = vmatpush1.msra.mxu0 0.0
    %1249 = vmatprep.subr.mxu0 0.0
    %1250 = vmatpush1.msra.mxu0 0.0
    %1251 = vmatprep.subr.mxu0 0.0
    %1252 = vmatpush1.msra.mxu0 0.0
    %1253 = vmatprep.subr.mxu0 0.0
    %1254 = vmatpush1.msra.mxu0 0.0
    %1255 = vmatprep.subr.mxu0 0.0
    %1256 = vmatpush1.msra.mxu0 0.0
    %1257 = vmatprep.subr.mxu0 0.0
    %1258 = vmatpush1.msra.mxu0 0.0
    %1259 = vmatprep.subr.mxu0 0.0
    %1260 = vmatpush1.msra.mxu0 0.0
    %1261 = vmatprep.subr.mxu0 0.0
    %1262 = vmatpush1.msra.mxu0 0.0
    %1263 = vmatprep.subr.mxu0 0.0
    %1264 = vmatpush1.msra.mxu0 0.0
    %1265 = vmatprep.subr.mxu0 0.0
    %1266 = vmatpush1.msra.mxu0 0.0
    %1267 = vmatprep.subr.mxu0 0.0
    %1268 = vmatpush1.msra.mxu0 0.0
    %1269 = vmatprep.subr.mxu0 0.0
    %1270 = vmatpush1.msra.mxu0 0.0
    %1271 = vmatprep.subr.mxu0 0.0
    %1272 = vmatpush1.msra.mxu0 0.0
    %1273 = vmatprep.subr.mxu0 0.0
    %1274 = vmatpush1.msra.mxu0 0.0
    %1275 = vmatprep.subr.mxu0 0.0
    %1276 = vmatpush1.msra.mxu0 %v1240
    %1277 = vmatprep.subr.mxu0 0.0
    %1278 = vmatpush2.msra.mxu0 0.0
    %1279 = vmatprep.subr.mxu0 0.0
    %1280 = vmatpush2.msra.mxu0 0.0
    %1281 = vmatprep.subr.mxu0 0.0
    %1282 = vmatpush2.msra.mxu0 0.0
    %1283 = vmatprep.subr.mxu0 0.0
    %1284 = vmatpush2.msra.mxu0 0.0
    %1285 = vmatprep.subr.mxu0 0.0
    %1286 = vmatpush2.msra.mxu0 0.0
    %1287 = vmatprep.subr.mxu0 0.0
    %1288 = vmatpush2.msra.mxu0 0.0
    %1289 = vmatprep.subr.mxu0 0.0
    %1290 = vmatpush2.msra.mxu0 0.0
    %1291 = vmatprep.subr.mxu0 0.0
    %1292 = vmatpush2.msra.mxu0 0.0
    %1293 = vmatprep.subr.mxu0 0.0
    %1294 = vmatpush2.msra.mxu0 0.0
    %1295 = vmatprep.subr.mxu0 0.0
    %1296 = vmatpush2.msra.mxu0 0.0
    %1297 = vmatprep.subr.mxu0 0.0
    %1298 = vmatpush2.msra.mxu0 0.0
    %1299 = vmatprep.subr.mxu0 0.0
    %1300 = vmatpush2.msra.mxu0 0.0
    %1301 = vmatprep.subr.mxu0 0.0
    %1302 = vmatpush2.msra.mxu0 0.0
    %1303 = vmatprep.subr.mxu0 0.0
    %1304 = vmatpush2.msra.mxu0 0.0
    %1305 = vmatprep.subr.mxu0 0.0
    %1306 = vmatpush2.msra.mxu0 0.0
    %1307 = vmatprep.subr.mxu0 0.0
    %1308 = vmatpush2.msra.mxu0 0.0
    %1309 = vmatprep.mubr.f32.mxu0 0.0
    %1310 = vmatmul.mubr.f32.gmra.mxu0 %v1243
    %v1311 = vpop.f32.mrf.mxu0
    %v1312 = vadd.f32 0.0, %v1311
    %v1313 = vpop.f32.mrf.mxu0
    %1314 = vdwg.mxu0
    %1315 = vrot.lane.b32.xlu0 %v405, 96
    %v1316 = vpop.permute.xlu0 %1315
    %v1319 = vsel %vm560, %v1238, 0
    %1321 = vmatprep.subr.mxu0 0.0
    %1322 = vmatpush1.msra.mxu0 0.0
    %1323 = vmatprep.subr.mxu0 0.0
    %1324 = vmatpush1.msra.mxu0 0.0
    %1325 = vmatprep.subr.mxu0 0.0
    %1326 = vmatpush1.msra.mxu0 0.0
    %1327 = vmatprep.subr.mxu0 0.0
    %1328 = vmatpush1.msra.mxu0 0.0
    %1329 = vmatprep.subr.mxu0 0.0
    %1330 = vmatpush1.msra.mxu0 0.0
    %1331 = vmatprep.subr.mxu0 0.0
    %1332 = vmatpush1.msra.mxu0 0.0
    %1333 = vmatprep.subr.mxu0 0.0
    %1334 = vmatpush1.msra.mxu0 0.0
    %1335 = vmatprep.subr.mxu0 0.0
    %1336 = vmatpush1.msra.mxu0 0.0
    %1337 = vmatprep.subr.mxu0 0.0
    %1338 = vmatpush1.msra.mxu0 0.0
    %1339 = vmatprep.subr.mxu0 0.0
    %1340 = vmatpush1.msra.mxu0 0.0
    %1341 = vmatprep.subr.mxu0 0.0
    %1342 = vmatpush1.msra.mxu0 0.0
    %1343 = vmatprep.subr.mxu0 0.0
    %1344 = vmatpush1.msra.mxu0 0.0
    %1345 = vmatprep.subr.mxu0 0.0
    %1346 = vmatpush1.msra.mxu0 0.0
    %1347 = vmatprep.subr.mxu0 0.0
    %1348 = vmatpush1.msra.mxu0 0.0
    %1349 = vmatprep.subr.mxu0 0.0
    %1350 = vmatpush1.msra.mxu0 0.0
    %1351 = vmatprep.subr.mxu0 0.0
    %1352 = vmatpush1.msra.mxu0 %v1316
    %1353 = vmatprep.subr.mxu0 0.0
    %1354 = vmatpush2.msra.mxu0 0.0
    %1355 = vmatprep.subr.mxu0 0.0
    %1356 = vmatpush2.msra.mxu0 0.0
    %1357 = vmatprep.subr.mxu0 0.0
    %1358 = vmatpush2.msra.mxu0 0.0
    %1359 = vmatprep.subr.mxu0 0.0
    %1360 = vmatpush2.msra.mxu0 0.0
    %1361 = vmatprep.subr.mxu0 0.0
    %1362 = vmatpush2.msra.mxu0 0.0
    %1363 = vmatprep.subr.mxu0 0.0
    %1364 = vmatpush2.msra.mxu0 0.0
    %1365 = vmatprep.subr.mxu0 0.0
    %1366 = vmatpush2.msra.mxu0 0.0
    %1367 = vmatprep.subr.mxu0 0.0
    %1368 = vmatpush2.msra.mxu0 0.0
    %1369 = vmatprep.subr.mxu0 0.0
    %1370 = vmatpush2.msra.mxu0 0.0
    %1371 = vmatprep.subr.mxu0 0.0
    %1372 = vmatpush2.msra.mxu0 0.0
    %1373 = vmatprep.subr.mxu0 0.0
    %1374 = vmatpush2.msra.mxu0 0.0
    %1375 = vmatprep.subr.mxu0 0.0
    %1376 = vmatpush2.msra.mxu0 0.0
    %1377 = vmatprep.subr.mxu0 0.0
    %1378 = vmatpush2.msra.mxu0 0.0
    %1379 = vmatprep.subr.mxu0 0.0
    %1380 = vmatpush2.msra.mxu0 0.0
    %1381 = vmatprep.subr.mxu0 0.0
    %1382 = vmatpush2.msra.mxu0 0.0
    %1383 = vmatprep.subr.mxu0 0.0
    %1384 = vmatpush2.msra.mxu0 0.0
    %1385 = vmatprep.mubr.f32.mxu0 0.0
    %1386 = vmatmul.mubr.f32.gmra.mxu0 %v1319
    %v1387 = vpop.f32.mrf.mxu0
    %v1388 = vadd.f32 0.0, %v1387
    %v1389 = vpop.f32.mrf.mxu0
    %1390 = vdwg.mxu0
    %1391 = vrot.lane.b32.xlu0 %v242, 80
    %v1392 = vpop.permute.xlu0 %1391
    %1393 = vrot.lane.b32.xlu0 %v322, 80
    %v1394 = vpop.permute.xlu0 %1393
    %v1395 = vsel %vm81, %v1392, 0
    %v1397 = vsel %vm81, %v1394, 0
    %1399 = vmatprep.subr.mxu0 0.0
    %1400 = vmatpush1.xpose.msra.mxu0 0.0
    %1401 = vmatprep.subr.mxu0 0.0
    %1402 = vmatpush1.xpose.msra.mxu0 0.0
    %1403 = vmatprep.subr.mxu0 0.0
    %1404 = vmatpush1.xpose.msra.mxu0 0.0
    %1405 = vmatprep.subr.mxu0 0.0
    %1406 = vmatpush1.xpose.msra.mxu0 0.0
    %1407 = vmatprep.subr.mxu0 0.0
    %1408 = vmatpush1.xpose.msra.mxu0 0.0
    %1409 = vmatprep.subr.mxu0 0.0
    %1410 = vmatpush1.xpose.msra.mxu0 0.0
    %1411 = vmatprep.subr.mxu0 0.0
    %1412 = vmatpush1.xpose.msra.mxu0 0.0
    %1413 = vmatprep.subr.mxu0 0.0
    %1414 = vmatpush1.xpose.msra.mxu0 0.0
    %1415 = vmatprep.subr.mxu0 0.0
    %1416 = vmatpush1.xpose.msra.mxu0 0.0
    %1417 = vmatprep.subr.mxu0 0.0
    %1418 = vmatpush1.xpose.msra.mxu0 0.0
    %1419 = vmatprep.subr.mxu0 0.0
    %1420 = vmatpush1.xpose.msra.mxu0 0.0
    %1421 = vmatprep.subr.mxu0 0.0
    %1422 = vmatpush1.xpose.msra.mxu0 0.0
    %1423 = vmatprep.subr.mxu0 0.0
    %1424 = vmatpush1.xpose.msra.mxu0 0.0
    %1425 = vmatprep.subr.mxu0 0.0
    %1426 = vmatpush1.xpose.msra.mxu0 0.0
    %1427 = vmatprep.subr.mxu0 0.0
    %1428 = vmatpush1.xpose.msra.mxu0 0.0
    %1429 = vmatprep.subr.mxu0 0.0
    %1430 = vmatpush1.xpose.msra.mxu0 %v1397
    %1431 = vmatprep.subr.mxu0 0.0
    %1432 = vmatpush2.xpose.msra.mxu0 0.0
    %1433 = vmatprep.subr.mxu0 0.0
    %1434 = vmatpush2.xpose.msra.mxu0 0.0
    %1435 = vmatprep.subr.mxu0 0.0
    %1436 = vmatpush2.xpose.msra.mxu0 0.0
    %1437 = vmatprep.subr.mxu0 0.0
    %1438 = vmatpush2.xpose.msra.mxu0 0.0
    %1439 = vmatprep.subr.mxu0 0.0
    %1440 = vmatpush2.xpose.msra.mxu0 0.0
    %1441 = vmatprep.subr.mxu0 0.0
    %1442 = vmatpush2.xpose.msra.mxu0 0.0
    %1443 = vmatprep.subr.mxu0 0.0
    %1444 = vmatpush2.xpose.msra.mxu0 0.0
    %1445 = vmatprep.subr.mxu0 0.0
    %1446 = vmatpush2.xpose.msra.mxu0 0.0
    %1447 = vmatprep.subr.mxu0 0.0
    %1448 = vmatpush2.xpose.msra.mxu0 0.0
    %1449 = vmatprep.subr.mxu0 0.0
    %1450 = vmatpush2.xpose.msra.mxu0 0.0
    %1451 = vmatprep.subr.mxu0 0.0
    %1452 = vmatpush2.xpose.msra.mxu0 0.0
    %1453 = vmatprep.subr.mxu0 0.0
    %1454 = vmatpush2.xpose.msra.mxu0 0.0
    %1455 = vmatprep.subr.mxu0 0.0
    %1456 = vmatpush2.xpose.msra.mxu0 0.0
    %1457 = vmatprep.subr.mxu0 0.0
    %1458 = vmatpush2.xpose.msra.mxu0 0.0
    %1459 = vmatprep.subr.mxu0 0.0
    %1460 = vmatpush2.xpose.msra.mxu0 0.0
    %1461 = vmatprep.subr.mxu0 0.0
    %1462 = vmatpush2.xpose.msra.mxu0 0.0
    %1463 = vmatprep.mubr.f32.mxu0 0.0
    %1464 = vmatmul.mubr.f32.gmra.mxu0 %v1395
    %v1465 = vpop.f32.mrf.mxu0
    %v1466 = vadd.f32 0.0, %v1465
    %v1467 = vpop.f32.mrf.mxu0
    %1468 = vdwg.mxu0
    %1469 = vrot.lane.b32.xlu0 %v245, 80
    %v1470 = vpop.permute.xlu0 %1469
    %1471 = vrot.lane.b32.xlu0 %v325, 80
    %v1472 = vpop.permute.xlu0 %1471
    %v1473 = vsel %vm81, %v1470, 0
    %v1475 = vsel %vm81, %v1472, 0
    %1477 = vmatprep.subr.mxu0 0.0
    %1478 = vmatpush1.xpose.msra.mxu0 0.0
    %1479 = vmatprep.subr.mxu0 0.0
    %1480 = vmatpush1.xpose.msra.mxu0 0.0
    %1481 = vmatprep.subr.mxu0 0.0
    %1482 = vmatpush1.xpose.msra.mxu0 0.0
    %1483 = vmatprep.subr.mxu0 0.0
    %1484 = vmatpush1.xpose.msra.mxu0 0.0
    %1485 = vmatprep.subr.mxu0 0.0
    %1486 = vmatpush1.xpose.msra.mxu0 0.0
    %1487 = vmatprep.subr.mxu0 0.0
    %1488 = vmatpush1.xpose.msra.mxu0 0.0
    %1489 = vmatprep.subr.mxu0 0.0
    %1490 = vmatpush1.xpose.msra.mxu0 0.0
    %1491 = vmatprep.subr.mxu0 0.0
    %1492 = vmatpush1.xpose.msra.mxu0 0.0
    %1493 = vmatprep.subr.mxu0 0.0
    %1494 = vmatpush1.xpose.msra.mxu0 0.0
    %1495 = vmatprep.subr.mxu0 0.0
    %1496 = vmatpush1.xpose.msra.mxu0 0.0
    %1497 = vmatprep.subr.mxu0 0.0
    %1498 = vmatpush1.xpose.msra.mxu0 0.0
    %1499 = vmatprep.subr.mxu0 0.0
    %1500 = vmatpush1.xpose.msra.mxu0 0.0
    %1501 = vmatprep.subr.mxu0 0.0
    %1502 = vmatpush1.xpose.msra.mxu0 0.0
    %1503 = vmatprep.subr.mxu0 0.0
    %1504 = vmatpush1.xpose.msra.mxu0 0.0
    %1505 = vmatprep.subr.mxu0 0.0
    %1506 = vmatpush1.xpose.msra.mxu0 0.0
    %1507 = vmatprep.subr.mxu0 0.0
    %1508 = vmatpush1.xpose.msra.mxu0 %v1475
    %1509 = vmatprep.subr.mxu0 0.0
    %1510 = vmatpush2.xpose.msra.mxu0 0.0
    %1511 = vmatprep.subr.mxu0 0.0
    %1512 = vmatpush2.xpose.msra.mxu0 0.0
    %1513 = vmatprep.subr.mxu0 0.0
    %1514 = vmatpush2.xpose.msra.mxu0 0.0
    %1515 = vmatprep.subr.mxu0 0.0
    %1516 = vmatpush2.xpose.msra.mxu0 0.0
    %1517 = vmatprep.subr.mxu0 0.0
    %1518 = vmatpush2.xpose.msra.mxu0 0.0
    %1519 = vmatprep.subr.mxu0 0.0
    %1520 = vmatpush2.xpose.msra.mxu0 0.0
    %1521 = vmatprep.subr.mxu0 0.0
    %1522 = vmatpush2.xpose.msra.mxu0 0.0
    %1523 = vmatprep.subr.mxu0 0.0
    %1524 = vmatpush2.xpose.msra.mxu0 0.0
    %1525 = vmatprep.subr.mxu0 0.0
    %1526 = vmatpush2.xpose.msra.mxu0 0.0
    %1527 = vmatprep.subr.mxu0 0.0
    %1528 = vmatpush2.xpose.msra.mxu0 0.0
    %1529 = vmatprep.subr.mxu0 0.0
    %1530 = vmatpush2.xpose.msra.mxu0 0.0
    %1531 = vmatprep.subr.mxu0 0.0
    %1532 = vmatpush2.xpose.msra.mxu0 0.0
    %1533 = vmatprep.subr.mxu0 0.0
    %1534 = vmatpush2.xpose.msra.mxu0 0.0
    %1535 = vmatprep.subr.mxu0 0.0
    %1536 = vmatpush2.xpose.msra.mxu0 0.0
    %1537 = vmatprep.subr.mxu0 0.0
    %1538 = vmatpush2.xpose.msra.mxu0 0.0
    %1539 = vmatprep.subr.mxu0 0.0
    %1540 = vmatpush2.xpose.msra.mxu0 0.0
    %1541 = vmatprep.mubr.f32.mxu0 0.0
    %1542 = vmatmul.mubr.f32.gmra.mxu0 %v1473
    %v1543 = vpop.f32.mrf.mxu0
    %v1544 = vadd.f32 0.0, %v1543
    %v1545 = vpop.f32.mrf.mxu0
    %1546 = vdwg.mxu0
    %v1547 = vsel %vm560, %v1466, -inf
    %1548 = vmax.xlane.f32.xlu0 %v1547
    %v1549 = vpop.xlane.xlu0 %1548
    %v1550 = vsel %vm560, %v1544, -inf
    %1551 = vmax.xlane.f32.xlu0 %v1550
    %v1552 = vpop.xlane.xlu0 %1551
    %v1553 = vsub.f32 %v1466, %v1549
    %v1554 = vsub.f32 %v1544, %v1552
    %v1555 = vmul.f32 %v1553, 1.442695
    %v1556 = vpow.pop %v1555
    %v1557 = vmul.f32 %v1554, 1.442695
    %v1558 = vpow.pop %v1557
    %v1559 = vsel %vm560, %v1556, 0.0
    %1560 = vadd.xlane.f32.xlu0 %v1559
    %v1561 = vpop.xlane.xlu0 %1560
    %v1562 = vsel %vm560, %v1558, 0.0
    %1563 = vadd.xlane.f32.xlu0 %v1562
    %v1564 = vpop.xlane.xlu0 %1563
    %v1565 = vrcp.pop %v1561
    %v1566 = vrcp.pop %v1564
    %v1567 = vmul.f32 %v1556, %v1565
    %v1568 = vmul.f32 %v1558, %v1566
    %1569 = vrot.lane.b32.xlu0 %v402, 80
    %v1570 = vpop.permute.xlu0 %1569
    %v1573 = vsel %vm560, %v1567, 0
    %1575 = vmatprep.subr.mxu0 0.0
    %1576 = vmatpush1.msra.mxu0 0.0
    %1577 = vmatprep.subr.mxu0 0.0
    %1578 = vmatpush1.msra.mxu0 0.0
    %1579 = vmatprep.subr.mxu0 0.0
    %1580 = vmatpush1.msra.mxu0 0.0
    %1581 = vmatprep.subr.mxu0 0.0
    %1582 = vmatpush1.msra.mxu0 0.0
    %1583 = vmatprep.subr.mxu0 0.0
    %1584 = vmatpush1.msra.mxu0 0.0
    %1585 = vmatprep.subr.mxu0 0.0
    %1586 = vmatpush1.msra.mxu0 0.0
    %1587 = vmatprep.subr.mxu0 0.0
    %1588 = vmatpush1.msra.mxu0 0.0
    %1589 = vmatprep.subr.mxu0 0.0
    %1590 = vmatpush1.msra.mxu0 0.0
    %1591 = vmatprep.subr.mxu0 0.0
    %1592 = vmatpush1.msra.mxu0 0.0
    %1593 = vmatprep.subr.mxu0 0.0
    %1594 = vmatpush1.msra.mxu0 0.0
    %1595 = vmatprep.subr.mxu0 0.0
    %1596 = vmatpush1.msra.mxu0 0.0
    %1597 = vmatprep.subr.mxu0 0.0
    %1598 = vmatpush1.msra.mxu0 0.0
    %1599 = vmatprep.subr.mxu0 0.0
    %1600 = vmatpush1.msra.mxu0 0.0
    %1601 = vmatprep.subr.mxu0 0.0
    %1602 = vmatpush1.msra.mxu0 0.0
    %1603 = vmatprep.subr.mxu0 0.0
    %1604 = vmatpush1.msra.mxu0 0.0
    %1605 = vmatprep.subr.mxu0 0.0
    %1606 = vmatpush1.msra.mxu0 %v1570
    %1607 = vmatprep.subr.mxu0 0.0
    %1608 = vmatpush2.msra.mxu0 0.0
    %1609 = vmatprep.subr.mxu0 0.0
    %1610 = vmatpush2.msra.mxu0 0.0
    %1611 = vmatprep.subr.mxu0 0.0
    %1612 = vmatpush2.msra.mxu0 0.0
    %1613 = vmatprep.subr.mxu0 0.0
    %1614 = vmatpush2.msra.mxu0 0.0
    %1615 = vmatprep.subr.mxu0 0.0
    %1616 = vmatpush2.msra.mxu0 0.0
    %1617 = vmatprep.subr.mxu0 0.0
    %1618 = vmatpush2.msra.mxu0 0.0
    %1619 = vmatprep.subr.mxu0 0.0
    %1620 = vmatpush2.msra.mxu0 0.0
    %1621 = vmatprep.subr.mxu0 0.0
    %1622 = vmatpush2.msra.mxu0 0.0
    %1623 = vmatprep.subr.mxu0 0.0
    %1624 = vmatpush2.msra.mxu0 0.0
    %1625 = vmatprep.subr.mxu0 0.0
    %1626 = vmatpush2.msra.mxu0 0.0
    %1627 = vmatprep.subr.mxu0 0.0
    %1628 = vmatpush2.msra.mxu0 0.0
    %1629 = vmatprep.subr.mxu0 0.0
    %1630 = vmatpush2.msra.mxu0 0.0
    %1631 = vmatprep.subr.mxu0 0.0
    %1632 = vmatpush2.msra.mxu0 0.0
    %1633 = vmatprep.subr.mxu0 0.0
    %1634 = vmatpush2.msra.mxu0 0.0
    %1635 = vmatprep.subr.mxu0 0.0
    %1636 = vmatpush2.msra.mxu0 0.0
    %1637 = vmatprep.subr.mxu0 0.0
    %1638 = vmatpush2.msra.mxu0 0.0
    %1639 = vmatprep.mubr.f32.mxu0 0.0
    %1640 = vmatmul.mubr.f32.gmra.mxu0 %v1573
    %v1641 = vpop.f32.mrf.mxu0
    %v1642 = vadd.f32 0.0, %v1641
    %v1643 = vpop.f32.mrf.mxu0
    %1644 = vdwg.mxu0
    %1645 = vrot.lane.b32.xlu0 %v405, 80
    %v1646 = vpop.permute.xlu0 %1645
    %v1649 = vsel %vm560, %v1568, 0
    %1651 = vmatprep.subr.mxu0 0.0
    %1652 = vmatpush1.msra.mxu0 0.0
    %1653 = vmatprep.subr.mxu0 0.0
    %1654 = vmatpush1.msra.mxu0 0.0
    %1655 = vmatprep.subr.mxu0 0.0
    %1656 = vmatpush1.msra.mxu0 0.0
    %1657 = vmatprep.subr.mxu0 0.0
    %1658 = vmatpush1.msra.mxu0 0.0
    %1659 = vmatprep.subr.mxu0 0.0
    %1660 = vmatpush1.msra.mxu0 0.0
    %1661 = vmatprep.subr.mxu0 0.0
    %1662 = vmatpush1.msra.mxu0 0.0
    %1663 = vmatprep.subr.mxu0 0.0
    %1664 = vmatpush1.msra.mxu0 0.0
    %1665 = vmatprep.subr.mxu0 0.0
    %1666 = vmatpush1.msra.mxu0 0.0
    %1667 = vmatprep.subr.mxu0 0.0
    %1668 = vmatpush1.msra.mxu0 0.0
    %1669 = vmatprep.subr.mxu0 0.0
    %1670 = vmatpush1.msra.mxu0 0.0
    %1671 = vmatprep.subr.mxu0 0.0
    %1672 = vmatpush1.msra.mxu0 0.0
    %1673 = vmatprep.subr.mxu0 0.0
    %1674 = vmatpush1.msra.mxu0 0.0
    %1675 = vmatprep.subr.mxu0 0.0
    %1676 = vmatpush1.msra.mxu0 0.0
    %1677 = vmatprep.subr.mxu0 0.0
    %1678 = vmatpush1.msra.mxu0 0.0
    %1679 = vmatprep.subr.mxu0 0.0
    %1680 = vmatpush1.msra.mxu0 0.0
    %1681 = vmatprep.subr.mxu0 0.0
    %1682 = vmatpush1.msra.mxu0 %v1646
    %1683 = vmatprep.subr.mxu0 0.0
    %1684 = vmatpush2.msra.mxu0 0.0
    %1685 = vmatprep.subr.mxu0 0.0
    %1686 = vmatpush2.msra.mxu0 0.0
    %1687 = vmatprep.subr.mxu0 0.0
    %1688 = vmatpush2.msra.mxu0 0.0
    %1689 = vmatprep.subr.mxu0 0.0
    %1690 = vmatpush2.msra.mxu0 0.0
    %1691 = vmatprep.subr.mxu0 0.0
    %1692 = vmatpush2.msra.mxu0 0.0
    %1693 = vmatprep.subr.mxu0 0.0
    %1694 = vmatpush2.msra.mxu0 0.0
    %1695 = vmatprep.subr.mxu0 0.0
    %1696 = vmatpush2.msra.mxu0 0.0
    %1697 = vmatprep.subr.mxu0 0.0
    %1698 = vmatpush2.msra.mxu0 0.0
    %1699 = vmatprep.subr.mxu0 0.0
    %1700 = vmatpush2.msra.mxu0 0.0
    %1701 = vmatprep.subr.mxu0 0.0
    %1702 = vmatpush2.msra.mxu0 0.0
    %1703 = vmatprep.subr.mxu0 0.0
    %1704 = vmatpush2.msra.mxu0 0.0
    %1705 = vmatprep.subr.mxu0 0.0
    %1706 = vmatpush2.msra.mxu0 0.0
    %1707 = vmatprep.subr.mxu0 0.0
    %1708 = vmatpush2.msra.mxu0 0.0
    %1709 = vmatprep.subr.mxu0 0.0
    %1710 = vmatpush2.msra.mxu0 0.0
    %1711 = vmatprep.subr.mxu0 0.0
    %1712 = vmatpush2.msra.mxu0 0.0
    %1713 = vmatprep.subr.mxu0 0.0
    %1714 = vmatpush2.msra.mxu0 0.0
    %1715 = vmatprep.mubr.f32.mxu0 0.0
    %1716 = vmatmul.mubr.f32.gmra.mxu0 %v1649
    %v1717 = vpop.f32.mrf.mxu0
    %v1718 = vadd.f32 0.0, %v1717
    %v1719 = vpop.f32.mrf.mxu0
    %1720 = vdwg.mxu0
    %1723 = vrot.lane.b32.xlu0 %v981, 16
    %v1724 = vpop.permute.xlu0 %1723
    %1725 = vrot.lane.b32.xlu0 %v1058, 16
    %v1726 = vpop.permute.xlu0 %1725
    %1731 = vrot.lane.b32.xlu0 %v1312, 32
    %v1732 = vpop.permute.xlu0 %1731
    %1733 = vrot.lane.b32.xlu0 %v1388, 32
    %v1734 = vpop.permute.xlu0 %1733
    %1739 = vrot.lane.b32.xlu0 %v1642, 48
    %v1740 = vpop.permute.xlu0 %1739
    %1741 = vrot.lane.b32.xlu0 %v1718, 48
    %v1742 = vpop.permute.xlu0 %1741
    %v1745 = vsel %vm81, %v653, %v1724
    %v1746 = vsel %vm81, %v726, %v1726
    %vm1747 = vcmask 261120
    %v1748 = vsel %vm1747, %v1745, %v1732
    %v1749 = vsel %vm1747, %v1746, %v1734
    %vm1750 = vcmask 392192
    %v1751 = vsel %vm1750, %v1748, %v1740
    %v1752 = vsel %vm1750, %v1749, %v1742
    %v1753 = vpack.c.bf16 %v1752, %v1751
    %v1754 = vld [vmem:[%s9] sm:$0xf]
    %v1755 = vld [vmem:[%s9 + $0x4] sm:$0xf]
    %v1756 = vld [vmem:[%s9 + $0x8] sm:$0xf]
    %v1757 = vld [vmem:[%s9 + $0xc] sm:$0xf]
    %v1758 = vld [vmem:[%s9 + $0x10] sm:$0xf]
    %v1759 = vld [vmem:[%s9 + $0x14] sm:$0xf]
    %v1760 = vld [vmem:[%s9 + $0x18] sm:$0xf]
    %v1761 = vld [vmem:[%s9 + $0x1c] sm:$0xf]
    %v1762 = vld [vmem:[%s10] sm:$0x1]
    %v1764 = vlaneseq
    %v1765 = vshrl.u32 %v1764, 7
    %v1766 = vsub.s32 0, %v1765
    %v1767 = vrot.slane %v1762, %v1766
    %v1777 = vunpack.c.l.b16 %v1754
    %v1778 = vunpack.c.l.b16 %v1755
    %v1779 = vunpack.c.l.b16 %v1756
    %v1780 = vunpack.c.l.b16 %v1757
    %v1781 = vunpack.c.l.b16 %v1758
    %v1782 = vunpack.c.l.b16 %v1759
    %v1783 = vunpack.c.l.b16 %v1760
    %v1784 = vunpack.c.l.b16 %v1761
    %v1785 = vpack.c.b16 %v1778, %v1777
    %v1786 = vpack.c.b16 %v1780, %v1779
    %v1787 = vpack.c.b16 %v1782, %v1781
    %v1788 = vpack.c.b16 %v1784, %v1783
    %v1794 = vsel %vm203, %v1753, 0
    %1796 = vmatprep.subr.bf16.mxu0 0
    %1797 = vmatpush1.bf16.msra.mxu0 0
    %1798 = vmatprep.subr.bf16.mxu0 0
    %1799 = vmatpush1.bf16.msra.mxu0 0
    %1800 = vmatprep.subr.bf16.mxu0 0
    %1801 = vmatpush1.bf16.msra.mxu0 0
    %1802 = vmatprep.subr.bf16.mxu0 0
    %1803 = vmatpush1.bf16.msra.mxu0 0
    %1804 = vmatprep.subr.bf16.mxu0 0
    %1805 = vmatpush1.bf16.msra.mxu0 %v1788
    %1806 = vmatprep.subr.bf16.mxu0 0
    %1807 = vmatpush1.bf16.msra.mxu0 %v1787
    %1808 = vmatprep.subr.bf16.mxu0 0
    %1809 = vmatpush1.bf16.msra.mxu0 %v1786
    %1810 = vmatprep.subr.bf16.mxu0 0
    %1811 = vmatpush1.bf16.msra.mxu0 %v1785
    %1812 = vmatprep.subr.bf16.mxu0 0
    %1813 = vmatpush2.bf16.msra.mxu0 0
    %1814 = vmatprep.subr.bf16.mxu0 0
    %1815 = vmatpush2.bf16.msra.mxu0 0
    %1816 = vmatprep.subr.bf16.mxu0 0
    %1817 = vmatpush2.bf16.msra.mxu0 0
    %1818 = vmatprep.subr.bf16.mxu0 0
    %1819 = vmatpush2.bf16.msra.mxu0 0
    %1820 = vmatprep.subr.bf16.mxu0 0
    %1821 = vmatpush2.bf16.msra.mxu0 0
    %1822 = vmatprep.subr.bf16.mxu0 0
    %1823 = vmatpush2.bf16.msra.mxu0 0
    %1824 = vmatprep.subr.bf16.mxu0 0
    %1825 = vmatpush2.bf16.msra.mxu0 0
    %1826 = vmatprep.subr.bf16.mxu0 0
    %1827 = vmatpush2.bf16.msra.mxu0 0
    %1828 = vmatprep.mubr.bf16.mxu0 0
    %1829 = vmatmul.mubr.bf16.gmra.mxu0 %v1794
    %v1830 = vpop.f32.mrf.mxu0
    %v1831 = vadd.f32 %v1767, %v1830
    %v1832 = vpop.f32.mrf.mxu0
    %v1833 = vpop.f32.mrf.mxu0
    %v1834 = vadd.f32 %v1767, %v1833
    %v1835 = vpop.f32.mrf.mxu0
    %1836 = vdwg.mxu0
    %v1837 = vadd.f32 %v155, %v1831
    %v1838 = vadd.f32 %v160, %v1834
    %v1839 = vld [vmem:[%s11] sm:$0x1]
    %v1840 = vld [vmem:[%s12] sm:$0x1]
    %v1841 = vsel %vm203, %v1837, 0.0
    %1842 = vadd.xlane.f32.xlu0 %v1841
    %v1843 = vpop.xlane.xlu0 %1842
    %v1844 = vsel %vm203, %v1838, 0.0
    %1845 = vadd.xlane.f32.xlu0 %v1844
    %v1846 = vpop.xlane.xlu0 %1845
    %v1847 = vrcp.pop 64.0
    %v1848 = vmul.f32 %v1843, %v1847
    %v1849 = vmul.f32 %v1846, %v1847
    %v1850 = vsub.f32 %v1837, %v1848
    %v1851 = vsub.f32 %v1838, %v1849
    %v1852 = vmul.f32 %v1850, %v1850
    %v1853 = vmul.f32 %v1851, %v1851
    %v1854 = vsel %vm203, %v1852, 0.0
    %1855 = vadd.xlane.f32.xlu0 %v1854
    %v1856 = vpop.xlane.xlu0 %1855
    %v1857 = vsel %vm203, %v1853, 0.0
    %1858 = vadd.xlane.f32.xlu0 %v1857
    %v1859 = vpop.xlane.xlu0 %1858
    %v1860 = vmul.f32 %v1856, %v1847
    %v1861 = vmul.f32 %v1859, %v1847
    %v1862 = vadd.f32 %v1860, 1e-05
    %v1863 = vadd.f32 %v1861, 1e-05
    %v1864 = vrsqrt.pop %v1862
    %v1865 = vrsqrt.pop %v1863
    %v1866 = vmul.f32 %v1850, %v1864
    %v1867 = vmul.f32 %v1851, %v1865
    %v1869 = vlaneseq
    %v1870 = vshrl.u32 %v1869, 7
    %v1871 = vsub.s32 0, %v1870
    %v1872 = vrot.slane %v1839, %v1871
    %v1874 = vmul.f32 %v1866, %v1872
    %v1875 = vmul.f32 %v1867, %v1872
    %v1877 = vlaneseq
    %v1878 = vshrl.u32 %v1877, 7
    %v1879 = vsub.s32 0, %v1878
    %v1880 = vrot.slane %v1840, %v1879
    %v1882 = vadd.f32 %v1874, %v1880
    %v1883 = vadd.f32 %v1875, %v1880
    %v1884 = vpack.c.bf16 %v1883, %v1882
    %v1885 = vld [vmem:[%s15] sm:$0xff]
    %v1886 = vld [vmem:[%s15 + $0x8] sm:$0xff]
    %v1887 = vld [vmem:[%s15 + $0x10] sm:$0xff]
    %v1888 = vld [vmem:[%s15 + $0x18] sm:$0xff]
    %v1889 = vld [vmem:[%s15 + $0x20] sm:$0xff]
    %v1890 = vld [vmem:[%s15 + $0x28] sm:$0xff]
    %v1891 = vld [vmem:[%s15 + $0x30] sm:$0xff]
    %v1892 = vld [vmem:[%s15 + $0x38] sm:$0xff]
    %v1893 = vld [vmem:[%s15 + $0x40] sm:$0xff]
    %v1894 = vld [vmem:[%s15 + $0x48] sm:$0xff]
    %v1895 = vld [vmem:[%s15 + $0x50] sm:$0xff]
    %v1896 = vld [vmem:[%s15 + $0x58] sm:$0xff]
    %v1897 = vld [vmem:[%s15 + $0x60] sm:$0xff]
    %v1898 = vld [vmem:[%s15 + $0x68] sm:$0xff]
    %v1899 = vld [vmem:[%s15 + $0x70] sm:$0xff]
    %v1900 = vld [vmem:[%s15 + $0x78] sm:$0xff]
    %v1901 = vld [vmem:[%s16] sm:$0xf]
    %v1903 = vlaneseq
    %v1904 = vshrl.u32 %v1903, 7
    %v1905 = vsub.s32 0, %v1904
    %v1906 = vrot.slane %v1901, %v1905
    %v1907 = vlaneseq
    %v1908 = vshrl.u32 %v1907, 7
    %v1909 = vsub.s32 1, %v1908
    %v1910 = vrot.slane %v1901, %v1909
    %v1911 = vlaneseq
    %v1912 = vshrl.u32 %v1911, 7
    %v1913 = vsub.s32 2, %v1912
    %v1914 = vrot.slane %v1901, %v1913
    %v1915 = vlaneseq
    %v1916 = vshrl.u32 %v1915, 7
    %v1917 = vsub.s32 3, %v1916
    %v1918 = vrot.slane %v1901, %v1917
    %v1939 = vunpack.c.l.b16 %v1885
    %v1940 = vunpack.c.h.b16 %v1885
    %v1941 = vunpack.c.l.b16 %v1886
    %v1942 = vunpack.c.h.b16 %v1886
    %v1943 = vunpack.c.l.b16 %v1887
    %v1944 = vunpack.c.h.b16 %v1887
    %v1945 = vunpack.c.l.b16 %v1888
    %v1946 = vunpack.c.h.b16 %v1888
    %v1947 = vunpack.c.l.b16 %v1889
    %v1948 = vunpack.c.h.b16 %v1889
    %v1949 = vunpack.c.l.b16 %v1890
    %v1950 = vunpack.c.h.b16 %v1890
    %v1951 = vunpack.c.l.b16 %v1891
    %v1952 = vunpack.c.h.b16 %v1891
    %v1953 = vunpack.c.l.b16 %v1892
    %v1954 = vunpack.c.h.b16 %v1892
    %v1955 = vunpack.c.l.b16 %v1893
    %v1956 = vunpack.c.h.b16 %v1893
    %v1957 = vunpack.c.l.b16 %v1894
    %v1958 = vunpack.c.h.b16 %v1894
    %v1959 = vunpack.c.l.b16 %v1895
    %v1960 = vunpack.c.h.b16 %v1895
    %v1961 = vunpack.c.l.b16 %v1896
    %v1962 = vunpack.c.h.b16 %v1896
    %v1963 = vunpack.c.l.b16 %v1897
    %v1964 = vunpack.c.h.b16 %v1897
    %v1965 = vunpack.c.l.b16 %v1898
    %v1966 = vunpack.c.h.b16 %v1898
    %v1967 = vunpack.c.l.b16 %v1899
    %v1968 = vunpack.c.h.b16 %v1899
    %v1969 = vunpack.c.l.b16 %v1900
    %v1970 = vunpack.c.h.b16 %v1900
    %v1971 = vpack.c.b16 %v1943, %v1939
    %v1972 = vpack.c.b16 %v1944, %v1940
    %v1973 = vpack.c.b16 %v1945, %v1941
    %v1974 = vpack.c.b16 %v1946, %v1942
    %v1975 = vpack.c.b16 %v1951, %v1947
    %v1976 = vpack.c.b16 %v1952, %v1948
    %v1977 = vpack.c.b16 %v1953, %v1949
    %v1978 = vpack.c.b16 %v1954, %v1950
    %v1979 = vpack.c.b16 %v1959, %v1955
    %v1980 = vpack.c.b16 %v1960, %v1956
    %v1981 = vpack.c.b16 %v1961, %v1957
    %v1982 = vpack.c.b16 %v1962, %v1958
    %v1983 = vpack.c.b16 %v1967, %v1963
    %v1984 = vpack.c.b16 %v1968, %v1964
    %v1985 = vpack.c.b16 %v1969, %v1965
    %v1986 = vpack.c.b16 %v1970, %v1966
    %v2004 = vsel %vm203, %v1884, 0
    %2006 = vmatprep.subr.bf16.mxu0 0
    %2007 = vmatpush1.bf16.msra.mxu0 0
    %2008 = vmatprep.subr.bf16.mxu0 0
    %2009 = vmatpush1.bf16.msra.mxu0 0
    %2010 = vmatprep.subr.bf16.mxu0 0
    %2011 = vmatpush1.bf16.msra.mxu0 0
    %2012 = vmatprep.subr.bf16.mxu0 0
    %2013 = vmatpush1.bf16.msra.mxu0 0
    %2014 = vmatprep.subr.bf16.mxu0 %v1984
    %2015 = vmatpush1.bf16.msra.mxu0 %v1983
    %2016 = vmatprep.subr.bf16.mxu0 %v1980
    %2017 = vmatpush1.bf16.msra.mxu0 %v1979
    %2018 = vmatprep.subr.bf16.mxu0 %v1976
    %2019 = vmatpush1.bf16.msra.mxu0 %v1975
    %2020 = vmatprep.subr.bf16.mxu0 %v1972
    %2021 = vmatpush1.bf16.msra.mxu0 %v1971
    %2022 = vmatprep.subr.bf16.mxu0 0
    %2023 = vmatpush2.bf16.msra.mxu0 0
    %2024 = vmatprep.subr.bf16.mxu0 0
    %2025 = vmatpush2.bf16.msra.mxu0 0
    %2026 = vmatprep.subr.bf16.mxu0 0
    %2027 = vmatpush2.bf16.msra.mxu0 0
    %2028 = vmatprep.subr.bf16.mxu0 0
    %2029 = vmatpush2.bf16.msra.mxu0 0
    %2030 = vmatprep.subr.bf16.mxu0 0
    %2031 = vmatpush2.bf16.msra.mxu0 0
    %2032 = vmatprep.subr.bf16.mxu0 0
    %2033 = vmatpush2.bf16.msra.mxu0 0
    %2034 = vmatprep.subr.bf16.mxu0 0
    %2035 = vmatpush2.bf16.msra.mxu0 0
    %2036 = vmatprep.subr.bf16.mxu0 0
    %2037 = vmatpush2.bf16.msra.mxu0 0
    %2038 = vmatprep.mubr.bf16.mxu0 0
    %2039 = vmatmul.mubr.bf16.gmra.mxu0 %v2004
    %v2040 = vpop.f32.mrf.mxu0
    %v2041 = vadd.f32 %v1906, %v2040
    %v2042 = vpop.f32.mrf.mxu0
    %v2043 = vadd.f32 %v1910, %v2042
    %v2044 = vpop.f32.mrf.mxu0
    %v2045 = vadd.f32 %v1906, %v2044
    %v2046 = vpop.f32.mrf.mxu0
    %v2047 = vadd.f32 %v1910, %v2046
    %2048 = vdwg.mxu0
    %2049 = vmatprep.subr.bf16.mxu0 0
    %2050 = vmatpush1.bf16.msra.mxu0 0
    %2051 = vmatprep.subr.bf16.mxu0 0
    %2052 = vmatpush1.bf16.msra.mxu0 0
    %2053 = vmatprep.subr.bf16.mxu0 0
    %2054 = vmatpush1.bf16.msra.mxu0 0
    %2055 = vmatprep.subr.bf16.mxu0 0
    %2056 = vmatpush1.bf16.msra.mxu0 0
    %2057 = vmatprep.subr.bf16.mxu0 %v1986
    %2058 = vmatpush1.bf16.msra.mxu0 %v1985
    %2059 = vmatprep.subr.bf16.mxu0 %v1982
    %2060 = vmatpush1.bf16.msra.mxu0 %v1981
    %2061 = vmatprep.subr.bf16.mxu0 %v1978
    %2062 = vmatpush1.bf16.msra.mxu0 %v1977
    %2063 = vmatprep.subr.bf16.mxu0 %v1974
    %2064 = vmatpush1.bf16.msra.mxu0 %v1973
    %2065 = vmatprep.subr.bf16.mxu0 0
    %2066 = vmatpush2.bf16.msra.mxu0 0
    %2067 = vmatprep.subr.bf16.mxu0 0
    %2068 = vmatpush2.bf16.msra.mxu0 0
    %2069 = vmatprep.subr.bf16.mxu0 0
    %2070 = vmatpush2.bf16.msra.mxu0 0
    %2071 = vmatprep.subr.bf16.mxu0 0
    %2072 = vmatpush2.bf16.msra.mxu0 0
    %2073 = vmatprep.subr.bf16.mxu0 0
    %2074 = vmatpush2.bf16.msra.mxu0 0
    %2075 = vmatprep.subr.bf16.mxu0 0
    %2076 = vmatpush2.bf16.msra.mxu0 0
    %2077 = vmatprep.subr.bf16.mxu0 0
    %2078 = vmatpush2.bf16.msra.mxu0 0
    %2079 = vmatprep.subr.bf16.mxu0 0
    %2080 = vmatpush2.bf16.msra.mxu0 0
    %2081 = vmatprep.mubr.bf16.mxu0 0
    %2082 = vmatmul.mubr.bf16.gmra.mxu0 %v2004
    %v2083 = vpop.f32.mrf.mxu0
    %v2084 = vadd.f32 %v1914, %v2083
    %v2085 = vpop.f32.mrf.mxu0
    %v2086 = vadd.f32 %v1918, %v2085
    %v2087 = vpop.f32.mrf.mxu0
    %v2088 = vadd.f32 %v1914, %v2087
    %v2089 = vpop.f32.mrf.mxu0
    %v2090 = vadd.f32 %v1918, %v2089
    %2091 = vdwg.mxu0
    %v2092 = vmax.f32 %v2041, 0.0
    %v2093 = vmax.f32 %v2043, 0.0
    %v2094 = vmax.f32 %v2084, 0.0
    %v2095 = vmax.f32 %v2086, 0.0
    %v2096 = vmax.f32 %v2045, 0.0
    %v2097 = vmax.f32 %v2047, 0.0
    %v2098 = vmax.f32 %v2088, 0.0
    %v2099 = vmax.f32 %v2090, 0.0
    %v2100 = vpack.c.bf16 %v2096, %v2092
    %v2101 = vpack.c.bf16 %v2097, %v2093
    %v2102 = vpack.c.bf16 %v2098, %v2094
    %v2103 = vpack.c.bf16 %v2099, %v2095
    %v2104 = vld [vmem:[%s17] sm:$0xf]
    %v2105 = vld [vmem:[%s17 + $0x4] sm:$0xf]
    %v2106 = vld [vmem:[%s17 + $0x8] sm:$0xf]
    %v2107 = vld [vmem:[%s17 + $0xc] sm:$0xf]
    %v2108 = vld [vmem:[%s17 + $0x10] sm:$0xf]
    %v2109 = vld [vmem:[%s17 + $0x14] sm:$0xf]
    %v2110 = vld [vmem:[%s17 + $0x18] sm:$0xf]
    %v2111 = vld [vmem:[%s17 + $0x1c] sm:$0xf]
    %v2112 = vld [vmem:[%s17 + $0x20] sm:$0xf]
    %v2113 = vld [vmem:[%s17 + $0x24] sm:$0xf]
    %v2114 = vld [vmem:[%s17 + $0x28] sm:$0xf]
    %v2115 = vld [vmem:[%s17 + $0x2c] sm:$0xf]
    %v2116 = vld [vmem:[%s17 + $0x30] sm:$0xf]
    %v2117 = vld [vmem:[%s17 + $0x34] sm:$0xf]
    %v2118 = vld [vmem:[%s17 + $0x38] sm:$0xf]
    %v2119 = vld [vmem:[%s17 + $0x3c] sm:$0xf]
    %v2120 = vld [vmem:[%s17 + $0x40] sm:$0xf]
    %v2121 = vld [vmem:[%s17 + $0x44] sm:$0xf]
    %v2122 = vld [vmem:[%s17 + $0x48] sm:$0xf]
    %v2123 = vld [vmem:[%s17 + $0x4c] sm:$0xf]
    %v2124 = vld [vmem:[%s17 + $0x50] sm:$0xf]
    %v2125 = vld [vmem:[%s17 + $0x54] sm:$0xf]
    %v2126 = vld [vmem:[%s17 + $0x58] sm:$0xf]
    %v2127 = vld [vmem:[%s17 + $0x5c] sm:$0xf]
    %v2128 = vld [vmem:[%s17 + $0x60] sm:$0xf]
    %v2129 = vld [vmem:[%s17 + $0x64] sm:$0xf]
    %v2130 = vld [vmem:[%s17 + $0x68] sm:$0xf]
    %v2131 = vld [vmem:[%s17 + $0x6c] sm:$0xf]
    %v2132 = vld [vmem:[%s17 + $0x70] sm:$0xf]
    %v2133 = vld [vmem:[%s17 + $0x74] sm:$0xf]
    %v2134 = vld [vmem:[%s17 + $0x78] sm:$0xf]
    %v2135 = vld [vmem:[%s17 + $0x7c] sm:$0xf]
    %v2136 = vld [vmem:[%s17 + $0x80] sm:$0xf]
    %v2137 = vld [vmem:[%s17 + $0x84] sm:$0xf]
    %v2138 = vld [vmem:[%s17 + $0x88] sm:$0xf]
    %v2139 = vld [vmem:[%s17 + $0x8c] sm:$0xf]
    %v2140 = vld [vmem:[%s17 + $0x90] sm:$0xf]
    %v2141 = vld [vmem:[%s17 + $0x94] sm:$0xf]
    %v2142 = vld [vmem:[%s17 + $0x98] sm:$0xf]
    %v2143 = vld [vmem:[%s17 + $0x9c] sm:$0xf]
    %v2144 = vld [vmem:[%s17 + $0xa0] sm:$0xf]
    %v2145 = vld [vmem:[%s17 + $0xa4] sm:$0xf]
    %v2146 = vld [vmem:[%s17 + $0xa8] sm:$0xf]
    %v2147 = vld [vmem:[%s17 + $0xac] sm:$0xf]
    %v2148 = vld [vmem:[%s17 + $0xb0] sm:$0xf]
    %v2149 = vld [vmem:[%s17 + $0xb4] sm:$0xf]
    %v2150 = vld [vmem:[%s17 + $0xb8] sm:$0xf]
    %v2151 = vld [vmem:[%s17 + $0xbc] sm:$0xf]
    %v2152 = vld [vmem:[%s17 + $0xc0] sm:$0xf]
    %v2153 = vld [vmem:[%s17 + $0xc4] sm:$0xf]
    %v2154 = vld [vmem:[%s17 + $0xc8] sm:$0xf]
    %v2155 = vld [vmem:[%s17 + $0xcc] sm:$0xf]
    %v2156 = vld [vmem:[%s17 + $0xd0] sm:$0xf]
    %v2157 = vld [vmem:[%s17 + $0xd4] sm:$0xf]
    %v2158 = vld [vmem:[%s17 + $0xd8] sm:$0xf]
    %v2159 = vld [vmem:[%s17 + $0xdc] sm:$0xf]
    %v2160 = vld [vmem:[%s17 + $0xe0] sm:$0xf]
    %v2161 = vld [vmem:[%s17 + $0xe4] sm:$0xf]
    %v2162 = vld [vmem:[%s17 + $0xe8] sm:$0xf]
    %v2163 = vld [vmem:[%s17 + $0xec] sm:$0xf]
    %v2164 = vld [vmem:[%s17 + $0xf0] sm:$0xf]
    %v2165 = vld [vmem:[%s17 + $0xf4] sm:$0xf]
    %v2166 = vld [vmem:[%s17 + $0xf8] sm:$0xf]
    %v2167 = vld [vmem:[%s17 + $0xfc] sm:$0xf]
    %s2168 = scalar_lea.vmem %s15, 128
    %v2169 = vld [vmem:[%s2168] sm:$0xff]
    %v2170 = vld [vmem:[%s2168 + $0x8] sm:$0xff]
    %v2171 = vld [vmem:[%s2168 + $0x10] sm:$0xff]
    %v2172 = vld [vmem:[%s2168 + $0x18] sm:$0xff]
    %v2173 = vld [vmem:[%s2168 + $0x20] sm:$0xff]
    %v2174 = vld [vmem:[%s2168 + $0x28] sm:$0xff]
    %v2175 = vld [vmem:[%s2168 + $0x30] sm:$0xff]
    %v2176 = vld [vmem:[%s2168 + $0x38] sm:$0xff]
    %v2177 = vld [vmem:[%s2168 + $0x40] sm:$0xff]
    %v2178 = vld [vmem:[%s2168 + $0x48] sm:$0xff]
    %v2179 = vld [vmem:[%s2168 + $0x50] sm:$0xff]
    %v2180 = vld [vmem:[%s2168 + $0x58] sm:$0xff]
    %v2181 = vld [vmem:[%s2168 + $0x60] sm:$0xff]
    %v2182 = vld [vmem:[%s2168 + $0x68] sm:$0xff]
    %v2183 = vld [vmem:[%s2168 + $0x70] sm:$0xff]
    %v2184 = vld [vmem:[%s2168 + $0x78] sm:$0xff]
    %s2185 = scalar_lea.vmem %s16, 4
    %v2186 = vld [vmem:[%s2185] sm:$0xf]
    %v2188 = vlaneseq
    %v2189 = vshrl.u32 %v2188, 7
    %v2190 = vsub.s32 0, %v2189
    %v2191 = vrot.slane %v2186, %v2190
    %v2192 = vlaneseq
    %v2193 = vshrl.u32 %v2192, 7
    %v2194 = vsub.s32 1, %v2193
    %v2195 = vrot.slane %v2186, %v2194
    %v2196 = vlaneseq
    %v2197 = vshrl.u32 %v2196, 7
    %v2198 = vsub.s32 2, %v2197
    %v2199 = vrot.slane %v2186, %v2198
    %v2200 = vlaneseq
    %v2201 = vshrl.u32 %v2200, 7
    %v2202 = vsub.s32 3, %v2201
    %v2203 = vrot.slane %v2186, %v2202
    %v2224 = vunpack.c.l.b16 %v2169
    %v2225 = vunpack.c.h.b16 %v2169
    %v2226 = vunpack.c.l.b16 %v2170
    %v2227 = vunpack.c.h.b16 %v2170
    %v2228 = vunpack.c.l.b16 %v2171
    %v2229 = vunpack.c.h.b16 %v2171
    %v2230 = vunpack.c.l.b16 %v2172
    %v2231 = vunpack.c.h.b16 %v2172
    %v2232 = vunpack.c.l.b16 %v2173
    %v2233 = vunpack.c.h.b16 %v2173
    %v2234 = vunpack.c.l.b16 %v2174
    %v2235 = vunpack.c.h.b16 %v2174
    %v2236 = vunpack.c.l.b16 %v2175
    %v2237 = vunpack.c.h.b16 %v2175
    %v2238 = vunpack.c.l.b16 %v2176
    %v2239 = vunpack.c.h.b16 %v2176
    %v2240 = vunpack.c.l.b16 %v2177
    %v2241 = vunpack.c.h.b16 %v2177
    %v2242 = vunpack.c.l.b16 %v2178
    %v2243 = vunpack.c.h.b16 %v2178
    %v2244 = vunpack.c.l.b16 %v2179
    %v2245 = vunpack.c.h.b16 %v2179
    %v2246 = vunpack.c.l.b16 %v2180
    %v2247 = vunpack.c.h.b16 %v2180
    %v2248 = vunpack.c.l.b16 %v2181
    %v2249 = vunpack.c.h.b16 %v2181
    %v2250 = vunpack.c.l.b16 %v2182
    %v2251 = vunpack.c.h.b16 %v2182
    %v2252 = vunpack.c.l.b16 %v2183
    %v2253 = vunpack.c.h.b16 %v2183
    %v2254 = vunpack.c.l.b16 %v2184
    %v2255 = vunpack.c.h.b16 %v2184
    %v2256 = vpack.c.b16 %v2228, %v2224
    %v2257 = vpack.c.b16 %v2229, %v2225
    %v2258 = vpack.c.b16 %v2230, %v2226
    %v2259 = vpack.c.b16 %v2231, %v2227
    %v2260 = vpack.c.b16 %v2236, %v2232
    %v2261 = vpack.c.b16 %v2237, %v2233
    %v2262 = vpack.c.b16 %v2238, %v2234
    %v2263 = vpack.c.b16 %v2239, %v2235
    %v2264 = vpack.c.b16 %v2244, %v2240
    %v2265 = vpack.c.b16 %v2245, %v2241
    %v2266 = vpack.c.b16 %v2246, %v2242
    %v2267 = vpack.c.b16 %v2247, %v2243
    %v2268 = vpack.c.b16 %v2252, %v2248
    %v2269 = vpack.c.b16 %v2253, %v2249
    %v2270 = vpack.c.b16 %v2254, %v2250
    %v2271 = vpack.c.b16 %v2255, %v2251
    %2288 = vmatprep.subr.bf16.mxu0 0
    %2289 = vmatpush1.bf16.msra.mxu0 0
    %2290 = vmatprep.subr.bf16.mxu0 0
    %2291 = vmatpush1.bf16.msra.mxu0 0
    %2292 = vmatprep.subr.bf16.mxu0 0
    %2293 = vmatpush1.bf16.msra.mxu0 0
    %2294 = vmatprep.subr.bf16.mxu0 0
    %2295 = vmatpush1.bf16.msra.mxu0 0
    %2296 = vmatprep.subr.bf16.mxu0 %v2269
    %2297 = vmatpush1.bf16.msra.mxu0 %v2268
    %2298 = vmatprep.subr.bf16.mxu0 %v2265
    %2299 = vmatpush1.bf16.msra.mxu0 %v2264
    %2300 = vmatprep.subr.bf16.mxu0 %v2261
    %2301 = vmatpush1.bf16.msra.mxu0 %v2260
    %2302 = vmatprep.subr.bf16.mxu0 %v2257
    %2303 = vmatpush1.bf16.msra.mxu0 %v2256
    %2304 = vmatprep.subr.bf16.mxu0 0
    %2305 = vmatpush2.bf16.msra.mxu0 0
    %2306 = vmatprep.subr.bf16.mxu0 0
    %2307 = vmatpush2.bf16.msra.mxu0 0
    %2308 = vmatprep.subr.bf16.mxu0 0
    %2309 = vmatpush2.bf16.msra.mxu0 0
    %2310 = vmatprep.subr.bf16.mxu0 0
    %2311 = vmatpush2.bf16.msra.mxu0 0
    %2312 = vmatprep.subr.bf16.mxu0 0
    %2313 = vmatpush2.bf16.msra.mxu0 0
    %2314 = vmatprep.subr.bf16.mxu0 0
    %2315 = vmatpush2.bf16.msra.mxu0 0
    %2316 = vmatprep.subr.bf16.mxu0 0
    %2317 = vmatpush2.bf16.msra.mxu0 0
    %2318 = vmatprep.subr.bf16.mxu0 0
    %2319 = vmatpush2.bf16.msra.mxu0 0
    %2320 = vmatprep.mubr.bf16.mxu0 0
    %2321 = vmatmul.mubr.bf16.gmra.mxu0 %v2004
    %v2322 = vpop.f32.mrf.mxu0
    %v2323 = vadd.f32 %v2191, %v2322
    %v2324 = vpop.f32.mrf.mxu0
    %v2325 = vadd.f32 %v2195, %v2324
    %v2326 = vpop.f32.mrf.mxu0
    %v2327 = vadd.f32 %v2191, %v2326
    %v2328 = vpop.f32.mrf.mxu0
    %v2329 = vadd.f32 %v2195, %v2328
    %2330 = vdwg.mxu0
    %2331 = vmatprep.subr.bf16.mxu0 0
    %2332 = vmatpush1.bf16.msra.mxu0 0
    %2333 = vmatprep.subr.bf16.mxu0 0
    %2334 = vmatpush1.bf16.msra.mxu0 0
    %2335 = vmatprep.subr.bf16.mxu0 0
    %2336 = vmatpush1.bf16.msra.mxu0 0
    %2337 = vmatprep.subr.bf16.mxu0 0
    %2338 = vmatpush1.bf16.msra.mxu0 0
    %2339 = vmatprep.subr.bf16.mxu0 %v2271
    %2340 = vmatpush1.bf16.msra.mxu0 %v2270
    %2341 = vmatprep.subr.bf16.mxu0 %v2267
    %2342 = vmatpush1.bf16.msra.mxu0 %v2266
    %2343 = vmatprep.subr.bf16.mxu0 %v2263
    %2344 = vmatpush1.bf16.msra.mxu0 %v2262
    %2345 = vmatprep.subr.bf16.mxu0 %v2259
    %2346 = vmatpush1.bf16.msra.mxu0 %v2258
    %2347 = vmatprep.subr.bf16.mxu0 0
    %2348 = vmatpush2.bf16.msra.mxu0 0
    %2349 = vmatprep.subr.bf16.mxu0 0
    %2350 = vmatpush2.bf16.msra.mxu0 0
    %2351 = vmatprep.subr.bf16.mxu0 0
    %2352 = vmatpush2.bf16.msra.mxu0 0
    %2353 = vmatprep.subr.bf16.mxu0 0
    %2354 = vmatpush2.bf16.msra.mxu0 0
    %2355 = vmatprep.subr.bf16.mxu0 0
    %2356 = vmatpush2.bf16.msra.mxu0 0
    %2357 = vmatprep.subr.bf16.mxu0 0
    %2358 = vmatpush2.bf16.msra.mxu0 0
    %2359 = vmatprep.subr.bf16.mxu0 0
    %2360 = vmatpush2.bf16.msra.mxu0 0
    %2361 = vmatprep.subr.bf16.mxu0 0
    %2362 = vmatpush2.bf16.msra.mxu0 0
    %2363 = vmatprep.mubr.bf16.mxu0 0
    %2364 = vmatmul.mubr.bf16.gmra.mxu0 %v2004
    %v2365 = vpop.f32.mrf.mxu0
    %v2366 = vadd.f32 %v2199, %v2365
    %v2367 = vpop.f32.mrf.mxu0
    %v2368 = vadd.f32 %v2203, %v2367
    %v2369 = vpop.f32.mrf.mxu0
    %v2370 = vadd.f32 %v2199, %v2369
    %v2371 = vpop.f32.mrf.mxu0
    %v2372 = vadd.f32 %v2203, %v2371
    %2373 = vdwg.mxu0
    %v2374 = vmax.f32 %v2323, 0.0
    %v2375 = vmax.f32 %v2325, 0.0
    %v2376 = vmax.f32 %v2366, 0.0
    %v2377 = vmax.f32 %v2368, 0.0
    %v2378 = vmax.f32 %v2327, 0.0
    %v2379 = vmax.f32 %v2329, 0.0
    %v2380 = vmax.f32 %v2370, 0.0
    %v2381 = vmax.f32 %v2372, 0.0
    %v2382 = vpack.c.bf16 %v2378, %v2374
    %v2383 = vpack.c.bf16 %v2379, %v2375
    %v2384 = vpack.c.bf16 %v2380, %v2376
    %v2385 = vpack.c.bf16 %v2381, %v2377
    %s2386 = scalar_lea.vmem %s17, 256
    %v2387 = vld [vmem:[%s2386] sm:$0xf]
    %v2388 = vld [vmem:[%s2386 + $0x4] sm:$0xf]
    %v2389 = vld [vmem:[%s2386 + $0x8] sm:$0xf]
    %v2390 = vld [vmem:[%s2386 + $0xc] sm:$0xf]
    %v2391 = vld [vmem:[%s2386 + $0x10] sm:$0xf]
    %v2392 = vld [vmem:[%s2386 + $0x14] sm:$0xf]
    %v2393 = vld [vmem:[%s2386 + $0x18] sm:$0xf]
    %v2394 = vld [vmem:[%s2386 + $0x1c] sm:$0xf]
    %v2395 = vld [vmem:[%s2386 + $0x20] sm:$0xf]
    %v2396 = vld [vmem:[%s2386 + $0x24] sm:$0xf]
    %v2397 = vld [vmem:[%s2386 + $0x28] sm:$0xf]
    %v2398 = vld [vmem:[%s2386 + $0x2c] sm:$0xf]
    %v2399 = vld [vmem:[%s2386 + $0x30] sm:$0xf]
    %v2400 = vld [vmem:[%s2386 + $0x34] sm:$0xf]
    %v2401 = vld [vmem:[%s2386 + $0x38] sm:$0xf]
    %v2402 = vld [vmem:[%s2386 + $0x3c] sm:$0xf]
    %v2403 = vld [vmem:[%s2386 + $0x40] sm:$0xf]
    %v2404 = vld [vmem:[%s2386 + $0x44] sm:$0xf]
    %v2405 = vld [vmem:[%s2386 + $0x48] sm:$0xf]
    %v2406 = vld [vmem:[%s2386 + $0x4c] sm:$0xf]
    %v2407 = vld [vmem:[%s2386 + $0x50] sm:$0xf]
    %v2408 = vld [vmem:[%s2386 + $0x54] sm:$0xf]
    %v2409 = vld [vmem:[%s2386 + $0x58] sm:$0xf]
    %v2410 = vld [vmem:[%s2386 + $0x5c] sm:$0xf]
    %v2411 = vld [vmem:[%s2386 + $0x60] sm:$0xf]
    %v2412 = vld [vmem:[%s2386 + $0x64] sm:$0xf]
    %v2413 = vld [vmem:[%s2386 + $0x68] sm:$0xf]
    %v2414 = vld [vmem:[%s2386 + $0x6c] sm:$0xf]
    %v2415 = vld [vmem:[%s2386 + $0x70] sm:$0xf]
    %v2416 = vld [vmem:[%s2386 + $0x74] sm:$0xf]
    %v2417 = vld [vmem:[%s2386 + $0x78] sm:$0xf]
    %v2418 = vld [vmem:[%s2386 + $0x7c] sm:$0xf]
    %v2419 = vld [vmem:[%s2386 + $0x80] sm:$0xf]
    %v2420 = vld [vmem:[%s2386 + $0x84] sm:$0xf]
    %v2421 = vld [vmem:[%s2386 + $0x88] sm:$0xf]
    %v2422 = vld [vmem:[%s2386 + $0x8c] sm:$0xf]
    %v2423 = vld [vmem:[%s2386 + $0x90] sm:$0xf]
    %v2424 = vld [vmem:[%s2386 + $0x94] sm:$0xf]
    %v2425 = vld [vmem:[%s2386 + $0x98] sm:$0xf]
    %v2426 = vld [vmem:[%s2386 + $0x9c] sm:$0xf]
    %v2427 = vld [vmem:[%s2386 + $0xa0] sm:$0xf]
    %v2428 = vld [vmem:[%s2386 + $0xa4] sm:$0xf]
    %v2429 = vld [vmem:[%s2386 + $0xa8] sm:$0xf]
    %v2430 = vld [vmem:[%s2386 + $0xac] sm:$0xf]
    %v2431 = vld [vmem:[%s2386 + $0xb0] sm:$0xf]
    %v2432 = vld [vmem:[%s2386 + $0xb4] sm:$0xf]
    %v2433 = vld [vmem:[%s2386 + $0xb8] sm:$0xf]
    %v2434 = vld [vmem:[%s2386 + $0xbc] sm:$0xf]
    %v2435 = vld [vmem:[%s2386 + $0xc0] sm:$0xf]
    %v2436 = vld [vmem:[%s2386 + $0xc4] sm:$0xf]
    %v2437 = vld [vmem:[%s2386 + $0xc8] sm:$0xf]
    %v2438 = vld [vmem:[%s2386 + $0xcc] sm:$0xf]
    %v2439 = vld [vmem:[%s2386 + $0xd0] sm:$0xf]
    %v2440 = vld [vmem:[%s2386 + $0xd4] sm:$0xf]
    %v2441 = vld [vmem:[%s2386 + $0xd8] sm:$0xf]
    %v2442 = vld [vmem:[%s2386 + $0xdc] sm:$0xf]
    %v2443 = vld [vmem:[%s2386 + $0xe0] sm:$0xf]
    %v2444 = vld [vmem:[%s2386 + $0xe4] sm:$0xf]
    %v2445 = vld [vmem:[%s2386 + $0xe8] sm:$0xf]
    %v2446 = vld [vmem:[%s2386 + $0xec] sm:$0xf]
    %v2447 = vld [vmem:[%s2386 + $0xf0] sm:$0xf]
    %v2448 = vld [vmem:[%s2386 + $0xf4] sm:$0xf]
    %v2449 = vld [vmem:[%s2386 + $0xf8] sm:$0xf]
    %v2450 = vld [vmem:[%s2386 + $0xfc] sm:$0xf]
    %v2515 = vunpack.c.l.b16 %v2387
    %v2516 = vunpack.c.l.b16 %v2388
    %v2517 = vunpack.c.l.b16 %v2389
    %v2518 = vunpack.c.l.b16 %v2390
    %v2519 = vunpack.c.l.b16 %v2391
    %v2520 = vunpack.c.l.b16 %v2392
    %v2521 = vunpack.c.l.b16 %v2393
    %v2522 = vunpack.c.l.b16 %v2394
    %v2523 = vunpack.c.l.b16 %v2395
    %v2524 = vunpack.c.l.b16 %v2396
    %v2525 = vunpack.c.l.b16 %v2397
    %v2526 = vunpack.c.l.b16 %v2398
    %v2527 = vunpack.c.l.b16 %v2399
    %v2528 = vunpack.c.l.b16 %v2400
    %v2529 = vunpack.c.l.b16 %v2401
    %v2530 = vunpack.c.l.b16 %v2402
    %v2531 = vunpack.c.l.b16 %v2403
    %v2532 = vunpack.c.l.b16 %v2404
    %v2533 = vunpack.c.l.b16 %v2405
    %v2534 = vunpack.c.l.b16 %v2406
    %v2535 = vunpack.c.l.b16 %v2407
    %v2536 = vunpack.c.l.b16 %v2408
    %v2537 = vunpack.c.l.b16 %v2409
    %v2538 = vunpack.c.l.b16 %v2410
    %v2539 = vunpack.c.l.b16 %v2411
    %v2540 = vunpack.c.l.b16 %v2412
    %v2541 = vunpack.c.l.b16 %v2413
    %v2542 = vunpack.c.l.b16 %v2414
    %v2543 = vunpack.c.l.b16 %v2415
    %v2544 = vunpack.c.l.b16 %v2416
    %v2545 = vunpack.c.l.b16 %v2417
    %v2546 = vunpack.c.l.b16 %v2418
    %v2547 = vunpack.c.l.b16 %v2419
    %v2548 = vunpack.c.l.b16 %v2420
    %v2549 = vunpack.c.l.b16 %v2421
    %v2550 = vunpack.c.l.b16 %v2422
    %v2551 = vunpack.c.l.b16 %v2423
    %v2552 = vunpack.c.l.b16 %v2424
    %v2553 = vunpack.c.l.b16 %v2425
    %v2554 = vunpack.c.l.b16 %v2426
    %v2555 = vunpack.c.l.b16 %v2427
    %v2556 = vunpack.c.l.b16 %v2428
    %v2557 = vunpack.c.l.b16 %v2429
    %v2558 = vunpack.c.l.b16 %v2430
    %v2559 = vunpack.c.l.b16 %v2431
    %v2560 = vunpack.c.l.b16 %v2432
    %v2561 = vunpack.c.l.b16 %v2433
    %v2562 = vunpack.c.l.b16 %v2434
    %v2563 = vunpack.c.l.b16 %v2435
    %v2564 = vunpack.c.l.b16 %v2436
    %v2565 = vunpack.c.l.b16 %v2437
    %v2566 = vunpack.c.l.b16 %v2438
    %v2567 = vunpack.c.l.b16 %v2439
    %v2568 = vunpack.c.l.b16 %v2440
    %v2569 = vunpack.c.l.b16 %v2441
    %v2570 = vunpack.c.l.b16 %v2442
    %v2571 = vunpack.c.l.b16 %v2443
    %v2572 = vunpack.c.l.b16 %v2444
    %v2573 = vunpack.c.l.b16 %v2445
    %v2574 = vunpack.c.l.b16 %v2446
    %v2575 = vunpack.c.l.b16 %v2447
    %v2576 = vunpack.c.l.b16 %v2448
    %v2577 = vunpack.c.l.b16 %v2449
    %v2578 = vunpack.c.l.b16 %v2450
    %v2579 = vpack.c.b16 %v2516, %v2515
    %v2580 = vpack.c.b16 %v2518, %v2517
    %v2581 = vpack.c.b16 %v2520, %v2519
    %v2582 = vpack.c.b16 %v2522, %v2521
    %v2583 = vpack.c.b16 %v2524, %v2523
    %v2584 = vpack.c.b16 %v2526, %v2525
    %v2585 = vpack.c.b16 %v2528, %v2527
    %v2586 = vpack.c.b16 %v2530, %v2529
    %v2587 = vpack.c.b16 %v2532, %v2531
    %v2588 = vpack.c.b16 %v2534, %v2533
    %v2589 = vpack.c.b16 %v2536, %v2535
    %v2590 = vpack.c.b16 %v2538, %v2537
    %v2591 = vpack.c.b16 %v2540, %v2539
    %v2592 = vpack.c.b16 %v2542, %v2541
    %v2593 = vpack.c.b16 %v2544, %v2543
    %v2594 = vpack.c.b16 %v2546, %v2545
    %v2595 = vpack.c.b16 %v2548, %v2547
    %v2596 = vpack.c.b16 %v2550, %v2549
    %v2597 = vpack.c.b16 %v2552, %v2551
    %v2598 = vpack.c.b16 %v2554, %v2553
    %v2599 = vpack.c.b16 %v2556, %v2555
    %v2600 = vpack.c.b16 %v2558, %v2557
    %v2601 = vpack.c.b16 %v2560, %v2559
    %v2602 = vpack.c.b16 %v2562, %v2561
    %v2603 = vpack.c.b16 %v2564, %v2563
    %v2604 = vpack.c.b16 %v2566, %v2565
    %v2605 = vpack.c.b16 %v2568, %v2567
    %v2606 = vpack.c.b16 %v2570, %v2569
    %v2607 = vpack.c.b16 %v2572, %v2571
    %v2608 = vpack.c.b16 %v2574, %v2573
    %v2609 = vpack.c.b16 %v2576, %v2575
    %v2610 = vpack.c.b16 %v2578, %v2577
    %2643 = vmatprep.subr.bf16.mxu0 0
    %2644 = vmatpush1.bf16.msra.mxu0 %v2586
    %2645 = vmatprep.subr.bf16.mxu0 0
    %2646 = vmatpush1.bf16.msra.mxu0 %v2585
    %2647 = vmatprep.subr.bf16.mxu0 0
    %2648 = vmatpush1.bf16.msra.mxu0 %v2584
    %2649 = vmatprep.subr.bf16.mxu0 0
    %2650 = vmatpush1.bf16.msra.mxu0 %v2583
    %2651 = vmatprep.subr.bf16.mxu0 0
    %2652 = vmatpush1.bf16.msra.mxu0 %v2582
    %2653 = vmatprep.subr.bf16.mxu0 0
    %2654 = vmatpush1.bf16.msra.mxu0 %v2581
    %2655 = vmatprep.subr.bf16.mxu0 0
    %2656 = vmatpush1.bf16.msra.mxu0 %v2580
    %2657 = vmatprep.subr.bf16.mxu0 0
    %2658 = vmatpush1.bf16.msra.mxu0 %v2579
    %2659 = vmatprep.subr.bf16.mxu0 0
    %2660 = vmatpush2.bf16.msra.mxu0 %v2594
    %2661 = vmatprep.subr.bf16.mxu0 0
    %2662 = vmatpush2.bf16.msra.mxu0 %v2593
    %2663 = vmatprep.subr.bf16.mxu0 0
    %2664 = vmatpush2.bf16.msra.mxu0 %v2592
    %2665 = vmatprep.subr.bf16.mxu0 0
    %2666 = vmatpush2.bf16.msra.mxu0 %v2591
    %2667 = vmatprep.subr.bf16.mxu0 0
    %2668 = vmatpush2.bf16.msra.mxu0 %v2590
    %2669 = vmatprep.subr.bf16.mxu0 0
    %2670 = vmatpush2.bf16.msra.mxu0 %v2589
    %2671 = vmatprep.subr.bf16.mxu0 0
    %2672 = vmatpush2.bf16.msra.mxu0 %v2588
    %2673 = vmatprep.subr.bf16.mxu0 0
    %2674 = vmatpush2.bf16.msra.mxu0 %v2587
    %2675 = vmatprep.mubr.bf16.mxu0 %v2383
    %2676 = vmatmul.mubr.bf16.gmra.mxu0 %v2382
    %v2677 = vpop.f32.mrf.mxu0
    %v2678 = vadd.f32 0.0, %v2677
    %v2679 = vpop.f32.mrf.mxu0
    %v2680 = vpop.f32.mrf.mxu0
    %v2681 = vadd.f32 0.0, %v2680
    %v2682 = vpop.f32.mrf.mxu0
    %2683 = vdwg.mxu0
    %2684 = vmatprep.subr.bf16.mxu0 0
    %2685 = vmatpush1.bf16.msra.mxu0 %v2602
    %2686 = vmatprep.subr.bf16.mxu0 0
    %2687 = vmatpush1.bf16.msra.mxu0 %v2601
    %2688 = vmatprep.subr.bf16.mxu0 0
    %2689 = vmatpush1.bf16.msra.mxu0 %v2600
    %2690 = vmatprep.subr.bf16.mxu0 0
    %2691 = vmatpush1.bf16.msra.mxu0 %v2599
    %2692 = vmatprep.subr.bf16.mxu0 0
    %2693 = vmatpush1.bf16.msra.mxu0 %v2598
    %2694 = vmatprep.subr.bf16.mxu0 0
    %2695 = vmatpush1.bf16.msra.mxu0 %v2597
    %2696 = vmatprep.subr.bf16.mxu0 0
    %2697 = vmatpush1.bf16.msra.mxu0 %v2596
    %2698 = vmatprep.subr.bf16.mxu0 0
    %2699 = vmatpush1.bf16.msra.mxu0 %v2595
    %2700 = vmatprep.subr.bf16.mxu0 0
    %2701 = vmatpush2.bf16.msra.mxu0 %v2610
    %2702 = vmatprep.subr.bf16.mxu0 0
    %2703 = vmatpush2.bf16.msra.mxu0 %v2609
    %2704 = vmatprep.subr.bf16.mxu0 0
    %2705 = vmatpush2.bf16.msra.mxu0 %v2608
    %2706 = vmatprep.subr.bf16.mxu0 0
    %2707 = vmatpush2.bf16.msra.mxu0 %v2607
    %2708 = vmatprep.subr.bf16.mxu0 0
    %2709 = vmatpush2.bf16.msra.mxu0 %v2606
    %2710 = vmatprep.subr.bf16.mxu0 0
    %2711 = vmatpush2.bf16.msra.mxu0 %v2605
    %2712 = vmatprep.subr.bf16.mxu0 0
    %2713 = vmatpush2.bf16.msra.mxu0 %v2604
    %2714 = vmatprep.subr.bf16.mxu0 0
    %2715 = vmatpush2.bf16.msra.mxu0 %v2603
    %2716 = vmatprep.mubr.bf16.mxu0 %v2385
    %2717 = vmatmul.mubr.bf16.gmra.mxu0 %v2384
    %v2718 = vpop.f32.mrf.mxu0
    %v2719 = vadd.f32 %v2678, %v2718
    %v2720 = vpop.f32.mrf.mxu0
    %v2721 = vpop.f32.mrf.mxu0
    %v2722 = vadd.f32 %v2681, %v2721
    %v2723 = vpop.f32.mrf.mxu0
    %2724 = vdwg.mxu0
    %v2789 = vunpack.c.l.b16 %v2104
    %v2790 = vunpack.c.l.b16 %v2105
    %v2791 = vunpack.c.l.b16 %v2106
    %v2792 = vunpack.c.l.b16 %v2107
    %v2793 = vunpack.c.l.b16 %v2108
    %v2794 = vunpack.c.l.b16 %v2109
    %v2795 = vunpack.c.l.b16 %v2110
    %v2796 = vunpack.c.l.b16 %v2111
    %v2797 = vunpack.c.l.b16 %v2112
    %v2798 = vunpack.c.l.b16 %v2113
    %v2799 = vunpack.c.l.b16 %v2114
    %v2800 = vunpack.c.l.b16 %v2115
    %v2801 = vunpack.c.l.b16 %v2116
    %v2802 = vunpack.c.l.b16 %v2117
    %v2803 = vunpack.c.l.b16 %v2118
    %v2804 = vunpack.c.l.b16 %v2119
    %v2805 = vunpack.c.l.b16 %v2120
    %v2806 = vunpack.c.l.b16 %v2121
    %v2807 = vunpack.c.l.b16 %v2122
    %v2808 = vunpack.c.l.b16 %v2123
    %v2809 = vunpack.c.l.b16 %v2124
    %v2810 = vunpack.c.l.b16 %v2125
    %v2811 = vunpack.c.l.b16 %v2126
    %v2812 = vunpack.c.l.b16 %v2127
    %v2813 = vunpack.c.l.b16 %v2128
    %v2814 = vunpack.c.l.b16 %v2129
    %v2815 = vunpack.c.l.b16 %v2130
    %v2816 = vunpack.c.l.b16 %v2131
    %v2817 = vunpack.c.l.b16 %v2132
    %v2818 = vunpack.c.l.b16 %v2133
    %v2819 = vunpack.c.l.b16 %v2134
    %v2820 = vunpack.c.l.b16 %v2135
    %v2821 = vunpack.c.l.b16 %v2136
    %v2822 = vunpack.c.l.b16 %v2137
    %v2823 = vunpack.c.l.b16 %v2138
    %v2824 = vunpack.c.l.b16 %v2139
    %v2825 = vunpack.c.l.b16 %v2140
    %v2826 = vunpack.c.l.b16 %v2141
    %v2827 = vunpack.c.l.b16 %v2142
    %v2828 = vunpack.c.l.b16 %v2143
    %v2829 = vunpack.c.l.b16 %v2144
    %v2830 = vunpack.c.l.b16 %v2145
    %v2831 = vunpack.c.l.b16 %v2146
    %v2832 = vunpack.c.l.b16 %v2147
    %v2833 = vunpack.c.l.b16 %v2148
    %v2834 = vunpack.c.l.b16 %v2149
    %v2835 = vunpack.c.l.b16 %v2150
    %v2836 = vunpack.c.l.b16 %v2151
    %v2837 = vunpack.c.l.b16 %v2152
    %v2838 = vunpack.c.l.b16 %v2153
    %v2839 = vunpack.c.l.b16 %v2154
    %v2840 = vunpack.c.l.b16 %v2155
    %v2841 = vunpack.c.l.b16 %v2156
    %v2842 = vunpack.c.l.b16 %v2157
    %v2843 = vunpack.c.l.b16 %v2158
    %v2844 = vunpack.c.l.b16 %v2159
    %v2845 = vunpack.c.l.b16 %v2160
    %v2846 = vunpack.c.l.b16 %v2161
    %v2847 = vunpack.c.l.b16 %v2162
    %v2848 = vunpack.c.l.b16 %v2163
    %v2849 = vunpack.c.l.b16 %v2164
    %v2850 = vunpack.c.l.b16 %v2165
    %v2851 = vunpack.c.l.b16 %v2166
    %v2852 = vunpack.c.l.b16 %v2167
    %v2853 = vpack.c.b16 %v2790, %v2789
    %v2854 = vpack.c.b16 %v2792, %v2791
    %v2855 = vpack.c.b16 %v2794, %v2793
    %v2856 = vpack.c.b16 %v2796, %v2795
    %v2857 = vpack.c.b16 %v2798, %v2797
    %v2858 = vpack.c.b16 %v2800, %v2799
    %v2859 = vpack.c.b16 %v2802, %v2801
    %v2860 = vpack.c.b16 %v2804, %v2803
    %v2861 = vpack.c.b16 %v2806, %v2805
    %v2862 = vpack.c.b16 %v2808, %v2807
    %v2863 = vpack.c.b16 %v2810, %v2809
    %v2864 = vpack.c.b16 %v2812, %v2811
    %v2865 = vpack.c.b16 %v2814, %v2813
    %v2866 = vpack.c.b16 %v2816, %v2815
    %v2867 = vpack.c.b16 %v2818, %v2817
    %v2868 = vpack.c.b16 %v2820, %v2819
    %v2869 = vpack.c.b16 %v2822, %v2821
    %v2870 = vpack.c.b16 %v2824, %v2823
    %v2871 = vpack.c.b16 %v2826, %v2825
    %v2872 = vpack.c.b16 %v2828, %v2827
    %v2873 = vpack.c.b16 %v2830, %v2829
    %v2874 = vpack.c.b16 %v2832, %v2831
    %v2875 = vpack.c.b16 %v2834, %v2833
    %v2876 = vpack.c.b16 %v2836, %v2835
    %v2877 = vpack.c.b16 %v2838, %v2837
    %v2878 = vpack.c.b16 %v2840, %v2839
    %v2879 = vpack.c.b16 %v2842, %v2841
    %v2880 = vpack.c.b16 %v2844, %v2843
    %v2881 = vpack.c.b16 %v2846, %v2845
    %v2882 = vpack.c.b16 %v2848, %v2847
    %v2883 = vpack.c.b16 %v2850, %v2849
    %v2884 = vpack.c.b16 %v2852, %v2851
    %2917 = vmatprep.subr.bf16.mxu0 0
    %2918 = vmatpush1.bf16.msra.mxu0 %v2860
    %2919 = vmatprep.subr.bf16.mxu0 0
    %2920 = vmatpush1.bf16.msra.mxu0 %v2859
    %2921 = vmatprep.subr.bf16.mxu0 0
    %2922 = vmatpush1.bf16.msra.mxu0 %v2858
    %2923 = vmatprep.subr.bf16.mxu0 0
    %2924 = vmatpush1.bf16.msra.mxu0 %v2857
    %2925 = vmatprep.subr.bf16.mxu0 0
    %2926 = vmatpush1.bf16.msra.mxu0 %v2856
    %2927 = vmatprep.subr.bf16.mxu0 0
    %2928 = vmatpush1.bf16.msra.mxu0 %v2855
    %2929 = vmatprep.subr.bf16.mxu0 0
    %2930 = vmatpush1.bf16.msra.mxu0 %v2854
    %2931 = vmatprep.subr.bf16.mxu0 0
    %2932 = vmatpush1.bf16.msra.mxu0 %v2853
    %2933 = vmatprep.subr.bf16.mxu0 0
    %2934 = vmatpush2.bf16.msra.mxu0 %v2868
    %2935 = vmatprep.subr.bf16.mxu0 0
    %2936 = vmatpush2.bf16.msra.mxu0 %v2867
    %2937 = vmatprep.subr.bf16.mxu0 0
    %2938 = vmatpush2.bf16.msra.mxu0 %v2866
    %2939 = vmatprep.subr.bf16.mxu0 0
    %2940 = vmatpush2.bf16.msra.mxu0 %v2865
    %2941 = vmatprep.subr.bf16.mxu0 0
    %2942 = vmatpush2.bf16.msra.mxu0 %v2864
    %2943 = vmatprep.subr.bf16.mxu0 0
    %2944 = vmatpush2.bf16.msra.mxu0 %v2863
    %2945 = vmatprep.subr.bf16.mxu0 0
    %2946 = vmatpush2.bf16.msra.mxu0 %v2862
    %2947 = vmatprep.subr.bf16.mxu0 0
    %2948 = vmatpush2.bf16.msra.mxu0 %v2861
    %2949 = vmatprep.mubr.bf16.mxu0 %v2101
    %2950 = vmatmul.mubr.bf16.gmra.mxu0 %v2100
    %v2951 = vpop.f32.mrf.mxu0
    %v2952 = vadd.f32 %v2719, %v2951
    %v2953 = vpop.f32.mrf.mxu0
    %v2954 = vpop.f32.mrf.mxu0
    %v2955 = vadd.f32 %v2722, %v2954
    %v2956 = vpop.f32.mrf.mxu0
    %2957 = vdwg.mxu0
    %2958 = vmatprep.subr.bf16.mxu0 0
    %2959 = vmatpush1.bf16.msra.mxu0 %v2876
    %2960 = vmatprep.subr.bf16.mxu0 0
    %2961 = vmatpush1.bf16.msra.mxu0 %v2875
    %2962 = vmatprep.subr.bf16.mxu0 0
    %2963 = vmatpush1.bf16.msra.mxu0 %v2874
    %2964 = vmatprep.subr.bf16.mxu0 0
    %2965 = vmatpush1.bf16.msra.mxu0 %v2873
    %2966 = vmatprep.subr.bf16.mxu0 0
    %2967 = vmatpush1.bf16.msra.mxu0 %v2872
    %2968 = vmatprep.subr.bf16.mxu0 0
    %2969 = vmatpush1.bf16.msra.mxu0 %v2871
    %2970 = vmatprep.subr.bf16.mxu0 0
    %2971 = vmatpush1.bf16.msra.mxu0 %v2870
    %2972 = vmatprep.subr.bf16.mxu0 0
    %2973 = vmatpush1.bf16.msra.mxu0 %v2869
    %2974 = vmatprep.subr.bf16.mxu0 0
    %2975 = vmatpush2.bf16.msra.mxu0 %v2884
    %2976 = vmatprep.subr.bf16.mxu0 0
    %2977 = vmatpush2.bf16.msra.mxu0 %v2883
    %2978 = vmatprep.subr.bf16.mxu0 0
    %2979 = vmatpush2.bf16.msra.mxu0 %v2882
    %2980 = vmatprep.subr.bf16.mxu0 0
    %2981 = vmatpush2.bf16.msra.mxu0 %v2881
    %2982 = vmatprep.subr.bf16.mxu0 0
    %2983 = vmatpush2.bf16.msra.mxu0 %v2880
    %2984 = vmatprep.subr.bf16.mxu0 0
    %2985 = vmatpush2.bf16.msra.mxu0 %v2879
    %2986 = vmatprep.subr.bf16.mxu0 0
    %2987 = vmatpush2.bf16.msra.mxu0 %v2878
    %2988 = vmatprep.subr.bf16.mxu0 0
    %2989 = vmatpush2.bf16.msra.mxu0 %v2877
    %2990 = vmatprep.mubr.bf16.mxu0 %v2103
    %2991 = vmatmul.mubr.bf16.gmra.mxu0 %v2102
    %v2992 = vpop.f32.mrf.mxu0
    %v2993 = vadd.f32 %v2952, %v2992
    %v2994 = vpop.f32.mrf.mxu0
    %v2995 = vpop.f32.mrf.mxu0
    %v2996 = vadd.f32 %v2955, %v2995
    %v2997 = vpop.f32.mrf.mxu0
    %2998 = vdwg.mxu0
    %s2999 = scalar_lea.vmem %s15, 256
    %v3000 = vld [vmem:[%s2999] sm:$0xff]
    %v3001 = vld [vmem:[%s2999 + $0x8] sm:$0xff]
    %v3002 = vld [vmem:[%s2999 + $0x10] sm:$0xff]
    %v3003 = vld [vmem:[%s2999 + $0x18] sm:$0xff]
    %v3004 = vld [vmem:[%s2999 + $0x20] sm:$0xff]
    %v3005 = vld [vmem:[%s2999 + $0x28] sm:$0xff]
    %v3006 = vld [vmem:[%s2999 + $0x30] sm:$0xff]
    %v3007 = vld [vmem:[%s2999 + $0x38] sm:$0xff]
    %v3008 = vld [vmem:[%s2999 + $0x40] sm:$0xff]
    %v3009 = vld [vmem:[%s2999 + $0x48] sm:$0xff]
    %v3010 = vld [vmem:[%s2999 + $0x50] sm:$0xff]
    %v3011 = vld [vmem:[%s2999 + $0x58] sm:$0xff]
    %v3012 = vld [vmem:[%s2999 + $0x60] sm:$0xff]
    %v3013 = vld [vmem:[%s2999 + $0x68] sm:$0xff]
    %v3014 = vld [vmem:[%s2999 + $0x70] sm:$0xff]
    %v3015 = vld [vmem:[%s2999 + $0x78] sm:$0xff]
    %s3016 = scalar_lea.vmem %s16, 8
    %v3017 = vld [vmem:[%s3016] sm:$0xf]
    %v3019 = vlaneseq
    %v3020 = vshrl.u32 %v3019, 7
    %v3021 = vsub.s32 0, %v3020
    %v3022 = vrot.slane %v3017, %v3021
    %v3023 = vlaneseq
    %v3024 = vshrl.u32 %v3023, 7
    %v3025 = vsub.s32 1, %v3024
    %v3026 = vrot.slane %v3017, %v3025
    %v3027 = vlaneseq
    %v3028 = vshrl.u32 %v3027, 7
    %v3029 = vsub.s32 2, %v3028
    %v3030 = vrot.slane %v3017, %v3029
    %v3031 = vlaneseq
    %v3032 = vshrl.u32 %v3031, 7
    %v3033 = vsub.s32 3, %v3032
    %v3034 = vrot.slane %v3017, %v3033
    %v3055 = vunpack.c.l.b16 %v3000
    %v3056 = vunpack.c.h.b16 %v3000
    %v3057 = vunpack.c.l.b16 %v3001
    %v3058 = vunpack.c.h.b16 %v3001
    %v3059 = vunpack.c.l.b16 %v3002
    %v3060 = vunpack.c.h.b16 %v3002
    %v3061 = vunpack.c.l.b16 %v3003
    %v3062 = vunpack.c.h.b16 %v3003
    %v3063 = vunpack.c.l.b16 %v3004
    %v3064 = vunpack.c.h.b16 %v3004
    %v3065 = vunpack.c.l.b16 %v3005
    %v3066 = vunpack.c.h.b16 %v3005
    %v3067 = vunpack.c.l.b16 %v3006
    %v3068 = vunpack.c.h.b16 %v3006
    %v3069 = vunpack.c.l.b16 %v3007
    %v3070 = vunpack.c.h.b16 %v3007
    %v3071 = vunpack.c.l.b16 %v3008
    %v3072 = vunpack.c.h.b16 %v3008
    %v3073 = vunpack.c.l.b16 %v3009
    %v3074 = vunpack.c.h.b16 %v3009
    %v3075 = vunpack.c.l.b16 %v3010
    %v3076 = vunpack.c.h.b16 %v3010
    %v3077 = vunpack.c.l.b16 %v3011
    %v3078 = vunpack.c.h.b16 %v3011
    %v3079 = vunpack.c.l.b16 %v3012
    %v3080 = vunpack.c.h.b16 %v3012
    %v3081 = vunpack.c.l.b16 %v3013
    %v3082 = vunpack.c.h.b16 %v3013
    %v3083 = vunpack.c.l.b16 %v3014
    %v3084 = vunpack.c.h.b16 %v3014
    %v3085 = vunpack.c.l.b16 %v3015
    %v3086 = vunpack.c.h.b16 %v3015
    %v3087 = vpack.c.b16 %v3059, %v3055
    %v3088 = vpack.c.b16 %v3060, %v3056
    %v3089 = vpack.c.b16 %v3061, %v3057
    %v3090 = vpack.c.b16 %v3062, %v3058
    %v3091 = vpack.c.b16 %v3067, %v3063
    %v3092 = vpack.c.b16 %v3068, %v3064
    %v3093 = vpack.c.b16 %v3069, %v3065
    %v3094 = vpack.c.b16 %v3070, %v3066
    %v3095 = vpack.c.b16 %v3075, %v3071
    %v3096 = vpack.c.b16 %v3076, %v3072
    %v3097 = vpack.c.b16 %v3077, %v3073
    %v3098 = vpack.c.b16 %v3078, %v3074
    %v3099 = vpack.c.b16 %v3083, %v3079
    %v3100 = vpack.c.b16 %v3084, %v3080
    %v3101 = vpack.c.b16 %v3085, %v3081
    %v3102 = vpack.c.b16 %v3086, %v3082
    %3119 = vmatprep.subr.bf16.mxu0 0
    %3120 = vmatpush1.bf16.msra.mxu0 0
    %3121 = vmatprep.subr.bf16.mxu0 0
    %3122 = vmatpush1.bf16.msra.mxu0 0
    %3123 = vmatprep.subr.bf16.mxu0 0
    %3124 = vmatpush1.bf16.msra.mxu0 0
    %3125 = vmatprep.subr.bf16.mxu0 0
    %3126 = vmatpush1.bf16.msra.mxu0 0
    %3127 = vmatprep.subr.bf16.mxu0 %v3100
    %3128 = vmatpush1.bf16.msra.mxu0 %v3099
    %3129 = vmatprep.subr.bf16.mxu0 %v3096
    %3130 = vmatpush1.bf16.msra.mxu0 %v3095
    %3131 = vmatprep.subr.bf16.mxu0 %v3092
    %3132 = vmatpush1.bf16.msra.mxu0 %v3091
    %3133 = vmatprep.subr.bf16.mxu0 %v3088
    %3134 = vmatpush1.bf16.msra.mxu0 %v3087
    %3135 = vmatprep.subr.bf16.mxu0 0
    %3136 = vmatpush2.bf16.msra.mxu0 0
    %3137 = vmatprep.subr.bf16.mxu0 0
    %3138 = vmatpush2.bf16.msra.mxu0 0
    %3139 = vmatprep.subr.bf16.mxu0 0
    %3140 = vmatpush2.bf16.msra.mxu0 0
    %3141 = vmatprep.subr.bf16.mxu0 0
    %3142 = vmatpush2.bf16.msra.mxu0 0
    %3143 = vmatprep.subr.bf16.mxu0 0
    %3144 = vmatpush2.bf16.msra.mxu0 0
    %3145 = vmatprep.subr.bf16.mxu0 0
    %3146 = vmatpush2.bf16.msra.mxu0 0
    %3147 = vmatprep.subr.bf16.mxu0 0
    %3148 = vmatpush2.bf16.msra.mxu0 0
    %3149 = vmatprep.subr.bf16.mxu0 0
    %3150 = vmatpush2.bf16.msra.mxu0 0
    %3151 = vmatprep.mubr.bf16.mxu0 0
    %3152 = vmatmul.mubr.bf16.gmra.mxu0 %v2004
    %v3153 = vpop.f32.mrf.mxu0
    %v3154 = vadd.f32 %v3022, %v3153
    %v3155 = vpop.f32.mrf.mxu0
    %v3156 = vadd.f32 %v3026, %v3155
    %v3157 = vpop.f32.mrf.mxu0
    %v3158 = vadd.f32 %v3022, %v3157
    %v3159 = vpop.f32.mrf.mxu0
    %v3160 = vadd.f32 %v3026, %v3159
    %3161 = vdwg.mxu0
    %3162 = vmatprep.subr.bf16.mxu0 0
    %3163 = vmatpush1.bf16.msra.mxu0 0
    %3164 = vmatprep.subr.bf16.mxu0 0
    %3165 = vmatpush1.bf16.msra.mxu0 0
    %3166 = vmatprep.subr.bf16.mxu0 0
    %3167 = vmatpush1.bf16.msra.mxu0 0
    %3168 = vmatprep.subr.bf16.mxu0 0
    %3169 = vmatpush1.bf16.msra.mxu0 0
    %3170 = vmatprep.subr.bf16.mxu0 %v3102
    %3171 = vmatpush1.bf16.msra.mxu0 %v3101
    %3172 = vmatprep.subr.bf16.mxu0 %v3098
    %3173 = vmatpush1.bf16.msra.mxu0 %v3097
    %3174 = vmatprep.subr.bf16.mxu0 %v3094
    %3175 = vmatpush1.bf16.msra.mxu0 %v3093
    %3176 = vmatprep.subr.bf16.mxu0 %v3090
    %3177 = vmatpush1.bf16.msra.mxu0 %v3089
    %3178 = vmatprep.subr.bf16.mxu0 0
    %3179 = vmatpush2.bf16.msra.mxu0 0
    %3180 = vmatprep.subr.bf16.mxu0 0
    %3181 = vmatpush2.bf16.msra.mxu0 0
    %3182 = vmatprep.subr.bf16.mxu0 0
    %3183 = vmatpush2.bf16.msra.mxu0 0
    %3184 = vmatprep.subr.bf16.mxu0 0
    %3185 = vmatpush2.bf16.msra.mxu0 0
    %3186 = vmatprep.subr.bf16.mxu0 0
    %3187 = vmatpush2.bf16.msra.mxu0 0
    %3188 = vmatprep.subr.bf16.mxu0 0
    %3189 = vmatpush2.bf16.msra.mxu0 0
    %3190 = vmatprep.subr.bf16.mxu0 0
    %3191 = vmatpush2.bf16.msra.mxu0 0
    %3192 = vmatprep.subr.bf16.mxu0 0
    %3193 = vmatpush2.bf16.msra.mxu0 0
    %3194 = vmatprep.mubr.bf16.mxu0 0
    %3195 = vmatmul.mubr.bf16.gmra.mxu0 %v2004
    %v3196 = vpop.f32.mrf.mxu0
    %v3197 = vadd.f32 %v3030, %v3196
    %v3198 = vpop.f32.mrf.mxu0
    %v3199 = vadd.f32 %v3034, %v3198
    %v3200 = vpop.f32.mrf.mxu0
    %v3201 = vadd.f32 %v3030, %v3200
    %v3202 = vpop.f32.mrf.mxu0
    %v3203 = vadd.f32 %v3034, %v3202
    %3204 = vdwg.mxu0
    %v3205 = vmax.f32 %v3154, 0.0
    %v3206 = vmax.f32 %v3156, 0.0
    %v3207 = vmax.f32 %v3197, 0.0
    %v3208 = vmax.f32 %v3199, 0.0
    %v3209 = vmax.f32 %v3158, 0.0
    %v3210 = vmax.f32 %v3160, 0.0
    %v3211 = vmax.f32 %v3201, 0.0
    %v3212 = vmax.f32 %v3203, 0.0
    %v3213 = vpack.c.bf16 %v3209, %v3205
    %v3214 = vpack.c.bf16 %v3210, %v3206
    %v3215 = vpack.c.bf16 %v3211, %v3207
    %v3216 = vpack.c.bf16 %v3212, %v3208
    %s3217 = scalar_lea.vmem %s17, 512
    %v3218 = vld [vmem:[%s3217] sm:$0xf]
    %v3219 = vld [vmem:[%s3217 + $0x4] sm:$0xf]
    %v3220 = vld [vmem:[%s3217 + $0x8] sm:$0xf]
    %v3221 = vld [vmem:[%s3217 + $0xc] sm:$0xf]
    %v3222 = vld [vmem:[%s3217 + $0x10] sm:$0xf]
    %v3223 = vld [vmem:[%s3217 + $0x14] sm:$0xf]
    %v3224 = vld [vmem:[%s3217 + $0x18] sm:$0xf]
    %v3225 = vld [vmem:[%s3217 + $0x1c] sm:$0xf]
    %v3226 = vld [vmem:[%s3217 + $0x20] sm:$0xf]
    %v3227 = vld [vmem:[%s3217 + $0x24] sm:$0xf]
    %v3228 = vld [vmem:[%s3217 + $0x28] sm:$0xf]
    %v3229 = vld [vmem:[%s3217 + $0x2c] sm:$0xf]
    %v3230 = vld [vmem:[%s3217 + $0x30] sm:$0xf]
    %v3231 = vld [vmem:[%s3217 + $0x34] sm:$0xf]
    %v3232 = vld [vmem:[%s3217 + $0x38] sm:$0xf]
    %v3233 = vld [vmem:[%s3217 + $0x3c] sm:$0xf]
    %v3234 = vld [vmem:[%s3217 + $0x40] sm:$0xf]
    %v3235 = vld [vmem:[%s3217 + $0x44] sm:$0xf]
    %v3236 = vld [vmem:[%s3217 + $0x48] sm:$0xf]
    %v3237 = vld [vmem:[%s3217 + $0x4c] sm:$0xf]
    %v3238 = vld [vmem:[%s3217 + $0x50] sm:$0xf]
    %v3239 = vld [vmem:[%s3217 + $0x54] sm:$0xf]
    %v3240 = vld [vmem:[%s3217 + $0x58] sm:$0xf]
    %v3241 = vld [vmem:[%s3217 + $0x5c] sm:$0xf]
    %v3242 = vld [vmem:[%s3217 + $0x60] sm:$0xf]
    %v3243 = vld [vmem:[%s3217 + $0x64] sm:$0xf]
    %v3244 = vld [vmem:[%s3217 + $0x68] sm:$0xf]
    %v3245 = vld [vmem:[%s3217 + $0x6c] sm:$0xf]
    %v3246 = vld [vmem:[%s3217 + $0x70] sm:$0xf]
    %v3247 = vld [vmem:[%s3217 + $0x74] sm:$0xf]
    %v3248 = vld [vmem:[%s3217 + $0x78] sm:$0xf]
    %v3249 = vld [vmem:[%s3217 + $0x7c] sm:$0xf]
    %v3250 = vld [vmem:[%s3217 + $0x80] sm:$0xf]
    %v3251 = vld [vmem:[%s3217 + $0x84] sm:$0xf]
    %v3252 = vld [vmem:[%s3217 + $0x88] sm:$0xf]
    %v3253 = vld [vmem:[%s3217 + $0x8c] sm:$0xf]
    %v3254 = vld [vmem:[%s3217 + $0x90] sm:$0xf]
    %v3255 = vld [vmem:[%s3217 + $0x94] sm:$0xf]
    %v3256 = vld [vmem:[%s3217 + $0x98] sm:$0xf]
    %v3257 = vld [vmem:[%s3217 + $0x9c] sm:$0xf]
    %v3258 = vld [vmem:[%s3217 + $0xa0] sm:$0xf]
    %v3259 = vld [vmem:[%s3217 + $0xa4] sm:$0xf]
    %v3260 = vld [vmem:[%s3217 + $0xa8] sm:$0xf]
    %v3261 = vld [vmem:[%s3217 + $0xac] sm:$0xf]
    %v3262 = vld [vmem:[%s3217 + $0xb0] sm:$0xf]
    %v3263 = vld [vmem:[%s3217 + $0xb4] sm:$0xf]
    %v3264 = vld [vmem:[%s3217 + $0xb8] sm:$0xf]
    %v3265 = vld [vmem:[%s3217 + $0xbc] sm:$0xf]
    %v3266 = vld [vmem:[%s3217 + $0xc0] sm:$0xf]
    %v3267 = vld [vmem:[%s3217 + $0xc4] sm:$0xf]
    %v3268 = vld [vmem:[%s3217 + $0xc8] sm:$0xf]
    %v3269 = vld [vmem:[%s3217 + $0xcc] sm:$0xf]
    %v3270 = vld [vmem:[%s3217 + $0xd0] sm:$0xf]
    %v3271 = vld [vmem:[%s3217 + $0xd4] sm:$0xf]
    %v3272 = vld [vmem:[%s3217 + $0xd8] sm:$0xf]
    %v3273 = vld [vmem:[%s3217 + $0xdc] sm:$0xf]
    %v3274 = vld [vmem:[%s3217 + $0xe0] sm:$0xf]
    %v3275 = vld [vmem:[%s3217 + $0xe4] sm:$0xf]
    %v3276 = vld [vmem:[%s3217 + $0xe8] sm:$0xf]
    %v3277 = vld [vmem:[%s3217 + $0xec] sm:$0xf]
    %v3278 = vld [vmem:[%s3217 + $0xf0] sm:$0xf]
    %v3279 = vld [vmem:[%s3217 + $0xf4] sm:$0xf]
    %v3280 = vld [vmem:[%s3217 + $0xf8] sm:$0xf]
    %v3281 = vld [vmem:[%s3217 + $0xfc] sm:$0xf]
    %v3346 = vunpack.c.l.b16 %v3218
    %v3347 = vunpack.c.l.b16 %v3219
    %v3348 = vunpack.c.l.b16 %v3220
    %v3349 = vunpack.c.l.b16 %v3221
    %v3350 = vunpack.c.l.b16 %v3222
    %v3351 = vunpack.c.l.b16 %v3223
    %v3352 = vunpack.c.l.b16 %v3224
    %v3353 = vunpack.c.l.b16 %v3225
    %v3354 = vunpack.c.l.b16 %v3226
    %v3355 = vunpack.c.l.b16 %v3227
    %v3356 = vunpack.c.l.b16 %v3228
    %v3357 = vunpack.c.l.b16 %v3229
    %v3358 = vunpack.c.l.b16 %v3230
    %v3359 = vunpack.c.l.b16 %v3231
    %v3360 = vunpack.c.l.b16 %v3232
    %v3361 = vunpack.c.l.b16 %v3233
    %v3362 = vunpack.c.l.b16 %v3234
    %v3363 = vunpack.c.l.b16 %v3235
    %v3364 = vunpack.c.l.b16 %v3236
    %v3365 = vunpack.c.l.b16 %v3237
    %v3366 = vunpack.c.l.b16 %v3238
    %v3367 = vunpack.c.l.b16 %v3239
    %v3368 = vunpack.c.l.b16 %v3240
    %v3369 = vunpack.c.l.b16 %v3241
    %v3370 = vunpack.c.l.b16 %v3242
    %v3371 = vunpack.c.l.b16 %v3243
    %v3372 = vunpack.c.l.b16 %v3244
    %v3373 = vunpack.c.l.b16 %v3245
    %v3374 = vunpack.c.l.b16 %v3246
    %v3375 = vunpack.c.l.b16 %v3247
    %v3376 = vunpack.c.l.b16 %v3248
    %v3377 = vunpack.c.l.b16 %v3249
    %v3378 = vunpack.c.l.b16 %v3250
    %v3379 = vunpack.c.l.b16 %v3251
    %v3380 = vunpack.c.l.b16 %v3252
    %v3381 = vunpack.c.l.b16 %v3253
    %v3382 = vunpack.c.l.b16 %v3254
    %v3383 = vunpack.c.l.b16 %v3255
    %v3384 = vunpack.c.l.b16 %v3256
    %v3385 = vunpack.c.l.b16 %v3257
    %v3386 = vunpack.c.l.b16 %v3258
    %v3387 = vunpack.c.l.b16 %v3259
    %v3388 = vunpack.c.l.b16 %v3260
    %v3389 = vunpack.c.l.b16 %v3261
    %v3390 = vunpack.c.l.b16 %v3262
    %v3391 = vunpack.c.l.b16 %v3263
    %v3392 = vunpack.c.l.b16 %v3264
    %v3393 = vunpack.c.l.b16 %v3265
    %v3394 = vunpack.c.l.b16 %v3266
    %v3395 = vunpack.c.l.b16 %v3267
    %v3396 = vunpack.c.l.b16 %v3268
    %v3397 = vunpack.c.l.b16 %v3269
    %v3398 = vunpack.c.l.b16 %v3270
    %v3399 = vunpack.c.l.b16 %v3271
    %v3400 = vunpack.c.l.b16 %v3272
    %v3401 = vunpack.c.l.b16 %v3273
    %v3402 = vunpack.c.l.b16 %v3274
    %v3403 = vunpack.c.l.b16 %v3275
    %v3404 = vunpack.c.l.b16 %v3276
    %v3405 = vunpack.c.l.b16 %v3277
    %v3406 = vunpack.c.l.b16 %v3278
    %v3407 = vunpack.c.l.b16 %v3279
    %v3408 = vunpack.c.l.b16 %v3280
    %v3409 = vunpack.c.l.b16 %v3281
    %v3410 = vpack.c.b16 %v3347, %v3346
    %v3411 = vpack.c.b16 %v3349, %v3348
    %v3412 = vpack.c.b16 %v3351, %v3350
    %v3413 = vpack.c.b16 %v3353, %v3352
    %v3414 = vpack.c.b16 %v3355, %v3354
    %v3415 = vpack.c.b16 %v3357, %v3356
    %v3416 = vpack.c.b16 %v3359, %v3358
    %v3417 = vpack.c.b16 %v3361, %v3360
    %v3418 = vpack.c.b16 %v3363, %v3362
    %v3419 = vpack.c.b16 %v3365, %v3364
    %v3420 = vpack.c.b16 %v3367, %v3366
    %v3421 = vpack.c.b16 %v3369, %v3368
    %v3422 = vpack.c.b16 %v3371, %v3370
    %v3423 = vpack.c.b16 %v3373, %v3372
    %v3424 = vpack.c.b16 %v3375, %v3374
    %v3425 = vpack.c.b16 %v3377, %v3376
    %v3426 = vpack.c.b16 %v3379, %v3378
    %v3427 = vpack.c.b16 %v3381, %v3380
    %v3428 = vpack.c.b16 %v3383, %v3382
    %v3429 = vpack.c.b16 %v3385, %v3384
    %v3430 = vpack.c.b16 %v3387, %v3386
    %v3431 = vpack.c.b16 %v3389, %v3388
    %v3432 = vpack.c.b16 %v3391, %v3390
    %v3433 = vpack.c.b16 %v3393, %v3392
    %v3434 = vpack.c.b16 %v3395, %v3394
    %v3435 = vpack.c.b16 %v3397, %v3396
    %v3436 = vpack.c.b16 %v3399, %v3398
    %v3437 = vpack.c.b16 %v3401, %v3400
    %v3438 = vpack.c.b16 %v3403, %v3402
    %v3439 = vpack.c.b16 %v3405, %v3404
    %v3440 = vpack.c.b16 %v3407, %v3406
    %v3441 = vpack.c.b16 %v3409, %v3408
    %3474 = vmatprep.subr.bf16.mxu0 0
    %3475 = vmatpush1.bf16.msra.mxu0 %v3417
    %3476 = vmatprep.subr.bf16.mxu0 0
    %3477 = vmatpush1.bf16.msra.mxu0 %v3416
    %3478 = vmatprep.subr.bf16.mxu0 0
    %3479 = vmatpush1.bf16.msra.mxu0 %v3415
    %3480 = vmatprep.subr.bf16.mxu0 0
    %3481 = vmatpush1.bf16.msra.mxu0 %v3414
    %3482 = vmatprep.subr.bf16.mxu0 0
    %3483 = vmatpush1.bf16.msra.mxu0 %v3413
    %3484 = vmatprep.subr.bf16.mxu0 0
    %3485 = vmatpush1.bf16.msra.mxu0 %v3412
    %3486 = vmatprep.subr.bf16.mxu0 0
    %3487 = vmatpush1.bf16.msra.mxu0 %v3411
    %3488 = vmatprep.subr.bf16.mxu0 0
    %3489 = vmatpush1.bf16.msra.mxu0 %v3410
    %3490 = vmatprep.subr.bf16.mxu0 0
    %3491 = vmatpush2.bf16.msra.mxu0 %v3425
    %3492 = vmatprep.subr.bf16.mxu0 0
    %3493 = vmatpush2.bf16.msra.mxu0 %v3424
    %3494 = vmatprep.subr.bf16.mxu0 0
    %3495 = vmatpush2.bf16.msra.mxu0 %v3423
    %3496 = vmatprep.subr.bf16.mxu0 0
    %3497 = vmatpush2.bf16.msra.mxu0 %v3422
    %3498 = vmatprep.subr.bf16.mxu0 0
    %3499 = vmatpush2.bf16.msra.mxu0 %v3421
    %3500 = vmatprep.subr.bf16.mxu0 0
    %3501 = vmatpush2.bf16.msra.mxu0 %v3420
    %3502 = vmatprep.subr.bf16.mxu0 0
    %3503 = vmatpush2.bf16.msra.mxu0 %v3419
    %3504 = vmatprep.subr.bf16.mxu0 0
    %3505 = vmatpush2.bf16.msra.mxu0 %v3418
    %3506 = vmatprep.mubr.bf16.mxu0 %v3214
    %3507 = vmatmul.mubr.bf16.gmra.mxu0 %v3213
    %v3508 = vpop.f32.mrf.mxu0
    %v3509 = vadd.f32 0.0, %v3508
    %v3510 = vpop.f32.mrf.mxu0
    %v3511 = vpop.f32.mrf.mxu0
    %v3512 = vadd.f32 0.0, %v3511
    %v3513 = vpop.f32.mrf.mxu0
    %3514 = vdwg.mxu0
    %3515 = vmatprep.subr.bf16.mxu0 0
    %3516 = vmatpush1.bf16.msra.mxu0 %v3433
    %3517 = vmatprep.subr.bf16.mxu0 0
    %3518 = vmatpush1.bf16.msra.mxu0 %v3432
    %3519 = vmatprep.subr.bf16.mxu0 0
    %3520 = vmatpush1.bf16.msra.mxu0 %v3431
    %3521 = vmatprep.subr.bf16.mxu0 0
    %3522 = vmatpush1.bf16.msra.mxu0 %v3430
    %3523 = vmatprep.subr.bf16.mxu0 0
    %3524 = vmatpush1.bf16.msra.mxu0 %v3429
    %3525 = vmatprep.subr.bf16.mxu0 0
    %3526 = vmatpush1.bf16.msra.mxu0 %v3428
    %3527 = vmatprep.subr.bf16.mxu0 0
    %3528 = vmatpush1.bf16.msra.mxu0 %v3427
    %3529 = vmatprep.subr.bf16.mxu0 0
    %3530 = vmatpush1.bf16.msra.mxu0 %v3426
    %3531 = vmatprep.subr.bf16.mxu0 0
    %3532 = vmatpush2.bf16.msra.mxu0 %v3441
    %3533 = vmatprep.subr.bf16.mxu0 0
    %3534 = vmatpush2.bf16.msra.mxu0 %v3440
    %3535 = vmatprep.subr.bf16.mxu0 0
    %3536 = vmatpush2.bf16.msra.mxu0 %v3439
    %3537 = vmatprep.subr.bf16.mxu0 0
    %3538 = vmatpush2.bf16.msra.mxu0 %v3438
    %3539 = vmatprep.subr.bf16.mxu0 0
    %3540 = vmatpush2.bf16.msra.mxu0 %v3437
    %3541 = vmatprep.subr.bf16.mxu0 0
    %3542 = vmatpush2.bf16.msra.mxu0 %v3436
    %3543 = vmatprep.subr.bf16.mxu0 0
    %3544 = vmatpush2.bf16.msra.mxu0 %v3435
    %3545 = vmatprep.subr.bf16.mxu0 0
    %3546 = vmatpush2.bf16.msra.mxu0 %v3434
    %3547 = vmatprep.mubr.bf16.mxu0 %v3216
    %3548 = vmatmul.mubr.bf16.gmra.mxu0 %v3215
    %v3549 = vpop.f32.mrf.mxu0
    %v3550 = vadd.f32 %v3509, %v3549
    %v3551 = vpop.f32.mrf.mxu0
    %v3552 = vpop.f32.mrf.mxu0
    %v3553 = vadd.f32 %v3512, %v3552
    %v3554 = vpop.f32.mrf.mxu0
    %3555 = vdwg.mxu0
    %v3556 = vadd.f32 %v2993, %v3550
    %v3557 = vadd.f32 %v2996, %v3553
    %s3558 = scalar_lea.vmem %s15, 384
    %v3559 = vld [vmem:[%s3558] sm:$0xff]
    %v3560 = vld [vmem:[%s3558 + $0x8] sm:$0xff]
    %v3561 = vld [vmem:[%s3558 + $0x10] sm:$0xff]
    %v3562 = vld [vmem:[%s3558 + $0x18] sm:$0xff]
    %v3563 = vld [vmem:[%s3558 + $0x20] sm:$0xff]
    %v3564 = vld [vmem:[%s3558 + $0x28] sm:$0xff]
    %v3565 = vld [vmem:[%s3558 + $0x30] sm:$0xff]
    %v3566 = vld [vmem:[%s3558 + $0x38] sm:$0xff]
    %v3567 = vld [vmem:[%s3558 + $0x40] sm:$0xff]
    %v3568 = vld [vmem:[%s3558 + $0x48] sm:$0xff]
    %v3569 = vld [vmem:[%s3558 + $0x50] sm:$0xff]
    %v3570 = vld [vmem:[%s3558 + $0x58] sm:$0xff]
    %v3571 = vld [vmem:[%s3558 + $0x60] sm:$0xff]
    %v3572 = vld [vmem:[%s3558 + $0x68] sm:$0xff]
    %v3573 = vld [vmem:[%s3558 + $0x70] sm:$0xff]
    %v3574 = vld [vmem:[%s3558 + $0x78] sm:$0xff]
    %s3575 = scalar_lea.vmem %s16, 12
    %v3576 = vld [vmem:[%s3575] sm:$0xf]
    %v3578 = vlaneseq
    %v3579 = vshrl.u32 %v3578, 7
    %v3580 = vsub.s32 0, %v3579
    %v3581 = vrot.slane %v3576, %v3580
    %v3582 = vlaneseq
    %v3583 = vshrl.u32 %v3582, 7
    %v3584 = vsub.s32 1, %v3583
    %v3585 = vrot.slane %v3576, %v3584
    %v3586 = vlaneseq
    %v3587 = vshrl.u32 %v3586, 7
    %v3588 = vsub.s32 2, %v3587
    %v3589 = vrot.slane %v3576, %v3588
    %v3590 = vlaneseq
    %v3591 = vshrl.u32 %v3590, 7
    %v3592 = vsub.s32 3, %v3591
    %v3593 = vrot.slane %v3576, %v3592
    %v3614 = vunpack.c.l.b16 %v3559
    %v3615 = vunpack.c.h.b16 %v3559
    %v3616 = vunpack.c.l.b16 %v3560
    %v3617 = vunpack.c.h.b16 %v3560
    %v3618 = vunpack.c.l.b16 %v3561
    %v3619 = vunpack.c.h.b16 %v3561
    %v3620 = vunpack.c.l.b16 %v3562
    %v3621 = vunpack.c.h.b16 %v3562
    %v3622 = vunpack.c.l.b16 %v3563
    %v3623 = vunpack.c.h.b16 %v3563
    %v3624 = vunpack.c.l.b16 %v3564
    %v3625 = vunpack.c.h.b16 %v3564
    %v3626 = vunpack.c.l.b16 %v3565
    %v3627 = vunpack.c.h.b16 %v3565
    %v3628 = vunpack.c.l.b16 %v3566
    %v3629 = vunpack.c.h.b16 %v3566
    %v3630 = vunpack.c.l.b16 %v3567
    %v3631 = vunpack.c.h.b16 %v3567
    %v3632 = vunpack.c.l.b16 %v3568
    %v3633 = vunpack.c.h.b16 %v3568
    %v3634 = vunpack.c.l.b16 %v3569
    %v3635 = vunpack.c.h.b16 %v3569
    %v3636 = vunpack.c.l.b16 %v3570
    %v3637 = vunpack.c.h.b16 %v3570
    %v3638 = vunpack.c.l.b16 %v3571
    %v3639 = vunpack.c.h.b16 %v3571
    %v3640 = vunpack.c.l.b16 %v3572
    %v3641 = vunpack.c.h.b16 %v3572
    %v3642 = vunpack.c.l.b16 %v3573
    %v3643 = vunpack.c.h.b16 %v3573
    %v3644 = vunpack.c.l.b16 %v3574
    %v3645 = vunpack.c.h.b16 %v3574
    %v3646 = vpack.c.b16 %v3618, %v3614
    %v3647 = vpack.c.b16 %v3619, %v3615
    %v3648 = vpack.c.b16 %v3620, %v3616
    %v3649 = vpack.c.b16 %v3621, %v3617
    %v3650 = vpack.c.b16 %v3626, %v3622
    %v3651 = vpack.c.b16 %v3627, %v3623
    %v3652 = vpack.c.b16 %v3628, %v3624
    %v3653 = vpack.c.b16 %v3629, %v3625
    %v3654 = vpack.c.b16 %v3634, %v3630
    %v3655 = vpack.c.b16 %v3635, %v3631
    %v3656 = vpack.c.b16 %v3636, %v3632
    %v3657 = vpack.c.b16 %v3637, %v3633
    %v3658 = vpack.c.b16 %v3642, %v3638
    %v3659 = vpack.c.b16 %v3643, %v3639
    %v3660 = vpack.c.b16 %v3644, %v3640
    %v3661 = vpack.c.b16 %v3645, %v3641
    %3678 = vmatprep.subr.bf16.mxu0 0
    %3679 = vmatpush1.bf16.msra.mxu0 0
    %3680 = vmatprep.subr.bf16.mxu0 0
    %3681 = vmatpush1.bf16.msra.mxu0 0
    %3682 = vmatprep.subr.bf16.mxu0 0
    %3683 = vmatpush1.bf16.msra.mxu0 0
    %3684 = vmatprep.subr.bf16.mxu0 0
    %3685 = vmatpush1.bf16.msra.mxu0 0
    %3686 = vmatprep.subr.bf16.mxu0 %v3659
    %3687 = vmatpush1.bf16.msra.mxu0 %v3658
    %3688 = vmatprep.subr.bf16.mxu0 %v3655
    %3689 = vmatpush1.bf16.msra.mxu0 %v3654
    %3690 = vmatprep.subr.bf16.mxu0 %v3651
    %3691 = vmatpush1.bf16.msra.mxu0 %v3650
    %3692 = vmatprep.subr.bf16.mxu0 %v3647
    %3693 = vmatpush1.bf16.msra.mxu0 %v3646
    %3694 = vmatprep.subr.bf16.mxu0 0
    %3695 = vmatpush2.bf16.msra.mxu0 0
    %3696 = vmatprep.subr.bf16.mxu0 0
    %3697 = vmatpush2.bf16.msra.mxu0 0
    %3698 = vmatprep.subr.bf16.mxu0 0
    %3699 = vmatpush2.bf16.msra.mxu0 0
    %3700 = vmatprep.subr.bf16.mxu0 0
    %3701 = vmatpush2.bf16.msra.mxu0 0
    %3702 = vmatprep.subr.bf16.mxu0 0
    %3703 = vmatpush2.bf16.msra.mxu0 0
    %3704 = vmatprep.subr.bf16.mxu0 0
    %3705 = vmatpush2.bf16.msra.mxu0 0
    %3706 = vmatprep.subr.bf16.mxu0 0
    %3707 = vmatpush2.bf16.msra.mxu0 0
    %3708 = vmatprep.subr.bf16.mxu0 0
    %3709 = vmatpush2.bf16.msra.mxu0 0
    %3710 = vmatprep.mubr.bf16.mxu0 0
    %3711 = vmatmul.mubr.bf16.gmra.mxu0 %v2004
    %v3712 = vpop.f32.mrf.mxu0
    %v3713 = vadd.f32 %v3581, %v3712
    %v3714 = vpop.f32.mrf.mxu0
    %v3715 = vadd.f32 %v3585, %v3714
    %v3716 = vpop.f32.mrf.mxu0
    %v3717 = vadd.f32 %v3581, %v3716
    %v3718 = vpop.f32.mrf.mxu0
    %v3719 = vadd.f32 %v3585, %v3718
    %3720 = vdwg.mxu0
    %3721 = vmatprep.subr.bf16.mxu0 0
    %3722 = vmatpush1.bf16.msra.mxu0 0
    %3723 = vmatprep.subr.bf16.mxu0 0
    %3724 = vmatpush1.bf16.msra.mxu0 0
    %3725 = vmatprep.subr.bf16.mxu0 0
    %3726 = vmatpush1.bf16.msra.mxu0 0
    %3727 = vmatprep.subr.bf16.mxu0 0
    %3728 = vmatpush1.bf16.msra.mxu0 0
    %3729 = vmatprep.subr.bf16.mxu0 %v3661
    %3730 = vmatpush1.bf16.msra.mxu0 %v3660
    %3731 = vmatprep.subr.bf16.mxu0 %v3657
    %3732 = vmatpush1.bf16.msra.mxu0 %v3656
    %3733 = vmatprep.subr.bf16.mxu0 %v3653
    %3734 = vmatpush1.bf16.msra.mxu0 %v3652
    %3735 = vmatprep.subr.bf16.mxu0 %v3649
    %3736 = vmatpush1.bf16.msra.mxu0 %v3648
    %3737 = vmatprep.subr.bf16.mxu0 0
    %3738 = vmatpush2.bf16.msra.mxu0 0
    %3739 = vmatprep.subr.bf16.mxu0 0
    %3740 = vmatpush2.bf16.msra.mxu0 0
    %3741 = vmatprep.subr.bf16.mxu0 0
    %3742 = vmatpush2.bf16.msra.mxu0 0
    %3743 = vmatprep.subr.bf16.mxu0 0
    %3744 = vmatpush2.bf16.msra.mxu0 0
    %3745 = vmatprep.subr.bf16.mxu0 0
    %3746 = vmatpush2.bf16.msra.mxu0 0
    %3747 = vmatprep.subr.bf16.mxu0 0
    %3748 = vmatpush2.bf16.msra.mxu0 0
    %3749 = vmatprep.subr.bf16.mxu0 0
    %3750 = vmatpush2.bf16.msra.mxu0 0
    %3751 = vmatprep.subr.bf16.mxu0 0
    %3752 = vmatpush2.bf16.msra.mxu0 0
    %3753 = vmatprep.mubr.bf16.mxu0 0
    %3754 = vmatmul.mubr.bf16.gmra.mxu0 %v2004
    %v3755 = vpop.f32.mrf.mxu0
    %v3756 = vadd.f32 %v3589, %v3755
    %v3757 = vpop.f32.mrf.mxu0
    %v3758 = vadd.f32 %v3593, %v3757
    %v3759 = vpop.f32.mrf.mxu0
    %v3760 = vadd.f32 %v3589, %v3759
    %v3761 = vpop.f32.mrf.mxu0
    %v3762 = vadd.f32 %v3593, %v3761
    %3763 = vdwg.mxu0
    %v3764 = vmax.f32 %v3713, 0.0
    %v3765 = vmax.f32 %v3715, 0.0
    %v3766 = vmax.f32 %v3756, 0.0
    %v3767 = vmax.f32 %v3758, 0.0
    %v3768 = vmax.f32 %v3717, 0.0
    %v3769 = vmax.f32 %v3719, 0.0
    %v3770 = vmax.f32 %v3760, 0.0
    %v3771 = vmax.f32 %v3762, 0.0
    %v3772 = vpack.c.bf16 %v3768, %v3764
    %v3773 = vpack.c.bf16 %v3769, %v3765
    %v3774 = vpack.c.bf16 %v3770, %v3766
    %v3775 = vpack.c.bf16 %v3771, %v3767
    %s3776 = scalar_lea.vmem %s17, 768
    %v3777 = vld [vmem:[%s3776] sm:$0xf]
    %v3778 = vld [vmem:[%s3776 + $0x4] sm:$0xf]
    %v3779 = vld [vmem:[%s3776 + $0x8] sm:$0xf]
    %v3780 = vld [vmem:[%s3776 + $0xc] sm:$0xf]
    %v3781 = vld [vmem:[%s3776 + $0x10] sm:$0xf]
    %v3782 = vld [vmem:[%s3776 + $0x14] sm:$0xf]
    %v3783 = vld [vmem:[%s3776 + $0x18] sm:$0xf]
    %v3784 = vld [vmem:[%s3776 + $0x1c] sm:$0xf]
    %v3785 = vld [vmem:[%s3776 + $0x20] sm:$0xf]
    %v3786 = vld [vmem:[%s3776 + $0x24] sm:$0xf]
    %v3787 = vld [vmem:[%s3776 + $0x28] sm:$0xf]
    %v3788 = vld [vmem:[%s3776 + $0x2c] sm:$0xf]
    %v3789 = vld [vmem:[%s3776 + $0x30] sm:$0xf]
    %v3790 = vld [vmem:[%s3776 + $0x34] sm:$0xf]
    %v3791 = vld [vmem:[%s3776 + $0x38] sm:$0xf]
    %v3792 = vld [vmem:[%s3776 + $0x3c] sm:$0xf]
    %v3793 = vld [vmem:[%s3776 + $0x40] sm:$0xf]
    %v3794 = vld [vmem:[%s3776 + $0x44] sm:$0xf]
    %v3795 = vld [vmem:[%s3776 + $0x48] sm:$0xf]
    %v3796 = vld [vmem:[%s3776 + $0x4c] sm:$0xf]
    %v3797 = vld [vmem:[%s3776 + $0x50] sm:$0xf]
    %v3798 = vld [vmem:[%s3776 + $0x54] sm:$0xf]
    %v3799 = vld [vmem:[%s3776 + $0x58] sm:$0xf]
    %v3800 = vld [vmem:[%s3776 + $0x5c] sm:$0xf]
    %v3801 = vld [vmem:[%s3776 + $0x60] sm:$0xf]
    %v3802 = vld [vmem:[%s3776 + $0x64] sm:$0xf]
    %v3803 = vld [vmem:[%s3776 + $0x68] sm:$0xf]
    %v3804 = vld [vmem:[%s3776 + $0x6c] sm:$0xf]
    %v3805 = vld [vmem:[%s3776 + $0x70] sm:$0xf]
    %v3806 = vld [vmem:[%s3776 + $0x74] sm:$0xf]
    %v3807 = vld [vmem:[%s3776 + $0x78] sm:$0xf]
    %v3808 = vld [vmem:[%s3776 + $0x7c] sm:$0xf]
    %v3809 = vld [vmem:[%s3776 + $0x80] sm:$0xf]
    %v3810 = vld [vmem:[%s3776 + $0x84] sm:$0xf]
    %v3811 = vld [vmem:[%s3776 + $0x88] sm:$0xf]
    %v3812 = vld [vmem:[%s3776 + $0x8c] sm:$0xf]
    %v3813 = vld [vmem:[%s3776 + $0x90] sm:$0xf]
    %v3814 = vld [vmem:[%s3776 + $0x94] sm:$0xf]
    %v3815 = vld [vmem:[%s3776 + $0x98] sm:$0xf]
    %v3816 = vld [vmem:[%s3776 + $0x9c] sm:$0xf]
    %v3817 = vld [vmem:[%s3776 + $0xa0] sm:$0xf]
    %v3818 = vld [vmem:[%s3776 + $0xa4] sm:$0xf]
    %v3819 = vld [vmem:[%s3776 + $0xa8] sm:$0xf]
    %v3820 = vld [vmem:[%s3776 + $0xac] sm:$0xf]
    %v3821 = vld [vmem:[%s3776 + $0xb0] sm:$0xf]
    %v3822 = vld [vmem:[%s3776 + $0xb4] sm:$0xf]
    %v3823 = vld [vmem:[%s3776 + $0xb8] sm:$0xf]
    %v3824 = vld [vmem:[%s3776 + $0xbc] sm:$0xf]
    %v3825 = vld [vmem:[%s3776 + $0xc0] sm:$0xf]
    %v3826 = vld [vmem:[%s3776 + $0xc4] sm:$0xf]
    %v3827 = vld [vmem:[%s3776 + $0xc8] sm:$0xf]
    %v3828 = vld [vmem:[%s3776 + $0xcc] sm:$0xf]
    %v3829 = vld [vmem:[%s3776 + $0xd0] sm:$0xf]
    %v3830 = vld [vmem:[%s3776 + $0xd4] sm:$0xf]
    %v3831 = vld [vmem:[%s3776 + $0xd8] sm:$0xf]
    %v3832 = vld [vmem:[%s3776 + $0xdc] sm:$0xf]
    %v3833 = vld [vmem:[%s3776 + $0xe0] sm:$0xf]
    %v3834 = vld [vmem:[%s3776 + $0xe4] sm:$0xf]
    %v3835 = vld [vmem:[%s3776 + $0xe8] sm:$0xf]
    %v3836 = vld [vmem:[%s3776 + $0xec] sm:$0xf]
    %v3837 = vld [vmem:[%s3776 + $0xf0] sm:$0xf]
    %v3838 = vld [vmem:[%s3776 + $0xf4] sm:$0xf]
    %v3839 = vld [vmem:[%s3776 + $0xf8] sm:$0xf]
    %v3840 = vld [vmem:[%s3776 + $0xfc] sm:$0xf]
    %v3905 = vunpack.c.l.b16 %v3777
    %v3906 = vunpack.c.l.b16 %v3778
    %v3907 = vunpack.c.l.b16 %v3779
    %v3908 = vunpack.c.l.b16 %v3780
    %v3909 = vunpack.c.l.b16 %v3781
    %v3910 = vunpack.c.l.b16 %v3782
    %v3911 = vunpack.c.l.b16 %v3783
    %v3912 = vunpack.c.l.b16 %v3784
    %v3913 = vunpack.c.l.b16 %v3785
    %v3914 = vunpack.c.l.b16 %v3786
    %v3915 = vunpack.c.l.b16 %v3787
    %v3916 = vunpack.c.l.b16 %v3788
    %v3917 = vunpack.c.l.b16 %v3789
    %v3918 = vunpack.c.l.b16 %v3790
    %v3919 = vunpack.c.l.b16 %v3791
    %v3920 = vunpack.c.l.b16 %v3792
    %v3921 = vunpack.c.l.b16 %v3793
    %v3922 = vunpack.c.l.b16 %v3794
    %v3923 = vunpack.c.l.b16 %v3795
    %v3924 = vunpack.c.l.b16 %v3796
    %v3925 = vunpack.c.l.b16 %v3797
    %v3926 = vunpack.c.l.b16 %v3798
    %v3927 = vunpack.c.l.b16 %v3799
    %v3928 = vunpack.c.l.b16 %v3800
    %v3929 = vunpack.c.l.b16 %v3801
    %v3930 = vunpack.c.l.b16 %v3802
    %v3931 = vunpack.c.l.b16 %v3803
    %v3932 = vunpack.c.l.b16 %v3804
    %v3933 = vunpack.c.l.b16 %v3805
    %v3934 = vunpack.c.l.b16 %v3806
    %v3935 = vunpack.c.l.b16 %v3807
    %v3936 = vunpack.c.l.b16 %v3808
    %v3937 = vunpack.c.l.b16 %v3809
    %v3938 = vunpack.c.l.b16 %v3810
    %v3939 = vunpack.c.l.b16 %v3811
    %v3940 = vunpack.c.l.b16 %v3812
    %v3941 = vunpack.c.l.b16 %v3813
    %v3942 = vunpack.c.l.b16 %v3814
    %v3943 = vunpack.c.l.b16 %v3815
    %v3944 = vunpack.c.l.b16 %v3816
    %v3945 = vunpack.c.l.b16 %v3817
    %v3946 = vunpack.c.l.b16 %v3818
    %v3947 = vunpack.c.l.b16 %v3819
    %v3948 = vunpack.c.l.b16 %v3820
    %v3949 = vunpack.c.l.b16 %v3821
    %v3950 = vunpack.c.l.b16 %v3822
    %v3951 = vunpack.c.l.b16 %v3823
    %v3952 = vunpack.c.l.b16 %v3824
    %v3953 = vunpack.c.l.b16 %v3825
    %v3954 = vunpack.c.l.b16 %v3826
    %v3955 = vunpack.c.l.b16 %v3827
    %v3956 = vunpack.c.l.b16 %v3828
    %v3957 = vunpack.c.l.b16 %v3829
    %v3958 = vunpack.c.l.b16 %v3830
    %v3959 = vunpack.c.l.b16 %v3831
    %v3960 = vunpack.c.l.b16 %v3832
    %v3961 = vunpack.c.l.b16 %v3833
    %v3962 = vunpack.c.l.b16 %v3834
    %v3963 = vunpack.c.l.b16 %v3835
    %v3964 = vunpack.c.l.b16 %v3836
    %v3965 = vunpack.c.l.b16 %v3837
    %v3966 = vunpack.c.l.b16 %v3838
    %v3967 = vunpack.c.l.b16 %v3839
    %v3968 = vunpack.c.l.b16 %v3840
    %v3969 = vpack.c.b16 %v3906, %v3905
    %v3970 = vpack.c.b16 %v3908, %v3907
    %v3971 = vpack.c.b16 %v3910, %v3909
    %v3972 = vpack.c.b16 %v3912, %v3911
    %v3973 = vpack.c.b16 %v3914, %v3913
    %v3974 = vpack.c.b16 %v3916, %v3915
    %v3975 = vpack.c.b16 %v3918, %v3917
    %v3976 = vpack.c.b16 %v3920, %v3919
    %v3977 = vpack.c.b16 %v3922, %v3921
    %v3978 = vpack.c.b16 %v3924, %v3923
    %v3979 = vpack.c.b16 %v3926, %v3925
    %v3980 = vpack.c.b16 %v3928, %v3927
    %v3981 = vpack.c.b16 %v3930, %v3929
    %v3982 = vpack.c.b16 %v3932, %v3931
    %v3983 = vpack.c.b16 %v3934, %v3933
    %v3984 = vpack.c.b16 %v3936, %v3935
    %v3985 = vpack.c.b16 %v3938, %v3937
    %v3986 = vpack.c.b16 %v3940, %v3939
    %v3987 = vpack.c.b16 %v3942, %v3941
    %v3988 = vpack.c.b16 %v3944, %v3943
    %v3989 = vpack.c.b16 %v3946, %v3945
    %v3990 = vpack.c.b16 %v3948, %v3947
    %v3991 = vpack.c.b16 %v3950, %v3949
    %v3992 = vpack.c.b16 %v3952, %v3951
    %v3993 = vpack.c.b16 %v3954, %v3953
    %v3994 = vpack.c.b16 %v3956, %v3955
    %v3995 = vpack.c.b16 %v3958, %v3957
    %v3996 = vpack.c.b16 %v3960, %v3959
    %v3997 = vpack.c.b16 %v3962, %v3961
    %v3998 = vpack.c.b16 %v3964, %v3963
    %v3999 = vpack.c.b16 %v3966, %v3965
    %v4000 = vpack.c.b16 %v3968, %v3967
    %4033 = vmatprep.subr.bf16.mxu0 0
    %4034 = vmatpush1.bf16.msra.mxu0 %v3976
    %4035 = vmatprep.subr.bf16.mxu0 0
    %4036 = vmatpush1.bf16.msra.mxu0 %v3975
    %4037 = vmatprep.subr.bf16.mxu0 0
    %4038 = vmatpush1.bf16.msra.mxu0 %v3974
    %4039 = vmatprep.subr.bf16.mxu0 0
    %4040 = vmatpush1.bf16.msra.mxu0 %v3973
    %4041 = vmatprep.subr.bf16.mxu0 0
    %4042 = vmatpush1.bf16.msra.mxu0 %v3972
    %4043 = vmatprep.subr.bf16.mxu0 0
    %4044 = vmatpush1.bf16.msra.mxu0 %v3971
    %4045 = vmatprep.subr.bf16.mxu0 0
    %4046 = vmatpush1.bf16.msra.mxu0 %v3970
    %4047 = vmatprep.subr.bf16.mxu0 0
    %4048 = vmatpush1.bf16.msra.mxu0 %v3969
    %4049 = vmatprep.subr.bf16.mxu0 0
    %4050 = vmatpush2.bf16.msra.mxu0 %v3984
    %4051 = vmatprep.subr.bf16.mxu0 0
    %4052 = vmatpush2.bf16.msra.mxu0 %v3983
    %4053 = vmatprep.subr.bf16.mxu0 0
    %4054 = vmatpush2.bf16.msra.mxu0 %v3982
    %4055 = vmatprep.subr.bf16.mxu0 0
    %4056 = vmatpush2.bf16.msra.mxu0 %v3981
    %4057 = vmatprep.subr.bf16.mxu0 0
    %4058 = vmatpush2.bf16.msra.mxu0 %v3980
    %4059 = vmatprep.subr.bf16.mxu0 0
    %4060 = vmatpush2.bf16.msra.mxu0 %v3979
    %4061 = vmatprep.subr.bf16.mxu0 0
    %4062 = vmatpush2.bf16.msra.mxu0 %v3978
    %4063 = vmatprep.subr.bf16.mxu0 0
    %4064 = vmatpush2.bf16.msra.mxu0 %v3977
    %4065 = vmatprep.mubr.bf16.mxu0 %v3773
    %4066 = vmatmul.mubr.bf16.gmra.mxu0 %v3772
    %v4067 = vpop.f32.mrf.mxu0
    %v4068 = vadd.f32 0.0, %v4067
    %v4069 = vpop.f32.mrf.mxu0
    %v4070 = vpop.f32.mrf.mxu0
    %v4071 = vadd.f32 0.0, %v4070
    %v4072 = vpop.f32.mrf.mxu0
    %4073 = vdwg.mxu0
    %4074 = vmatprep.subr.bf16.mxu0 0
    %4075 = vmatpush1.bf16.msra.mxu0 %v3992
    %4076 = vmatprep.subr.bf16.mxu0 0
    %4077 = vmatpush1.bf16.msra.mxu0 %v3991
    %4078 = vmatprep.subr.bf16.mxu0 0
    %4079 = vmatpush1.bf16.msra.mxu0 %v3990
    %4080 = vmatprep.subr.bf16.mxu0 0
    %4081 = vmatpush1.bf16.msra.mxu0 %v3989
    %4082 = vmatprep.subr.bf16.mxu0 0
    %4083 = vmatpush1.bf16.msra.mxu0 %v3988
    %4084 = vmatprep.subr.bf16.mxu0 0
    %4085 = vmatpush1.bf16.msra.mxu0 %v3987
    %4086 = vmatprep.subr.bf16.mxu0 0
    %4087 = vmatpush1.bf16.msra.mxu0 %v3986
    %4088 = vmatprep.subr.bf16.mxu0 0
    %4089 = vmatpush1.bf16.msra.mxu0 %v3985
    %4090 = vmatprep.subr.bf16.mxu0 0
    %4091 = vmatpush2.bf16.msra.mxu0 %v4000
    %4092 = vmatprep.subr.bf16.mxu0 0
    %4093 = vmatpush2.bf16.msra.mxu0 %v3999
    %4094 = vmatprep.subr.bf16.mxu0 0
    %4095 = vmatpush2.bf16.msra.mxu0 %v3998
    %4096 = vmatprep.subr.bf16.mxu0 0
    %4097 = vmatpush2.bf16.msra.mxu0 %v3997
    %4098 = vmatprep.subr.bf16.mxu0 0
    %4099 = vmatpush2.bf16.msra.mxu0 %v3996
    %4100 = vmatprep.subr.bf16.mxu0 0
    %4101 = vmatpush2.bf16.msra.mxu0 %v3995
    %4102 = vmatprep.subr.bf16.mxu0 0
    %4103 = vmatpush2.bf16.msra.mxu0 %v3994
    %4104 = vmatprep.subr.bf16.mxu0 0
    %4105 = vmatpush2.bf16.msra.mxu0 %v3993
    %4106 = vmatprep.mubr.bf16.mxu0 %v3775
    %4107 = vmatmul.mubr.bf16.gmra.mxu0 %v3774
    %v4108 = vpop.f32.mrf.mxu0
    %v4109 = vadd.f32 %v4068, %v4108
    %v4110 = vpop.f32.mrf.mxu0
    %v4111 = vpop.f32.mrf.mxu0
    %v4112 = vadd.f32 %v4071, %v4111
    %v4113 = vpop.f32.mrf.mxu0
    %4114 = vdwg.mxu0
    %v4115 = vadd.f32 %v3556, %v4109
    %v4116 = vadd.f32 %v3557, %v4112
    %v4117 = vld [vmem:[%s18] sm:$0x1]
    %v4119 = vlaneseq
    %v4120 = vshrl.u32 %v4119, 7
    %v4121 = vsub.s32 0, %v4120
    %v4122 = vrot.slane %v4117, %v4121
    %v4124 = vadd.f32 %v4115, %v4122
    %v4125 = vadd.f32 %v4116, %v4122
    %v4126 = vadd.f32 %v1882, %v4124
    %v4127 = vadd.f32 %v1883, %v4125
    %v4128 = vld [vmem:[%s13] sm:$0x1]
    %v4129 = vld [vmem:[%s14] sm:$0x1]
    %v4130 = vsel %vm203, %v4126, 0.0
    %4131 = vadd.xlane.f32.xlu0 %v4130
    %v4132 = vpop.xlane.xlu0 %4131
    %v4133 = vsel %vm203, %v4127, 0.0
    %4134 = vadd.xlane.f32.xlu0 %v4133
    %v4135 = vpop.xlane.xlu0 %4134
    %v4136 = vmul.f32 %v4132, %v1847
    %v4137 = vmul.f32 %v4135, %v1847
    %v4138 = vsub.f32 %v4126, %v4136
    %v4139 = vsub.f32 %v4127, %v4137
    %v4140 = vmul.f32 %v4138, %v4138
    %v4141 = vmul.f32 %v4139, %v4139
    %v4142 = vsel %vm203, %v4140, 0.0
    %4143 = vadd.xlane.f32.xlu0 %v4142
    %v4144 = vpop.xlane.xlu0 %4143
    %v4145 = vsel %vm203, %v4141, 0.0
    %4146 = vadd.xlane.f32.xlu0 %v4145
    %v4147 = vpop.xlane.xlu0 %4146
    %v4148 = vmul.f32 %v4144, %v1847
    %v4149 = vmul.f32 %v4147, %v1847
    %v4150 = vadd.f32 %v4148, 1e-05
    %v4151 = vadd.f32 %v4149, 1e-05
    %v4152 = vrsqrt.pop %v4150
    %v4153 = vrsqrt.pop %v4151
    %v4154 = vmul.f32 %v4138, %v4152
    %v4155 = vmul.f32 %v4139, %v4153
    %v4157 = vlaneseq
    %v4158 = vshrl.u32 %v4157, 7
    %v4159 = vsub.s32 0, %v4158
    %v4160 = vrot.slane %v4128, %v4159
    %v4162 = vmul.f32 %v4154, %v4160
    %v4163 = vmul.f32 %v4155, %v4160
    %v4165 = vlaneseq
    %v4166 = vshrl.u32 %v4165, 7
    %v4167 = vsub.s32 0, %v4166
    %v4168 = vrot.slane %v4129, %v4167
    %v4170 = vadd.f32 %v4162, %v4168
    %v4171 = vadd.f32 %v4163, %v4168
    %v4172 = vpack.c.bf16 %v4171, %v4170
    %v4173 = vpack.c.bf16 %v4170, %v4170
    %v4174 = vpack.c.bf16 %v4171, %v4171
    %s4175 = scalar_lea.vmem %s3, 32
    %v4176 = vld [vmem:[%s4175] sm:$0xf]
    %v4177 = vld [vmem:[%s4175 + $0x4] sm:$0xf]
    %v4178 = vld [vmem:[%s4175 + $0x8] sm:$0xf]
    %v4179 = vld [vmem:[%s4175 + $0xc] sm:$0xf]
    %v4180 = vld [vmem:[%s4175 + $0x10] sm:$0xf]
    %v4181 = vld [vmem:[%s4175 + $0x14] sm:$0xf]
    %v4182 = vld [vmem:[%s4175 + $0x18] sm:$0xf]
    %v4183 = vld [vmem:[%s4175 + $0x1c] sm:$0xf]
    %s4184 = scalar_lea.vmem %s4, 1
    %v4185 = vld [vmem:[%s4184] sm:$0x1]
    %v4187 = vlaneseq
    %v4188 = vshrl.u32 %v4187, 7
    %v4189 = vsub.s32 0, %v4188
    %v4190 = vrot.slane %v4185, %v4189
    %v4194 = vunpack.c.l.b16 %v4173
    %v4195 = vunpack.c.l.b16 %v4174
    %v4196 = vrot.slane %v4194, 7
    %v4197 = vrot.slane %v4195, 6
    %vm4198 = vcmask 1041409
    %v4199 = vsel %vm4198, %v4197, %v4196
    %v4200 = vpack.c.b16 %v4199, %v4199
    %v4209 = vunpack.c.l.b16 %v4176
    %v4210 = vunpack.c.l.b16 %v4177
    %v4211 = vunpack.c.l.b16 %v4178
    %v4212 = vunpack.c.l.b16 %v4179
    %v4213 = vunpack.c.l.b16 %v4180
    %v4214 = vunpack.c.l.b16 %v4181
    %v4215 = vunpack.c.l.b16 %v4182
    %v4216 = vunpack.c.l.b16 %v4183
    %v4217 = vpack.c.b16 %v4210, %v4209
    %v4218 = vpack.c.b16 %v4212, %v4211
    %v4219 = vpack.c.b16 %v4214, %v4213
    %v4220 = vpack.c.b16 %v4216, %v4215
    %v4226 = vsel %vm203, %v4200, 0
    %4228 = vmatprep.subr.bf16.mxu0 0
    %4229 = vmatpush1.bf16.msra.mxu0 0
    %4230 = vmatprep.subr.bf16.mxu0 0
    %4231 = vmatpush1.bf16.msra.mxu0 0
    %4232 = vmatprep.subr.bf16.mxu0 0
    %4233 = vmatpush1.bf16.msra.mxu0 0
    %4234 = vmatprep.subr.bf16.mxu0 0
    %4235 = vmatpush1.bf16.msra.mxu0 0
    %4236 = vmatprep.subr.bf16.mxu0 0
    %4237 = vmatpush1.bf16.msra.mxu0 %v4220
    %4238 = vmatprep.subr.bf16.mxu0 0
    %4239 = vmatpush1.bf16.msra.mxu0 %v4219
    %4240 = vmatprep.subr.bf16.mxu0 0
    %4241 = vmatpush1.bf16.msra.mxu0 %v4218
    %4242 = vmatprep.subr.bf16.mxu0 0
    %4243 = vmatpush1.bf16.msra.mxu0 %v4217
    %4244 = vmatprep.subr.bf16.mxu0 0
    %4245 = vmatpush2.bf16.msra.mxu0 0
    %4246 = vmatprep.subr.bf16.mxu0 0
    %4247 = vmatpush2.bf16.msra.mxu0 0
    %4248 = vmatprep.subr.bf16.mxu0 0
    %4249 = vmatpush2.bf16.msra.mxu0 0
    %4250 = vmatprep.subr.bf16.mxu0 0
    %4251 = vmatpush2.bf16.msra.mxu0 0
    %4252 = vmatprep.subr.bf16.mxu0 0
    %4253 = vmatpush2.bf16.msra.mxu0 0
    %4254 = vmatprep.subr.bf16.mxu0 0
    %4255 = vmatpush2.bf16.msra.mxu0 0
    %4256 = vmatprep.subr.bf16.mxu0 0
    %4257 = vmatpush2.bf16.msra.mxu0 0
    %4258 = vmatprep.subr.bf16.mxu0 0
    %4259 = vmatpush2.bf16.msra.mxu0 0
    %4260 = vmatprep.mubr.bf16.mxu0 0
    %4261 = vmatmul.mubr.bf16.gmra.mxu0 %v4226
    %v4262 = vpop.f32.mrf.mxu0
    %v4263 = vadd.f32 %v4190, %v4262
    %v4264 = vpop.f32.mrf.mxu0
    %v4265 = vpop.f32.mrf.mxu0
    %v4266 = vpop.f32.mrf.mxu0
    %4267 = vdwg.mxu0
    %s4268 = scalar_lea.vmem %s5, 32
    %v4269 = vld [vmem:[%s4268] sm:$0xf]
    %v4270 = vld [vmem:[%s4268 + $0x4] sm:$0xf]
    %v4271 = vld [vmem:[%s4268 + $0x8] sm:$0xf]
    %v4272 = vld [vmem:[%s4268 + $0xc] sm:$0xf]
    %v4273 = vld [vmem:[%s4268 + $0x10] sm:$0xf]
    %v4274 = vld [vmem:[%s4268 + $0x14] sm:$0xf]
    %v4275 = vld [vmem:[%s4268 + $0x18] sm:$0xf]
    %v4276 = vld [vmem:[%s4268 + $0x1c] sm:$0xf]
    %s4277 = scalar_lea.vmem %s6, 1
    %v4278 = vld [vmem:[%s4277] sm:$0x1]
    %v4280 = vlaneseq
    %v4281 = vshrl.u32 %v4280, 7
    %v4282 = vsub.s32 0, %v4281
    %v4283 = vrot.slane %v4278, %v4282
    %v4293 = vunpack.c.l.b16 %v4269
    %v4294 = vunpack.c.l.b16 %v4270
    %v4295 = vunpack.c.l.b16 %v4271
    %v4296 = vunpack.c.l.b16 %v4272
    %v4297 = vunpack.c.l.b16 %v4273
    %v4298 = vunpack.c.l.b16 %v4274
    %v4299 = vunpack.c.l.b16 %v4275
    %v4300 = vunpack.c.l.b16 %v4276
    %v4301 = vpack.c.b16 %v4294, %v4293
    %v4302 = vpack.c.b16 %v4296, %v4295
    %v4303 = vpack.c.b16 %v4298, %v4297
    %v4304 = vpack.c.b16 %v4300, %v4299
    %v4310 = vsel %vm203, %v4172, 0
    %4312 = vmatprep.subr.bf16.mxu0 0
    %4313 = vmatpush1.bf16.msra.mxu0 0
    %4314 = vmatprep.subr.bf16.mxu0 0
    %4315 = vmatpush1.bf16.msra.mxu0 0
    %4316 = vmatprep.subr.bf16.mxu0 0
    %4317 = vmatpush1.bf16.msra.mxu0 0
    %4318 = vmatprep.subr.bf16.mxu0 0
    %4319 = vmatpush1.bf16.msra.mxu0 0
    %4320 = vmatprep.subr.bf16.mxu0 0
    %4321 = vmatpush1.bf16.msra.mxu0 %v4304
    %4322 = vmatprep.subr.bf16.mxu0 0
    %4323 = vmatpush1.bf16.msra.mxu0 %v4303
    %4324 = vmatprep.subr.bf16.mxu0 0
    %4325 = vmatpush1.bf16.msra.mxu0 %v4302
    %4326 = vmatprep.subr.bf16.mxu0 0
    %4327 = vmatpush1.bf16.msra.mxu0 %v4301
    %4328 = vmatprep.subr.bf16.mxu0 0
    %4329 = vmatpush2.bf16.msra.mxu0 0
    %4330 = vmatprep.subr.bf16.mxu0 0
    %4331 = vmatpush2.bf16.msra.mxu0 0
    %4332 = vmatprep.subr.bf16.mxu0 0
    %4333 = vmatpush2.bf16.msra.mxu0 0
    %4334 = vmatprep.subr.bf16.mxu0 0
    %4335 = vmatpush2.bf16.msra.mxu0 0
    %4336 = vmatprep.subr.bf16.mxu0 0
    %4337 = vmatpush2.bf16.msra.mxu0 0
    %4338 = vmatprep.subr.bf16.mxu0 0
    %4339 = vmatpush2.bf16.msra.mxu0 0
    %4340 = vmatprep.subr.bf16.mxu0 0
    %4341 = vmatpush2.bf16.msra.mxu0 0
    %4342 = vmatprep.subr.bf16.mxu0 0
    %4343 = vmatpush2.bf16.msra.mxu0 0
    %4344 = vmatprep.mubr.bf16.mxu0 0
    %4345 = vmatmul.mubr.bf16.gmra.mxu0 %v4310
    %v4346 = vpop.f32.mrf.mxu0
    %v4347 = vadd.f32 %v4283, %v4346
    %v4348 = vpop.f32.mrf.mxu0
    %v4349 = vpop.f32.mrf.mxu0
    %v4350 = vadd.f32 %v4283, %v4349
    %v4351 = vpop.f32.mrf.mxu0
    %4352 = vdwg.mxu0
    %s4353 = scalar_lea.vmem %s7, 32
    %v4354 = vld [vmem:[%s4353] sm:$0xf]
    %v4355 = vld [vmem:[%s4353 + $0x4] sm:$0xf]
    %v4356 = vld [vmem:[%s4353 + $0x8] sm:$0xf]
    %v4357 = vld [vmem:[%s4353 + $0xc] sm:$0xf]
    %v4358 = vld [vmem:[%s4353 + $0x10] sm:$0xf]
    %v4359 = vld [vmem:[%s4353 + $0x14] sm:$0xf]
    %v4360 = vld [vmem:[%s4353 + $0x18] sm:$0xf]
    %v4361 = vld [vmem:[%s4353 + $0x1c] sm:$0xf]
    %s4362 = scalar_lea.vmem %s8, 1
    %v4363 = vld [vmem:[%s4362] sm:$0x1]
    %v4365 = vlaneseq
    %v4366 = vshrl.u32 %v4365, 7
    %v4367 = vsub.s32 0, %v4366
    %v4368 = vrot.slane %v4363, %v4367
    %v4378 = vunpack.c.l.b16 %v4354
    %v4379 = vunpack.c.l.b16 %v4355
    %v4380 = vunpack.c.l.b16 %v4356
    %v4381 = vunpack.c.l.b16 %v4357
    %v4382 = vunpack.c.l.b16 %v4358
    %v4383 = vunpack.c.l.b16 %v4359
    %v4384 = vunpack.c.l.b16 %v4360
    %v4385 = vunpack.c.l.b16 %v4361
    %v4386 = vpack.c.b16 %v4379, %v4378
    %v4387 = vpack.c.b16 %v4381, %v4380
    %v4388 = vpack.c.b16 %v4383, %v4382
    %v4389 = vpack.c.b16 %v4385, %v4384
    %4394 = vmatprep.subr.bf16.mxu0 0
    %4395 = vmatpush1.bf16.msra.mxu0 0
    %4396 = vmatprep.subr.bf16.mxu0 0
    %4397 = vmatpush1.bf16.msra.mxu0 0
    %4398 = vmatprep.subr.bf16.mxu0 0
    %4399 = vmatpush1.bf16.msra.mxu0 0
    %4400 = vmatprep.subr.bf16.mxu0 0
    %4401 = vmatpush1.bf16.msra.mxu0 0
    %4402 = vmatprep.subr.bf16.mxu0 0
    %4403 = vmatpush1.bf16.msra.mxu0 %v4389
    %4404 = vmatprep.subr.bf16.mxu0 0
    %4405 = vmatpush1.bf16.msra.mxu0 %v4388
    %4406 = vmatprep.subr.bf16.mxu0 0
    %4407 = vmatpush1.bf16.msra.mxu0 %v4387
    %4408 = vmatprep.subr.bf16.mxu0 0
    %4409 = vmatpush1.bf16.msra.mxu0 %v4386
    %4410 = vmatprep.subr.bf16.mxu0 0
    %4411 = vmatpush2.bf16.msra.mxu0 0
    %4412 = vmatprep.subr.bf16.mxu0 0
    %4413 = vmatpush2.bf16.msra.mxu0 0
    %4414 = vmatprep.subr.bf16.mxu0 0
    %4415 = vmatpush2.bf16.msra.mxu0 0
    %4416 = vmatprep.subr.bf16.mxu0 0
    %4417 = vmatpush2.bf16.msra.mxu0 0
    %4418 = vmatprep.subr.bf16.mxu0 0
    %4419 = vmatpush2.bf16.msra.mxu0 0
    %4420 = vmatprep.subr.bf16.mxu0 0
    %4421 = vmatpush2.bf16.msra.mxu0 0
    %4422 = vmatprep.subr.bf16.mxu0 0
    %4423 = vmatpush2.bf16.msra.mxu0 0
    %4424 = vmatprep.subr.bf16.mxu0 0
    %4425 = vmatpush2.bf16.msra.mxu0 0
    %4426 = vmatprep.mubr.bf16.mxu0 0
    %4427 = vmatmul.mubr.bf16.gmra.mxu0 %v4310
    %v4428 = vpop.f32.mrf.mxu0
    %v4429 = vadd.f32 %v4368, %v4428
    %v4430 = vpop.f32.mrf.mxu0
    %v4431 = vpop.f32.mrf.mxu0
    %v4432 = vadd.f32 %v4368, %v4431
    %v4433 = vpop.f32.mrf.mxu0
    %4434 = vdwg.mxu0
    %v4437 = vunpack.c.l.s4 1966171168
    %v4438 = vunpack.c.0.s8 %v4437
    %v4439 = vlaneseq
    %v4440 = vshrl.u32 %v4439, 7
    %v4441 = vsub.s32 %v4438, %v4440
    %v4442 = vrot.slane %v4263, %v4441
    %v4443 = vcombine.high %v4442, %v4442
    %v4445 = vunpack.c.l.s4 1966171168
    %v4446 = vunpack.c.0.s8 %v4445
    %v4447 = vlaneseq
    %v4448 = vshrl.u32 %v4447, 7
    %v4449 = vsub.s32 %v4446, %v4448
    %v4450 = vrot.slane %v4442, %v4449
    %v4452 = vunpack.c.l.s4 1966171168
    %v4453 = vunpack.c.0.s8 %v4452
    %v4454 = vlaneseq
    %v4455 = vshrl.u32 %v4454, 7
    %v4456 = vsub.s32 %v4453, %v4455
    %v4457 = vrot.slane %v4443, %v4456
    %v4458 = vsel %vm81, %v4450, 0
    %v4461 = vsel %vm81, %v4347, 0
    %4463 = vmatprep.subr.mxu0 0.0
    %4464 = vmatpush1.xpose.msra.mxu0 0.0
    %4465 = vmatprep.subr.mxu0 0.0
    %4466 = vmatpush1.xpose.msra.mxu0 0.0
    %4467 = vmatprep.subr.mxu0 0.0
    %4468 = vmatpush1.xpose.msra.mxu0 0.0
    %4469 = vmatprep.subr.mxu0 0.0
    %4470 = vmatpush1.xpose.msra.mxu0 0.0
    %4471 = vmatprep.subr.mxu0 0.0
    %4472 = vmatpush1.xpose.msra.mxu0 0.0
    %4473 = vmatprep.subr.mxu0 0.0
    %4474 = vmatpush1.xpose.msra.mxu0 0.0
    %4475 = vmatprep.subr.mxu0 0.0
    %4476 = vmatpush1.xpose.msra.mxu0 0.0
    %4477 = vmatprep.subr.mxu0 0.0
    %4478 = vmatpush1.xpose.msra.mxu0 0.0
    %4479 = vmatprep.subr.mxu0 0.0
    %4480 = vmatpush1.xpose.msra.mxu0 0.0
    %4481 = vmatprep.subr.mxu0 0.0
    %4482 = vmatpush1.xpose.msra.mxu0 0.0
    %4483 = vmatprep.subr.mxu0 0.0
    %4484 = vmatpush1.xpose.msra.mxu0 0.0
    %4485 = vmatprep.subr.mxu0 0.0
    %4486 = vmatpush1.xpose.msra.mxu0 0.0
    %4487 = vmatprep.subr.mxu0 0.0
    %4488 = vmatpush1.xpose.msra.mxu0 0.0
    %4489 = vmatprep.subr.mxu0 0.0
    %4490 = vmatpush1.xpose.msra.mxu0 0.0
    %4491 = vmatprep.subr.mxu0 0.0
    %4492 = vmatpush1.xpose.msra.mxu0 0.0
    %4493 = vmatprep.subr.mxu0 0.0
    %4494 = vmatpush1.xpose.msra.mxu0 %v4461
    %4495 = vmatprep.subr.mxu0 0.0
    %4496 = vmatpush2.xpose.msra.mxu0 0.0
    %4497 = vmatprep.subr.mxu0 0.0
    %4498 = vmatpush2.xpose.msra.mxu0 0.0
    %4499 = vmatprep.subr.mxu0 0.0
    %4500 = vmatpush2.xpose.msra.mxu0 0.0
    %4501 = vmatprep.subr.mxu0 0.0
    %4502 = vmatpush2.xpose.msra.mxu0 0.0
    %4503 = vmatprep.subr.mxu0 0.0
    %4504 = vmatpush2.xpose.msra.mxu0 0.0
    %4505 = vmatprep.subr.mxu0 0.0
    %4506 = vmatpush2.xpose.msra.mxu0 0.0
    %4507 = vmatprep.subr.mxu0 0.0
    %4508 = vmatpush2.xpose.msra.mxu0 0.0
    %4509 = vmatprep.subr.mxu0 0.0
    %4510 = vmatpush2.xpose.msra.mxu0 0.0
    %4511 = vmatprep.subr.mxu0 0.0
    %4512 = vmatpush2.xpose.msra.mxu0 0.0
    %4513 = vmatprep.subr.mxu0 0.0
    %4514 = vmatpush2.xpose.msra.mxu0 0.0
    %4515 = vmatprep.subr.mxu0 0.0
    %4516 = vmatpush2.xpose.msra.mxu0 0.0
    %4517 = vmatprep.subr.mxu0 0.0
    %4518 = vmatpush2.xpose.msra.mxu0 0.0
    %4519 = vmatprep.subr.mxu0 0.0
    %4520 = vmatpush2.xpose.msra.mxu0 0.0
    %4521 = vmatprep.subr.mxu0 0.0
    %4522 = vmatpush2.xpose.msra.mxu0 0.0
    %4523 = vmatprep.subr.mxu0 0.0
    %4524 = vmatpush2.xpose.msra.mxu0 0.0
    %4525 = vmatprep.subr.mxu0 0.0
    %4526 = vmatpush2.xpose.msra.mxu0 0.0
    %4527 = vmatprep.mubr.f32.mxu0 0.0
    %4528 = vmatmul.mubr.f32.gmra.mxu0 %v4458
    %v4529 = vpop.f32.mrf.mxu0
    %v4530 = vadd.f32 0.0, %v4529
    %v4531 = vpop.f32.mrf.mxu0
    %4532 = vdwg.mxu0
    %v4533 = vsel %vm81, %v4457, 0
    %v4536 = vsel %vm81, %v4350, 0
    %4538 = vmatprep.subr.mxu0 0.0
    %4539 = vmatpush1.xpose.msra.mxu0 0.0
    %4540 = vmatprep.subr.mxu0 0.0
    %4541 = vmatpush1.xpose.msra.mxu0 0.0
    %4542 = vmatprep.subr.mxu0 0.0
    %4543 = vmatpush1.xpose.msra.mxu0 0.0
    %4544 = vmatprep.subr.mxu0 0.0
    %4545 = vmatpush1.xpose.msra.mxu0 0.0
    %4546 = vmatprep.subr.mxu0 0.0
    %4547 = vmatpush1.xpose.msra.mxu0 0.0
    %4548 = vmatprep.subr.mxu0 0.0
    %4549 = vmatpush1.xpose.msra.mxu0 0.0
    %4550 = vmatprep.subr.mxu0 0.0
    %4551 = vmatpush1.xpose.msra.mxu0 0.0
    %4552 = vmatprep.subr.mxu0 0.0
    %4553 = vmatpush1.xpose.msra.mxu0 0.0
    %4554 = vmatprep.subr.mxu0 0.0
    %4555 = vmatpush1.xpose.msra.mxu0 0.0
    %4556 = vmatprep.subr.mxu0 0.0
    %4557 = vmatpush1.xpose.msra.mxu0 0.0
    %4558 = vmatprep.subr.mxu0 0.0
    %4559 = vmatpush1.xpose.msra.mxu0 0.0
    %4560 = vmatprep.subr.mxu0 0.0
    %4561 = vmatpush1.xpose.msra.mxu0 0.0
    %4562 = vmatprep.subr.mxu0 0.0
    %4563 = vmatpush1.xpose.msra.mxu0 0.0
    %4564 = vmatprep.subr.mxu0 0.0
    %4565 = vmatpush1.xpose.msra.mxu0 0.0
    %4566 = vmatprep.subr.mxu0 0.0
    %4567 = vmatpush1.xpose.msra.mxu0 0.0
    %4568 = vmatprep.subr.mxu0 0.0
    %4569 = vmatpush1.xpose.msra.mxu0 %v4536
    %4570 = vmatprep.subr.mxu0 0.0
    %4571 = vmatpush2.xpose.msra.mxu0 0.0
    %4572 = vmatprep.subr.mxu0 0.0
    %4573 = vmatpush2.xpose.msra.mxu0 0.0
    %4574 = vmatprep.subr.mxu0 0.0
    %4575 = vmatpush2.xpose.msra.mxu0 0.0
    %4576 = vmatprep.subr.mxu0 0.0
    %4577 = vmatpush2.xpose.msra.mxu0 0.0
    %4578 = vmatprep.subr.mxu0 0.0
    %4579 = vmatpush2.xpose.msra.mxu0 0.0
    %4580 = vmatprep.subr.mxu0 0.0
    %4581 = vmatpush2.xpose.msra.mxu0 0.0
    %4582 = vmatprep.subr.mxu0 0.0
    %4583 = vmatpush2.xpose.msra.mxu0 0.0
    %4584 = vmatprep.subr.mxu0 0.0
    %4585 = vmatpush2.xpose.msra.mxu0 0.0
    %4586 = vmatprep.subr.mxu0 0.0
    %4587 = vmatpush2.xpose.msra.mxu0 0.0
    %4588 = vmatprep.subr.mxu0 0.0
    %4589 = vmatpush2.xpose.msra.mxu0 0.0
    %4590 = vmatprep.subr.mxu0 0.0
    %4591 = vmatpush2.xpose.msra.mxu0 0.0
    %4592 = vmatprep.subr.mxu0 0.0
    %4593 = vmatpush2.xpose.msra.mxu0 0.0
    %4594 = vmatprep.subr.mxu0 0.0
    %4595 = vmatpush2.xpose.msra.mxu0 0.0
    %4596 = vmatprep.subr.mxu0 0.0
    %4597 = vmatpush2.xpose.msra.mxu0 0.0
    %4598 = vmatprep.subr.mxu0 0.0
    %4599 = vmatpush2.xpose.msra.mxu0 0.0
    %4600 = vmatprep.subr.mxu0 0.0
    %4601 = vmatpush2.xpose.msra.mxu0 0.0
    %4602 = vmatprep.mubr.f32.mxu0 0.0
    %4603 = vmatmul.mubr.f32.gmra.mxu0 %v4533
    %v4604 = vpop.f32.mrf.mxu0
    %v4605 = vadd.f32 0.0, %v4604
    %v4606 = vpop.f32.mrf.mxu0
    %4607 = vdwg.mxu0
    %vm4608 = vcmask 57344
    %v4609 = vsel %vm4608, %v4530, -inf
    %4610 = vmax.xlane.f32.xlu0 %v4609
    %v4611 = vpop.xlane.xlu0 %4610
    %v4612 = vsel %vm4608, %v4605, -inf
    %4613 = vmax.xlane.f32.xlu0 %v4612
    %v4614 = vpop.xlane.xlu0 %4613
    %v4615 = vsub.f32 %v4530, %v4611
    %v4616 = vsub.f32 %v4605, %v4614
    %v4617 = vmul.f32 %v4615, 1.442695
    %v4618 = vpow.pop %v4617
    %v4619 = vmul.f32 %v4616, 1.442695
    %v4620 = vpow.pop %v4619
    %v4621 = vsel %vm4608, %v4618, 0.0
    %4622 = vadd.xlane.f32.xlu0 %v4621
    %v4623 = vpop.xlane.xlu0 %4622
    %v4624 = vsel %vm4608, %v4620, 0.0
    %4625 = vadd.xlane.f32.xlu0 %v4624
    %v4626 = vpop.xlane.xlu0 %4625
    %v4627 = vrcp.pop %v4623
    %v4628 = vrcp.pop %v4626
    %v4629 = vmul.f32 %v4618, %v4627
    %v4630 = vmul.f32 %v4620, %v4628
    %v4632 = vsel %vm560, %v4629, 0
    %4634 = vmatprep.subr.mxu0 0.0
    %4635 = vmatpush1.msra.mxu0 0.0
    %4636 = vmatprep.subr.mxu0 0.0
    %4637 = vmatpush1.msra.mxu0 0.0
    %4638 = vmatprep.subr.mxu0 0.0
    %4639 = vmatpush1.msra.mxu0 0.0
    %4640 = vmatprep.subr.mxu0 0.0
    %4641 = vmatpush1.msra.mxu0 0.0
    %4642 = vmatprep.subr.mxu0 0.0
    %4643 = vmatpush1.msra.mxu0 0.0
    %4644 = vmatprep.subr.mxu0 0.0
    %4645 = vmatpush1.msra.mxu0 0.0
    %4646 = vmatprep.subr.mxu0 0.0
    %4647 = vmatpush1.msra.mxu0 0.0
    %4648 = vmatprep.subr.mxu0 0.0
    %4649 = vmatpush1.msra.mxu0 0.0
    %4650 = vmatprep.subr.mxu0 0.0
    %4651 = vmatpush1.msra.mxu0 0.0
    %4652 = vmatprep.subr.mxu0 0.0
    %4653 = vmatpush1.msra.mxu0 0.0
    %4654 = vmatprep.subr.mxu0 0.0
    %4655 = vmatpush1.msra.mxu0 0.0
    %4656 = vmatprep.subr.mxu0 0.0
    %4657 = vmatpush1.msra.mxu0 0.0
    %4658 = vmatprep.subr.mxu0 0.0
    %4659 = vmatpush1.msra.mxu0 0.0
    %4660 = vmatprep.subr.mxu0 0.0
    %4661 = vmatpush1.msra.mxu0 0.0
    %4662 = vmatprep.subr.mxu0 0.0
    %4663 = vmatpush1.msra.mxu0 0.0
    %4664 = vmatprep.subr.mxu0 0.0
    %4665 = vmatpush1.msra.mxu0 %v4429
    %4666 = vmatprep.subr.mxu0 0.0
    %4667 = vmatpush2.msra.mxu0 0.0
    %4668 = vmatprep.subr.mxu0 0.0
    %4669 = vmatpush2.msra.mxu0 0.0
    %4670 = vmatprep.subr.mxu0 0.0
    %4671 = vmatpush2.msra.mxu0 0.0
    %4672 = vmatprep.subr.mxu0 0.0
    %4673 = vmatpush2.msra.mxu0 0.0
    %4674 = vmatprep.subr.mxu0 0.0
    %4675 = vmatpush2.msra.mxu0 0.0
    %4676 = vmatprep.subr.mxu0 0.0
    %4677 = vmatpush2.msra.mxu0 0.0
    %4678 = vmatprep.subr.mxu0 0.0
    %4679 = vmatpush2.msra.mxu0 0.0
    %4680 = vmatprep.subr.mxu0 0.0
    %4681 = vmatpush2.msra.mxu0 0.0
    %4682 = vmatprep.subr.mxu0 0.0
    %4683 = vmatpush2.msra.mxu0 0.0
    %4684 = vmatprep.subr.mxu0 0.0
    %4685 = vmatpush2.msra.mxu0 0.0
    %4686 = vmatprep.subr.mxu0 0.0
    %4687 = vmatpush2.msra.mxu0 0.0
    %4688 = vmatprep.subr.mxu0 0.0
    %4689 = vmatpush2.msra.mxu0 0.0
    %4690 = vmatprep.subr.mxu0 0.0
    %4691 = vmatpush2.msra.mxu0 0.0
    %4692 = vmatprep.subr.mxu0 0.0
    %4693 = vmatpush2.msra.mxu0 0.0
    %4694 = vmatprep.subr.mxu0 0.0
    %4695 = vmatpush2.msra.mxu0 0.0
    %4696 = vmatprep.subr.mxu0 0.0
    %4697 = vmatpush2.msra.mxu0 0.0
    %4698 = vmatprep.mubr.f32.mxu0 0.0
    %4699 = vmatmul.mubr.f32.gmra.mxu0 %v4632
    %v4700 = vpop.f32.mrf.mxu0
    %v4701 = vadd.f32 0.0, %v4700
    %v4702 = vpop.f32.mrf.mxu0
    %4703 = vdwg.mxu0
    %v4705 = vsel %vm560, %v4630, 0
    %4707 = vmatprep.subr.mxu0 0.0
    %4708 = vmatpush1.msra.mxu0 0.0
    %4709 = vmatprep.subr.mxu0 0.0
    %4710 = vmatpush1.msra.mxu0 0.0
    %4711 = vmatprep.subr.mxu0 0.0
    %4712 = vmatpush1.msra.mxu0 0.0
    %4713 = vmatprep.subr.mxu0 0.0
    %4714 = vmatpush1.msra.mxu0 0.0
    %4715 = vmatprep.subr.mxu0 0.0
    %4716 = vmatpush1.msra.mxu0 0.0
    %4717 = vmatprep.subr.mxu0 0.0
    %4718 = vmatpush1.msra.mxu0 0.0
    %4719 = vmatprep.subr.mxu0 0.0
    %4720 = vmatpush1.msra.mxu0 0.0
    %4721 = vmatprep.subr.mxu0 0.0
    %4722 = vmatpush1.msra.mxu0 0.0
    %4723 = vmatprep.subr.mxu0 0.0
    %4724 = vmatpush1.msra.mxu0 0.0
    %4725 = vmatprep.subr.mxu0 0.0
    %4726 = vmatpush1.msra.mxu0 0.0
    %4727 = vmatprep.subr.mxu0 0.0
    %4728 = vmatpush1.msra.mxu0 0.0
    %4729 = vmatprep.subr.mxu0 0.0
    %4730 = vmatpush1.msra.mxu0 0.0
    %4731 = vmatprep.subr.mxu0 0.0
    %4732 = vmatpush1.msra.mxu0 0.0
    %4733 = vmatprep.subr.mxu0 0.0
    %4734 = vmatpush1.msra.mxu0 0.0
    %4735 = vmatprep.subr.mxu0 0.0
    %4736 = vmatpush1.msra.mxu0 0.0
    %4737 = vmatprep.subr.mxu0 0.0
    %4738 = vmatpush1.msra.mxu0 %v4432
    %4739 = vmatprep.subr.mxu0 0.0
    %4740 = vmatpush2.msra.mxu0 0.0
    %4741 = vmatprep.subr.mxu0 0.0
    %4742 = vmatpush2.msra.mxu0 0.0
    %4743 = vmatprep.subr.mxu0 0.0
    %4744 = vmatpush2.msra.mxu0 0.0
    %4745 = vmatprep.subr.mxu0 0.0
    %4746 = vmatpush2.msra.mxu0 0.0
    %4747 = vmatprep.subr.mxu0 0.0
    %4748 = vmatpush2.msra.mxu0 0.0
    %4749 = vmatprep.subr.mxu0 0.0
    %4750 = vmatpush2.msra.mxu0 0.0
    %4751 = vmatprep.subr.mxu0 0.0
    %4752 = vmatpush2.msra.mxu0 0.0
    %4753 = vmatprep.subr.mxu0 0.0
    %4754 = vmatpush2.msra.mxu0 0.0
    %4755 = vmatprep.subr.mxu0 0.0
    %4756 = vmatpush2.msra.mxu0 0.0
    %4757 = vmatprep.subr.mxu0 0.0
    %4758 = vmatpush2.msra.mxu0 0.0
    %4759 = vmatprep.subr.mxu0 0.0
    %4760 = vmatpush2.msra.mxu0 0.0
    %4761 = vmatprep.subr.mxu0 0.0
    %4762 = vmatpush2.msra.mxu0 0.0
    %4763 = vmatprep.subr.mxu0 0.0
    %4764 = vmatpush2.msra.mxu0 0.0
    %4765 = vmatprep.subr.mxu0 0.0
    %4766 = vmatpush2.msra.mxu0 0.0
    %4767 = vmatprep.subr.mxu0 0.0
    %4768 = vmatpush2.msra.mxu0 0.0
    %4769 = vmatprep.subr.mxu0 0.0
    %4770 = vmatpush2.msra.mxu0 0.0
    %4771 = vmatprep.mubr.f32.mxu0 0.0
    %4772 = vmatmul.mubr.f32.gmra.mxu0 %v4705
    %v4773 = vpop.f32.mrf.mxu0
    %v4774 = vadd.f32 0.0, %v4773
    %v4775 = vpop.f32.mrf.mxu0
    %4776 = vdwg.mxu0
    %v4777 = vlaneseq
    %v4778 = vshrl.u32 %v4777, 7
    %v4779 = vsub.s32 0, %v4778
    %v4780 = vrot.slane %v4450, %v4779
    %4781 = vrot.lane.b32.xlu0 %v4780, 112
    %v4782 = vpop.permute.xlu0 %4781
    %4783 = vrot.lane.b32.xlu0 %v4347, 112
    %v4784 = vpop.permute.xlu0 %4783
    %v4785 = vsel %vm81, %v4782, 0
    %v4787 = vsel %vm81, %v4784, 0
    %4789 = vmatprep.subr.mxu0 0.0
    %4790 = vmatpush1.xpose.msra.mxu0 0.0
    %4791 = vmatprep.subr.mxu0 0.0
    %4792 = vmatpush1.xpose.msra.mxu0 0.0
    %4793 = vmatprep.subr.mxu0 0.0
    %4794 = vmatpush1.xpose.msra.mxu0 0.0
    %4795 = vmatprep.subr.mxu0 0.0
    %4796 = vmatpush1.xpose.msra.mxu0 0.0
    %4797 = vmatprep.subr.mxu0 0.0
    %4798 = vmatpush1.xpose.msra.mxu0 0.0
    %4799 = vmatprep.subr.mxu0 0.0
    %4800 = vmatpush1.xpose.msra.mxu0 0.0
    %4801 = vmatprep.subr.mxu0 0.0
    %4802 = vmatpush1.xpose.msra.mxu0 0.0
    %4803 = vmatprep.subr.mxu0 0.0
    %4804 = vmatpush1.xpose.msra.mxu0 0.0
    %4805 = vmatprep.subr.mxu0 0.0
    %4806 = vmatpush1.xpose.msra.mxu0 0.0
    %4807 = vmatprep.subr.mxu0 0.0
    %4808 = vmatpush1.xpose.msra.mxu0 0.0
    %4809 = vmatprep.subr.mxu0 0.0
    %4810 = vmatpush1.xpose.msra.mxu0 0.0
    %4811 = vmatprep.subr.mxu0 0.0
    %4812 = vmatpush1.xpose.msra.mxu0 0.0
    %4813 = vmatprep.subr.mxu0 0.0
    %4814 = vmatpush1.xpose.msra.mxu0 0.0
    %4815 = vmatprep.subr.mxu0 0.0
    %4816 = vmatpush1.xpose.msra.mxu0 0.0
    %4817 = vmatprep.subr.mxu0 0.0
    %4818 = vmatpush1.xpose.msra.mxu0 0.0
    %4819 = vmatprep.subr.mxu0 0.0
    %4820 = vmatpush1.xpose.msra.mxu0 %v4787
    %4821 = vmatprep.subr.mxu0 0.0
    %4822 = vmatpush2.xpose.msra.mxu0 0.0
    %4823 = vmatprep.subr.mxu0 0.0
    %4824 = vmatpush2.xpose.msra.mxu0 0.0
    %4825 = vmatprep.subr.mxu0 0.0
    %4826 = vmatpush2.xpose.msra.mxu0 0.0
    %4827 = vmatprep.subr.mxu0 0.0
    %4828 = vmatpush2.xpose.msra.mxu0 0.0
    %4829 = vmatprep.subr.mxu0 0.0
    %4830 = vmatpush2.xpose.msra.mxu0 0.0
    %4831 = vmatprep.subr.mxu0 0.0
    %4832 = vmatpush2.xpose.msra.mxu0 0.0
    %4833 = vmatprep.subr.mxu0 0.0
    %4834 = vmatpush2.xpose.msra.mxu0 0.0
    %4835 = vmatprep.subr.mxu0 0.0
    %4836 = vmatpush2.xpose.msra.mxu0 0.0
    %4837 = vmatprep.subr.mxu0 0.0
    %4838 = vmatpush2.xpose.msra.mxu0 0.0
    %4839 = vmatprep.subr.mxu0 0.0
    %4840 = vmatpush2.xpose.msra.mxu0 0.0
    %4841 = vmatprep.subr.mxu0 0.0
    %4842 = vmatpush2.xpose.msra.mxu0 0.0
    %4843 = vmatprep.subr.mxu0 0.0
    %4844 = vmatpush2.xpose.msra.mxu0 0.0
    %4845 = vmatprep.subr.mxu0 0.0
    %4846 = vmatpush2.xpose.msra.mxu0 0.0
    %4847 = vmatprep.subr.mxu0 0.0
    %4848 = vmatpush2.xpose.msra.mxu0 0.0
    %4849 = vmatprep.subr.mxu0 0.0
    %4850 = vmatpush2.xpose.msra.mxu0 0.0
    %4851 = vmatprep.subr.mxu0 0.0
    %4852 = vmatpush2.xpose.msra.mxu0 0.0
    %4853 = vmatprep.mubr.f32.mxu0 0.0
    %4854 = vmatmul.mubr.f32.gmra.mxu0 %v4785
    %v4855 = vpop.f32.mrf.mxu0
    %v4856 = vadd.f32 0.0, %v4855
    %v4857 = vpop.f32.mrf.mxu0
    %4858 = vdwg.mxu0
    %v4859 = vlaneseq
    %v4860 = vshrl.u32 %v4859, 7
    %v4861 = vsub.s32 0, %v4860
    %v4862 = vrot.slane %v4457, %v4861
    %4863 = vrot.lane.b32.xlu0 %v4862, 112
    %v4864 = vpop.permute.xlu0 %4863
    %4865 = vrot.lane.b32.xlu0 %v4350, 112
    %v4866 = vpop.permute.xlu0 %4865
    %v4867 = vsel %vm81, %v4864, 0
    %v4869 = vsel %vm81, %v4866, 0
    %4871 = vmatprep.subr.mxu0 0.0
    %4872 = vmatpush1.xpose.msra.mxu0 0.0
    %4873 = vmatprep.subr.mxu0 0.0
    %4874 = vmatpush1.xpose.msra.mxu0 0.0
    %4875 = vmatprep.subr.mxu0 0.0
    %4876 = vmatpush1.xpose.msra.mxu0 0.0
    %4877 = vmatprep.subr.mxu0 0.0
    %4878 = vmatpush1.xpose.msra.mxu0 0.0
    %4879 = vmatprep.subr.mxu0 0.0
    %4880 = vmatpush1.xpose.msra.mxu0 0.0
    %4881 = vmatprep.subr.mxu0 0.0
    %4882 = vmatpush1.xpose.msra.mxu0 0.0
    %4883 = vmatprep.subr.mxu0 0.0
    %4884 = vmatpush1.xpose.msra.mxu0 0.0
    %4885 = vmatprep.subr.mxu0 0.0
    %4886 = vmatpush1.xpose.msra.mxu0 0.0
    %4887 = vmatprep.subr.mxu0 0.0
    %4888 = vmatpush1.xpose.msra.mxu0 0.0
    %4889 = vmatprep.subr.mxu0 0.0
    %4890 = vmatpush1.xpose.msra.mxu0 0.0
    %4891 = vmatprep.subr.mxu0 0.0
    %4892 = vmatpush1.xpose.msra.mxu0 0.0
    %4893 = vmatprep.subr.mxu0 0.0
    %4894 = vmatpush1.xpose.msra.mxu0 0.0
    %4895 = vmatprep.subr.mxu0 0.0
    %4896 = vmatpush1.xpose.msra.mxu0 0.0
    %4897 = vmatprep.subr.mxu0 0.0
    %4898 = vmatpush1.xpose.msra.mxu0 0.0
    %4899 = vmatprep.subr.mxu0 0.0
    %4900 = vmatpush1.xpose.msra.mxu0 0.0
    %4901 = vmatprep.subr.mxu0 0.0
    %4902 = vmatpush1.xpose.msra.mxu0 %v4869
    %4903 = vmatprep.subr.mxu0 0.0
    %4904 = vmatpush2.xpose.msra.mxu0 0.0
    %4905 = vmatprep.subr.mxu0 0.0
    %4906 = vmatpush2.xpose.msra.mxu0 0.0
    %4907 = vmatprep.subr.mxu0 0.0
    %4908 = vmatpush2.xpose.msra.mxu0 0.0
    %4909 = vmatprep.subr.mxu0 0.0
    %4910 = vmatpush2.xpose.msra.mxu0 0.0
    %4911 = vmatprep.subr.mxu0 0.0
    %4912 = vmatpush2.xpose.msra.mxu0 0.0
    %4913 = vmatprep.subr.mxu0 0.0
    %4914 = vmatpush2.xpose.msra.mxu0 0.0
    %4915 = vmatprep.subr.mxu0 0.0
    %4916 = vmatpush2.xpose.msra.mxu0 0.0
    %4917 = vmatprep.subr.mxu0 0.0
    %4918 = vmatpush2.xpose.msra.mxu0 0.0
    %4919 = vmatprep.subr.mxu0 0.0
    %4920 = vmatpush2.xpose.msra.mxu0 0.0
    %4921 = vmatprep.subr.mxu0 0.0
    %4922 = vmatpush2.xpose.msra.mxu0 0.0
    %4923 = vmatprep.subr.mxu0 0.0
    %4924 = vmatpush2.xpose.msra.mxu0 0.0
    %4925 = vmatprep.subr.mxu0 0.0
    %4926 = vmatpush2.xpose.msra.mxu0 0.0
    %4927 = vmatprep.subr.mxu0 0.0
    %4928 = vmatpush2.xpose.msra.mxu0 0.0
    %4929 = vmatprep.subr.mxu0 0.0
    %4930 = vmatpush2.xpose.msra.mxu0 0.0
    %4931 = vmatprep.subr.mxu0 0.0
    %4932 = vmatpush2.xpose.msra.mxu0 0.0
    %4933 = vmatprep.subr.mxu0 0.0
    %4934 = vmatpush2.xpose.msra.mxu0 0.0
    %4935 = vmatprep.mubr.f32.mxu0 0.0
    %4936 = vmatmul.mubr.f32.gmra.mxu0 %v4867
    %v4937 = vpop.f32.mrf.mxu0
    %v4938 = vadd.f32 0.0, %v4937
    %v4939 = vpop.f32.mrf.mxu0
    %4940 = vdwg.mxu0
    %v4941 = vsel %vm4608, %v4856, -inf
    %4942 = vmax.xlane.f32.xlu0 %v4941
    %v4943 = vpop.xlane.xlu0 %4942
    %v4944 = vsel %vm4608, %v4938, -inf
    %4945 = vmax.xlane.f32.xlu0 %v4944
    %v4946 = vpop.xlane.xlu0 %4945
    %v4947 = vsub.f32 %v4856, %v4943
    %v4948 = vsub.f32 %v4938, %v4946
    %v4949 = vmul.f32 %v4947, 1.442695
    %v4950 = vpow.pop %v4949
    %v4951 = vmul.f32 %v4948, 1.442695
    %v4952 = vpow.pop %v4951
    %v4953 = vsel %vm4608, %v4950, 0.0
    %4954 = vadd.xlane.f32.xlu0 %v4953
    %v4955 = vpop.xlane.xlu0 %4954
    %v4956 = vsel %vm4608, %v4952, 0.0
    %4957 = vadd.xlane.f32.xlu0 %v4956
    %v4958 = vpop.xlane.xlu0 %4957
    %v4959 = vrcp.pop %v4955
    %v4960 = vrcp.pop %v4958
    %v4961 = vmul.f32 %v4950, %v4959
    %v4962 = vmul.f32 %v4952, %v4960
    %4964 = vrot.lane.b32.xlu0 %v4429, 112
    %v4965 = vpop.permute.xlu0 %4964
    %v4968 = vsel %vm560, %v4961, 0
    %4970 = vmatprep.subr.mxu0 0.0
    %4971 = vmatpush1.msra.mxu0 0.0
    %4972 = vmatprep.subr.mxu0 0.0
    %4973 = vmatpush1.msra.mxu0 0.0
    %4974 = vmatprep.subr.mxu0 0.0
    %4975 = vmatpush1.msra.mxu0 0.0
    %4976 = vmatprep.subr.mxu0 0.0
    %4977 = vmatpush1.msra.mxu0 0.0
    %4978 = vmatprep.subr.mxu0 0.0
    %4979 = vmatpush1.msra.mxu0 0.0
    %4980 = vmatprep.subr.mxu0 0.0
    %4981 = vmatpush1.msra.mxu0 0.0
    %4982 = vmatprep.subr.mxu0 0.0
    %4983 = vmatpush1.msra.mxu0 0.0
    %4984 = vmatprep.subr.mxu0 0.0
    %4985 = vmatpush1.msra.mxu0 0.0
    %4986 = vmatprep.subr.mxu0 0.0
    %4987 = vmatpush1.msra.mxu0 0.0
    %4988 = vmatprep.subr.mxu0 0.0
    %4989 = vmatpush1.msra.mxu0 0.0
    %4990 = vmatprep.subr.mxu0 0.0
    %4991 = vmatpush1.msra.mxu0 0.0
    %4992 = vmatprep.subr.mxu0 0.0
    %4993 = vmatpush1.msra.mxu0 0.0
    %4994 = vmatprep.subr.mxu0 0.0
    %4995 = vmatpush1.msra.mxu0 0.0
    %4996 = vmatprep.subr.mxu0 0.0
    %4997 = vmatpush1.msra.mxu0 0.0
    %4998 = vmatprep.subr.mxu0 0.0
    %4999 = vmatpush1.msra.mxu0 0.0
    %5000 = vmatprep.subr.mxu0 0.0
    %5001 = vmatpush1.msra.mxu0 %v4965
    %5002 = vmatprep.subr.mxu0 0.0
    %5003 = vmatpush2.msra.mxu0 0.0
    %5004 = vmatprep.subr.mxu0 0.0
    %5005 = vmatpush2.msra.mxu0 0.0
    %5006 = vmatprep.subr.mxu0 0.0
    %5007 = vmatpush2.msra.mxu0 0.0
    %5008 = vmatprep.subr.mxu0 0.0
    %5009 = vmatpush2.msra.mxu0 0.0
    %5010 = vmatprep.subr.mxu0 0.0
    %5011 = vmatpush2.msra.mxu0 0.0
    %5012 = vmatprep.subr.mxu0 0.0
    %5013 = vmatpush2.msra.mxu0 0.0
    %5014 = vmatprep.subr.mxu0 0.0
    %5015 = vmatpush2.msra.mxu0 0.0
    %5016 = vmatprep.subr.mxu0 0.0
    %5017 = vmatpush2.msra.mxu0 0.0
    %5018 = vmatprep.subr.mxu0 0.0
    %5019 = vmatpush2.msra.mxu0 0.0
    %5020 = vmatprep.subr.mxu0 0.0
    %5021 = vmatpush2.msra.mxu0 0.0
    %5022 = vmatprep.subr.mxu0 0.0
    %5023 = vmatpush2.msra.mxu0 0.0
    %5024 = vmatprep.subr.mxu0 0.0
    %5025 = vmatpush2.msra.mxu0 0.0
    %5026 = vmatprep.subr.mxu0 0.0
    %5027 = vmatpush2.msra.mxu0 0.0
    %5028 = vmatprep.subr.mxu0 0.0
    %5029 = vmatpush2.msra.mxu0 0.0
    %5030 = vmatprep.subr.mxu0 0.0
    %5031 = vmatpush2.msra.mxu0 0.0
    %5032 = vmatprep.subr.mxu0 0.0
    %5033 = vmatpush2.msra.mxu0 0.0
    %5034 = vmatprep.mubr.f32.mxu0 0.0
    %5035 = vmatmul.mubr.f32.gmra.mxu0 %v4968
    %v5036 = vpop.f32.mrf.mxu0
    %v5037 = vadd.f32 0.0, %v5036
    %v5038 = vpop.f32.mrf.mxu0
    %5039 = vdwg.mxu0
    %5041 = vrot.lane.b32.xlu0 %v4432, 112
    %v5042 = vpop.permute.xlu0 %5041
    %v5045 = vsel %vm560, %v4962, 0
    %5047 = vmatprep.subr.mxu0 0.0
    %5048 = vmatpush1.msra.mxu0 0.0
    %5049 = vmatprep.subr.mxu0 0.0
    %5050 = vmatpush1.msra.mxu0 0.0
    %5051 = vmatprep.subr.mxu0 0.0
    %5052 = vmatpush1.msra.mxu0 0.0
    %5053 = vmatprep.subr.mxu0 0.0
    %5054 = vmatpush1.msra.mxu0 0.0
    %5055 = vmatprep.subr.mxu0 0.0
    %5056 = vmatpush1.msra.mxu0 0.0
    %5057 = vmatprep.subr.mxu0 0.0
    %5058 = vmatpush1.msra.mxu0 0.0
    %5059 = vmatprep.subr.mxu0 0.0
    %5060 = vmatpush1.msra.mxu0 0.0
    %5061 = vmatprep.subr.mxu0 0.0
    %5062 = vmatpush1.msra.mxu0 0.0
    %5063 = vmatprep.subr.mxu0 0.0
    %5064 = vmatpush1.msra.mxu0 0.0
    %5065 = vmatprep.subr.mxu0 0.0
    %5066 = vmatpush1.msra.mxu0 0.0
    %5067 = vmatprep.subr.mxu0 0.0
    %5068 = vmatpush1.msra.mxu0 0.0
    %5069 = vmatprep.subr.mxu0 0.0
    %5070 = vmatpush1.msra.mxu0 0.0
    %5071 = vmatprep.subr.mxu0 0.0
    %5072 = vmatpush1.msra.mxu0 0.0
    %5073 = vmatprep.subr.mxu0 0.0
    %5074 = vmatpush1.msra.mxu0 0.0
    %5075 = vmatprep.subr.mxu0 0.0
    %5076 = vmatpush1.msra.mxu0 0.0
    %5077 = vmatprep.subr.mxu0 0.0
    %5078 = vmatpush1.msra.mxu0 %v5042
    %5079 = vmatprep.subr.mxu0 0.0
    %5080 = vmatpush2.msra.mxu0 0.0
    %5081 = vmatprep.subr.mxu0 0.0
    %5082 = vmatpush2.msra.mxu0 0.0
    %5083 = vmatprep.subr.mxu0 0.0
    %5084 = vmatpush2.msra.mxu0 0.0
    %5085 = vmatprep.subr.mxu0 0.0
    %5086 = vmatpush2.msra.mxu0 0.0
    %5087 = vmatprep.subr.mxu0 0.0
    %5088 = vmatpush2.msra.mxu0 0.0
    %5089 = vmatprep.subr.mxu0 0.0
    %5090 = vmatpush2.msra.mxu0 0.0
    %5091 = vmatprep.subr.mxu0 0.0
    %5092 = vmatpush2.msra.mxu0 0.0
    %5093 = vmatprep.subr.mxu0 0.0
    %5094 = vmatpush2.msra.mxu0 0.0
    %5095 = vmatprep.subr.mxu0 0.0
    %5096 = vmatpush2.msra.mxu0 0.0
    %5097 = vmatprep.subr.mxu0 0.0
    %5098 = vmatpush2.msra.mxu0 0.0
    %5099 = vmatprep.subr.mxu0 0.0
    %5100 = vmatpush2.msra.mxu0 0.0
    %5101 = vmatprep.subr.mxu0 0.0
    %5102 = vmatpush2.msra.mxu0 0.0
    %5103 = vmatprep.subr.mxu0 0.0
    %5104 = vmatpush2.msra.mxu0 0.0
    %5105 = vmatprep.subr.mxu0 0.0
    %5106 = vmatpush2.msra.mxu0 0.0
    %5107 = vmatprep.subr.mxu0 0.0
    %5108 = vmatpush2.msra.mxu0 0.0
    %5109 = vmatprep.subr.mxu0 0.0
    %5110 = vmatpush2.msra.mxu0 0.0
    %5111 = vmatprep.mubr.f32.mxu0 0.0
    %5112 = vmatmul.mubr.f32.gmra.mxu0 %v5045
    %v5113 = vpop.f32.mrf.mxu0
    %v5114 = vadd.f32 0.0, %v5113
    %v5115 = vpop.f32.mrf.mxu0
    %5116 = vdwg.mxu0
    %5117 = vrot.lane.b32.xlu0 %v4780, 96
    %v5118 = vpop.permute.xlu0 %5117
    %5119 = vrot.lane.b32.xlu0 %v4347, 96
    %v5120 = vpop.permute.xlu0 %5119
    %v5121 = vsel %vm81, %v5118, 0
    %v5123 = vsel %vm81, %v5120, 0
    %5125 = vmatprep.subr.mxu0 0.0
    %5126 = vmatpush1.xpose.msra.mxu0 0.0
    %5127 = vmatprep.subr.mxu0 0.0
    %5128 = vmatpush1.xpose.msra.mxu0 0.0
    %5129 = vmatprep.subr.mxu0 0.0
    %5130 = vmatpush1.xpose.msra.mxu0 0.0
    %5131 = vmatprep.subr.mxu0 0.0
    %5132 = vmatpush1.xpose.msra.mxu0 0.0
    %5133 = vmatprep.subr.mxu0 0.0
    %5134 = vmatpush1.xpose.msra.mxu0 0.0
    %5135 = vmatprep.subr.mxu0 0.0
    %5136 = vmatpush1.xpose.msra.mxu0 0.0
    %5137 = vmatprep.subr.mxu0 0.0
    %5138 = vmatpush1.xpose.msra.mxu0 0.0
    %5139 = vmatprep.subr.mxu0 0.0
    %5140 = vmatpush1.xpose.msra.mxu0 0.0
    %5141 = vmatprep.subr.mxu0 0.0
    %5142 = vmatpush1.xpose.msra.mxu0 0.0
    %5143 = vmatprep.subr.mxu0 0.0
    %5144 = vmatpush1.xpose.msra.mxu0 0.0
    %5145 = vmatprep.subr.mxu0 0.0
    %5146 = vmatpush1.xpose.msra.mxu0 0.0
    %5147 = vmatprep.subr.mxu0 0.0
    %5148 = vmatpush1.xpose.msra.mxu0 0.0
    %5149 = vmatprep.subr.mxu0 0.0
    %5150 = vmatpush1.xpose.msra.mxu0 0.0
    %5151 = vmatprep.subr.mxu0 0.0
    %5152 = vmatpush1.xpose.msra.mxu0 0.0
    %5153 = vmatprep.subr.mxu0 0.0
    %5154 = vmatpush1.xpose.msra.mxu0 0.0
    %5155 = vmatprep.subr.mxu0 0.0
    %5156 = vmatpush1.xpose.msra.mxu0 %v5123
    %5157 = vmatprep.subr.mxu0 0.0
    %5158 = vmatpush2.xpose.msra.mxu0 0.0
    %5159 = vmatprep.subr.mxu0 0.0
    %5160 = vmatpush2.xpose.msra.mxu0 0.0
    %5161 = vmatprep.subr.mxu0 0.0
    %5162 = vmatpush2.xpose.msra.mxu0 0.0
    %5163 = vmatprep.subr.mxu0 0.0
    %5164 = vmatpush2.xpose.msra.mxu0 0.0
    %5165 = vmatprep.subr.mxu0 0.0
    %5166 = vmatpush2.xpose.msra.mxu0 0.0
    %5167 = vmatprep.subr.mxu0 0.0
    %5168 = vmatpush2.xpose.msra.mxu0 0.0
    %5169 = vmatprep.subr.mxu0 0.0
    %5170 = vmatpush2.xpose.msra.mxu0 0.0
    %5171 = vmatprep.subr.mxu0 0.0
    %5172 = vmatpush2.xpose.msra.mxu0 0.0
    %5173 = vmatprep.subr.mxu0 0.0
    %5174 = vmatpush2.xpose.msra.mxu0 0.0
    %5175 = vmatprep.subr.mxu0 0.0
    %5176 = vmatpush2.xpose.msra.mxu0 0.0
    %5177 = vmatprep.subr.mxu0 0.0
    %5178 = vmatpush2.xpose.msra.mxu0 0.0
    %5179 = vmatprep.subr.mxu0 0.0
    %5180 = vmatpush2.xpose.msra.mxu0 0.0
    %5181 = vmatprep.subr.mxu0 0.0
    %5182 = vmatpush2.xpose.msra.mxu0 0.0
    %5183 = vmatprep.subr.mxu0 0.0
    %5184 = vmatpush2.xpose.msra.mxu0 0.0
    %5185 = vmatprep.subr.mxu0 0.0
    %5186 = vmatpush2.xpose.msra.mxu0 0.0
    %5187 = vmatprep.subr.mxu0 0.0
    %5188 = vmatpush2.xpose.msra.mxu0 0.0
    %5189 = vmatprep.mubr.f32.mxu0 0.0
    %5190 = vmatmul.mubr.f32.gmra.mxu0 %v5121
    %v5191 = vpop.f32.mrf.mxu0
    %v5192 = vadd.f32 0.0, %v5191
    %v5193 = vpop.f32.mrf.mxu0
    %5194 = vdwg.mxu0
    %5195 = vrot.lane.b32.xlu0 %v4862, 96
    %v5196 = vpop.permute.xlu0 %5195
    %5197 = vrot.lane.b32.xlu0 %v4350, 96
    %v5198 = vpop.permute.xlu0 %5197
    %v5199 = vsel %vm81, %v5196, 0
    %v5201 = vsel %vm81, %v5198, 0
    %5203 = vmatprep.subr.mxu0 0.0
    %5204 = vmatpush1.xpose.msra.mxu0 0.0
    %5205 = vmatprep.subr.mxu0 0.0
    %5206 = vmatpush1.xpose.msra.mxu0 0.0
    %5207 = vmatprep.subr.mxu0 0.0
    %5208 = vmatpush1.xpose.msra.mxu0 0.0
    %5209 = vmatprep.subr.mxu0 0.0
    %5210 = vmatpush1.xpose.msra.mxu0 0.0
    %5211 = vmatprep.subr.mxu0 0.0
    %5212 = vmatpush1.xpose.msra.mxu0 0.0
    %5213 = vmatprep.subr.mxu0 0.0
    %5214 = vmatpush1.xpose.msra.mxu0 0.0
    %5215 = vmatprep.subr.mxu0 0.0
    %5216 = vmatpush1.xpose.msra.mxu0 0.0
    %5217 = vmatprep.subr.mxu0 0.0
    %5218 = vmatpush1.xpose.msra.mxu0 0.0
    %5219 = vmatprep.subr.mxu0 0.0
    %5220 = vmatpush1.xpose.msra.mxu0 0.0
    %5221 = vmatprep.subr.mxu0 0.0
    %5222 = vmatpush1.xpose.msra.mxu0 0.0
    %5223 = vmatprep.subr.mxu0 0.0
    %5224 = vmatpush1.xpose.msra.mxu0 0.0
    %5225 = vmatprep.subr.mxu0 0.0
    %5226 = vmatpush1.xpose.msra.mxu0 0.0
    %5227 = vmatprep.subr.mxu0 0.0
    %5228 = vmatpush1.xpose.msra.mxu0 0.0
    %5229 = vmatprep.subr.mxu0 0.0
    %5230 = vmatpush1.xpose.msra.mxu0 0.0
    %5231 = vmatprep.subr.mxu0 0.0
    %5232 = vmatpush1.xpose.msra.mxu0 0.0
    %5233 = vmatprep.subr.mxu0 0.0
    %5234 = vmatpush1.xpose.msra.mxu0 %v5201
    %5235 = vmatprep.subr.mxu0 0.0
    %5236 = vmatpush2.xpose.msra.mxu0 0.0
    %5237 = vmatprep.subr.mxu0 0.0
    %5238 = vmatpush2.xpose.msra.mxu0 0.0
    %5239 = vmatprep.subr.mxu0 0.0
    %5240 = vmatpush2.xpose.msra.mxu0 0.0
    %5241 = vmatprep.subr.mxu0 0.0
    %5242 = vmatpush2.xpose.msra.mxu0 0.0
    %5243 = vmatprep.subr.mxu0 0.0
    %5244 = vmatpush2.xpose.msra.mxu0 0.0
    %5245 = vmatprep.subr.mxu0 0.0
    %5246 = vmatpush2.xpose.msra.mxu0 0.0
    %5247 = vmatprep.subr.mxu0 0.0
    %5248 = vmatpush2.xpose.msra.mxu0 0.0
    %5249 = vmatprep.subr.mxu0 0.0
    %5250 = vmatpush2.xpose.msra.mxu0 0.0
    %5251 = vmatprep.subr.mxu0 0.0
    %5252 = vmatpush2.xpose.msra.mxu0 0.0
    %5253 = vmatprep.subr.mxu0 0.0
    %5254 = vmatpush2.xpose.msra.mxu0 0.0
    %5255 = vmatprep.subr.mxu0 0.0
    %5256 = vmatpush2.xpose.msra.mxu0 0.0
    %5257 = vmatprep.subr.mxu0 0.0
    %5258 = vmatpush2.xpose.msra.mxu0 0.0
    %5259 = vmatprep.subr.mxu0 0.0
    %5260 = vmatpush2.xpose.msra.mxu0 0.0
    %5261 = vmatprep.subr.mxu0 0.0
    %5262 = vmatpush2.xpose.msra.mxu0 0.0
    %5263 = vmatprep.subr.mxu0 0.0
    %5264 = vmatpush2.xpose.msra.mxu0 0.0
    %5265 = vmatprep.subr.mxu0 0.0
    %5266 = vmatpush2.xpose.msra.mxu0 0.0
    %5267 = vmatprep.mubr.f32.mxu0 0.0
    %5268 = vmatmul.mubr.f32.gmra.mxu0 %v5199
    %v5269 = vpop.f32.mrf.mxu0
    %v5270 = vadd.f32 0.0, %v5269
    %v5271 = vpop.f32.mrf.mxu0
    %5272 = vdwg.mxu0
    %v5273 = vsel %vm4608, %v5192, -inf
    %5274 = vmax.xlane.f32.xlu0 %v5273
    %v5275 = vpop.xlane.xlu0 %5274
    %v5276 = vsel %vm4608, %v5270, -inf
    %5277 = vmax.xlane.f32.xlu0 %v5276
    %v5278 = vpop.xlane.xlu0 %5277
    %v5279 = vsub.f32 %v5192, %v5275
    %v5280 = vsub.f32 %v5270, %v5278
    %v5281 = vmul.f32 %v5279, 1.442695
    %v5282 = vpow.pop %v5281
    %v5283 = vmul.f32 %v5280, 1.442695
    %v5284 = vpow.pop %v5283
    %v5285 = vsel %vm4608, %v5282, 0.0
    %5286 = vadd.xlane.f32.xlu0 %v5285
    %v5287 = vpop.xlane.xlu0 %5286
    %v5288 = vsel %vm4608, %v5284, 0.0
    %5289 = vadd.xlane.f32.xlu0 %v5288
    %v5290 = vpop.xlane.xlu0 %5289
    %v5291 = vrcp.pop %v5287
    %v5292 = vrcp.pop %v5290
    %v5293 = vmul.f32 %v5282, %v5291
    %v5294 = vmul.f32 %v5284, %v5292
    %5295 = vrot.lane.b32.xlu0 %v4429, 96
    %v5296 = vpop.permute.xlu0 %5295
    %v5299 = vsel %vm560, %v5293, 0
    %5301 = vmatprep.subr.mxu0 0.0
    %5302 = vmatpush1.msra.mxu0 0.0
    %5303 = vmatprep.subr.mxu0 0.0
    %5304 = vmatpush1.msra.mxu0 0.0
    %5305 = vmatprep.subr.mxu0 0.0
    %5306 = vmatpush1.msra.mxu0 0.0
    %5307 = vmatprep.subr.mxu0 0.0
    %5308 = vmatpush1.msra.mxu0 0.0
    %5309 = vmatprep.subr.mxu0 0.0
    %5310 = vmatpush1.msra.mxu0 0.0
    %5311 = vmatprep.subr.mxu0 0.0
    %5312 = vmatpush1.msra.mxu0 0.0
    %5313 = vmatprep.subr.mxu0 0.0
    %5314 = vmatpush1.msra.mxu0 0.0
    %5315 = vmatprep.subr.mxu0 0.0
    %5316 = vmatpush1.msra.mxu0 0.0
    %5317 = vmatprep.subr.mxu0 0.0
    %5318 = vmatpush1.msra.mxu0 0.0
    %5319 = vmatprep.subr.mxu0 0.0
    %5320 = vmatpush1.msra.mxu0 0.0
    %5321 = vmatprep.subr.mxu0 0.0
    %5322 = vmatpush1.msra.mxu0 0.0
    %5323 = vmatprep.subr.mxu0 0.0
    %5324 = vmatpush1.msra.mxu0 0.0
    %5325 = vmatprep.subr.mxu0 0.0
    %5326 = vmatpush1.msra.mxu0 0.0
    %5327 = vmatprep.subr.mxu0 0.0
    %5328 = vmatpush1.msra.mxu0 0.0
    %5329 = vmatprep.subr.mxu0 0.0
    %5330 = vmatpush1.msra.mxu0 0.0
    %5331 = vmatprep.subr.mxu0 0.0
    %5332 = vmatpush1.msra.mxu0 %v5296
    %5333 = vmatprep.subr.mxu0 0.0
    %5334 = vmatpush2.msra.mxu0 0.0
    %5335 = vmatprep.subr.mxu0 0.0
    %5336 = vmatpush2.msra.mxu0 0.0
    %5337 = vmatprep.subr.mxu0 0.0
    %5338 = vmatpush2.msra.mxu0 0.0
    %5339 = vmatprep.subr.mxu0 0.0
    %5340 = vmatpush2.msra.mxu0 0.0
    %5341 = vmatprep.subr.mxu0 0.0
    %5342 = vmatpush2.msra.mxu0 0.0
    %5343 = vmatprep.subr.mxu0 0.0
    %5344 = vmatpush2.msra.mxu0 0.0
    %5345 = vmatprep.subr.mxu0 0.0
    %5346 = vmatpush2.msra.mxu0 0.0
    %5347 = vmatprep.subr.mxu0 0.0
    %5348 = vmatpush2.msra.mxu0 0.0
    %5349 = vmatprep.subr.mxu0 0.0
    %5350 = vmatpush2.msra.mxu0 0.0
    %5351 = vmatprep.subr.mxu0 0.0
    %5352 = vmatpush2.msra.mxu0 0.0
    %5353 = vmatprep.subr.mxu0 0.0
    %5354 = vmatpush2.msra.mxu0 0.0
    %5355 = vmatprep.subr.mxu0 0.0
    %5356 = vmatpush2.msra.mxu0 0.0
    %5357 = vmatprep.subr.mxu0 0.0
    %5358 = vmatpush2.msra.mxu0 0.0
    %5359 = vmatprep.subr.mxu0 0.0
    %5360 = vmatpush2.msra.mxu0 0.0
    %5361 = vmatprep.subr.mxu0 0.0
    %5362 = vmatpush2.msra.mxu0 0.0
    %5363 = vmatprep.subr.mxu0 0.0
    %5364 = vmatpush2.msra.mxu0 0.0
    %5365 = vmatprep.mubr.f32.mxu0 0.0
    %5366 = vmatmul.mubr.f32.gmra.mxu0 %v5299
    %v5367 = vpop.f32.mrf.mxu0
    %v5368 = vadd.f32 0.0, %v5367
    %v5369 = vpop.f32.mrf.mxu0
    %5370 = vdwg.mxu0
    %5371 = vrot.lane.b32.xlu0 %v4432, 96
    %v5372 = vpop.permute.xlu0 %5371
    %v5375 = vsel %vm560, %v5294, 0
    %5377 = vmatprep.subr.mxu0 0.0
    %5378 = vmatpush1.msra.mxu0 0.0
    %5379 = vmatprep.subr.mxu0 0.0
    %5380 = vmatpush1.msra.mxu0 0.0
    %5381 = vmatprep.subr.mxu0 0.0
    %5382 = vmatpush1.msra.mxu0 0.0
    %5383 = vmatprep.subr.mxu0 0.0
    %5384 = vmatpush1.msra.mxu0 0.0
    %5385 = vmatprep.subr.mxu0 0.0
    %5386 = vmatpush1.msra.mxu0 0.0
    %5387 = vmatprep.subr.mxu0 0.0
    %5388 = vmatpush1.msra.mxu0 0.0
    %5389 = vmatprep.subr.mxu0 0.0
    %5390 = vmatpush1.msra.mxu0 0.0
    %5391 = vmatprep.subr.mxu0 0.0
    %5392 = vmatpush1.msra.mxu0 0.0
    %5393 = vmatprep.subr.mxu0 0.0
    %5394 = vmatpush1.msra.mxu0 0.0
    %5395 = vmatprep.subr.mxu0 0.0
    %5396 = vmatpush1.msra.mxu0 0.0
    %5397 = vmatprep.subr.mxu0 0.0
    %5398 = vmatpush1.msra.mxu0 0.0
    %5399 = vmatprep.subr.mxu0 0.0
    %5400 = vmatpush1.msra.mxu0 0.0
    %5401 = vmatprep.subr.mxu0 0.0
    %5402 = vmatpush1.msra.mxu0 0.0
    %5403 = vmatprep.subr.mxu0 0.0
    %5404 = vmatpush1.msra.mxu0 0.0
    %5405 = vmatprep.subr.mxu0 0.0
    %5406 = vmatpush1.msra.mxu0 0.0
    %5407 = vmatprep.subr.mxu0 0.0
    %5408 = vmatpush1.msra.mxu0 %v5372
    %5409 = vmatprep.subr.mxu0 0.0
    %5410 = vmatpush2.msra.mxu0 0.0
    %5411 = vmatprep.subr.mxu0 0.0
    %5412 = vmatpush2.msra.mxu0 0.0
    %5413 = vmatprep.subr.mxu0 0.0
    %5414 = vmatpush2.msra.mxu0 0.0
    %5415 = vmatprep.subr.mxu0 0.0
    %5416 = vmatpush2.msra.mxu0 0.0
    %5417 = vmatprep.subr.mxu0 0.0
    %5418 = vmatpush2.msra.mxu0 0.0
    %5419 = vmatprep.subr.mxu0 0.0
    %5420 = vmatpush2.msra.mxu0 0.0
    %5421 = vmatprep.subr.mxu0 0.0
    %5422 = vmatpush2.msra.mxu0 0.0
    %5423 = vmatprep.subr.mxu0 0.0
    %5424 = vmatpush2.msra.mxu0 0.0
    %5425 = vmatprep.subr.mxu0 0.0
    %5426 = vmatpush2.msra.mxu0 0.0
    %5427 = vmatprep.subr.mxu0 0.0
    %5428 = vmatpush2.msra.mxu0 0.0
    %5429 = vmatprep.subr.mxu0 0.0
    %5430 = vmatpush2.msra.mxu0 0.0
    %5431 = vmatprep.subr.mxu0 0.0
    %5432 = vmatpush2.msra.mxu0 0.0
    %5433 = vmatprep.subr.mxu0 0.0
    %5434 = vmatpush2.msra.mxu0 0.0
    %5435 = vmatprep.subr.mxu0 0.0
    %5436 = vmatpush2.msra.mxu0 0.0
    %5437 = vmatprep.subr.mxu0 0.0
    %5438 = vmatpush2.msra.mxu0 0.0
    %5439 = vmatprep.subr.mxu0 0.0
    %5440 = vmatpush2.msra.mxu0 0.0
    %5441 = vmatprep.mubr.f32.mxu0 0.0
    %5442 = vmatmul.mubr.f32.gmra.mxu0 %v5375
    %v5443 = vpop.f32.mrf.mxu0
    %v5444 = vadd.f32 0.0, %v5443
    %v5445 = vpop.f32.mrf.mxu0
    %5446 = vdwg.mxu0
    %5447 = vrot.lane.b32.xlu0 %v4780, 80
    %v5448 = vpop.permute.xlu0 %5447
    %5449 = vrot.lane.b32.xlu0 %v4347, 80
    %v5450 = vpop.permute.xlu0 %5449
    %v5451 = vsel %vm81, %v5448, 0
    %v5453 = vsel %vm81, %v5450, 0
    %5455 = vmatprep.subr.mxu0 0.0
    %5456 = vmatpush1.xpose.msra.mxu0 0.0
    %5457 = vmatprep.subr.mxu0 0.0
    %5458 = vmatpush1.xpose.msra.mxu0 0.0
    %5459 = vmatprep.subr.mxu0 0.0
    %5460 = vmatpush1.xpose.msra.mxu0 0.0
    %5461 = vmatprep.subr.mxu0 0.0
    %5462 = vmatpush1.xpose.msra.mxu0 0.0
    %5463 = vmatprep.subr.mxu0 0.0
    %5464 = vmatpush1.xpose.msra.mxu0 0.0
    %5465 = vmatprep.subr.mxu0 0.0
    %5466 = vmatpush1.xpose.msra.mxu0 0.0
    %5467 = vmatprep.subr.mxu0 0.0
    %5468 = vmatpush1.xpose.msra.mxu0 0.0
    %5469 = vmatprep.subr.mxu0 0.0
    %5470 = vmatpush1.xpose.msra.mxu0 0.0
    %5471 = vmatprep.subr.mxu0 0.0
    %5472 = vmatpush1.xpose.msra.mxu0 0.0
    %5473 = vmatprep.subr.mxu0 0.0
    %5474 = vmatpush1.xpose.msra.mxu0 0.0
    %5475 = vmatprep.subr.mxu0 0.0
    %5476 = vmatpush1.xpose.msra.mxu0 0.0
    %5477 = vmatprep.subr.mxu0 0.0
    %5478 = vmatpush1.xpose.msra.mxu0 0.0
    %5479 = vmatprep.subr.mxu0 0.0
    %5480 = vmatpush1.xpose.msra.mxu0 0.0
    %5481 = vmatprep.subr.mxu0 0.0
    %5482 = vmatpush1.xpose.msra.mxu0 0.0
    %5483 = vmatprep.subr.mxu0 0.0
    %5484 = vmatpush1.xpose.msra.mxu0 0.0
    %5485 = vmatprep.subr.mxu0 0.0
    %5486 = vmatpush1.xpose.msra.mxu0 %v5453
    %5487 = vmatprep.subr.mxu0 0.0
    %5488 = vmatpush2.xpose.msra.mxu0 0.0
    %5489 = vmatprep.subr.mxu0 0.0
    %5490 = vmatpush2.xpose.msra.mxu0 0.0
    %5491 = vmatprep.subr.mxu0 0.0
    %5492 = vmatpush2.xpose.msra.mxu0 0.0
    %5493 = vmatprep.subr.mxu0 0.0
    %5494 = vmatpush2.xpose.msra.mxu0 0.0
    %5495 = vmatprep.subr.mxu0 0.0
    %5496 = vmatpush2.xpose.msra.mxu0 0.0
    %5497 = vmatprep.subr.mxu0 0.0
    %5498 = vmatpush2.xpose.msra.mxu0 0.0
    %5499 = vmatprep.subr.mxu0 0.0
    %5500 = vmatpush2.xpose.msra.mxu0 0.0
    %5501 = vmatprep.subr.mxu0 0.0
    %5502 = vmatpush2.xpose.msra.mxu0 0.0
    %5503 = vmatprep.subr.mxu0 0.0
    %5504 = vmatpush2.xpose.msra.mxu0 0.0
    %5505 = vmatprep.subr.mxu0 0.0
    %5506 = vmatpush2.xpose.msra.mxu0 0.0
    %5507 = vmatprep.subr.mxu0 0.0
    %5508 = vmatpush2.xpose.msra.mxu0 0.0
    %5509 = vmatprep.subr.mxu0 0.0
    %5510 = vmatpush2.xpose.msra.mxu0 0.0
    %5511 = vmatprep.subr.mxu0 0.0
    %5512 = vmatpush2.xpose.msra.mxu0 0.0
    %5513 = vmatprep.subr.mxu0 0.0
    %5514 = vmatpush2.xpose.msra.mxu0 0.0
    %5515 = vmatprep.subr.mxu0 0.0
    %5516 = vmatpush2.xpose.msra.mxu0 0.0
    %5517 = vmatprep.subr.mxu0 0.0
    %5518 = vmatpush2.xpose.msra.mxu0 0.0
    %5519 = vmatprep.mubr.f32.mxu0 0.0
    %5520 = vmatmul.mubr.f32.gmra.mxu0 %v5451
    %v5521 = vpop.f32.mrf.mxu0
    %v5522 = vadd.f32 0.0, %v5521
    %v5523 = vpop.f32.mrf.mxu0
    %5524 = vdwg.mxu0
    %5525 = vrot.lane.b32.xlu0 %v4862, 80
    %v5526 = vpop.permute.xlu0 %5525
    %5527 = vrot.lane.b32.xlu0 %v4350, 80
    %v5528 = vpop.permute.xlu0 %5527
    %v5529 = vsel %vm81, %v5526, 0
    %v5531 = vsel %vm81, %v5528, 0
    %5533 = vmatprep.subr.mxu0 0.0
    %5534 = vmatpush1.xpose.msra.mxu0 0.0
    %5535 = vmatprep.subr.mxu0 0.0
    %5536 = vmatpush1.xpose.msra.mxu0 0.0
    %5537 = vmatprep.subr.mxu0 0.0
    %5538 = vmatpush1.xpose.msra.mxu0 0.0
    %5539 = vmatprep.subr.mxu0 0.0
    %5540 = vmatpush1.xpose.msra.mxu0 0.0
    %5541 = vmatprep.subr.mxu0 0.0
    %5542 = vmatpush1.xpose.msra.mxu0 0.0
    %5543 = vmatprep.subr.mxu0 0.0
    %5544 = vmatpush1.xpose.msra.mxu0 0.0
    %5545 = vmatprep.subr.mxu0 0.0
    %5546 = vmatpush1.xpose.msra.mxu0 0.0
    %5547 = vmatprep.subr.mxu0 0.0
    %5548 = vmatpush1.xpose.msra.mxu0 0.0
    %5549 = vmatprep.subr.mxu0 0.0
    %5550 = vmatpush1.xpose.msra.mxu0 0.0
    %5551 = vmatprep.subr.mxu0 0.0
    %5552 = vmatpush1.xpose.msra.mxu0 0.0
    %5553 = vmatprep.subr.mxu0 0.0
    %5554 = vmatpush1.xpose.msra.mxu0 0.0
    %5555 = vmatprep.subr.mxu0 0.0
    %5556 = vmatpush1.xpose.msra.mxu0 0.0
    %5557 = vmatprep.subr.mxu0 0.0
    %5558 = vmatpush1.xpose.msra.mxu0 0.0
    %5559 = vmatprep.subr.mxu0 0.0
    %5560 = vmatpush1.xpose.msra.mxu0 0.0
    %5561 = vmatprep.subr.mxu0 0.0
    %5562 = vmatpush1.xpose.msra.mxu0 0.0
    %5563 = vmatprep.subr.mxu0 0.0
    %5564 = vmatpush1.xpose.msra.mxu0 %v5531
    %5565 = vmatprep.subr.mxu0 0.0
    %5566 = vmatpush2.xpose.msra.mxu0 0.0
    %5567 = vmatprep.subr.mxu0 0.0
    %5568 = vmatpush2.xpose.msra.mxu0 0.0
    %5569 = vmatprep.subr.mxu0 0.0
    %5570 = vmatpush2.xpose.msra.mxu0 0.0
    %5571 = vmatprep.subr.mxu0 0.0
    %5572 = vmatpush2.xpose.msra.mxu0 0.0
    %5573 = vmatprep.subr.mxu0 0.0
    %5574 = vmatpush2.xpose.msra.mxu0 0.0
    %5575 = vmatprep.subr.mxu0 0.0
    %5576 = vmatpush2.xpose.msra.mxu0 0.0
    %5577 = vmatprep.subr.mxu0 0.0
    %5578 = vmatpush2.xpose.msra.mxu0 0.0
    %5579 = vmatprep.subr.mxu0 0.0
    %5580 = vmatpush2.xpose.msra.mxu0 0.0
    %5581 = vmatprep.subr.mxu0 0.0
    %5582 = vmatpush2.xpose.msra.mxu0 0.0
    %5583 = vmatprep.subr.mxu0 0.0
    %5584 = vmatpush2.xpose.msra.mxu0 0.0
    %5585 = vmatprep.subr.mxu0 0.0
    %5586 = vmatpush2.xpose.msra.mxu0 0.0
    %5587 = vmatprep.subr.mxu0 0.0
    %5588 = vmatpush2.xpose.msra.mxu0 0.0
    %5589 = vmatprep.subr.mxu0 0.0
    %5590 = vmatpush2.xpose.msra.mxu0 0.0
    %5591 = vmatprep.subr.mxu0 0.0
    %5592 = vmatpush2.xpose.msra.mxu0 0.0
    %5593 = vmatprep.subr.mxu0 0.0
    %5594 = vmatpush2.xpose.msra.mxu0 0.0
    %5595 = vmatprep.subr.mxu0 0.0
    %5596 = vmatpush2.xpose.msra.mxu0 0.0
    %5597 = vmatprep.mubr.f32.mxu0 0.0
    %5598 = vmatmul.mubr.f32.gmra.mxu0 %v5529
    %v5599 = vpop.f32.mrf.mxu0
    %v5600 = vadd.f32 0.0, %v5599
    %v5601 = vpop.f32.mrf.mxu0
    %5602 = vdwg.mxu0
    %v5603 = vsel %vm4608, %v5522, -inf
    %5604 = vmax.xlane.f32.xlu0 %v5603
    %v5605 = vpop.xlane.xlu0 %5604
    %v5606 = vsel %vm4608, %v5600, -inf
    %5607 = vmax.xlane.f32.xlu0 %v5606
    %v5608 = vpop.xlane.xlu0 %5607
    %v5609 = vsub.f32 %v5522, %v5605
    %v5610 = vsub.f32 %v5600, %v5608
    %v5611 = vmul.f32 %v5609, 1.442695
    %v5612 = vpow.pop %v5611
    %v5613 = vmul.f32 %v5610, 1.442695
    %v5614 = vpow.pop %v5613
    %v5615 = vsel %vm4608, %v5612, 0.0
    %5616 = vadd.xlane.f32.xlu0 %v5615
    %v5617 = vpop.xlane.xlu0 %5616
    %v5618 = vsel %vm4608, %v5614, 0.0
    %5619 = vadd.xlane.f32.xlu0 %v5618
    %v5620 = vpop.xlane.xlu0 %5619
    %v5621 = vrcp.pop %v5617
    %v5622 = vrcp.pop %v5620
    %v5623 = vmul.f32 %v5612, %v5621
    %v5624 = vmul.f32 %v5614, %v5622
    %5625 = vrot.lane.b32.xlu0 %v4429, 80
    %v5626 = vpop.permute.xlu0 %5625
    %v5629 = vsel %vm560, %v5623, 0
    %5631 = vmatprep.subr.mxu0 0.0
    %5632 = vmatpush1.msra.mxu0 0.0
    %5633 = vmatprep.subr.mxu0 0.0
    %5634 = vmatpush1.msra.mxu0 0.0
    %5635 = vmatprep.subr.mxu0 0.0
    %5636 = vmatpush1.msra.mxu0 0.0
    %5637 = vmatprep.subr.mxu0 0.0
    %5638 = vmatpush1.msra.mxu0 0.0
    %5639 = vmatprep.subr.mxu0 0.0
    %5640 = vmatpush1.msra.mxu0 0.0
    %5641 = vmatprep.subr.mxu0 0.0
    %5642 = vmatpush1.msra.mxu0 0.0
    %5643 = vmatprep.subr.mxu0 0.0
    %5644 = vmatpush1.msra.mxu0 0.0
    %5645 = vmatprep.subr.mxu0 0.0
    %5646 = vmatpush1.msra.mxu0 0.0
    %5647 = vmatprep.subr.mxu0 0.0
    %5648 = vmatpush1.msra.mxu0 0.0
    %5649 = vmatprep.subr.mxu0 0.0
    %5650 = vmatpush1.msra.mxu0 0.0
    %5651 = vmatprep.subr.mxu0 0.0
    %5652 = vmatpush1.msra.mxu0 0.0
    %5653 = vmatprep.subr.mxu0 0.0
    %5654 = vmatpush1.msra.mxu0 0.0
    %5655 = vmatprep.subr.mxu0 0.0
    %5656 = vmatpush1.msra.mxu0 0.0
    %5657 = vmatprep.subr.mxu0 0.0
    %5658 = vmatpush1.msra.mxu0 0.0
    %5659 = vmatprep.subr.mxu0 0.0
    %5660 = vmatpush1.msra.mxu0 0.0
    %5661 = vmatprep.subr.mxu0 0.0
    %5662 = vmatpush1.msra.mxu0 %v5626
    %5663 = vmatprep.subr.mxu0 0.0
    %5664 = vmatpush2.msra.mxu0 0.0
    %5665 = vmatprep.subr.mxu0 0.0
    %5666 = vmatpush2.msra.mxu0 0.0
    %5667 = vmatprep.subr.mxu0 0.0
    %5668 = vmatpush2.msra.mxu0 0.0
    %5669 = vmatprep.subr.mxu0 0.0
    %5670 = vmatpush2.msra.mxu0 0.0
    %5671 = vmatprep.subr.mxu0 0.0
    %5672 = vmatpush2.msra.mxu0 0.0
    %5673 = vmatprep.subr.mxu0 0.0
    %5674 = vmatpush2.msra.mxu0 0.0
    %5675 = vmatprep.subr.mxu0 0.0
    %5676 = vmatpush2.msra.mxu0 0.0
    %5677 = vmatprep.subr.mxu0 0.0
    %5678 = vmatpush2.msra.mxu0 0.0
    %5679 = vmatprep.subr.mxu0 0.0
    %5680 = vmatpush2.msra.mxu0 0.0
    %5681 = vmatprep.subr.mxu0 0.0
    %5682 = vmatpush2.msra.mxu0 0.0
    %5683 = vmatprep.subr.mxu0 0.0
    %5684 = vmatpush2.msra.mxu0 0.0
    %5685 = vmatprep.subr.mxu0 0.0
    %5686 = vmatpush2.msra.mxu0 0.0
    %5687 = vmatprep.subr.mxu0 0.0
    %5688 = vmatpush2.msra.mxu0 0.0
    %5689 = vmatprep.subr.mxu0 0.0
    %5690 = vmatpush2.msra.mxu0 0.0
    %5691 = vmatprep.subr.mxu0 0.0
    %5692 = vmatpush2.msra.mxu0 0.0
    %5693 = vmatprep.subr.mxu0 0.0
    %5694 = vmatpush2.msra.mxu0 0.0
    %5695 = vmatprep.mubr.f32.mxu0 0.0
    %5696 = vmatmul.mubr.f32.gmra.mxu0 %v5629
    %v5697 = vpop.f32.mrf.mxu0
    %v5698 = vadd.f32 0.0, %v5697
    %v5699 = vpop.f32.mrf.mxu0
    %5700 = vdwg.mxu0
    %5701 = vrot.lane.b32.xlu0 %v4432, 80
    %v5702 = vpop.permute.xlu0 %5701
    %v5705 = vsel %vm560, %v5624, 0
    %5707 = vmatprep.subr.mxu0 0.0
    %5708 = vmatpush1.msra.mxu0 0.0
    %5709 = vmatprep.subr.mxu0 0.0
    %5710 = vmatpush1.msra.mxu0 0.0
    %5711 = vmatprep.subr.mxu0 0.0
    %5712 = vmatpush1.msra.mxu0 0.0
    %5713 = vmatprep.subr.mxu0 0.0
    %5714 = vmatpush1.msra.mxu0 0.0
    %5715 = vmatprep.subr.mxu0 0.0
    %5716 = vmatpush1.msra.mxu0 0.0
    %5717 = vmatprep.subr.mxu0 0.0
    %5718 = vmatpush1.msra.mxu0 0.0
    %5719 = vmatprep.subr.mxu0 0.0
    %5720 = vmatpush1.msra.mxu0 0.0
    %5721 = vmatprep.subr.mxu0 0.0
    %5722 = vmatpush1.msra.mxu0 0.0
    %5723 = vmatprep.subr.mxu0 0.0
    %5724 = vmatpush1.msra.mxu0 0.0
    %5725 = vmatprep.subr.mxu0 0.0
    %5726 = vmatpush1.msra.mxu0 0.0
    %5727 = vmatprep.subr.mxu0 0.0
    %5728 = vmatpush1.msra.mxu0 0.0
    %5729 = vmatprep.subr.mxu0 0.0
    %5730 = vmatpush1.msra.mxu0 0.0
    %5731 = vmatprep.subr.mxu0 0.0
    %5732 = vmatpush1.msra.mxu0 0.0
    %5733 = vmatprep.subr.mxu0 0.0
    %5734 = vmatpush1.msra.mxu0 0.0
    %5735 = vmatprep.subr.mxu0 0.0
    %5736 = vmatpush1.msra.mxu0 0.0
    %5737 = vmatprep.subr.mxu0 0.0
    %5738 = vmatpush1.msra.mxu0 %v5702
    %5739 = vmatprep.subr.mxu0 0.0
    %5740 = vmatpush2.msra.mxu0 0.0
    %5741 = vmatprep.subr.mxu0 0.0
    %5742 = vmatpush2.msra.mxu0 0.0
    %5743 = vmatprep.subr.mxu0 0.0
    %5744 = vmatpush2.msra.mxu0 0.0
    %5745 = vmatprep.subr.mxu0 0.0
    %5746 = vmatpush2.msra.mxu0 0.0
    %5747 = vmatprep.subr.mxu0 0.0
    %5748 = vmatpush2.msra.mxu0 0.0
    %5749 = vmatprep.subr.mxu0 0.0
    %5750 = vmatpush2.msra.mxu0 0.0
    %5751 = vmatprep.subr.mxu0 0.0
    %5752 = vmatpush2.msra.mxu0 0.0
    %5753 = vmatprep.subr.mxu0 0.0
    %5754 = vmatpush2.msra.mxu0 0.0
    %5755 = vmatprep.subr.mxu0 0.0
    %5756 = vmatpush2.msra.mxu0 0.0
    %5757 = vmatprep.subr.mxu0 0.0
    %5758 = vmatpush2.msra.mxu0 0.0
    %5759 = vmatprep.subr.mxu0 0.0
    %5760 = vmatpush2.msra.mxu0 0.0
    %5761 = vmatprep.subr.mxu0 0.0
    %5762 = vmatpush2.msra.mxu0 0.0
    %5763 = vmatprep.subr.mxu0 0.0
    %5764 = vmatpush2.msra.mxu0 0.0
    %5765 = vmatprep.subr.mxu0 0.0
    %5766 = vmatpush2.msra.mxu0 0.0
    %5767 = vmatprep.subr.mxu0 0.0
    %5768 = vmatpush2.msra.mxu0 0.0
    %5769 = vmatprep.subr.mxu0 0.0
    %5770 = vmatpush2.msra.mxu0 0.0
    %5771 = vmatprep.mubr.f32.mxu0 0.0
    %5772 = vmatmul.mubr.f32.gmra.mxu0 %v5705
    %v5773 = vpop.f32.mrf.mxu0
    %v5774 = vadd.f32 0.0, %v5773
    %v5775 = vpop.f32.mrf.mxu0
    %5776 = vdwg.mxu0
    %v5779 = vrot.slane %v4774, 7
    %v5780 = vsel %vm4198, %v5779, %v4701
    %v5784 = vrot.slane %v5114, 7
    %v5785 = vsel %vm4198, %v5784, %v5037
    %5786 = vrot.lane.b32.xlu0 %v5785, 16
    %v5787 = vpop.permute.xlu0 %5786
    %v5791 = vrot.slane %v5444, 7
    %v5792 = vsel %vm4198, %v5791, %v5368
    %5793 = vrot.lane.b32.xlu0 %v5792, 32
    %v5794 = vpop.permute.xlu0 %5793
    %v5798 = vrot.slane %v5774, 7
    %v5799 = vsel %vm4198, %v5798, %v5698
    %5800 = vrot.lane.b32.xlu0 %v5799, 48
    %v5801 = vpop.permute.xlu0 %5800
    %v5803 = vsel %vm81, %v5780, %v5787
    %v5804 = vsel %vm1747, %v5803, %v5794
    %v5805 = vsel %vm1750, %v5804, %v5801
    %v5806 = vpack.c.bf16 %v5805, %v5805
    %s5807 = scalar_lea.vmem %s9, 32
    %v5808 = vld [vmem:[%s5807] sm:$0xf]
    %v5809 = vld [vmem:[%s5807 + $0x4] sm:$0xf]
    %v5810 = vld [vmem:[%s5807 + $0x8] sm:$0xf]
    %v5811 = vld [vmem:[%s5807 + $0xc] sm:$0xf]
    %v5812 = vld [vmem:[%s5807 + $0x10] sm:$0xf]
    %v5813 = vld [vmem:[%s5807 + $0x14] sm:$0xf]
    %v5814 = vld [vmem:[%s5807 + $0x18] sm:$0xf]
    %v5815 = vld [vmem:[%s5807 + $0x1c] sm:$0xf]
    %s5816 = scalar_lea.vmem %s10, 1
    %v5817 = vld [vmem:[%s5816] sm:$0x1]
    %v5819 = vlaneseq
    %v5820 = vshrl.u32 %v5819, 7
    %v5821 = vsub.s32 0, %v5820
    %v5822 = vrot.slane %v5817, %v5821
    %v5832 = vunpack.c.l.b16 %v5808
    %v5833 = vunpack.c.l.b16 %v5809
    %v5834 = vunpack.c.l.b16 %v5810
    %v5835 = vunpack.c.l.b16 %v5811
    %v5836 = vunpack.c.l.b16 %v5812
    %v5837 = vunpack.c.l.b16 %v5813
    %v5838 = vunpack.c.l.b16 %v5814
    %v5839 = vunpack.c.l.b16 %v5815
    %v5840 = vpack.c.b16 %v5833, %v5832
    %v5841 = vpack.c.b16 %v5835, %v5834
    %v5842 = vpack.c.b16 %v5837, %v5836
    %v5843 = vpack.c.b16 %v5839, %v5838
    %v5849 = vsel %vm203, %v5806, 0
    %5851 = vmatprep.subr.bf16.mxu0 0
    %5852 = vmatpush1.bf16.msra.mxu0 0
    %5853 = vmatprep.subr.bf16.mxu0 0
    %5854 = vmatpush1.bf16.msra.mxu0 0
    %5855 = vmatprep.subr.bf16.mxu0 0
    %5856 = vmatpush1.bf16.msra.mxu0 0
    %5857 = vmatprep.subr.bf16.mxu0 0
    %5858 = vmatpush1.bf16.msra.mxu0 0
    %5859 = vmatprep.subr.bf16.mxu0 0
    %5860 = vmatpush1.bf16.msra.mxu0 %v5843
    %5861 = vmatprep.subr.bf16.mxu0 0
    %5862 = vmatpush1.bf16.msra.mxu0 %v5842
    %5863 = vmatprep.subr.bf16.mxu0 0
    %5864 = vmatpush1.bf16.msra.mxu0 %v5841
    %5865 = vmatprep.subr.bf16.mxu0 0
    %5866 = vmatpush1.bf16.msra.mxu0 %v5840
    %5867 = vmatprep.subr.bf16.mxu0 0
    %5868 = vmatpush2.bf16.msra.mxu0 0
    %5869 = vmatprep.subr.bf16.mxu0 0
    %5870 = vmatpush2.bf16.msra.mxu0 0
    %5871 = vmatprep.subr.bf16.mxu0 0
    %5872 = vmatpush2.bf16.msra.mxu0 0
    %5873 = vmatprep.subr.bf16.mxu0 0
    %5874 = vmatpush2.bf16.msra.mxu0 0
    %5875 = vmatprep.subr.bf16.mxu0 0
    %5876 = vmatpush2.bf16.msra.mxu0 0
    %5877 = vmatprep.subr.bf16.mxu0 0
    %5878 = vmatpush2.bf16.msra.mxu0 0
    %5879 = vmatprep.subr.bf16.mxu0 0
    %5880 = vmatpush2.bf16.msra.mxu0 0
    %5881 = vmatprep.subr.bf16.mxu0 0
    %5882 = vmatpush2.bf16.msra.mxu0 0
    %5883 = vmatprep.mubr.bf16.mxu0 0
    %5884 = vmatmul.mubr.bf16.gmra.mxu0 %v5849
    %v5885 = vpop.f32.mrf.mxu0
    %v5886 = vadd.f32 %v5822, %v5885
    %v5887 = vpop.f32.mrf.mxu0
    %v5888 = vpop.f32.mrf.mxu0
    %v5889 = vpop.f32.mrf.mxu0
    %5890 = vdwg.mxu0
    %v5892 = vrot.slane %v5886, 1
    %v5893 = vrot.slane %v5886, 2
    %v5896 = vadd.f32 %v4170, %v5892
    %v5897 = vadd.f32 %v4171, %v5893
    %s5898 = scalar_lea.vmem %s11, 1
    %v5899 = vld [vmem:[%s5898] sm:$0x1]
    %s5900 = scalar_lea.vmem %s12, 1
    %v5901 = vld [vmem:[%s5900] sm:$0x1]
    %v5904 = vrot.slane %v5897, 7
    %vm5907 = vcmask 523271
    %v5908 = vsel %vm5907, %v5896, 0.0
    %5909 = vadd.xlane.f32.xlu0 %v5908
    %v5910 = vpop.xlane.xlu0 %5909
    %vm5911 = vcmask 516096
    %v5912 = vsel %vm5911, %v5904, 0.0
    %5913 = vadd.xlane.f32.xlu0 %v5912
    %v5914 = vpop.xlane.xlu0 %5913
    %v5915 = vmul.f32 %v5910, %v1847
    %v5916 = vmul.f32 %v5914, %v1847
    %v5919 = vrot.slane %v5916, 1
    %v5922 = vsub.f32 %v5896, %v5915
    %v5923 = vsub.f32 %v5897, %v5919
    %v5924 = vmul.f32 %v5922, %v5922
    %v5925 = vmul.f32 %v5923, %v5923
    %v5928 = vrot.slane %v5925, 7
    %v5931 = vsel %vm5907, %v5924, 0.0
    %5932 = vadd.xlane.f32.xlu0 %v5931
    %v5933 = vpop.xlane.xlu0 %5932
    %v5934 = vsel %vm5911, %v5928, 0.0
    %5935 = vadd.xlane.f32.xlu0 %v5934
    %v5936 = vpop.xlane.xlu0 %5935
    %v5937 = vmul.f32 %v5933, %v1847
    %v5938 = vmul.f32 %v5936, %v1847
    %v5939 = vadd.f32 %v5937, 1e-05
    %v5940 = vadd.f32 %v5938, 1e-05
    %v5941 = vrsqrt.pop %v5939
    %v5942 = vrsqrt.pop %v5940
    %v5945 = vrot.slane %v5942, 1
    %v5948 = vmul.f32 %v5922, %v5941
    %v5949 = vmul.f32 %v5923, %v5945
    %v5951 = vlaneseq
    %v5952 = vshrl.u32 %v5951, 7
    %v5953 = vsub.s32 0, %v5952
    %v5954 = vrot.slane %v5899, %v5953
    %v5956 = vmul.f32 %v5948, %v5954
    %v5957 = vmul.f32 %v5949, %v5954
    %v5959 = vlaneseq
    %v5960 = vshrl.u32 %v5959, 7
    %v5961 = vsub.s32 0, %v5960
    %v5962 = vrot.slane %v5901, %v5961
    %v5964 = vadd.f32 %v5956, %v5962
    %v5965 = vadd.f32 %v5957, %v5962
    %v5966 = vpack.c.bf16 %v5964, %v5964
    %v5967 = vpack.c.bf16 %v5965, %v5965
    %s5968 = scalar_lea.vmem %s15, 512
    %v5969 = vld [vmem:[%s5968] sm:$0xff]
    %v5970 = vld [vmem:[%s5968 + $0x8] sm:$0xff]
    %v5971 = vld [vmem:[%s5968 + $0x10] sm:$0xff]
    %v5972 = vld [vmem:[%s5968 + $0x18] sm:$0xff]
    %v5973 = vld [vmem:[%s5968 + $0x20] sm:$0xff]
    %v5974 = vld [vmem:[%s5968 + $0x28] sm:$0xff]
    %v5975 = vld [vmem:[%s5968 + $0x30] sm:$0xff]
    %v5976 = vld [vmem:[%s5968 + $0x38] sm:$0xff]
    %v5977 = vld [vmem:[%s5968 + $0x40] sm:$0xff]
    %v5978 = vld [vmem:[%s5968 + $0x48] sm:$0xff]
    %v5979 = vld [vmem:[%s5968 + $0x50] sm:$0xff]
    %v5980 = vld [vmem:[%s5968 + $0x58] sm:$0xff]
    %v5981 = vld [vmem:[%s5968 + $0x60] sm:$0xff]
    %v5982 = vld [vmem:[%s5968 + $0x68] sm:$0xff]
    %v5983 = vld [vmem:[%s5968 + $0x70] sm:$0xff]
    %v5984 = vld [vmem:[%s5968 + $0x78] sm:$0xff]
    %s5985 = scalar_lea.vmem %s16, 16
    %v5986 = vld [vmem:[%s5985] sm:$0xf]
    %v5988 = vlaneseq
    %v5989 = vshrl.u32 %v5988, 7
    %v5990 = vsub.s32 0, %v5989
    %v5991 = vrot.slane %v5986, %v5990
    %v5992 = vlaneseq
    %v5993 = vshrl.u32 %v5992, 7
    %v5994 = vsub.s32 1, %v5993
    %v5995 = vrot.slane %v5986, %v5994
    %v5996 = vlaneseq
    %v5997 = vshrl.u32 %v5996, 7
    %v5998 = vsub.s32 2, %v5997
    %v5999 = vrot.slane %v5986, %v5998
    %v6000 = vlaneseq
    %v6001 = vshrl.u32 %v6000, 7
    %v6002 = vsub.s32 3, %v6001
    %v6003 = vrot.slane %v5986, %v6002
    %v6010 = vunpack.c.l.b16 %v5966
    %v6011 = vunpack.c.l.b16 %v5967
    %v6012 = vrot.slane %v6010, 7
    %v6013 = vrot.slane %v6011, 6
    %v6014 = vsel %vm4198, %v6013, %v6012
    %v6015 = vpack.c.b16 %v6014, %v6014
    %v6032 = vunpack.c.l.b16 %v5969
    %v6033 = vunpack.c.h.b16 %v5969
    %v6034 = vunpack.c.l.b16 %v5970
    %v6035 = vunpack.c.h.b16 %v5970
    %v6036 = vunpack.c.l.b16 %v5971
    %v6037 = vunpack.c.h.b16 %v5971
    %v6038 = vunpack.c.l.b16 %v5972
    %v6039 = vunpack.c.h.b16 %v5972
    %v6040 = vunpack.c.l.b16 %v5973
    %v6041 = vunpack.c.h.b16 %v5973
    %v6042 = vunpack.c.l.b16 %v5974
    %v6043 = vunpack.c.h.b16 %v5974
    %v6044 = vunpack.c.l.b16 %v5975
    %v6045 = vunpack.c.h.b16 %v5975
    %v6046 = vunpack.c.l.b16 %v5976
    %v6047 = vunpack.c.h.b16 %v5976
    %v6048 = vunpack.c.l.b16 %v5977
    %v6049 = vunpack.c.h.b16 %v5977
    %v6050 = vunpack.c.l.b16 %v5978
    %v6051 = vunpack.c.h.b16 %v5978
    %v6052 = vunpack.c.l.b16 %v5979
    %v6053 = vunpack.c.h.b16 %v5979
    %v6054 = vunpack.c.l.b16 %v5980
    %v6055 = vunpack.c.h.b16 %v5980
    %v6056 = vunpack.c.l.b16 %v5981
    %v6057 = vunpack.c.h.b16 %v5981
    %v6058 = vunpack.c.l.b16 %v5982
    %v6059 = vunpack.c.h.b16 %v5982
    %v6060 = vunpack.c.l.b16 %v5983
    %v6061 = vunpack.c.h.b16 %v5983
    %v6062 = vunpack.c.l.b16 %v5984
    %v6063 = vunpack.c.h.b16 %v5984
    %v6064 = vpack.c.b16 %v6036, %v6032
    %v6065 = vpack.c.b16 %v6037, %v6033
    %v6066 = vpack.c.b16 %v6038, %v6034
    %v6067 = vpack.c.b16 %v6039, %v6035
    %v6068 = vpack.c.b16 %v6044, %v6040
    %v6069 = vpack.c.b16 %v6045, %v6041
    %v6070 = vpack.c.b16 %v6046, %v6042
    %v6071 = vpack.c.b16 %v6047, %v6043
    %v6072 = vpack.c.b16 %v6052, %v6048
    %v6073 = vpack.c.b16 %v6053, %v6049
    %v6074 = vpack.c.b16 %v6054, %v6050
    %v6075 = vpack.c.b16 %v6055, %v6051
    %v6076 = vpack.c.b16 %v6060, %v6056
    %v6077 = vpack.c.b16 %v6061, %v6057
    %v6078 = vpack.c.b16 %v6062, %v6058
    %v6079 = vpack.c.b16 %v6063, %v6059
    %v6097 = vsel %vm203, %v6015, 0
    %6099 = vmatprep.subr.bf16.mxu0 0
    %6100 = vmatpush1.bf16.msra.mxu0 0
    %6101 = vmatprep.subr.bf16.mxu0 0
    %6102 = vmatpush1.bf16.msra.mxu0 0
    %6103 = vmatprep.subr.bf16.mxu0 0
    %6104 = vmatpush1.bf16.msra.mxu0 0
    %6105 = vmatprep.subr.bf16.mxu0 0
    %6106 = vmatpush1.bf16.msra.mxu0 0
    %6107 = vmatprep.subr.bf16.mxu0 %v6077
    %6108 = vmatpush1.bf16.msra.mxu0 %v6076
    %6109 = vmatprep.subr.bf16.mxu0 %v6073
    %6110 = vmatpush1.bf16.msra.mxu0 %v6072
    %6111 = vmatprep.subr.bf16.mxu0 %v6069
    %6112 = vmatpush1.bf16.msra.mxu0 %v6068
    %6113 = vmatprep.subr.bf16.mxu0 %v6065
    %6114 = vmatpush1.bf16.msra.mxu0 %v6064
    %6115 = vmatprep.subr.bf16.mxu0 0
    %6116 = vmatpush2.bf16.msra.mxu0 0
    %6117 = vmatprep.subr.bf16.mxu0 0
    %6118 = vmatpush2.bf16.msra.mxu0 0
    %6119 = vmatprep.subr.bf16.mxu0 0
    %6120 = vmatpush2.bf16.msra.mxu0 0
    %6121 = vmatprep.subr.bf16.mxu0 0
    %6122 = vmatpush2.bf16.msra.mxu0 0
    %6123 = vmatprep.subr.bf16.mxu0 0
    %6124 = vmatpush2.bf16.msra.mxu0 0
    %6125 = vmatprep.subr.bf16.mxu0 0
    %6126 = vmatpush2.bf16.msra.mxu0 0
    %6127 = vmatprep.subr.bf16.mxu0 0
    %6128 = vmatpush2.bf16.msra.mxu0 0
    %6129 = vmatprep.subr.bf16.mxu0 0
    %6130 = vmatpush2.bf16.msra.mxu0 0
    %6131 = vmatprep.mubr.bf16.mxu0 0
    %6132 = vmatmul.mubr.bf16.gmra.mxu0 %v6097
    %v6133 = vpop.f32.mrf.mxu0
    %v6134 = vadd.f32 %v5991, %v6133
    %v6135 = vpop.f32.mrf.mxu0
    %v6136 = vadd.f32 %v5995, %v6135
    %v6137 = vpop.f32.mrf.mxu0
    %v6138 = vpop.f32.mrf.mxu0
    %6139 = vdwg.mxu0
    %6140 = vmatprep.subr.bf16.mxu0 0
    %6141 = vmatpush1.bf16.msra.mxu0 0
    %6142 = vmatprep.subr.bf16.mxu0 0
    %6143 = vmatpush1.bf16.msra.mxu0 0
    %6144 = vmatprep.subr.bf16.mxu0 0
    %6145 = vmatpush1.bf16.msra.mxu0 0
    %6146 = vmatprep.subr.bf16.mxu0 0
    %6147 = vmatpush1.bf16.msra.mxu0 0
    %6148 = vmatprep.subr.bf16.mxu0 %v6079
    %6149 = vmatpush1.bf16.msra.mxu0 %v6078
    %6150 = vmatprep.subr.bf16.mxu0 %v6075
    %6151 = vmatpush1.bf16.msra.mxu0 %v6074
    %6152 = vmatprep.subr.bf16.mxu0 %v6071
    %6153 = vmatpush1.bf16.msra.mxu0 %v6070
    %6154 = vmatprep.subr.bf16.mxu0 %v6067
    %6155 = vmatpush1.bf16.msra.mxu0 %v6066
    %6156 = vmatprep.subr.bf16.mxu0 0
    %6157 = vmatpush2.bf16.msra.mxu0 0
    %6158 = vmatprep.subr.bf16.mxu0 0
    %6159 = vmatpush2.bf16.msra.mxu0 0
    %6160 = vmatprep.subr.bf16.mxu0 0
    %6161 = vmatpush2.bf16.msra.mxu0 0
    %6162 = vmatprep.subr.bf16.mxu0 0
    %6163 = vmatpush2.bf16.msra.mxu0 0
    %6164 = vmatprep.subr.bf16.mxu0 0
    %6165 = vmatpush2.bf16.msra.mxu0 0
    %6166 = vmatprep.subr.bf16.mxu0 0
    %6167 = vmatpush2.bf16.msra.mxu0 0
    %6168 = vmatprep.subr.bf16.mxu0 0
    %6169 = vmatpush2.bf16.msra.mxu0 0
    %6170 = vmatprep.subr.bf16.mxu0 0
    %6171 = vmatpush2.bf16.msra.mxu0 0
    %6172 = vmatprep.mubr.bf16.mxu0 0
    %6173 = vmatmul.mubr.bf16.gmra.mxu0 %v6097
    %v6174 = vpop.f32.mrf.mxu0
    %v6175 = vadd.f32 %v5999, %v6174
    %v6176 = vpop.f32.mrf.mxu0
    %v6177 = vadd.f32 %v6003, %v6176
    %v6178 = vpop.f32.mrf.mxu0
    %v6179 = vpop.f32.mrf.mxu0
    %6180 = vdwg.mxu0
    %v6181 = vmax.f32 %v6134, 0.0
    %v6182 = vmax.f32 %v6136, 0.0
    %v6183 = vmax.f32 %v6175, 0.0
    %v6184 = vmax.f32 %v6177, 0.0
    %v6185 = vpack.c.bf16 %v6181, %v6181
    %v6186 = vpack.c.bf16 %v6182, %v6182
    %v6187 = vpack.c.bf16 %v6183, %v6183
    %v6188 = vpack.c.bf16 %v6184, %v6184
    %s6189 = scalar_lea.vmem %s17, 1024
    %v6190 = vld [vmem:[%s6189] sm:$0xf]
    %v6191 = vld [vmem:[%s6189 + $0x4] sm:$0xf]
    %v6192 = vld [vmem:[%s6189 + $0x8] sm:$0xf]
    %v6193 = vld [vmem:[%s6189 + $0xc] sm:$0xf]
    %v6194 = vld [vmem:[%s6189 + $0x10] sm:$0xf]
    %v6195 = vld [vmem:[%s6189 + $0x14] sm:$0xf]
    %v6196 = vld [vmem:[%s6189 + $0x18] sm:$0xf]
    %v6197 = vld [vmem:[%s6189 + $0x1c] sm:$0xf]
    %v6198 = vld [vmem:[%s6189 + $0x20] sm:$0xf]
    %v6199 = vld [vmem:[%s6189 + $0x24] sm:$0xf]
    %v6200 = vld [vmem:[%s6189 + $0x28] sm:$0xf]
    %v6201 = vld [vmem:[%s6189 + $0x2c] sm:$0xf]
    %v6202 = vld [vmem:[%s6189 + $0x30] sm:$0xf]
    %v6203 = vld [vmem:[%s6189 + $0x34] sm:$0xf]
    %v6204 = vld [vmem:[%s6189 + $0x38] sm:$0xf]
    %v6205 = vld [vmem:[%s6189 + $0x3c] sm:$0xf]
    %v6206 = vld [vmem:[%s6189 + $0x40] sm:$0xf]
    %v6207 = vld [vmem:[%s6189 + $0x44] sm:$0xf]
    %v6208 = vld [vmem:[%s6189 + $0x48] sm:$0xf]
    %v6209 = vld [vmem:[%s6189 + $0x4c] sm:$0xf]
    %v6210 = vld [vmem:[%s6189 + $0x50] sm:$0xf]
    %v6211 = vld [vmem:[%s6189 + $0x54] sm:$0xf]
    %v6212 = vld [vmem:[%s6189 + $0x58] sm:$0xf]
    %v6213 = vld [vmem:[%s6189 + $0x5c] sm:$0xf]
    %v6214 = vld [vmem:[%s6189 + $0x60] sm:$0xf]
    %v6215 = vld [vmem:[%s6189 + $0x64] sm:$0xf]
    %v6216 = vld [vmem:[%s6189 + $0x68] sm:$0xf]
    %v6217 = vld [vmem:[%s6189 + $0x6c] sm:$0xf]
    %v6218 = vld [vmem:[%s6189 + $0x70] sm:$0xf]
    %v6219 = vld [vmem:[%s6189 + $0x74] sm:$0xf]
    %v6220 = vld [vmem:[%s6189 + $0x78] sm:$0xf]
    %v6221 = vld [vmem:[%s6189 + $0x7c] sm:$0xf]
    %v6222 = vld [vmem:[%s6189 + $0x80] sm:$0xf]
    %v6223 = vld [vmem:[%s6189 + $0x84] sm:$0xf]
    %v6224 = vld [vmem:[%s6189 + $0x88] sm:$0xf]
    %v6225 = vld [vmem:[%s6189 + $0x8c] sm:$0xf]
    %v6226 = vld [vmem:[%s6189 + $0x90] sm:$0xf]
    %v6227 = vld [vmem:[%s6189 + $0x94] sm:$0xf]
    %v6228 = vld [vmem:[%s6189 + $0x98] sm:$0xf]
    %v6229 = vld [vmem:[%s6189 + $0x9c] sm:$0xf]
    %v6230 = vld [vmem:[%s6189 + $0xa0] sm:$0xf]
    %v6231 = vld [vmem:[%s6189 + $0xa4] sm:$0xf]
    %v6232 = vld [vmem:[%s6189 + $0xa8] sm:$0xf]
    %v6233 = vld [vmem:[%s6189 + $0xac] sm:$0xf]
    %v6234 = vld [vmem:[%s6189 + $0xb0] sm:$0xf]
    %v6235 = vld [vmem:[%s6189 + $0xb4] sm:$0xf]
    %v6236 = vld [vmem:[%s6189 + $0xb8] sm:$0xf]
    %v6237 = vld [vmem:[%s6189 + $0xbc] sm:$0xf]
    %v6238 = vld [vmem:[%s6189 + $0xc0] sm:$0xf]
    %v6239 = vld [vmem:[%s6189 + $0xc4] sm:$0xf]
    %v6240 = vld [vmem:[%s6189 + $0xc8] sm:$0xf]
    %v6241 = vld [vmem:[%s6189 + $0xcc] sm:$0xf]
    %v6242 = vld [vmem:[%s6189 + $0xd0] sm:$0xf]
    %v6243 = vld [vmem:[%s6189 + $0xd4] sm:$0xf]
    %v6244 = vld [vmem:[%s6189 + $0xd8] sm:$0xf]
    %v6245 = vld [vmem:[%s6189 + $0xdc] sm:$0xf]
    %v6246 = vld [vmem:[%s6189 + $0xe0] sm:$0xf]
    %v6247 = vld [vmem:[%s6189 + $0xe4] sm:$0xf]
    %v6248 = vld [vmem:[%s6189 + $0xe8] sm:$0xf]
    %v6249 = vld [vmem:[%s6189 + $0xec] sm:$0xf]
    %v6250 = vld [vmem:[%s6189 + $0xf0] sm:$0xf]
    %v6251 = vld [vmem:[%s6189 + $0xf4] sm:$0xf]
    %v6252 = vld [vmem:[%s6189 + $0xf8] sm:$0xf]
    %v6253 = vld [vmem:[%s6189 + $0xfc] sm:$0xf]
    %s6254 = scalar_lea.vmem %s15, 640
    %v6255 = vld [vmem:[%s6254] sm:$0xff]
    %v6256 = vld [vmem:[%s6254 + $0x8] sm:$0xff]
    %v6257 = vld [vmem:[%s6254 + $0x10] sm:$0xff]
    %v6258 = vld [vmem:[%s6254 + $0x18] sm:$0xff]
    %v6259 = vld [vmem:[%s6254 + $0x20] sm:$0xff]
    %v6260 = vld [vmem:[%s6254 + $0x28] sm:$0xff]
    %v6261 = vld [vmem:[%s6254 + $0x30] sm:$0xff]
    %v6262 = vld [vmem:[%s6254 + $0x38] sm:$0xff]
    %v6263 = vld [vmem:[%s6254 + $0x40] sm:$0xff]
    %v6264 = vld [vmem:[%s6254 + $0x48] sm:$0xff]
    %v6265 = vld [vmem:[%s6254 + $0x50] sm:$0xff]
    %v6266 = vld [vmem:[%s6254 + $0x58] sm:$0xff]
    %v6267 = vld [vmem:[%s6254 + $0x60] sm:$0xff]
    %v6268 = vld [vmem:[%s6254 + $0x68] sm:$0xff]
    %v6269 = vld [vmem:[%s6254 + $0x70] sm:$0xff]
    %v6270 = vld [vmem:[%s6254 + $0x78] sm:$0xff]
    %s6271 = scalar_lea.vmem %s16, 20
    %v6272 = vld [vmem:[%s6271] sm:$0xf]
    %v6274 = vlaneseq
    %v6275 = vshrl.u32 %v6274, 7
    %v6276 = vsub.s32 0, %v6275
    %v6277 = vrot.slane %v6272, %v6276
    %v6278 = vlaneseq
    %v6279 = vshrl.u32 %v6278, 7
    %v6280 = vsub.s32 1, %v6279
    %v6281 = vrot.slane %v6272, %v6280
    %v6282 = vlaneseq
    %v6283 = vshrl.u32 %v6282, 7
    %v6284 = vsub.s32 2, %v6283
    %v6285 = vrot.slane %v6272, %v6284
    %v6286 = vlaneseq
    %v6287 = vshrl.u32 %v6286, 7
    %v6288 = vsub.s32 3, %v6287
    %v6289 = vrot.slane %v6272, %v6288
    %v6310 = vunpack.c.l.b16 %v6255
    %v6311 = vunpack.c.h.b16 %v6255
    %v6312 = vunpack.c.l.b16 %v6256
    %v6313 = vunpack.c.h.b16 %v6256
    %v6314 = vunpack.c.l.b16 %v6257
    %v6315 = vunpack.c.h.b16 %v6257
    %v6316 = vunpack.c.l.b16 %v6258
    %v6317 = vunpack.c.h.b16 %v6258
    %v6318 = vunpack.c.l.b16 %v6259
    %v6319 = vunpack.c.h.b16 %v6259
    %v6320 = vunpack.c.l.b16 %v6260
    %v6321 = vunpack.c.h.b16 %v6260
    %v6322 = vunpack.c.l.b16 %v6261
    %v6323 = vunpack.c.h.b16 %v6261
    %v6324 = vunpack.c.l.b16 %v6262
    %v6325 = vunpack.c.h.b16 %v6262
    %v6326 = vunpack.c.l.b16 %v6263
    %v6327 = vunpack.c.h.b16 %v6263
    %v6328 = vunpack.c.l.b16 %v6264
    %v6329 = vunpack.c.h.b16 %v6264
    %v6330 = vunpack.c.l.b16 %v6265
    %v6331 = vunpack.c.h.b16 %v6265
    %v6332 = vunpack.c.l.b16 %v6266
    %v6333 = vunpack.c.h.b16 %v6266
    %v6334 = vunpack.c.l.b16 %v6267
    %v6335 = vunpack.c.h.b16 %v6267
    %v6336 = vunpack.c.l.b16 %v6268
    %v6337 = vunpack.c.h.b16 %v6268
    %v6338 = vunpack.c.l.b16 %v6269
    %v6339 = vunpack.c.h.b16 %v6269
    %v6340 = vunpack.c.l.b16 %v6270
    %v6341 = vunpack.c.h.b16 %v6270
    %v6342 = vpack.c.b16 %v6314, %v6310
    %v6343 = vpack.c.b16 %v6315, %v6311
    %v6344 = vpack.c.b16 %v6316, %v6312
    %v6345 = vpack.c.b16 %v6317, %v6313
    %v6346 = vpack.c.b16 %v6322, %v6318
    %v6347 = vpack.c.b16 %v6323, %v6319
    %v6348 = vpack.c.b16 %v6324, %v6320
    %v6349 = vpack.c.b16 %v6325, %v6321
    %v6350 = vpack.c.b16 %v6330, %v6326
    %v6351 = vpack.c.b16 %v6331, %v6327
    %v6352 = vpack.c.b16 %v6332, %v6328
    %v6353 = vpack.c.b16 %v6333, %v6329
    %v6354 = vpack.c.b16 %v6338, %v6334
    %v6355 = vpack.c.b16 %v6339, %v6335
    %v6356 = vpack.c.b16 %v6340, %v6336
    %v6357 = vpack.c.b16 %v6341, %v6337
    %6374 = vmatprep.subr.bf16.mxu0 0
    %6375 = vmatpush1.bf16.msra.mxu0 0
    %6376 = vmatprep.subr.bf16.mxu0 0
    %6377 = vmatpush1.bf16.msra.mxu0 0
    %6378 = vmatprep.subr.bf16.mxu0 0
    %6379 = vmatpush1.bf16.msra.mxu0 0
    %6380 = vmatprep.subr.bf16.mxu0 0
    %6381 = vmatpush1.bf16.msra.mxu0 0
    %6382 = vmatprep.subr.bf16.mxu0 %v6355
    %6383 = vmatpush1.bf16.msra.mxu0 %v6354
    %6384 = vmatprep.subr.bf16.mxu0 %v6351
    %6385 = vmatpush1.bf16.msra.mxu0 %v6350
    %6386 = vmatprep.subr.bf16.mxu0 %v6347
    %6387 = vmatpush1.bf16.msra.mxu0 %v6346
    %6388 = vmatprep.subr.bf16.mxu0 %v6343
    %6389 = vmatpush1.bf16.msra.mxu0 %v6342
    %6390 = vmatprep.subr.bf16.mxu0 0
    %6391 = vmatpush2.bf16.msra.mxu0 0
    %6392 = vmatprep.subr.bf16.mxu0 0
    %6393 = vmatpush2.bf16.msra.mxu0 0
    %6394 = vmatprep.subr.bf16.mxu0 0
    %6395 = vmatpush2.bf16.msra.mxu0 0
    %6396 = vmatprep.subr.bf16.mxu0 0
    %6397 = vmatpush2.bf16.msra.mxu0 0
    %6398 = vmatprep.subr.bf16.mxu0 0
    %6399 = vmatpush2.bf16.msra.mxu0 0
    %6400 = vmatprep.subr.bf16.mxu0 0
    %6401 = vmatpush2.bf16.msra.mxu0 0
    %6402 = vmatprep.subr.bf16.mxu0 0
    %6403 = vmatpush2.bf16.msra.mxu0 0
    %6404 = vmatprep.subr.bf16.mxu0 0
    %6405 = vmatpush2.bf16.msra.mxu0 0
    %6406 = vmatprep.mubr.bf16.mxu0 0
    %6407 = vmatmul.mubr.bf16.gmra.mxu0 %v6097
    %v6408 = vpop.f32.mrf.mxu0
    %v6409 = vadd.f32 %v6277, %v6408
    %v6410 = vpop.f32.mrf.mxu0
    %v6411 = vadd.f32 %v6281, %v6410
    %v6412 = vpop.f32.mrf.mxu0
    %v6413 = vpop.f32.mrf.mxu0
    %6414 = vdwg.mxu0
    %6415 = vmatprep.subr.bf16.mxu0 0
    %6416 = vmatpush1.bf16.msra.mxu0 0
    %6417 = vmatprep.subr.bf16.mxu0 0
    %6418 = vmatpush1.bf16.msra.mxu0 0
    %6419 = vmatprep.subr.bf16.mxu0 0
    %6420 = vmatpush1.bf16.msra.mxu0 0
    %6421 = vmatprep.subr.bf16.mxu0 0
    %6422 = vmatpush1.bf16.msra.mxu0 0
    %6423 = vmatprep.subr.bf16.mxu0 %v6357
    %6424 = vmatpush1.bf16.msra.mxu0 %v6356
    %6425 = vmatprep.subr.bf16.mxu0 %v6353
    %6426 = vmatpush1.bf16.msra.mxu0 %v6352
    %6427 = vmatprep.subr.bf16.mxu0 %v6349
    %6428 = vmatpush1.bf16.msra.mxu0 %v6348
    %6429 = vmatprep.subr.bf16.mxu0 %v6345
    %6430 = vmatpush1.bf16.msra.mxu0 %v6344
    %6431 = vmatprep.subr.bf16.mxu0 0
    %6432 = vmatpush2.bf16.msra.mxu0 0
    %6433 = vmatprep.subr.bf16.mxu0 0
    %6434 = vmatpush2.bf16.msra.mxu0 0
    %6435 = vmatprep.subr.bf16.mxu0 0
    %6436 = vmatpush2.bf16.msra.mxu0 0
    %6437 = vmatprep.subr.bf16.mxu0 0
    %6438 = vmatpush2.bf16.msra.mxu0 0
    %6439 = vmatprep.subr.bf16.mxu0 0
    %6440 = vmatpush2.bf16.msra.mxu0 0
    %6441 = vmatprep.subr.bf16.mxu0 0
    %6442 = vmatpush2.bf16.msra.mxu0 0
    %6443 = vmatprep.subr.bf16.mxu0 0
    %6444 = vmatpush2.bf16.msra.mxu0 0
    %6445 = vmatprep.subr.bf16.mxu0 0
    %6446 = vmatpush2.bf16.msra.mxu0 0
    %6447 = vmatprep.mubr.bf16.mxu0 0
    %6448 = vmatmul.mubr.bf16.gmra.mxu0 %v6097
    %v6449 = vpop.f32.mrf.mxu0
    %v6450 = vadd.f32 %v6285, %v6449
    %v6451 = vpop.f32.mrf.mxu0
    %v6452 = vadd.f32 %v6289, %v6451
    %v6453 = vpop.f32.mrf.mxu0
    %v6454 = vpop.f32.mrf.mxu0
    %6455 = vdwg.mxu0
    %v6456 = vmax.f32 %v6409, 0.0
    %v6457 = vmax.f32 %v6411, 0.0
    %v6458 = vmax.f32 %v6450, 0.0
    %v6459 = vmax.f32 %v6452, 0.0
    %v6460 = vpack.c.bf16 %v6456, %v6456
    %v6461 = vpack.c.bf16 %v6457, %v6457
    %v6462 = vpack.c.bf16 %v6458, %v6458
    %v6463 = vpack.c.bf16 %v6459, %v6459
    %s6464 = scalar_lea.vmem %s17, 1280
    %v6465 = vld [vmem:[%s6464] sm:$0xf]
    %v6466 = vld [vmem:[%s6464 + $0x4] sm:$0xf]
    %v6467 = vld [vmem:[%s6464 + $0x8] sm:$0xf]
    %v6468 = vld [vmem:[%s6464 + $0xc] sm:$0xf]
    %v6469 = vld [vmem:[%s6464 + $0x10] sm:$0xf]
    %v6470 = vld [vmem:[%s6464 + $0x14] sm:$0xf]
    %v6471 = vld [vmem:[%s6464 + $0x18] sm:$0xf]
    %v6472 = vld [vmem:[%s6464 + $0x1c] sm:$0xf]
    %v6473 = vld [vmem:[%s6464 + $0x20] sm:$0xf]
    %v6474 = vld [vmem:[%s6464 + $0x24] sm:$0xf]
    %v6475 = vld [vmem:[%s6464 + $0x28] sm:$0xf]
    %v6476 = vld [vmem:[%s6464 + $0x2c] sm:$0xf]
    %v6477 = vld [vmem:[%s6464 + $0x30] sm:$0xf]
    %v6478 = vld [vmem:[%s6464 + $0x34] sm:$0xf]
    %v6479 = vld [vmem:[%s6464 + $0x38] sm:$0xf]
    %v6480 = vld [vmem:[%s6464 + $0x3c] sm:$0xf]
    %v6481 = vld [vmem:[%s6464 + $0x40] sm:$0xf]
    %v6482 = vld [vmem:[%s6464 + $0x44] sm:$0xf]
    %v6483 = vld [vmem:[%s6464 + $0x48] sm:$0xf]
    %v6484 = vld [vmem:[%s6464 + $0x4c] sm:$0xf]
    %v6485 = vld [vmem:[%s6464 + $0x50] sm:$0xf]
    %v6486 = vld [vmem:[%s6464 + $0x54] sm:$0xf]
    %v6487 = vld [vmem:[%s6464 + $0x58] sm:$0xf]
    %v6488 = vld [vmem:[%s6464 + $0x5c] sm:$0xf]
    %v6489 = vld [vmem:[%s6464 + $0x60] sm:$0xf]
    %v6490 = vld [vmem:[%s6464 + $0x64] sm:$0xf]
    %v6491 = vld [vmem:[%s6464 + $0x68] sm:$0xf]
    %v6492 = vld [vmem:[%s6464 + $0x6c] sm:$0xf]
    %v6493 = vld [vmem:[%s6464 + $0x70] sm:$0xf]
    %v6494 = vld [vmem:[%s6464 + $0x74] sm:$0xf]
    %v6495 = vld [vmem:[%s6464 + $0x78] sm:$0xf]
    %v6496 = vld [vmem:[%s6464 + $0x7c] sm:$0xf]
    %v6497 = vld [vmem:[%s6464 + $0x80] sm:$0xf]
    %v6498 = vld [vmem:[%s6464 + $0x84] sm:$0xf]
    %v6499 = vld [vmem:[%s6464 + $0x88] sm:$0xf]
    %v6500 = vld [vmem:[%s6464 + $0x8c] sm:$0xf]
    %v6501 = vld [vmem:[%s6464 + $0x90] sm:$0xf]
    %v6502 = vld [vmem:[%s6464 + $0x94] sm:$0xf]
    %v6503 = vld [vmem:[%s6464 + $0x98] sm:$0xf]
    %v6504 = vld [vmem:[%s6464 + $0x9c] sm:$0xf]
    %v6505 = vld [vmem:[%s6464 + $0xa0] sm:$0xf]
    %v6506 = vld [vmem:[%s6464 + $0xa4] sm:$0xf]
    %v6507 = vld [vmem:[%s6464 + $0xa8] sm:$0xf]
    %v6508 = vld [vmem:[%s6464 + $0xac] sm:$0xf]
    %v6509 = vld [vmem:[%s6464 + $0xb0] sm:$0xf]
    %v6510 = vld [vmem:[%s6464 + $0xb4] sm:$0xf]
    %v6511 = vld [vmem:[%s6464 + $0xb8] sm:$0xf]
    %v6512 = vld [vmem:[%s6464 + $0xbc] sm:$0xf]
    %v6513 = vld [vmem:[%s6464 + $0xc0] sm:$0xf]
    %v6514 = vld [vmem:[%s6464 + $0xc4] sm:$0xf]
    %v6515 = vld [vmem:[%s6464 + $0xc8] sm:$0xf]
    %v6516 = vld [vmem:[%s6464 + $0xcc] sm:$0xf]
    %v6517 = vld [vmem:[%s6464 + $0xd0] sm:$0xf]
    %v6518 = vld [vmem:[%s6464 + $0xd4] sm:$0xf]
    %v6519 = vld [vmem:[%s6464 + $0xd8] sm:$0xf]
    %v6520 = vld [vmem:[%s6464 + $0xdc] sm:$0xf]
    %v6521 = vld [vmem:[%s6464 + $0xe0] sm:$0xf]
    %v6522 = vld [vmem:[%s6464 + $0xe4] sm:$0xf]
    %v6523 = vld [vmem:[%s6464 + $0xe8] sm:$0xf]
    %v6524 = vld [vmem:[%s6464 + $0xec] sm:$0xf]
    %v6525 = vld [vmem:[%s6464 + $0xf0] sm:$0xf]
    %v6526 = vld [vmem:[%s6464 + $0xf4] sm:$0xf]
    %v6527 = vld [vmem:[%s6464 + $0xf8] sm:$0xf]
    %v6528 = vld [vmem:[%s6464 + $0xfc] sm:$0xf]
    %v6593 = vunpack.c.l.b16 %v6465
    %v6594 = vunpack.c.l.b16 %v6466
    %v6595 = vunpack.c.l.b16 %v6467
    %v6596 = vunpack.c.l.b16 %v6468
    %v6597 = vunpack.c.l.b16 %v6469
    %v6598 = vunpack.c.l.b16 %v6470
    %v6599 = vunpack.c.l.b16 %v6471
    %v6600 = vunpack.c.l.b16 %v6472
    %v6601 = vunpack.c.l.b16 %v6473
    %v6602 = vunpack.c.l.b16 %v6474
    %v6603 = vunpack.c.l.b16 %v6475
    %v6604 = vunpack.c.l.b16 %v6476
    %v6605 = vunpack.c.l.b16 %v6477
    %v6606 = vunpack.c.l.b16 %v6478
    %v6607 = vunpack.c.l.b16 %v6479
    %v6608 = vunpack.c.l.b16 %v6480
    %v6609 = vunpack.c.l.b16 %v6481
    %v6610 = vunpack.c.l.b16 %v6482
    %v6611 = vunpack.c.l.b16 %v6483
    %v6612 = vunpack.c.l.b16 %v6484
    %v6613 = vunpack.c.l.b16 %v6485
    %v6614 = vunpack.c.l.b16 %v6486
    %v6615 = vunpack.c.l.b16 %v6487
    %v6616 = vunpack.c.l.b16 %v6488
    %v6617 = vunpack.c.l.b16 %v6489
    %v6618 = vunpack.c.l.b16 %v6490
    %v6619 = vunpack.c.l.b16 %v6491
    %v6620 = vunpack.c.l.b16 %v6492
    %v6621 = vunpack.c.l.b16 %v6493
    %v6622 = vunpack.c.l.b16 %v6494
    %v6623 = vunpack.c.l.b16 %v6495
    %v6624 = vunpack.c.l.b16 %v6496
    %v6625 = vunpack.c.l.b16 %v6497
    %v6626 = vunpack.c.l.b16 %v6498
    %v6627 = vunpack.c.l.b16 %v6499
    %v6628 = vunpack.c.l.b16 %v6500
    %v6629 = vunpack.c.l.b16 %v6501
    %v6630 = vunpack.c.l.b16 %v6502
    %v6631 = vunpack.c.l.b16 %v6503
    %v6632 = vunpack.c.l.b16 %v6504
    %v6633 = vunpack.c.l.b16 %v6505
    %v6634 = vunpack.c.l.b16 %v6506
    %v6635 = vunpack.c.l.b16 %v6507
    %v6636 = vunpack.c.l.b16 %v6508
    %v6637 = vunpack.c.l.b16 %v6509
    %v6638 = vunpack.c.l.b16 %v6510
    %v6639 = vunpack.c.l.b16 %v6511
    %v6640 = vunpack.c.l.b16 %v6512
    %v6641 = vunpack.c.l.b16 %v6513
    %v6642 = vunpack.c.l.b16 %v6514
    %v6643 = vunpack.c.l.b16 %v6515
    %v6644 = vunpack.c.l.b16 %v6516
    %v6645 = vunpack.c.l.b16 %v6517
    %v6646 = vunpack.c.l.b16 %v6518
    %v6647 = vunpack.c.l.b16 %v6519
    %v6648 = vunpack.c.l.b16 %v6520
    %v6649 = vunpack.c.l.b16 %v6521
    %v6650 = vunpack.c.l.b16 %v6522
    %v6651 = vunpack.c.l.b16 %v6523
    %v6652 = vunpack.c.l.b16 %v6524
    %v6653 = vunpack.c.l.b16 %v6525
    %v6654 = vunpack.c.l.b16 %v6526
    %v6655 = vunpack.c.l.b16 %v6527
    %v6656 = vunpack.c.l.b16 %v6528
    %v6657 = vpack.c.b16 %v6594, %v6593
    %v6658 = vpack.c.b16 %v6596, %v6595
    %v6659 = vpack.c.b16 %v6598, %v6597
    %v6660 = vpack.c.b16 %v6600, %v6599
    %v6661 = vpack.c.b16 %v6602, %v6601
    %v6662 = vpack.c.b16 %v6604, %v6603
    %v6663 = vpack.c.b16 %v6606, %v6605
    %v6664 = vpack.c.b16 %v6608, %v6607
    %v6665 = vpack.c.b16 %v6610, %v6609
    %v6666 = vpack.c.b16 %v6612, %v6611
    %v6667 = vpack.c.b16 %v6614, %v6613
    %v6668 = vpack.c.b16 %v6616, %v6615
    %v6669 = vpack.c.b16 %v6618, %v6617
    %v6670 = vpack.c.b16 %v6620, %v6619
    %v6671 = vpack.c.b16 %v6622, %v6621
    %v6672 = vpack.c.b16 %v6624, %v6623
    %v6673 = vpack.c.b16 %v6626, %v6625
    %v6674 = vpack.c.b16 %v6628, %v6627
    %v6675 = vpack.c.b16 %v6630, %v6629
    %v6676 = vpack.c.b16 %v6632, %v6631
    %v6677 = vpack.c.b16 %v6634, %v6633
    %v6678 = vpack.c.b16 %v6636, %v6635
    %v6679 = vpack.c.b16 %v6638, %v6637
    %v6680 = vpack.c.b16 %v6640, %v6639
    %v6681 = vpack.c.b16 %v6642, %v6641
    %v6682 = vpack.c.b16 %v6644, %v6643
    %v6683 = vpack.c.b16 %v6646, %v6645
    %v6684 = vpack.c.b16 %v6648, %v6647
    %v6685 = vpack.c.b16 %v6650, %v6649
    %v6686 = vpack.c.b16 %v6652, %v6651
    %v6687 = vpack.c.b16 %v6654, %v6653
    %v6688 = vpack.c.b16 %v6656, %v6655
    %6721 = vmatprep.subr.bf16.mxu0 0
    %6722 = vmatpush1.bf16.msra.mxu0 %v6664
    %6723 = vmatprep.subr.bf16.mxu0 0
    %6724 = vmatpush1.bf16.msra.mxu0 %v6663
    %6725 = vmatprep.subr.bf16.mxu0 0
    %6726 = vmatpush1.bf16.msra.mxu0 %v6662
    %6727 = vmatprep.subr.bf16.mxu0 0
    %6728 = vmatpush1.bf16.msra.mxu0 %v6661
    %6729 = vmatprep.subr.bf16.mxu0 0
    %6730 = vmatpush1.bf16.msra.mxu0 %v6660
    %6731 = vmatprep.subr.bf16.mxu0 0
    %6732 = vmatpush1.bf16.msra.mxu0 %v6659
    %6733 = vmatprep.subr.bf16.mxu0 0
    %6734 = vmatpush1.bf16.msra.mxu0 %v6658
    %6735 = vmatprep.subr.bf16.mxu0 0
    %6736 = vmatpush1.bf16.msra.mxu0 %v6657
    %6737 = vmatprep.subr.bf16.mxu0 0
    %6738 = vmatpush2.bf16.msra.mxu0 %v6672
    %6739 = vmatprep.subr.bf16.mxu0 0
    %6740 = vmatpush2.bf16.msra.mxu0 %v6671
    %6741 = vmatprep.subr.bf16.mxu0 0
    %6742 = vmatpush2.bf16.msra.mxu0 %v6670
    %6743 = vmatprep.subr.bf16.mxu0 0
    %6744 = vmatpush2.bf16.msra.mxu0 %v6669
    %6745 = vmatprep.subr.bf16.mxu0 0
    %6746 = vmatpush2.bf16.msra.mxu0 %v6668
    %6747 = vmatprep.subr.bf16.mxu0 0
    %6748 = vmatpush2.bf16.msra.mxu0 %v6667
    %6749 = vmatprep.subr.bf16.mxu0 0
    %6750 = vmatpush2.bf16.msra.mxu0 %v6666
    %6751 = vmatprep.subr.bf16.mxu0 0
    %6752 = vmatpush2.bf16.msra.mxu0 %v6665
    %6753 = vmatprep.mubr.bf16.mxu0 %v6461
    %6754 = vmatmul.mubr.bf16.gmra.mxu0 %v6460
    %v6755 = vpop.f32.mrf.mxu0
    %v6756 = vadd.f32 0.0, %v6755
    %v6757 = vpop.f32.mrf.mxu0
    %v6758 = vpop.f32.mrf.mxu0
    %v6759 = vpop.f32.mrf.mxu0
    %6760 = vdwg.mxu0
    %6761 = vmatprep.subr.bf16.mxu0 0
    %6762 = vmatpush1.bf16.msra.mxu0 %v6680
    %6763 = vmatprep.subr.bf16.mxu0 0
    %6764 = vmatpush1.bf16.msra.mxu0 %v6679
    %6765 = vmatprep.subr.bf16.mxu0 0
    %6766 = vmatpush1.bf16.msra.mxu0 %v6678
    %6767 = vmatprep.subr.bf16.mxu0 0
    %6768 = vmatpush1.bf16.msra.mxu0 %v6677
    %6769 = vmatprep.subr.bf16.mxu0 0
    %6770 = vmatpush1.bf16.msra.mxu0 %v6676
    %6771 = vmatprep.subr.bf16.mxu0 0
    %6772 = vmatpush1.bf16.msra.mxu0 %v6675
    %6773 = vmatprep.subr.bf16.mxu0 0
    %6774 = vmatpush1.bf16.msra.mxu0 %v6674
    %6775 = vmatprep.subr.bf16.mxu0 0
    %6776 = vmatpush1.bf16.msra.mxu0 %v6673
    %6777 = vmatprep.subr.bf16.mxu0 0
    %6778 = vmatpush2.bf16.msra.mxu0 %v6688
    %6779 = vmatprep.subr.bf16.mxu0 0
    %6780 = vmatpush2.bf16.msra.mxu0 %v6687
    %6781 = vmatprep.subr.bf16.mxu0 0
    %6782 = vmatpush2.bf16.msra.mxu0 %v6686
    %6783 = vmatprep.subr.bf16.mxu0 0
    %6784 = vmatpush2.bf16.msra.mxu0 %v6685
    %6785 = vmatprep.subr.bf16.mxu0 0
    %6786 = vmatpush2.bf16.msra.mxu0 %v6684
    %6787 = vmatprep.subr.bf16.mxu0 0
    %6788 = vmatpush2.bf16.msra.mxu0 %v6683
    %6789 = vmatprep.subr.bf16.mxu0 0
    %6790 = vmatpush2.bf16.msra.mxu0 %v6682
    %6791 = vmatprep.subr.bf16.mxu0 0
    %6792 = vmatpush2.bf16.msra.mxu0 %v6681
    %6793 = vmatprep.mubr.bf16.mxu0 %v6463
    %6794 = vmatmul.mubr.bf16.gmra.mxu0 %v6462
    %v6795 = vpop.f32.mrf.mxu0
    %v6796 = vadd.f32 %v6756, %v6795
    %v6797 = vpop.f32.mrf.mxu0
    %v6798 = vpop.f32.mrf.mxu0
    %v6799 = vpop.f32.mrf.mxu0
    %6800 = vdwg.mxu0
    %v6865 = vunpack.c.l.b16 %v6190
    %v6866 = vunpack.c.l.b16 %v6191
    %v6867 = vunpack.c.l.b16 %v6192
    %v6868 = vunpack.c.l.b16 %v6193
    %v6869 = vunpack.c.l.b16 %v6194
    %v6870 = vunpack.c.l.b16 %v6195
    %v6871 = vunpack.c.l.b16 %v6196
    %v6872 = vunpack.c.l.b16 %v6197
    %v6873 = vunpack.c.l.b16 %v6198
    %v6874 = vunpack.c.l.b16 %v6199
    %v6875 = vunpack.c.l.b16 %v6200
    %v6876 = vunpack.c.l.b16 %v6201
    %v6877 = vunpack.c.l.b16 %v6202
    %v6878 = vunpack.c.l.b16 %v6203
    %v6879 = vunpack.c.l.b16 %v6204
    %v6880 = vunpack.c.l.b16 %v6205
    %v6881 = vunpack.c.l.b16 %v6206
    %v6882 = vunpack.c.l.b16 %v6207
    %v6883 = vunpack.c.l.b16 %v6208
    %v6884 = vunpack.c.l.b16 %v6209
    %v6885 = vunpack.c.l.b16 %v6210
    %v6886 = vunpack.c.l.b16 %v6211
    %v6887 = vunpack.c.l.b16 %v6212
    %v6888 = vunpack.c.l.b16 %v6213
    %v6889 = vunpack.c.l.b16 %v6214
    %v6890 = vunpack.c.l.b16 %v6215
    %v6891 = vunpack.c.l.b16 %v6216
    %v6892 = vunpack.c.l.b16 %v6217
    %v6893 = vunpack.c.l.b16 %v6218
    %v6894 = vunpack.c.l.b16 %v6219
    %v6895 = vunpack.c.l.b16 %v6220
    %v6896 = vunpack.c.l.b16 %v6221
    %v6897 = vunpack.c.l.b16 %v6222
    %v6898 = vunpack.c.l.b16 %v6223
    %v6899 = vunpack.c.l.b16 %v6224
    %v6900 = vunpack.c.l.b16 %v6225
    %v6901 = vunpack.c.l.b16 %v6226
    %v6902 = vunpack.c.l.b16 %v6227
    %v6903 = vunpack.c.l.b16 %v6228
    %v6904 = vunpack.c.l.b16 %v6229
    %v6905 = vunpack.c.l.b16 %v6230
    %v6906 = vunpack.c.l.b16 %v6231
    %v6907 = vunpack.c.l.b16 %v6232
    %v6908 = vunpack.c.l.b16 %v6233
    %v6909 = vunpack.c.l.b16 %v6234
    %v6910 = vunpack.c.l.b16 %v6235
    %v6911 = vunpack.c.l.b16 %v6236
    %v6912 = vunpack.c.l.b16 %v6237
    %v6913 = vunpack.c.l.b16 %v6238
    %v6914 = vunpack.c.l.b16 %v6239
    %v6915 = vunpack.c.l.b16 %v6240
    %v6916 = vunpack.c.l.b16 %v6241
    %v6917 = vunpack.c.l.b16 %v6242
    %v6918 = vunpack.c.l.b16 %v6243
    %v6919 = vunpack.c.l.b16 %v6244
    %v6920 = vunpack.c.l.b16 %v6245
    %v6921 = vunpack.c.l.b16 %v6246
    %v6922 = vunpack.c.l.b16 %v6247
    %v6923 = vunpack.c.l.b16 %v6248
    %v6924 = vunpack.c.l.b16 %v6249
    %v6925 = vunpack.c.l.b16 %v6250
    %v6926 = vunpack.c.l.b16 %v6251
    %v6927 = vunpack.c.l.b16 %v6252
    %v6928 = vunpack.c.l.b16 %v6253
    %v6929 = vpack.c.b16 %v6866, %v6865
    %v6930 = vpack.c.b16 %v6868, %v6867
    %v6931 = vpack.c.b16 %v6870, %v6869
    %v6932 = vpack.c.b16 %v6872, %v6871
    %v6933 = vpack.c.b16 %v6874, %v6873
    %v6934 = vpack.c.b16 %v6876, %v6875
    %v6935 = vpack.c.b16 %v6878, %v6877
    %v6936 = vpack.c.b16 %v6880, %v6879
    %v6937 = vpack.c.b16 %v6882, %v6881
    %v6938 = vpack.c.b16 %v6884, %v6883
    %v6939 = vpack.c.b16 %v6886, %v6885
    %v6940 = vpack.c.b16 %v6888, %v6887
    %v6941 = vpack.c.b16 %v6890, %v6889
    %v6942 = vpack.c.b16 %v6892, %v6891
    %v6943 = vpack.c.b16 %v6894, %v6893
    %v6944 = vpack.c.b16 %v6896, %v6895
    %v6945 = vpack.c.b16 %v6898, %v6897
    %v6946 = vpack.c.b16 %v6900, %v6899
    %v6947 = vpack.c.b16 %v6902, %v6901
    %v6948 = vpack.c.b16 %v6904, %v6903
    %v6949 = vpack.c.b16 %v6906, %v6905
    %v6950 = vpack.c.b16 %v6908, %v6907
    %v6951 = vpack.c.b16 %v6910, %v6909
    %v6952 = vpack.c.b16 %v6912, %v6911
    %v6953 = vpack.c.b16 %v6914, %v6913
    %v6954 = vpack.c.b16 %v6916, %v6915
    %v6955 = vpack.c.b16 %v6918, %v6917
    %v6956 = vpack.c.b16 %v6920, %v6919
    %v6957 = vpack.c.b16 %v6922, %v6921
    %v6958 = vpack.c.b16 %v6924, %v6923
    %v6959 = vpack.c.b16 %v6926, %v6925
    %v6960 = vpack.c.b16 %v6928, %v6927
    %6993 = vmatprep.subr.bf16.mxu0 0
    %6994 = vmatpush1.bf16.msra.mxu0 %v6936
    %6995 = vmatprep.subr.bf16.mxu0 0
    %6996 = vmatpush1.bf16.msra.mxu0 %v6935
    %6997 = vmatprep.subr.bf16.mxu0 0
    %6998 = vmatpush1.bf16.msra.mxu0 %v6934
    %6999 = vmatprep.subr.bf16.mxu0 0
    %7000 = vmatpush1.bf16.msra.mxu0 %v6933
    %7001 = vmatprep.subr.bf16.mxu0 0
    %7002 = vmatpush1.bf16.msra.mxu0 %v6932
    %7003 = vmatprep.subr.bf16.mxu0 0
    %7004 = vmatpush1.bf16.msra.mxu0 %v6931
    %7005 = vmatprep.subr.bf16.mxu0 0
    %7006 = vmatpush1.bf16.msra.mxu0 %v6930
    %7007 = vmatprep.subr.bf16.mxu0 0
    %7008 = vmatpush1.bf16.msra.mxu0 %v6929
    %7009 = vmatprep.subr.bf16.mxu0 0
    %7010 = vmatpush2.bf16.msra.mxu0 %v6944
    %7011 = vmatprep.subr.bf16.mxu0 0
    %7012 = vmatpush2.bf16.msra.mxu0 %v6943
    %7013 = vmatprep.subr.bf16.mxu0 0
    %7014 = vmatpush2.bf16.msra.mxu0 %v6942
    %7015 = vmatprep.subr.bf16.mxu0 0
    %7016 = vmatpush2.bf16.msra.mxu0 %v6941
    %7017 = vmatprep.subr.bf16.mxu0 0
    %7018 = vmatpush2.bf16.msra.mxu0 %v6940
    %7019 = vmatprep.subr.bf16.mxu0 0
    %7020 = vmatpush2.bf16.msra.mxu0 %v6939
    %7021 = vmatprep.subr.bf16.mxu0 0
    %7022 = vmatpush2.bf16.msra.mxu0 %v6938
    %7023 = vmatprep.subr.bf16.mxu0 0
    %7024 = vmatpush2.bf16.msra.mxu0 %v6937
    %7025 = vmatprep.mubr.bf16.mxu0 %v6186
    %7026 = vmatmul.mubr.bf16.gmra.mxu0 %v6185
    %v7027 = vpop.f32.mrf.mxu0
    %v7028 = vadd.f32 %v6796, %v7027
    %v7029 = vpop.f32.mrf.mxu0
    %v7030 = vpop.f32.mrf.mxu0
    %v7031 = vpop.f32.mrf.mxu0
    %7032 = vdwg.mxu0
    %7033 = vmatprep.subr.bf16.mxu0 0
    %7034 = vmatpush1.bf16.msra.mxu0 %v6952
    %7035 = vmatprep.subr.bf16.mxu0 0
    %7036 = vmatpush1.bf16.msra.mxu0 %v6951
    %7037 = vmatprep.subr.bf16.mxu0 0
    %7038 = vmatpush1.bf16.msra.mxu0 %v6950
    %7039 = vmatprep.subr.bf16.mxu0 0
    %7040 = vmatpush1.bf16.msra.mxu0 %v6949
    %7041 = vmatprep.subr.bf16.mxu0 0
    %7042 = vmatpush1.bf16.msra.mxu0 %v6948
    %7043 = vmatprep.subr.bf16.mxu0 0
    %7044 = vmatpush1.bf16.msra.mxu0 %v6947
    %7045 = vmatprep.subr.bf16.mxu0 0
    %7046 = vmatpush1.bf16.msra.mxu0 %v6946
    %7047 = vmatprep.subr.bf16.mxu0 0
    %7048 = vmatpush1.bf16.msra.mxu0 %v6945
    %7049 = vmatprep.subr.bf16.mxu0 0
    %7050 = vmatpush2.bf16.msra.mxu0 %v6960
    %7051 = vmatprep.subr.bf16.mxu0 0
    %7052 = vmatpush2.bf16.msra.mxu0 %v6959
    %7053 = vmatprep.subr.bf16.mxu0 0
    %7054 = vmatpush2.bf16.msra.mxu0 %v6958
    %7055 = vmatprep.subr.bf16.mxu0 0
    %7056 = vmatpush2.bf16.msra.mxu0 %v6957
    %7057 = vmatprep.subr.bf16.mxu0 0
    %7058 = vmatpush2.bf16.msra.mxu0 %v6956
    %7059 = vmatprep.subr.bf16.mxu0 0
    %7060 = vmatpush2.bf16.msra.mxu0 %v6955
    %7061 = vmatprep.subr.bf16.mxu0 0
    %7062 = vmatpush2.bf16.msra.mxu0 %v6954
    %7063 = vmatprep.subr.bf16.mxu0 0
    %7064 = vmatpush2.bf16.msra.mxu0 %v6953
    %7065 = vmatprep.mubr.bf16.mxu0 %v6188
    %7066 = vmatmul.mubr.bf16.gmra.mxu0 %v6187
    %v7067 = vpop.f32.mrf.mxu0
    %v7068 = vadd.f32 %v7028, %v7067
    %v7069 = vpop.f32.mrf.mxu0
    %v7070 = vpop.f32.mrf.mxu0
    %v7071 = vpop.f32.mrf.mxu0
    %7072 = vdwg.mxu0
    %s7073 = scalar_lea.vmem %s15, 768
    %v7074 = vld [vmem:[%s7073] sm:$0xff]
    %v7075 = vld [vmem:[%s7073 + $0x8] sm:$0xff]
    %v7076 = vld [vmem:[%s7073 + $0x10] sm:$0xff]
    %v7077 = vld [vmem:[%s7073 + $0x18] sm:$0xff]
    %v7078 = vld [vmem:[%s7073 + $0x20] sm:$0xff]
    %v7079 = vld [vmem:[%s7073 + $0x28] sm:$0xff]
    %v7080 = vld [vmem:[%s7073 + $0x30] sm:$0xff]
    %v7081 = vld [vmem:[%s7073 + $0x38] sm:$0xff]
    %v7082 = vld [vmem:[%s7073 + $0x40] sm:$0xff]
    %v7083 = vld [vmem:[%s7073 + $0x48] sm:$0xff]
    %v7084 = vld [vmem:[%s7073 + $0x50] sm:$0xff]
    %v7085 = vld [vmem:[%s7073 + $0x58] sm:$0xff]
    %v7086 = vld [vmem:[%s7073 + $0x60] sm:$0xff]
    %v7087 = vld [vmem:[%s7073 + $0x68] sm:$0xff]
    %v7088 = vld [vmem:[%s7073 + $0x70] sm:$0xff]
    %v7089 = vld [vmem:[%s7073 + $0x78] sm:$0xff]
    %s7090 = scalar_lea.vmem %s16, 24
    %v7091 = vld [vmem:[%s7090] sm:$0xf]
    %v7093 = vlaneseq
    %v7094 = vshrl.u32 %v7093, 7
    %v7095 = vsub.s32 0, %v7094
    %v7096 = vrot.slane %v7091, %v7095
    %v7097 = vlaneseq
    %v7098 = vshrl.u32 %v7097, 7
    %v7099 = vsub.s32 1, %v7098
    %v7100 = vrot.slane %v7091, %v7099
    %v7101 = vlaneseq
    %v7102 = vshrl.u32 %v7101, 7
    %v7103 = vsub.s32 2, %v7102
    %v7104 = vrot.slane %v7091, %v7103
    %v7105 = vlaneseq
    %v7106 = vshrl.u32 %v7105, 7
    %v7107 = vsub.s32 3, %v7106
    %v7108 = vrot.slane %v7091, %v7107
    %v7129 = vunpack.c.l.b16 %v7074
    %v7130 = vunpack.c.h.b16 %v7074
    %v7131 = vunpack.c.l.b16 %v7075
    %v7132 = vunpack.c.h.b16 %v7075
    %v7133 = vunpack.c.l.b16 %v7076
    %v7134 = vunpack.c.h.b16 %v7076
    %v7135 = vunpack.c.l.b16 %v7077
    %v7136 = vunpack.c.h.b16 %v7077
    %v7137 = vunpack.c.l.b16 %v7078
    %v7138 = vunpack.c.h.b16 %v7078
    %v7139 = vunpack.c.l.b16 %v7079
    %v7140 = vunpack.c.h.b16 %v7079
    %v7141 = vunpack.c.l.b16 %v7080
    %v7142 = vunpack.c.h.b16 %v7080
    %v7143 = vunpack.c.l.b16 %v7081
    %v7144 = vunpack.c.h.b16 %v7081
    %v7145 = vunpack.c.l.b16 %v7082
    %v7146 = vunpack.c.h.b16 %v7082
    %v7147 = vunpack.c.l.b16 %v7083
    %v7148 = vunpack.c.h.b16 %v7083
    %v7149 = vunpack.c.l.b16 %v7084
    %v7150 = vunpack.c.h.b16 %v7084
    %v7151 = vunpack.c.l.b16 %v7085
    %v7152 = vunpack.c.h.b16 %v7085
    %v7153 = vunpack.c.l.b16 %v7086
    %v7154 = vunpack.c.h.b16 %v7086
    %v7155 = vunpack.c.l.b16 %v7087
    %v7156 = vunpack.c.h.b16 %v7087
    %v7157 = vunpack.c.l.b16 %v7088
    %v7158 = vunpack.c.h.b16 %v7088
    %v7159 = vunpack.c.l.b16 %v7089
    %v7160 = vunpack.c.h.b16 %v7089
    %v7161 = vpack.c.b16 %v7133, %v7129
    %v7162 = vpack.c.b16 %v7134, %v7130
    %v7163 = vpack.c.b16 %v7135, %v7131
    %v7164 = vpack.c.b16 %v7136, %v7132
    %v7165 = vpack.c.b16 %v7141, %v7137
    %v7166 = vpack.c.b16 %v7142, %v7138
    %v7167 = vpack.c.b16 %v7143, %v7139
    %v7168 = vpack.c.b16 %v7144, %v7140
    %v7169 = vpack.c.b16 %v7149, %v7145
    %v7170 = vpack.c.b16 %v7150, %v7146
    %v7171 = vpack.c.b16 %v7151, %v7147
    %v7172 = vpack.c.b16 %v7152, %v7148
    %v7173 = vpack.c.b16 %v7157, %v7153
    %v7174 = vpack.c.b16 %v7158, %v7154
    %v7175 = vpack.c.b16 %v7159, %v7155
    %v7176 = vpack.c.b16 %v7160, %v7156
    %7193 = vmatprep.subr.bf16.mxu0 0
    %7194 = vmatpush1.bf16.msra.mxu0 0
    %7195 = vmatprep.subr.bf16.mxu0 0
    %7196 = vmatpush1.bf16.msra.mxu0 0
    %7197 = vmatprep.subr.bf16.mxu0 0
    %7198 = vmatpush1.bf16.msra.mxu0 0
    %7199 = vmatprep.subr.bf16.mxu0 0
    %7200 = vmatpush1.bf16.msra.mxu0 0
    %7201 = vmatprep.subr.bf16.mxu0 %v7174
    %7202 = vmatpush1.bf16.msra.mxu0 %v7173
    %7203 = vmatprep.subr.bf16.mxu0 %v7170
    %7204 = vmatpush1.bf16.msra.mxu0 %v7169
    %7205 = vmatprep.subr.bf16.mxu0 %v7166
    %7206 = vmatpush1.bf16.msra.mxu0 %v7165
    %7207 = vmatprep.subr.bf16.mxu0 %v7162
    %7208 = vmatpush1.bf16.msra.mxu0 %v7161
    %7209 = vmatprep.subr.bf16.mxu0 0
    %7210 = vmatpush2.bf16.msra.mxu0 0
    %7211 = vmatprep.subr.bf16.mxu0 0
    %7212 = vmatpush2.bf16.msra.mxu0 0
    %7213 = vmatprep.subr.bf16.mxu0 0
    %7214 = vmatpush2.bf16.msra.mxu0 0
    %7215 = vmatprep.subr.bf16.mxu0 0
    %7216 = vmatpush2.bf16.msra.mxu0 0
    %7217 = vmatprep.subr.bf16.mxu0 0
    %7218 = vmatpush2.bf16.msra.mxu0 0
    %7219 = vmatprep.subr.bf16.mxu0 0
    %7220 = vmatpush2.bf16.msra.mxu0 0
    %7221 = vmatprep.subr.bf16.mxu0 0
    %7222 = vmatpush2.bf16.msra.mxu0 0
    %7223 = vmatprep.subr.bf16.mxu0 0
    %7224 = vmatpush2.bf16.msra.mxu0 0
    %7225 = vmatprep.mubr.bf16.mxu0 0
    %7226 = vmatmul.mubr.bf16.gmra.mxu0 %v6097
    %v7227 = vpop.f32.mrf.mxu0
    %v7228 = vadd.f32 %v7096, %v7227
    %v7229 = vpop.f32.mrf.mxu0
    %v7230 = vadd.f32 %v7100, %v7229
    %v7231 = vpop.f32.mrf.mxu0
    %v7232 = vpop.f32.mrf.mxu0
    %7233 = vdwg.mxu0
    %7234 = vmatprep.subr.bf16.mxu0 0
    %7235 = vmatpush1.bf16.msra.mxu0 0
    %7236 = vmatprep.subr.bf16.mxu0 0
    %7237 = vmatpush1.bf16.msra.mxu0 0
    %7238 = vmatprep.subr.bf16.mxu0 0
    %7239 = vmatpush1.bf16.msra.mxu0 0
    %7240 = vmatprep.subr.bf16.mxu0 0
    %7241 = vmatpush1.bf16.msra.mxu0 0
    %7242 = vmatprep.subr.bf16.mxu0 %v7176
    %7243 = vmatpush1.bf16.msra.mxu0 %v7175
    %7244 = vmatprep.subr.bf16.mxu0 %v7172
    %7245 = vmatpush1.bf16.msra.mxu0 %v7171
    %7246 = vmatprep.subr.bf16.mxu0 %v7168
    %7247 = vmatpush1.bf16.msra.mxu0 %v7167
    %7248 = vmatprep.subr.bf16.mxu0 %v7164
    %7249 = vmatpush1.bf16.msra.mxu0 %v7163
    %7250 = vmatprep.subr.bf16.mxu0 0
    %7251 = vmatpush2.bf16.msra.mxu0 0
    %7252 = vmatprep.subr.bf16.mxu0 0
    %7253 = vmatpush2.bf16.msra.mxu0 0
    %7254 = vmatprep.subr.bf16.mxu0 0
    %7255 = vmatpush2.bf16.msra.mxu0 0
    %7256 = vmatprep.subr.bf16.mxu0 0
    %7257 = vmatpush2.bf16.msra.mxu0 0
    %7258 = vmatprep.subr.bf16.mxu0 0
    %7259 = vmatpush2.bf16.msra.mxu0 0
    %7260 = vmatprep.subr.bf16.mxu0 0
    %7261 = vmatpush2.bf16.msra.mxu0 0
    %7262 = vmatprep.subr.bf16.mxu0 0
    %7263 = vmatpush2.bf16.msra.mxu0 0
    %7264 = vmatprep.subr.bf16.mxu0 0
    %7265 = vmatpush2.bf16.msra.mxu0 0
    %7266 = vmatprep.mubr.bf16.mxu0 0
    %7267 = vmatmul.mubr.bf16.gmra.mxu0 %v6097
    %v7268 = vpop.f32.mrf.mxu0
    %v7269 = vadd.f32 %v7104, %v7268
    %v7270 = vpop.f32.mrf.mxu0
    %v7271 = vadd.f32 %v7108, %v7270
    %v7272 = vpop.f32.mrf.mxu0
    %v7273 = vpop.f32.mrf.mxu0
    %7274 = vdwg.mxu0
    %v7275 = vmax.f32 %v7228, 0.0
    %v7276 = vmax.f32 %v7230, 0.0
    %v7277 = vmax.f32 %v7269, 0.0
    %v7278 = vmax.f32 %v7271, 0.0
    %v7279 = vpack.c.bf16 %v7275, %v7275
    %v7280 = vpack.c.bf16 %v7276, %v7276
    %v7281 = vpack.c.bf16 %v7277, %v7277
    %v7282 = vpack.c.bf16 %v7278, %v7278
    %s7283 = scalar_lea.vmem %s17, 1536
    %v7284 = vld [vmem:[%s7283] sm:$0xf]
    %v7285 = vld [vmem:[%s7283 + $0x4] sm:$0xf]
    %v7286 = vld [vmem:[%s7283 + $0x8] sm:$0xf]
    %v7287 = vld [vmem:[%s7283 + $0xc] sm:$0xf]
    %v7288 = vld [vmem:[%s7283 + $0x10] sm:$0xf]
    %v7289 = vld [vmem:[%s7283 + $0x14] sm:$0xf]
    %v7290 = vld [vmem:[%s7283 + $0x18] sm:$0xf]
    %v7291 = vld [vmem:[%s7283 + $0x1c] sm:$0xf]
    %v7292 = vld [vmem:[%s7283 + $0x20] sm:$0xf]
    %v7293 = vld [vmem:[%s7283 + $0x24] sm:$0xf]
    %v7294 = vld [vmem:[%s7283 + $0x28] sm:$0xf]
    %v7295 = vld [vmem:[%s7283 + $0x2c] sm:$0xf]
    %v7296 = vld [vmem:[%s7283 + $0x30] sm:$0xf]
    %v7297 = vld [vmem:[%s7283 + $0x34] sm:$0xf]
    %v7298 = vld [vmem:[%s7283 + $0x38] sm:$0xf]
    %v7299 = vld [vmem:[%s7283 + $0x3c] sm:$0xf]
    %v7300 = vld [vmem:[%s7283 + $0x40] sm:$0xf]
    %v7301 = vld [vmem:[%s7283 + $0x44] sm:$0xf]
    %v7302 = vld [vmem:[%s7283 + $0x48] sm:$0xf]
    %v7303 = vld [vmem:[%s7283 + $0x4c] sm:$0xf]
    %v7304 = vld [vmem:[%s7283 + $0x50] sm:$0xf]
    %v7305 = vld [vmem:[%s7283 + $0x54] sm:$0xf]
    %v7306 = vld [vmem:[%s7283 + $0x58] sm:$0xf]
    %v7307 = vld [vmem:[%s7283 + $0x5c] sm:$0xf]
    %v7308 = vld [vmem:[%s7283 + $0x60] sm:$0xf]
    %v7309 = vld [vmem:[%s7283 + $0x64] sm:$0xf]
    %v7310 = vld [vmem:[%s7283 + $0x68] sm:$0xf]
    %v7311 = vld [vmem:[%s7283 + $0x6c] sm:$0xf]
    %v7312 = vld [vmem:[%s7283 + $0x70] sm:$0xf]
    %v7313 = vld [vmem:[%s7283 + $0x74] sm:$0xf]
    %v7314 = vld [vmem:[%s7283 + $0x78] sm:$0xf]
    %v7315 = vld [vmem:[%s7283 + $0x7c] sm:$0xf]
    %v7316 = vld [vmem:[%s7283 + $0x80] sm:$0xf]
    %v7317 = vld [vmem:[%s7283 + $0x84] sm:$0xf]
    %v7318 = vld [vmem:[%s7283 + $0x88] sm:$0xf]
    %v7319 = vld [vmem:[%s7283 + $0x8c] sm:$0xf]
    %v7320 = vld [vmem:[%s7283 + $0x90] sm:$0xf]
    %v7321 = vld [vmem:[%s7283 + $0x94] sm:$0xf]
    %v7322 = vld [vmem:[%s7283 + $0x98] sm:$0xf]
    %v7323 = vld [vmem:[%s7283 + $0x9c] sm:$0xf]
    %v7324 = vld [vmem:[%s7283 + $0xa0] sm:$0xf]
    %v7325 = vld [vmem:[%s7283 + $0xa4] sm:$0xf]
    %v7326 = vld [vmem:[%s7283 + $0xa8] sm:$0xf]
    %v7327 = vld [vmem:[%s7283 + $0xac] sm:$0xf]
    %v7328 = vld [vmem:[%s7283 + $0xb0] sm:$0xf]
    %v7329 = vld [vmem:[%s7283 + $0xb4] sm:$0xf]
    %v7330 = vld [vmem:[%s7283 + $0xb8] sm:$0xf]
    %v7331 = vld [vmem:[%s7283 + $0xbc] sm:$0xf]
    %v7332 = vld [vmem:[%s7283 + $0xc0] sm:$0xf]
    %v7333 = vld [vmem:[%s7283 + $0xc4] sm:$0xf]
    %v7334 = vld [vmem:[%s7283 + $0xc8] sm:$0xf]
    %v7335 = vld [vmem:[%s7283 + $0xcc] sm:$0xf]
    %v7336 = vld [vmem:[%s7283 + $0xd0] sm:$0xf]
    %v7337 = vld [vmem:[%s7283 + $0xd4] sm:$0xf]
    %v7338 = vld [vmem:[%s7283 + $0xd8] sm:$0xf]
    %v7339 = vld [vmem:[%s7283 + $0xdc] sm:$0xf]
    %v7340 = vld [vmem:[%s7283 + $0xe0] sm:$0xf]
    %v7341 = vld [vmem:[%s7283 + $0xe4] sm:$0xf]
    %v7342 = vld [vmem:[%s7283 + $0xe8] sm:$0xf]
    %v7343 = vld [vmem:[%s7283 + $0xec] sm:$0xf]
    %v7344 = vld [vmem:[%s7283 + $0xf0] sm:$0xf]
    %v7345 = vld [vmem:[%s7283 + $0xf4] sm:$0xf]
    %v7346 = vld [vmem:[%s7283 + $0xf8] sm:$0xf]
    %v7347 = vld [vmem:[%s7283 + $0xfc] sm:$0xf]
    %v7412 = vunpack.c.l.b16 %v7284
    %v7413 = vunpack.c.l.b16 %v7285
    %v7414 = vunpack.c.l.b16 %v7286
    %v7415 = vunpack.c.l.b16 %v7287
    %v7416 = vunpack.c.l.b16 %v7288
    %v7417 = vunpack.c.l.b16 %v7289
    %v7418 = vunpack.c.l.b16 %v7290
    %v7419 = vunpack.c.l.b16 %v7291
    %v7420 = vunpack.c.l.b16 %v7292
    %v7421 = vunpack.c.l.b16 %v7293
    %v7422 = vunpack.c.l.b16 %v7294
    %v7423 = vunpack.c.l.b16 %v7295
    %v7424 = vunpack.c.l.b16 %v7296
    %v7425 = vunpack.c.l.b16 %v7297
    %v7426 = vunpack.c.l.b16 %v7298
    %v7427 = vunpack.c.l.b16 %v7299
    %v7428 = vunpack.c.l.b16 %v7300
    %v7429 = vunpack.c.l.b16 %v7301
    %v7430 = vunpack.c.l.b16 %v7302
    %v7431 = vunpack.c.l.b16 %v7303
    %v7432 = vunpack.c.l.b16 %v7304
    %v7433 = vunpack.c.l.b16 %v7305
    %v7434 = vunpack.c.l.b16 %v7306
    %v7435 = vunpack.c.l.b16 %v7307
    %v7436 = vunpack.c.l.b16 %v7308
    %v7437 = vunpack.c.l.b16 %v7309
    %v7438 = vunpack.c.l.b16 %v7310
    %v7439 = vunpack.c.l.b16 %v7311
    %v7440 = vunpack.c.l.b16 %v7312
    %v7441 = vunpack.c.l.b16 %v7313
    %v7442 = vunpack.c.l.b16 %v7314
    %v7443 = vunpack.c.l.b16 %v7315
    %v7444 = vunpack.c.l.b16 %v7316
    %v7445 = vunpack.c.l.b16 %v7317
    %v7446 = vunpack.c.l.b16 %v7318
    %v7447 = vunpack.c.l.b16 %v7319
    %v7448 = vunpack.c.l.b16 %v7320
    %v7449 = vunpack.c.l.b16 %v7321
    %v7450 = vunpack.c.l.b16 %v7322
    %v7451 = vunpack.c.l.b16 %v7323
    %v7452 = vunpack.c.l.b16 %v7324
    %v7453 = vunpack.c.l.b16 %v7325
    %v7454 = vunpack.c.l.b16 %v7326
    %v7455 = vunpack.c.l.b16 %v7327
    %v7456 = vunpack.c.l.b16 %v7328
    %v7457 = vunpack.c.l.b16 %v7329
    %v7458 = vunpack.c.l.b16 %v7330
    %v7459 = vunpack.c.l.b16 %v7331
    %v7460 = vunpack.c.l.b16 %v7332
    %v7461 = vunpack.c.l.b16 %v7333
    %v7462 = vunpack.c.l.b16 %v7334
    %v7463 = vunpack.c.l.b16 %v7335
    %v7464 = vunpack.c.l.b16 %v7336
    %v7465 = vunpack.c.l.b16 %v7337
    %v7466 = vunpack.c.l.b16 %v7338
    %v7467 = vunpack.c.l.b16 %v7339
    %v7468 = vunpack.c.l.b16 %v7340
    %v7469 = vunpack.c.l.b16 %v7341
    %v7470 = vunpack.c.l.b16 %v7342
    %v7471 = vunpack.c.l.b16 %v7343
    %v7472 = vunpack.c.l.b16 %v7344
    %v7473 = vunpack.c.l.b16 %v7345
    %v7474 = vunpack.c.l.b16 %v7346
    %v7475 = vunpack.c.l.b16 %v7347
    %v7476 = vpack.c.b16 %v7413, %v7412
    %v7477 = vpack.c.b16 %v7415, %v7414
    %v7478 = vpack.c.b16 %v7417, %v7416
    %v7479 = vpack.c.b16 %v7419, %v7418
    %v7480 = vpack.c.b16 %v7421, %v7420
    %v7481 = vpack.c.b16 %v7423, %v7422
    %v7482 = vpack.c.b16 %v7425, %v7424
    %v7483 = vpack.c.b16 %v7427, %v7426
    %v7484 = vpack.c.b16 %v7429, %v7428
    %v7485 = vpack.c.b16 %v7431, %v7430
    %v7486 = vpack.c.b16 %v7433, %v7432
    %v7487 = vpack.c.b16 %v7435, %v7434
    %v7488 = vpack.c.b16 %v7437, %v7436
    %v7489 = vpack.c.b16 %v7439, %v7438
    %v7490 = vpack.c.b16 %v7441, %v7440
    %v7491 = vpack.c.b16 %v7443, %v7442
    %v7492 = vpack.c.b16 %v7445, %v7444
    %v7493 = vpack.c.b16 %v7447, %v7446
    %v7494 = vpack.c.b16 %v7449, %v7448
    %v7495 = vpack.c.b16 %v7451, %v7450
    %v7496 = vpack.c.b16 %v7453, %v7452
    %v7497 = vpack.c.b16 %v7455, %v7454
    %v7498 = vpack.c.b16 %v7457, %v7456
    %v7499 = vpack.c.b16 %v7459, %v7458
    %v7500 = vpack.c.b16 %v7461, %v7460
    %v7501 = vpack.c.b16 %v7463, %v7462
    %v7502 = vpack.c.b16 %v7465, %v7464
    %v7503 = vpack.c.b16 %v7467, %v7466
    %v7504 = vpack.c.b16 %v7469, %v7468
    %v7505 = vpack.c.b16 %v7471, %v7470
    %v7506 = vpack.c.b16 %v7473, %v7472
    %v7507 = vpack.c.b16 %v7475, %v7474
    %7540 = vmatprep.subr.bf16.mxu0 0
    %7541 = vmatpush1.bf16.msra.mxu0 %v7483
    %7542 = vmatprep.subr.bf16.mxu0 0
    %7543 = vmatpush1.bf16.msra.mxu0 %v7482
    %7544 = vmatprep.subr.bf16.mxu0 0
    %7545 = vmatpush1.bf16.msra.mxu0 %v7481
    %7546 = vmatprep.subr.bf16.mxu0 0
    %7547 = vmatpush1.bf16.msra.mxu0 %v7480
    %7548 = vmatprep.subr.bf16.mxu0 0
    %7549 = vmatpush1.bf16.msra.mxu0 %v7479
    %7550 = vmatprep.subr.bf16.mxu0 0
    %7551 = vmatpush1.bf16.msra.mxu0 %v7478
    %7552 = vmatprep.subr.bf16.mxu0 0
    %7553 = vmatpush1.bf16.msra.mxu0 %v7477
    %7554 = vmatprep.subr.bf16.mxu0 0
    %7555 = vmatpush1.bf16.msra.mxu0 %v7476
    %7556 = vmatprep.subr.bf16.mxu0 0
    %7557 = vmatpush2.bf16.msra.mxu0 %v7491
    %7558 = vmatprep.subr.bf16.mxu0 0
    %7559 = vmatpush2.bf16.msra.mxu0 %v7490
    %7560 = vmatprep.subr.bf16.mxu0 0
    %7561 = vmatpush2.bf16.msra.mxu0 %v7489
    %7562 = vmatprep.subr.bf16.mxu0 0
    %7563 = vmatpush2.bf16.msra.mxu0 %v7488
    %7564 = vmatprep.subr.bf16.mxu0 0
    %7565 = vmatpush2.bf16.msra.mxu0 %v7487
    %7566 = vmatprep.subr.bf16.mxu0 0
    %7567 = vmatpush2.bf16.msra.mxu0 %v7486
    %7568 = vmatprep.subr.bf16.mxu0 0
    %7569 = vmatpush2.bf16.msra.mxu0 %v7485
    %7570 = vmatprep.subr.bf16.mxu0 0
    %7571 = vmatpush2.bf16.msra.mxu0 %v7484
    %7572 = vmatprep.mubr.bf16.mxu0 %v7280
    %7573 = vmatmul.mubr.bf16.gmra.mxu0 %v7279
    %v7574 = vpop.f32.mrf.mxu0
    %v7575 = vadd.f32 0.0, %v7574
    %v7576 = vpop.f32.mrf.mxu0
    %v7577 = vpop.f32.mrf.mxu0
    %v7578 = vpop.f32.mrf.mxu0
    %7579 = vdwg.mxu0
    %7580 = vmatprep.subr.bf16.mxu0 0
    %7581 = vmatpush1.bf16.msra.mxu0 %v7499
    %7582 = vmatprep.subr.bf16.mxu0 0
    %7583 = vmatpush1.bf16.msra.mxu0 %v7498
    %7584 = vmatprep.subr.bf16.mxu0 0
    %7585 = vmatpush1.bf16.msra.mxu0 %v7497
    %7586 = vmatprep.subr.bf16.mxu0 0
    %7587 = vmatpush1.bf16.msra.mxu0 %v7496
    %7588 = vmatprep.subr.bf16.mxu0 0
    %7589 = vmatpush1.bf16.msra.mxu0 %v7495
    %7590 = vmatprep.subr.bf16.mxu0 0
    %7591 = vmatpush1.bf16.msra.mxu0 %v7494
    %7592 = vmatprep.subr.bf16.mxu0 0
    %7593 = vmatpush1.bf16.msra.mxu0 %v7493
    %7594 = vmatprep.subr.bf16.mxu0 0
    %7595 = vmatpush1.bf16.msra.mxu0 %v7492
    %7596 = vmatprep.subr.bf16.mxu0 0
    %7597 = vmatpush2.bf16.msra.mxu0 %v7507
    %7598 = vmatprep.subr.bf16.mxu0 0
    %7599 = vmatpush2.bf16.msra.mxu0 %v7506
    %7600 = vmatprep.subr.bf16.mxu0 0
    %7601 = vmatpush2.bf16.msra.mxu0 %v7505
    %7602 = vmatprep.subr.bf16.mxu0 0
    %7603 = vmatpush2.bf16.msra.mxu0 %v7504
    %7604 = vmatprep.subr.bf16.mxu0 0
    %7605 = vmatpush2.bf16.msra.mxu0 %v7503
    %7606 = vmatprep.subr.bf16.mxu0 0
    %7607 = vmatpush2.bf16.msra.mxu0 %v7502
    %7608 = vmatprep.subr.bf16.mxu0 0
    %7609 = vmatpush2.bf16.msra.mxu0 %v7501
    %7610 = vmatprep.subr.bf16.mxu0 0
    %7611 = vmatpush2.bf16.msra.mxu0 %v7500
    %7612 = vmatprep.mubr.bf16.mxu0 %v7282
    %7613 = vmatmul.mubr.bf16.gmra.mxu0 %v7281
    %v7614 = vpop.f32.mrf.mxu0
    %v7615 = vadd.f32 %v7575, %v7614
    %v7616 = vpop.f32.mrf.mxu0
    %v7617 = vpop.f32.mrf.mxu0
    %v7618 = vpop.f32.mrf.mxu0
    %7619 = vdwg.mxu0
    %v7620 = vadd.f32 %v7068, %v7615
    %s7621 = scalar_lea.vmem %s15, 896
    %v7622 = vld [vmem:[%s7621] sm:$0xff]
    %v7623 = vld [vmem:[%s7621 + $0x8] sm:$0xff]
    %v7624 = vld [vmem:[%s7621 + $0x10] sm:$0xff]
    %v7625 = vld [vmem:[%s7621 + $0x18] sm:$0xff]
    %v7626 = vld [vmem:[%s7621 + $0x20] sm:$0xff]
    %v7627 = vld [vmem:[%s7621 + $0x28] sm:$0xff]
    %v7628 = vld [vmem:[%s7621 + $0x30] sm:$0xff]
    %v7629 = vld [vmem:[%s7621 + $0x38] sm:$0xff]
    %v7630 = vld [vmem:[%s7621 + $0x40] sm:$0xff]
    %v7631 = vld [vmem:[%s7621 + $0x48] sm:$0xff]
    %v7632 = vld [vmem:[%s7621 + $0x50] sm:$0xff]
    %v7633 = vld [vmem:[%s7621 + $0x58] sm:$0xff]
    %v7634 = vld [vmem:[%s7621 + $0x60] sm:$0xff]
    %v7635 = vld [vmem:[%s7621 + $0x68] sm:$0xff]
    %v7636 = vld [vmem:[%s7621 + $0x70] sm:$0xff]
    %v7637 = vld [vmem:[%s7621 + $0x78] sm:$0xff]
    %s7638 = scalar_lea.vmem %s16, 28
    %v7639 = vld [vmem:[%s7638] sm:$0xf]
    %v7641 = vlaneseq
    %v7642 = vshrl.u32 %v7641, 7
    %v7643 = vsub.s32 0, %v7642
    %v7644 = vrot.slane %v7639, %v7643
    %v7645 = vlaneseq
    %v7646 = vshrl.u32 %v7645, 7
    %v7647 = vsub.s32 1, %v7646
    %v7648 = vrot.slane %v7639, %v7647
    %v7649 = vlaneseq
    %v7650 = vshrl.u32 %v7649, 7
    %v7651 = vsub.s32 2, %v7650
    %v7652 = vrot.slane %v7639, %v7651
    %v7653 = vlaneseq
    %v7654 = vshrl.u32 %v7653, 7
    %v7655 = vsub.s32 3, %v7654
    %v7656 = vrot.slane %v7639, %v7655
    %v7677 = vunpack.c.l.b16 %v7622
    %v7678 = vunpack.c.h.b16 %v7622
    %v7679 = vunpack.c.l.b16 %v7623
    %v7680 = vunpack.c.h.b16 %v7623
    %v7681 = vunpack.c.l.b16 %v7624
    %v7682 = vunpack.c.h.b16 %v7624
    %v7683 = vunpack.c.l.b16 %v7625
    %v7684 = vunpack.c.h.b16 %v7625
    %v7685 = vunpack.c.l.b16 %v7626
    %v7686 = vunpack.c.h.b16 %v7626
    %v7687 = vunpack.c.l.b16 %v7627
    %v7688 = vunpack.c.h.b16 %v7627
    %v7689 = vunpack.c.l.b16 %v7628
    %v7690 = vunpack.c.h.b16 %v7628
    %v7691 = vunpack.c.l.b16 %v7629
    %v7692 = vunpack.c.h.b16 %v7629
    %v7693 = vunpack.c.l.b16 %v7630
    %v7694 = vunpack.c.h.b16 %v7630
    %v7695 = vunpack.c.l.b16 %v7631
    %v7696 = vunpack.c.h.b16 %v7631
    %v7697 = vunpack.c.l.b16 %v7632
    %v7698 = vunpack.c.h.b16 %v7632
    %v7699 = vunpack.c.l.b16 %v7633
    %v7700 = vunpack.c.h.b16 %v7633
    %v7701 = vunpack.c.l.b16 %v7634
    %v7702 = vunpack.c.h.b16 %v7634
    %v7703 = vunpack.c.l.b16 %v7635
    %v7704 = vunpack.c.h.b16 %v7635
    %v7705 = vunpack.c.l.b16 %v7636
    %v7706 = vunpack.c.h.b16 %v7636
    %v7707 = vunpack.c.l.b16 %v7637
    %v7708 = vunpack.c.h.b16 %v7637
    %v7709 = vpack.c.b16 %v7681, %v7677
    %v7710 = vpack.c.b16 %v7682, %v7678
    %v7711 = vpack.c.b16 %v7683, %v7679
    %v7712 = vpack.c.b16 %v7684, %v7680
    %v7713 = vpack.c.b16 %v7689, %v7685
    %v7714 = vpack.c.b16 %v7690, %v7686
    %v7715 = vpack.c.b16 %v7691, %v7687
    %v7716 = vpack.c.b16 %v7692, %v7688
    %v7717 = vpack.c.b16 %v7697, %v7693
    %v7718 = vpack.c.b16 %v7698, %v7694
    %v7719 = vpack.c.b16 %v7699, %v7695
    %v7720 = vpack.c.b16 %v7700, %v7696
    %v7721 = vpack.c.b16 %v7705, %v7701
    %v7722 = vpack.c.b16 %v7706, %v7702
    %v7723 = vpack.c.b16 %v7707, %v7703
    %v7724 = vpack.c.b16 %v7708, %v7704
    %7741 = vmatprep.subr.bf16.mxu0 0
    %7742 = vmatpush1.bf16.msra.mxu0 0
    %7743 = vmatprep.subr.bf16.mxu0 0
    %7744 = vmatpush1.bf16.msra.mxu0 0
    %7745 = vmatprep.subr.bf16.mxu0 0
    %7746 = vmatpush1.bf16.msra.mxu0 0
    %7747 = vmatprep.subr.bf16.mxu0 0
    %7748 = vmatpush1.bf16.msra.mxu0 0
    %7749 = vmatprep.subr.bf16.mxu0 %v7722
    %7750 = vmatpush1.bf16.msra.mxu0 %v7721
    %7751 = vmatprep.subr.bf16.mxu0 %v7718
    %7752 = vmatpush1.bf16.msra.mxu0 %v7717
    %7753 = vmatprep.subr.bf16.mxu0 %v7714
    %7754 = vmatpush1.bf16.msra.mxu0 %v7713
    %7755 = vmatprep.subr.bf16.mxu0 %v7710
    %7756 = vmatpush1.bf16.msra.mxu0 %v7709
    %7757 = vmatprep.subr.bf16.mxu0 0
    %7758 = vmatpush2.bf16.msra.mxu0 0
    %7759 = vmatprep.subr.bf16.mxu0 0
    %7760 = vmatpush2.bf16.msra.mxu0 0
    %7761 = vmatprep.subr.bf16.mxu0 0
    %7762 = vmatpush2.bf16.msra.mxu0 0
    %7763 = vmatprep.subr.bf16.mxu0 0
    %7764 = vmatpush2.bf16.msra.mxu0 0
    %7765 = vmatprep.subr.bf16.mxu0 0
    %7766 = vmatpush2.bf16.msra.mxu0 0
    %7767 = vmatprep.subr.bf16.mxu0 0
    %7768 = vmatpush2.bf16.msra.mxu0 0
    %7769 = vmatprep.subr.bf16.mxu0 0
    %7770 = vmatpush2.bf16.msra.mxu0 0
    %7771 = vmatprep.subr.bf16.mxu0 0
    %7772 = vmatpush2.bf16.msra.mxu0 0
    %7773 = vmatprep.mubr.bf16.mxu0 0
    %7774 = vmatmul.mubr.bf16.gmra.mxu0 %v6097
    %v7775 = vpop.f32.mrf.mxu0
    %v7776 = vadd.f32 %v7644, %v7775
    %v7777 = vpop.f32.mrf.mxu0
    %v7778 = vadd.f32 %v7648, %v7777
    %v7779 = vpop.f32.mrf.mxu0
    %v7780 = vpop.f32.mrf.mxu0
    %7781 = vdwg.mxu0
    %7782 = vmatprep.subr.bf16.mxu0 0
    %7783 = vmatpush1.bf16.msra.mxu0 0
    %7784 = vmatprep.subr.bf16.mxu0 0
    %7785 = vmatpush1.bf16.msra.mxu0 0
    %7786 = vmatprep.subr.bf16.mxu0 0
    %7787 = vmatpush1.bf16.msra.mxu0 0
    %7788 = vmatprep.subr.bf16.mxu0 0
    %7789 = vmatpush1.bf16.msra.mxu0 0
    %7790 = vmatprep.subr.bf16.mxu0 %v7724
    %7791 = vmatpush1.bf16.msra.mxu0 %v7723
    %7792 = vmatprep.subr.bf16.mxu0 %v7720
    %7793 = vmatpush1.bf16.msra.mxu0 %v7719
    %7794 = vmatprep.subr.bf16.mxu0 %v7716
    %7795 = vmatpush1.bf16.msra.mxu0 %v7715
    %7796 = vmatprep.subr.bf16.mxu0 %v7712
    %7797 = vmatpush1.bf16.msra.mxu0 %v7711
    %7798 = vmatprep.subr.bf16.mxu0 0
    %7799 = vmatpush2.bf16.msra.mxu0 0
    %7800 = vmatprep.subr.bf16.mxu0 0
    %7801 = vmatpush2.bf16.msra.mxu0 0
    %7802 = vmatprep.subr.bf16.mxu0 0
    %7803 = vmatpush2.bf16.msra.mxu0 0
    %7804 = vmatprep.subr.bf16.mxu0 0
    %7805 = vmatpush2.bf16.msra.mxu0 0
    %7806 = vmatprep.subr.bf16.mxu0 0
    %7807 = vmatpush2.bf16.msra.mxu0 0
    %7808 = vmatprep.subr.bf16.mxu0 0
    %7809 = vmatpush2.bf16.msra.mxu0 0
    %7810 = vmatprep.subr.bf16.mxu0 0
    %7811 = vmatpush2.bf16.msra.mxu0 0
    %7812 = vmatprep.subr.bf16.mxu0 0
    %7813 = vmatpush2.bf16.msra.mxu0 0
    %7814 = vmatprep.mubr.bf16.mxu0 0
    %7815 = vmatmul.mubr.bf16.gmra.mxu0 %v6097
    %v7816 = vpop.f32.mrf.mxu0
    %v7817 = vadd.f32 %v7652, %v7816
    %v7818 = vpop.f32.mrf.mxu0
    %v7819 = vadd.f32 %v7656, %v7818
    %v7820 = vpop.f32.mrf.mxu0
    %v7821 = vpop.f32.mrf.mxu0
    %7822 = vdwg.mxu0
    %v7823 = vmax.f32 %v7776, 0.0
    %v7824 = vmax.f32 %v7778, 0.0
    %v7825 = vmax.f32 %v7817, 0.0
    %v7826 = vmax.f32 %v7819, 0.0
    %v7827 = vpack.c.bf16 %v7823, %v7823
    %v7828 = vpack.c.bf16 %v7824, %v7824
    %v7829 = vpack.c.bf16 %v7825, %v7825
    %v7830 = vpack.c.bf16 %v7826, %v7826
    %s7831 = scalar_lea.vmem %s17, 1792
    %v7832 = vld [vmem:[%s7831] sm:$0xf]
    %v7833 = vld [vmem:[%s7831 + $0x4] sm:$0xf]
    %v7834 = vld [vmem:[%s7831 + $0x8] sm:$0xf]
    %v7835 = vld [vmem:[%s7831 + $0xc] sm:$0xf]
    %v7836 = vld [vmem:[%s7831 + $0x10] sm:$0xf]
    %v7837 = vld [vmem:[%s7831 + $0x14] sm:$0xf]
    %v7838 = vld [vmem:[%s7831 + $0x18] sm:$0xf]
    %v7839 = vld [vmem:[%s7831 + $0x1c] sm:$0xf]
    %v7840 = vld [vmem:[%s7831 + $0x20] sm:$0xf]
    %v7841 = vld [vmem:[%s7831 + $0x24] sm:$0xf]
    %v7842 = vld [vmem:[%s7831 + $0x28] sm:$0xf]
    %v7843 = vld [vmem:[%s7831 + $0x2c] sm:$0xf]
    %v7844 = vld [vmem:[%s7831 + $0x30] sm:$0xf]
    %v7845 = vld [vmem:[%s7831 + $0x34] sm:$0xf]
    %v7846 = vld [vmem:[%s7831 + $0x38] sm:$0xf]
    %v7847 = vld [vmem:[%s7831 + $0x3c] sm:$0xf]
    %v7848 = vld [vmem:[%s7831 + $0x40] sm:$0xf]
    %v7849 = vld [vmem:[%s7831 + $0x44] sm:$0xf]
    %v7850 = vld [vmem:[%s7831 + $0x48] sm:$0xf]
    %v7851 = vld [vmem:[%s7831 + $0x4c] sm:$0xf]
    %v7852 = vld [vmem:[%s7831 + $0x50] sm:$0xf]
    %v7853 = vld [vmem:[%s7831 + $0x54] sm:$0xf]
    %v7854 = vld [vmem:[%s7831 + $0x58] sm:$0xf]
    %v7855 = vld [vmem:[%s7831 + $0x5c] sm:$0xf]
    %v7856 = vld [vmem:[%s7831 + $0x60] sm:$0xf]
    %v7857 = vld [vmem:[%s7831 + $0x64] sm:$0xf]
    %v7858 = vld [vmem:[%s7831 + $0x68] sm:$0xf]
    %v7859 = vld [vmem:[%s7831 + $0x6c] sm:$0xf]
    %v7860 = vld [vmem:[%s7831 + $0x70] sm:$0xf]
    %v7861 = vld [vmem:[%s7831 + $0x74] sm:$0xf]
    %v7862 = vld [vmem:[%s7831 + $0x78] sm:$0xf]
    %v7863 = vld [vmem:[%s7831 + $0x7c] sm:$0xf]
    %v7864 = vld [vmem:[%s7831 + $0x80] sm:$0xf]
    %v7865 = vld [vmem:[%s7831 + $0x84] sm:$0xf]
    %v7866 = vld [vmem:[%s7831 + $0x88] sm:$0xf]
    %v7867 = vld [vmem:[%s7831 + $0x8c] sm:$0xf]
    %v7868 = vld [vmem:[%s7831 + $0x90] sm:$0xf]
    %v7869 = vld [vmem:[%s7831 + $0x94] sm:$0xf]
    %v7870 = vld [vmem:[%s7831 + $0x98] sm:$0xf]
    %v7871 = vld [vmem:[%s7831 + $0x9c] sm:$0xf]
    %v7872 = vld [vmem:[%s7831 + $0xa0] sm:$0xf]
    %v7873 = vld [vmem:[%s7831 + $0xa4] sm:$0xf]
    %v7874 = vld [vmem:[%s7831 + $0xa8] sm:$0xf]
    %v7875 = vld [vmem:[%s7831 + $0xac] sm:$0xf]
    %v7876 = vld [vmem:[%s7831 + $0xb0] sm:$0xf]
    %v7877 = vld [vmem:[%s7831 + $0xb4] sm:$0xf]
    %v7878 = vld [vmem:[%s7831 + $0xb8] sm:$0xf]
    %v7879 = vld [vmem:[%s7831 + $0xbc] sm:$0xf]
    %v7880 = vld [vmem:[%s7831 + $0xc0] sm:$0xf]
    %v7881 = vld [vmem:[%s7831 + $0xc4] sm:$0xf]
    %v7882 = vld [vmem:[%s7831 + $0xc8] sm:$0xf]
    %v7883 = vld [vmem:[%s7831 + $0xcc] sm:$0xf]
    %v7884 = vld [vmem:[%s7831 + $0xd0] sm:$0xf]
    %v7885 = vld [vmem:[%s7831 + $0xd4] sm:$0xf]
    %v7886 = vld [vmem:[%s7831 + $0xd8] sm:$0xf]
    %v7887 = vld [vmem:[%s7831 + $0xdc] sm:$0xf]
    %v7888 = vld [vmem:[%s7831 + $0xe0] sm:$0xf]
    %v7889 = vld [vmem:[%s7831 + $0xe4] sm:$0xf]
    %v7890 = vld [vmem:[%s7831 + $0xe8] sm:$0xf]
    %v7891 = vld [vmem:[%s7831 + $0xec] sm:$0xf]
    %v7892 = vld [vmem:[%s7831 + $0xf0] sm:$0xf]
    %v7893 = vld [vmem:[%s7831 + $0xf4] sm:$0xf]
    %v7894 = vld [vmem:[%s7831 + $0xf8] sm:$0xf]
    %v7895 = vld [vmem:[%s7831 + $0xfc] sm:$0xf]
    %v7960 = vunpack.c.l.b16 %v7832
    %v7961 = vunpack.c.l.b16 %v7833
    %v7962 = vunpack.c.l.b16 %v7834
    %v7963 = vunpack.c.l.b16 %v7835
    %v7964 = vunpack.c.l.b16 %v7836
    %v7965 = vunpack.c.l.b16 %v7837
    %v7966 = vunpack.c.l.b16 %v7838
    %v7967 = vunpack.c.l.b16 %v7839
    %v7968 = vunpack.c.l.b16 %v7840
    %v7969 = vunpack.c.l.b16 %v7841
    %v7970 = vunpack.c.l.b16 %v7842
    %v7971 = vunpack.c.l.b16 %v7843
    %v7972 = vunpack.c.l.b16 %v7844
    %v7973 = vunpack.c.l.b16 %v7845
    %v7974 = vunpack.c.l.b16 %v7846
    %v7975 = vunpack.c.l.b16 %v7847
    %v7976 = vunpack.c.l.b16 %v7848
    %v7977 = vunpack.c.l.b16 %v7849
    %v7978 = vunpack.c.l.b16 %v7850
    %v7979 = vunpack.c.l.b16 %v7851
    %v7980 = vunpack.c.l.b16 %v7852
    %v7981 = vunpack.c.l.b16 %v7853
    %v7982 = vunpack.c.l.b16 %v7854
    %v7983 = vunpack.c.l.b16 %v7855
    %v7984 = vunpack.c.l.b16 %v7856
    %v7985 = vunpack.c.l.b16 %v7857
    %v7986 = vunpack.c.l.b16 %v7858
    %v7987 = vunpack.c.l.b16 %v7859
    %v7988 = vunpack.c.l.b16 %v7860
    %v7989 = vunpack.c.l.b16 %v7861
    %v7990 = vunpack.c.l.b16 %v7862
    %v7991 = vunpack.c.l.b16 %v7863
    %v7992 = vunpack.c.l.b16 %v7864
    %v7993 = vunpack.c.l.b16 %v7865
    %v7994 = vunpack.c.l.b16 %v7866
    %v7995 = vunpack.c.l.b16 %v7867
    %v7996 = vunpack.c.l.b16 %v7868
    %v7997 = vunpack.c.l.b16 %v7869
    %v7998 = vunpack.c.l.b16 %v7870
    %v7999 = vunpack.c.l.b16 %v7871
    %v8000 = vunpack.c.l.b16 %v7872
    %v8001 = vunpack.c.l.b16 %v7873
    %v8002 = vunpack.c.l.b16 %v7874
    %v8003 = vunpack.c.l.b16 %v7875
    %v8004 = vunpack.c.l.b16 %v7876
    %v8005 = vunpack.c.l.b16 %v7877
    %v8006 = vunpack.c.l.b16 %v7878
    %v8007 = vunpack.c.l.b16 %v7879
    %v8008 = vunpack.c.l.b16 %v7880
    %v8009 = vunpack.c.l.b16 %v7881
    %v8010 = vunpack.c.l.b16 %v7882
    %v8011 = vunpack.c.l.b16 %v7883
    %v8012 = vunpack.c.l.b16 %v7884
    %v8013 = vunpack.c.l.b16 %v7885
    %v8014 = vunpack.c.l.b16 %v7886
    %v8015 = vunpack.c.l.b16 %v7887
    %v8016 = vunpack.c.l.b16 %v7888
    %v8017 = vunpack.c.l.b16 %v7889
    %v8018 = vunpack.c.l.b16 %v7890
    %v8019 = vunpack.c.l.b16 %v7891
    %v8020 = vunpack.c.l.b16 %v7892
    %v8021 = vunpack.c.l.b16 %v7893
    %v8022 = vunpack.c.l.b16 %v7894
    %v8023 = vunpack.c.l.b16 %v7895
    %v8024 = vpack.c.b16 %v7961, %v7960
    %v8025 = vpack.c.b16 %v7963, %v7962
    %v8026 = vpack.c.b16 %v7965, %v7964
    %v8027 = vpack.c.b16 %v7967, %v7966
    %v8028 = vpack.c.b16 %v7969, %v7968
    %v8029 = vpack.c.b16 %v7971, %v7970
    %v8030 = vpack.c.b16 %v7973, %v7972
    %v8031 = vpack.c.b16 %v7975, %v7974
    %v8032 = vpack.c.b16 %v7977, %v7976
    %v8033 = vpack.c.b16 %v7979, %v7978
    %v8034 = vpack.c.b16 %v7981, %v7980
    %v8035 = vpack.c.b16 %v7983, %v7982
    %v8036 = vpack.c.b16 %v7985, %v7984
    %v8037 = vpack.c.b16 %v7987, %v7986
    %v8038 = vpack.c.b16 %v7989, %v7988
    %v8039 = vpack.c.b16 %v7991, %v7990
    %v8040 = vpack.c.b16 %v7993, %v7992
    %v8041 = vpack.c.b16 %v7995, %v7994
    %v8042 = vpack.c.b16 %v7997, %v7996
    %v8043 = vpack.c.b16 %v7999, %v7998
    %v8044 = vpack.c.b16 %v8001, %v8000
    %v8045 = vpack.c.b16 %v8003, %v8002
    %v8046 = vpack.c.b16 %v8005, %v8004
    %v8047 = vpack.c.b16 %v8007, %v8006
    %v8048 = vpack.c.b16 %v8009, %v8008
    %v8049 = vpack.c.b16 %v8011, %v8010
    %v8050 = vpack.c.b16 %v8013, %v8012
    %v8051 = vpack.c.b16 %v8015, %v8014
    %v8052 = vpack.c.b16 %v8017, %v8016
    %v8053 = vpack.c.b16 %v8019, %v8018
    %v8054 = vpack.c.b16 %v8021, %v8020
    %v8055 = vpack.c.b16 %v8023, %v8022
    %8088 = vmatprep.subr.bf16.mxu0 0
    %8089 = vmatpush1.bf16.msra.mxu0 %v8031
    %8090 = vmatprep.subr.bf16.mxu0 0
    %8091 = vmatpush1.bf16.msra.mxu0 %v8030
    %8092 = vmatprep.subr.bf16.mxu0 0
    %8093 = vmatpush1.bf16.msra.mxu0 %v8029
    %8094 = vmatprep.subr.bf16.mxu0 0
    %8095 = vmatpush1.bf16.msra.mxu0 %v8028
    %8096 = vmatprep.subr.bf16.mxu0 0
    %8097 = vmatpush1.bf16.msra.mxu0 %v8027
    %8098 = vmatprep.subr.bf16.mxu0 0
    %8099 = vmatpush1.bf16.msra.mxu0 %v8026
    %8100 = vmatprep.subr.bf16.mxu0 0
    %8101 = vmatpush1.bf16.msra.mxu0 %v8025
    %8102 = vmatprep.subr.bf16.mxu0 0
    %8103 = vmatpush1.bf16.msra.mxu0 %v8024
    %8104 = vmatprep.subr.bf16.mxu0 0
    %8105 = vmatpush2.bf16.msra.mxu0 %v8039
    %8106 = vmatprep.subr.bf16.mxu0 0
    %8107 = vmatpush2.bf16.msra.mxu0 %v8038
    %8108 = vmatprep.subr.bf16.mxu0 0
    %8109 = vmatpush2.bf16.msra.mxu0 %v8037
    %8110 = vmatprep.subr.bf16.mxu0 0
    %8111 = vmatpush2.bf16.msra.mxu0 %v8036
    %8112 = vmatprep.subr.bf16.mxu0 0
    %8113 = vmatpush2.bf16.msra.mxu0 %v8035
    %8114 = vmatprep.subr.bf16.mxu0 0
    %8115 = vmatpush2.bf16.msra.mxu0 %v8034
    %8116 = vmatprep.subr.bf16.mxu0 0
    %8117 = vmatpush2.bf16.msra.mxu0 %v8033
    %8118 = vmatprep.subr.bf16.mxu0 0
    %8119 = vmatpush2.bf16.msra.mxu0 %v8032
    %8120 = vmatprep.mubr.bf16.mxu0 %v7828
    %8121 = vmatmul.mubr.bf16.gmra.mxu0 %v7827
    %v8122 = vpop.f32.mrf.mxu0
    %v8123 = vadd.f32 0.0, %v8122
    %v8124 = vpop.f32.mrf.mxu0
    %v8125 = vpop.f32.mrf.mxu0
    %v8126 = vpop.f32.mrf.mxu0
    %8127 = vdwg.mxu0
    %8128 = vmatprep.subr.bf16.mxu0 0
    %8129 = vmatpush1.bf16.msra.mxu0 %v8047
    %8130 = vmatprep.subr.bf16.mxu0 0
    %8131 = vmatpush1.bf16.msra.mxu0 %v8046
    %8132 = vmatprep.subr.bf16.mxu0 0
    %8133 = vmatpush1.bf16.msra.mxu0 %v8045
    %8134 = vmatprep.subr.bf16.mxu0 0
    %8135 = vmatpush1.bf16.msra.mxu0 %v8044
    %8136 = vmatprep.subr.bf16.mxu0 0
    %8137 = vmatpush1.bf16.msra.mxu0 %v8043
    %8138 = vmatprep.subr.bf16.mxu0 0
    %8139 = vmatpush1.bf16.msra.mxu0 %v8042
    %8140 = vmatprep.subr.bf16.mxu0 0
    %8141 = vmatpush1.bf16.msra.mxu0 %v8041
    %8142 = vmatprep.subr.bf16.mxu0 0
    %8143 = vmatpush1.bf16.msra.mxu0 %v8040
    %8144 = vmatprep.subr.bf16.mxu0 0
    %8145 = vmatpush2.bf16.msra.mxu0 %v8055
    %8146 = vmatprep.subr.bf16.mxu0 0
    %8147 = vmatpush2.bf16.msra.mxu0 %v8054
    %8148 = vmatprep.subr.bf16.mxu0 0
    %8149 = vmatpush2.bf16.msra.mxu0 %v8053
    %8150 = vmatprep.subr.bf16.mxu0 0
    %8151 = vmatpush2.bf16.msra.mxu0 %v8052
    %8152 = vmatprep.subr.bf16.mxu0 0
    %8153 = vmatpush2.bf16.msra.mxu0 %v8051
    %8154 = vmatprep.subr.bf16.mxu0 0
    %8155 = vmatpush2.bf16.msra.mxu0 %v8050
    %8156 = vmatprep.subr.bf16.mxu0 0
    %8157 = vmatpush2.bf16.msra.mxu0 %v8049
    %8158 = vmatprep.subr.bf16.mxu0 0
    %8159 = vmatpush2.bf16.msra.mxu0 %v8048
    %8160 = vmatprep.mubr.bf16.mxu0 %v7830
    %8161 = vmatmul.mubr.bf16.gmra.mxu0 %v7829
    %v8162 = vpop.f32.mrf.mxu0
    %v8163 = vadd.f32 %v8123, %v8162
    %v8164 = vpop.f32.mrf.mxu0
    %v8165 = vpop.f32.mrf.mxu0
    %v8166 = vpop.f32.mrf.mxu0
    %8167 = vdwg.mxu0
    %v8168 = vadd.f32 %v7620, %v8163
    %s8169 = scalar_lea.vmem %s18, 1
    %v8170 = vld [vmem:[%s8169] sm:$0x1]
    %v8172 = vlaneseq
    %v8173 = vshrl.u32 %v8172, 7
    %v8174 = vsub.s32 0, %v8173
    %v8175 = vrot.slane %v8170, %v8174
    %v8177 = vadd.f32 %v8168, %v8175
    %v8179 = vrot.slane %v8177, 1
    %v8180 = vrot.slane %v8177, 2
    %v8183 = vadd.f32 %v5964, %v8179
    %v8184 = vadd.f32 %v5965, %v8180
    %s8185 = scalar_lea.vmem %s13, 1
    %v8186 = vld [vmem:[%s8185] sm:$0x1]
    %s8187 = scalar_lea.vmem %s14, 1
    %v8188 = vld [vmem:[%s8187] sm:$0x1]
    %v8191 = vrot.slane %v8184, 7
    %v8194 = vsel %vm5907, %v8183, 0.0
    %8195 = vadd.xlane.f32.xlu0 %v8194
    %v8196 = vpop.xlane.xlu0 %8195
    %v8197 = vsel %vm5911, %v8191, 0.0
    %8198 = vadd.xlane.f32.xlu0 %v8197
    %v8199 = vpop.xlane.xlu0 %8198
    %v8200 = vmul.f32 %v8196, %v1847
    %v8201 = vmul.f32 %v8199, %v1847
    %v8204 = vrot.slane %v8201, 1
    %v8207 = vsub.f32 %v8183, %v8200
    %v8208 = vsub.f32 %v8184, %v8204
    %v8209 = vmul.f32 %v8207, %v8207
    %v8210 = vmul.f32 %v8208, %v8208
    %v8213 = vrot.slane %v8210, 7
    %v8216 = vsel %vm5907, %v8209, 0.0
    %8217 = vadd.xlane.f32.xlu0 %v8216
    %v8218 = vpop.xlane.xlu0 %8217
    %v8219 = vsel %vm5911, %v8213, 0.0
    %8220 = vadd.xlane.f32.xlu0 %v8219
    %v8221 = vpop.xlane.xlu0 %8220
    %v8222 = vmul.f32 %v8218, %v1847
    %v8223 = vmul.f32 %v8221, %v1847
    %v8224 = vadd.f32 %v8222, 1e-05
    %v8225 = vadd.f32 %v8223, 1e-05
    %v8226 = vrsqrt.pop %v8224
    %v8227 = vrsqrt.pop %v8225
    %v8230 = vrot.slane %v8227, 1
    %v8233 = vmul.f32 %v8207, %v8226
    %v8234 = vmul.f32 %v8208, %v8230
    %v8236 = vlaneseq
    %v8237 = vshrl.u32 %v8236, 7
    %v8238 = vsub.s32 0, %v8237
    %v8239 = vrot.slane %v8186, %v8238
    %v8241 = vmul.f32 %v8233, %v8239
    %v8242 = vmul.f32 %v8234, %v8239
    %v8244 = vlaneseq
    %v8245 = vshrl.u32 %v8244, 7
    %v8246 = vsub.s32 0, %v8245
    %v8247 = vrot.slane %v8188, %v8246
    %v8249 = vadd.f32 %v8241, %v8247
    %v8250 = vadd.f32 %v8242, %v8247
    %v8251 = vld [vmem:[%s19] sm:$0xff]
    %v8252 = vld [vmem:[%s19 + $0x8] sm:$0xff]
    %v8253 = vld [vmem:[%s19 + $0x10] sm:$0xff]
    %v8254 = vld [vmem:[%s19 + $0x18] sm:$0xff]
    %v8255 = vld [vmem:[%s19 + $0x20] sm:$0xff]
    %v8256 = vld [vmem:[%s19 + $0x28] sm:$0xff]
    %v8257 = vld [vmem:[%s19 + $0x30] sm:$0xff]
    %v8258 = vld [vmem:[%s19 + $0x38] sm:$0xff]
    %v8259 = vld [vmem:[%s20] sm:$0x1]
    %v8261 = vlaneseq
    %v8262 = vshrl.u32 %v8261, 7
    %v8263 = vsub.s32 0, %v8262
    %v8264 = vrot.slane %v8259, %v8263
    %v8268 = vrot.slane %v8249, 7
    %v8269 = vrot.slane %v8250, 6
    %v8270 = vsel %vm4198, %v8269, %v8268
    %v8271 = vsel %vm203, %v8270, 0
    %8273 = vmatprep.subr.mxu0 0.0
    %8274 = vmatpush1.msra.mxu0 0.0
    %8275 = vmatprep.subr.mxu0 0.0
    %8276 = vmatpush1.msra.mxu0 0.0
    %8277 = vmatprep.subr.mxu0 0.0
    %8278 = vmatpush1.msra.mxu0 0.0
    %8279 = vmatprep.subr.mxu0 0.0
    %8280 = vmatpush1.msra.mxu0 0.0
    %8281 = vmatprep.subr.mxu0 0.0
    %8282 = vmatpush1.msra.mxu0 0.0
    %8283 = vmatprep.subr.mxu0 0.0
    %8284 = vmatpush1.msra.mxu0 0.0
    %8285 = vmatprep.subr.mxu0 0.0
    %8286 = vmatpush1.msra.mxu0 0.0
    %8287 = vmatprep.subr.mxu0 0.0
    %8288 = vmatpush1.msra.mxu0 0.0
    %8289 = vmatprep.subr.mxu0 0.0
    %8290 = vmatpush1.msra.mxu0 %v8258
    %8291 = vmatprep.subr.mxu0 0.0
    %8292 = vmatpush1.msra.mxu0 %v8257
    %8293 = vmatprep.subr.mxu0 0.0
    %8294 = vmatpush1.msra.mxu0 %v8256
    %8295 = vmatprep.subr.mxu0 0.0
    %8296 = vmatpush1.msra.mxu0 %v8255
    %8297 = vmatprep.subr.mxu0 0.0
    %8298 = vmatpush1.msra.mxu0 %v8254
    %8299 = vmatprep.subr.mxu0 0.0
    %8300 = vmatpush1.msra.mxu0 %v8253
    %8301 = vmatprep.subr.mxu0 0.0
    %8302 = vmatpush1.msra.mxu0 %v8252
    %8303 = vmatprep.subr.mxu0 0.0
    %8304 = vmatpush1.msra.mxu0 %v8251
    %8305 = vmatprep.subr.mxu0 0.0
    %8306 = vmatpush2.msra.mxu0 0.0
    %8307 = vmatprep.subr.mxu0 0.0
    %8308 = vmatpush2.msra.mxu0 0.0
    %8309 = vmatprep.subr.mxu0 0.0
    %8310 = vmatpush2.msra.mxu0 0.0
    %8311 = vmatprep.subr.mxu0 0.0
    %8312 = vmatpush2.msra.mxu0 0.0
    %8313 = vmatprep.subr.mxu0 0.0
    %8314 = vmatpush2.msra.mxu0 0.0
    %8315 = vmatprep.subr.mxu0 0.0
    %8316 = vmatpush2.msra.mxu0 0.0
    %8317 = vmatprep.subr.mxu0 0.0
    %8318 = vmatpush2.msra.mxu0 0.0
    %8319 = vmatprep.subr.mxu0 0.0
    %8320 = vmatpush2.msra.mxu0 0.0
    %8321 = vmatprep.subr.mxu0 0.0
    %8322 = vmatpush2.msra.mxu0 0.0
    %8323 = vmatprep.subr.mxu0 0.0
    %8324 = vmatpush2.msra.mxu0 0.0
    %8325 = vmatprep.subr.mxu0 0.0
    %8326 = vmatpush2.msra.mxu0 0.0
    %8327 = vmatprep.subr.mxu0 0.0
    %8328 = vmatpush2.msra.mxu0 0.0
    %8329 = vmatprep.subr.mxu0 0.0
    %8330 = vmatpush2.msra.mxu0 0.0
    %8331 = vmatprep.subr.mxu0 0.0
    %8332 = vmatpush2.msra.mxu0 0.0
    %8333 = vmatprep.subr.mxu0 0.0
    %8334 = vmatpush2.msra.mxu0 0.0
    %8335 = vmatprep.subr.mxu0 0.0
    %8336 = vmatpush2.msra.mxu0 0.0
    %8337 = vmatprep.mubr.f32.mxu0 0.0
    %8338 = vmatmul.mubr.f32.gmra.mxu0 %v8271
    %v8339 = vpop.f32.mrf.mxu0
    %v8340 = vadd.f32 %v8264, %v8339
    %v8341 = vpop.f32.mrf.mxu0
    %8342 = vdwg.mxu0
    %vm8343 = vcmask 25600
    %8344 = vst.msk [vmem:[#allocation2] sm:$0x3] %vm8343, %v8340
    // Predicated region
    $region86: #{tpu_custom_call.1} parent=1 // pred_check
      _
    $region87: #{tpu_custom_call.1} parent=1 // pred_check_branch
      %8346 = sbr.rel (0) target = $region89
    $region88: #{tpu_custom_call.1} parent=1 // pred_region
      %s8348 = ssub.s32 32, 32
      %8349 = vsyncadd [#allocation3], %s8348
      %s8351 = sshll.u32 [#allocation2], 4
      %s8352 = int_to_ptr.vmem [resolvable:$true] %s8351
      %8354 = dma.vmem_to_hbm [thread:$0]  %s8352, 32, %s21, [#allocation3]
    $region89: #{tpu_custom_call.1} parent=1 // pred_fallthru
      _
    // Predicated region
    $region90: #{tpu_custom_call.1} parent=1 // pred_check
      _
    $region91: #{tpu_custom_call.1} parent=1 // pred_check_branch
      %8356 = sbr.rel (0) target = $region93
    $region92: #{tpu_custom_call.1} parent=1 // pred_region
      %8357 = dma.done [#allocation3], 32
    $region93: #{tpu_custom_call.1} parent=1 // pred_fallthru
      _
    %8358 = vsyncpa [#allocation3], 1

</llo_original>
